<compile_context>
chip_gen: v6e
topology: v6e:2x2x1
jax: 0.10.0
libtpu: 0.0.40
codegen_flags: <defaults>
</compile_context>

<pallas_src>
import functools

import jax
import jax.numpy as jnp
from jax.experimental import pallas as pl
from jax.experimental.pallas import tpu as pltpu

FEAT = 64  # DnCNN hidden width


# ------------------------------ fused kernel -------------------------------

def _dncnn_layer_kernel(x_ref, w_ref, scale_ref, shift_ref, alpha_ref, o_ref,
                        act_ref, *, H, W, C, K, L, LH, pad):
    """One DnCNN layer for one batch element; grid = (batch, layer).

    x_ref:     (1, H, W, C)      bf16  channel-padded input image
    w_ref:     (1, K, K*C, C)    bf16  this layer's weights, [kw][kh*C + ci]
    scale_ref: (1, 1, C)         f32   folded BN scale (1 where unused)
    shift_ref: (1, 1, C)         f32   folded conv-bias / BN shift
    alpha_ref: (1, 1, C)         f32   PReLU slope (1 where unused == id)
    o_ref:     (1, H, W, C)      f32   network output (channel-padded)
    act_ref:   (2, H+2p, Wpad, C) bf16 ping-pong activations with zero halo
    """
    l = pl.program_id(1)
    HW = H * W
    Hp = H + 2 * pad
    Wpad = act_ref.shape[2]

    # ---- per-image init (layer 0): zero halo strips, stage the input. -----
    @pl.when(l == 0)
    def _init():
        for i in range(2):
            if LH > 0:                                    # left W halo
                act_ref[i, :, 0:LH, :] = jnp.zeros((Hp, LH, C), act_ref.dtype)
            if Wpad > LH + W:                             # right W halo
                act_ref[i, :, LH + W:Wpad, :] = jnp.zeros(
                    (Hp, Wpad - LH - W, C), act_ref.dtype)
            if pad > 0:                                   # top / bottom halos
                zh = jnp.zeros((pad, Wpad, C), act_ref.dtype)
                act_ref[i, 0:pad, :, :] = zh
                act_ref[i, pad + H:Hp, :, :] = zh
        act_ref[0, pad:pad + H, LH:LH + W, :] = x_ref[0]

    # Residual connection exists only for the middle blocks (0 < l < L-1).
    res_gate = jnp.logical_and(l > 0, l < L - 1).astype(jnp.float32)

    def run_layer(src, dst):          # src / dst are static ping-pong indices
        # ---- conv: K accumulated matmuls of contraction depth K*C ---------
        y = None
        for kw in range(K):
            w_off = LH - pad + kw
            pieces = [
                act_ref[src, kh:kh + H, w_off:w_off + W, :].reshape(HW, C)
                for kh in range(K)
            ]
            operand = jnp.concatenate(pieces, axis=1)           # (HW, K*C) bf16
            part = jnp.dot(operand, w_ref[0, kw],
                           preferred_element_type=jnp.float32)  # (HW, C) f32
            y = part if y is None else y + part

        # ---- epilogue: (+x) (*bn_scale) (+shift) (PReLU), all in f32 ------
        center = act_ref[src, pad:pad + H, LH:LH + W, :].astype(jnp.float32)
        y = y + res_gate * center.reshape(HW, C)
        y = y * scale_ref[0] + shift_ref[0]
        y = jnp.where(y >= 0.0, y, y * alpha_ref[0])

        @pl.when(l == L - 1)
        def _():
            o_ref[...] = y.reshape(1, H, W, C).astype(o_ref.dtype)

        @pl.when(l < L - 1)
        def _():
            act_ref[dst, pad:pad + H, LH:LH + W, :] = (
                y.reshape(H, W, C).astype(act_ref.dtype))

    @pl.when(l % 2 == 0)
    def _even():
        run_layer(0, 1)

    @pl.when(l % 2 == 1)
    def _odd():
        run_layer(1, 0)


# ------------------------------- forward -----------------------------------

def dncnn_forward(x_nchw, params, depth):
    """Fused Pallas forward.  x_nchw: (B, C, H, W) like the PyTorch module."""
    bn_eps = 1e-5
    K = params["convi_w"].shape[0]
    in_ch = params["convi_w"].shape[2]
    C = params["convi_w"].shape[3]            # = FEAT
    assert K % 2 == 1, "odd kernel sizes only"
    assert in_ch <= C, "in_ch must not exceed the hidden width"

    B, _, H, W = x_nchw.shape
    L = depth + 2
    pad = K // 2
    KC = K * C
    ALIGN = 8
    LH = ((pad + ALIGN - 1) // ALIGN) * ALIGN            # aligned left halo
    Wpad = LH + ((W + pad + ALIGN - 1) // ALIGN) * ALIGN
    Hp = H + 2 * pad

    # NCHW -> NHWC, channel-pad Cin -> C, cast to bf16 (MXU operand dtype).
    x = jnp.transpose(x_nchw, (0, 2, 3, 1)).astype(jnp.float32)
    x = jnp.pad(x, ((0, 0), (0, 0), (0, 0), (0, C - in_ch)))
    x = x.astype(jnp.bfloat16)

    def arrange(w_hwio):              # HWIO -> [kw][kh*Cin + ci][co]
        return jnp.transpose(w_hwio, (1, 0, 2, 3)).reshape(K, KC, C)

    ones_c = jnp.ones((C,), jnp.float32)
    w_list, sc_list, sh_list, al_list = [], [], [], []

    # layer 0: PReLU(convi(x) + b)
    w_list.append(arrange(jnp.pad(params["convi_w"],
                                  ((0, 0), (0, 0), (0, C - in_ch), (0, 0)))))
    sc_list.append(ones_c)
    sh_list.append(params["convi_b"].astype(jnp.float32))
    al_list.append(params["prelui_alpha"].astype(jnp.float32))

    # middle blocks: PReLU(BN(x + conv(x) + b)), BN folded (inference stats).
    for i in range(depth):
        blk = params["blocks"][i]
        s = blk["bn_gamma"] / jnp.sqrt(blk["bn_var"] + bn_eps)
        sh = blk["bn_beta"] - blk["bn_mean"] * s + blk["b"] * s   # fold bias
        w_list.append(arrange(blk["w"]))
        sc_list.append(s.astype(jnp.float32))
        sh_list.append(sh.astype(jnp.float32))
        al_list.append(blk["alpha"].astype(jnp.float32))

    # final layer: convf(x) + b      (dropout p=0.0 -> identity)
    w_list.append(arrange(jnp.pad(params["convf_w"],
                                  ((0, 0), (0, 0), (0, 0), (0, C - in_ch)))))
    sc_list.append(ones_c)
    sh_list.append(jnp.pad(params["convf_b"].astype(jnp.float32),
                           (0, C - in_ch)))
    al_list.append(ones_c)

    w_all = jnp.stack(w_list).astype(jnp.bfloat16)        # (L, K, K*C, C)
    scales = jnp.stack(sc_list).reshape(L, 1, C)
    shifts = jnp.stack(sh_list).reshape(L, 1, C)
    alphas = jnp.stack(al_list).reshape(L, 1, C)

    kernel = functools.partial(_dncnn_layer_kernel, H=H, W=W, C=C, K=K, L=L,
                               LH=LH, pad=pad)

    # VMEM budget: ping-pong scratch + double-buffered streamed operands +
    # matmul temporaries, 2x headroom, clamped to [32 MiB, 100 MiB].
    act_bytes = 2 * Hp * Wpad * C * 2
    stream_bytes = 2 * (K * KC * C * 2 + 3 * C * 4
                        + H * W * C * 2 + H * W * C * 4)
    tmp_bytes = 6 * H * W * (KC + C) * 4
    vmem_limit = int(min(100 * 1024 * 1024,
                         max(32 * 1024 * 1024,
                             2 * (act_bytes + stream_bytes + tmp_bytes))))

    flops = 2 * B * H * W * K * K * C * C * L
    bytes_accessed = (2 * x.size + 4 * B * H * W * C
                      + B * (2 * w_all.size
                             + 4 * (scales.size + shifts.size + alphas.size)))

    out = pl.pallas_call(
        kernel,
        out_shape=jax.ShapeDtypeStruct((B, H, W, C), jnp.float32),
        grid_spec=pltpu.PrefetchScalarGridSpec(
            num_scalar_prefetch=0,
            grid=(B, L),                              # layer axis innermost
            in_specs=[
                pl.BlockSpec((1, H, W, C), lambda b, l: (b, 0, 0, 0)),   # x
                pl.BlockSpec((1, K, KC, C), lambda b, l: (l, 0, 0, 0)),  # w
                pl.BlockSpec((1, 1, C), lambda b, l: (l, 0, 0)),         # scale
                pl.BlockSpec((1, 1, C), lambda b, l: (l, 0, 0)),         # shift
                pl.BlockSpec((1, 1, C), lambda b, l: (l, 0, 0)),         # alpha
            ],
            out_specs=pl.BlockSpec((1, H, W, C), lambda b, l: (b, 0, 0, 0)),
            scratch_shapes=[
                pltpu.VMEM((2, Hp, Wpad, C), jnp.bfloat16),
            ]),
        compiler_params=pltpu.CompilerParams(
            dimension_semantics=("parallel", "arbitrary"),
            vmem_limit_bytes=vmem_limit),
        cost_estimate=pl.CostEstimate(
            flops=int(flops), transcendentals=0,
            bytes_accessed=int(bytes_accessed)),
    )(x, w_all, scales, shifts, alphas)

    out = out[..., :in_ch]                       # drop padded output channels
    return jnp.transpose(out, (0, 3, 1, 2))      # NHWC -> NCHW


# ----------------------------- parameter init -------------------------------

def init_dncnn_params(key, in_ch, depth, kernel):
    feat = FEAT
    eps_scale = 0.1

    def nrm(k, shape, s=eps_scale):
        return s * jax.random.normal(k, shape, jnp.float32)

    keys = jax.random.split(key, 4 + depth)
    params = {
        "convi_w": nrm(keys[0], (kernel, kernel, in_ch, feat)),
        "convi_b": nrm(keys[1], (feat,)),
        "prelui_alpha": jnp.full((feat,), 0.25, jnp.float32),
        "blocks": [],
        "convf_w": nrm(keys[2], (kernel, kernel, feat, in_ch)),
        "convf_b": nrm(keys[3], (in_ch,)),
    }
    for i in range(depth):
        ks = jax.random.split(keys[4 + i], 6)
        params["blocks"].append({
            "w": nrm(ks[0], (kernel, kernel, feat, feat)),
            "b": nrm(ks[1], (feat,)),
            "bn_gamma": 1.0 + nrm(ks[2], (feat,)),
            "bn_beta": nrm(ks[3], (feat,)),
            "bn_mean": nrm(ks[4], (feat,)),
            "bn_var": 1.0 + jnp.abs(nrm(ks[5], (feat,))),
            "alpha": jnp.full((feat,), 0.25, jnp.float32),
        })
    return params


# ------------------------- pure-JAX reference -------------------------------

def dncnn_reference(x_nchw, params, depth):
    bn_eps = 1e-5

    def conv(x, w, b):
        y = jax.lax.conv_general_dilated(
            x, w, window_strides=(1, 1), padding="SAME",
            dimension_numbers=("NHWC", "HWIO", "NHWC"))
        return y + b

    def prelu(x, a):
        return jnp.where(x >= 0, x, x * a)

    x = jnp.transpose(x_nchw, (0, 2, 3, 1))
    x = prelu(conv(x, params["convi_w"], params["convi_b"]),
              params["prelui_alpha"])
    for i in range(depth):
        blk = params["blocks"][i]
        t = x + conv(x, blk["w"], blk["b"])
        scale = blk["bn_gamma"] / jnp.sqrt(blk["bn_var"] + bn_eps)
        shift = blk["bn_beta"] - blk["bn_mean"] * scale
        x = prelu(t * scale + shift, blk["alpha"])
    x = conv(x, params["convf_w"], params["convf_b"])
    return jnp.transpose(x, (0, 3, 1, 2))


if __name__ == "__main__":
    # Small shapes consistent with the module: B=2, in_ch=2, 16x16, depth=4.
    B, IN_CH, H, W = 2, 2, 16, 16
    DEPTH, KERNEL = 4, 3

    key = jax.random.PRNGKey(0)
    kx, kp = jax.random.split(key)
    x = jax.random.normal(kx, (B, IN_CH, H, W), jnp.float32)
    params = init_dncnn_params(kp, IN_CH, DEPTH, KERNEL)

    out = jax.block_until_ready(dncnn_forward(x, params, DEPTH))
    ref = jax.block_until_ready(dncnn_reference(x, params, DEPTH))

    assert out.shape == (B, IN_CH, H, W), out.shape
    # bf16 matmul operands / bf16 inter-layer activations vs. f32 reference:
    # use a relative max-error criterion.
    err = float(jnp.max(jnp.abs(out - ref)))
    ref_mag = float(jnp.max(jnp.abs(ref))) + 1e-6
    assert err / ref_mag < 5e-2, (err, ref_mag)

    print("KERNEL_OK")
</pallas_src>

<mosaic_0001>
module attributes {stable_mosaic.version = 11 : i64} {
  func.func @_dncnn_layer_kernel(%arg0: i32, %arg1: i32, %arg2: memref<1x16x16x64xbf16, #tpu.memory_space<vmem>>, %arg3: memref<1x3x192x64xbf16, #tpu.memory_space<vmem>>, %arg4: memref<1x1x64xf32, #tpu.memory_space<vmem>>, %arg5: memref<1x1x64xf32, #tpu.memory_space<vmem>>, %arg6: memref<1x1x64xf32, #tpu.memory_space<vmem>>, %arg7: memref<1x16x16x64xf32, #tpu.memory_space<vmem>>, %arg8: memref<2x18x32x64xbf16, #tpu.memory_space<vmem>>) attributes {dimension_semantics = [#tpu.dimension_semantics<parallel>, #tpu.dimension_semantics<arbitrary>], iteration_bounds = array<i64: 2, 6>, scalar_prefetch = 0 : i64, scratch_operands = 1 : i64, tpu.core_type = #tpu.core_type<tc>, window_params = [{transform_indices = @transform_0, window_bounds = array<i64: 1, 16, 16, 64>}, {transform_indices = @transform_1, window_bounds = array<i64: 1, 3, 192, 64>}, {transform_indices = @transform_2, window_bounds = array<i64: 1, 1, 64>}, {transform_indices = @transform_3, window_bounds = array<i64: 1, 1, 64>}, {transform_indices = @transform_4, window_bounds = array<i64: 1, 1, 64>}, {transform_indices = @transform_5, window_bounds = array<i64: 1, 16, 16, 64>}]} {
    %c0_i32 = arith.constant 0 : i32
    %0 = arith.cmpi eq, %arg1, %c0_i32 : i32
    %1 = arith.extui %0 : i1 to i32
    %c0_i32_0 = arith.constant 0 : i32
    %2 = arith.cmpi ne, %1, %c0_i32_0 : i32
    scf.if %2 {
      %cst = arith.constant 0.000000e+00 : bf16
      %34 = vector.broadcast %cst : bf16 to vector<18x8x64xbf16>
      %c0 = arith.constant 0 : index
      %c0_16 = arith.constant 0 : index
      %c0_17 = arith.constant 0 : index
      %c0_18 = arith.constant 0 : index
      %35 = vector.load %arg8[%c0, %c0_16, %c0_17, %c0_18] : memref<2x18x32x64xbf16, #tpu.memory_space<vmem>>, vector<1x18x8x64xbf16>
      %36 = vector.shape_cast %35 : vector<1x18x8x64xbf16> to vector<18x8x64xbf16>
      %37 = vector.shape_cast %34 : vector<18x8x64xbf16> to vector<1x18x8x64xbf16>
      tpu.vector_store %arg8[%c0, %c0_16, %c0_17, %c0_18], %37 {strides = array<i32>} : memref<2x18x32x64xbf16, #tpu.memory_space<vmem>>, vector<1x18x8x64xbf16>,
      %cst_19 = arith.constant 0.000000e+00 : bf16
      %38 = vector.broadcast %cst_19 : bf16 to vector<18x8x64xbf16>
      %c0_20 = arith.constant 0 : index
      %c0_21 = arith.constant 0 : index
      %c24 = arith.constant 24 : index
      %c0_22 = arith.constant 0 : index
      %39 = vector.load %arg8[%c0_20, %c0_21, %c24, %c0_22] : memref<2x18x32x64xbf16, #tpu.memory_space<vmem>>, vector<1x18x8x64xbf16>
      %40 = vector.shape_cast %39 : vector<1x18x8x64xbf16> to vector<18x8x64xbf16>
      %41 = vector.shape_cast %38 : vector<18x8x64xbf16> to vector<1x18x8x64xbf16>
      tpu.vector_store %arg8[%c0_20, %c0_21, %c24, %c0_22], %41 {strides = array<i32>} : memref<2x18x32x64xbf16, #tpu.memory_space<vmem>>, vector<1x18x8x64xbf16>,
      %cst_23 = arith.constant 0.000000e+00 : bf16
      %42 = vector.broadcast %cst_23 : bf16 to vector<1x32x64xbf16>
      %c0_24 = arith.constant 0 : index
      %c0_25 = arith.constant 0 : index
      %c0_26 = arith.constant 0 : index
      %c0_27 = arith.constant 0 : index
      %43 = vector.load %arg8[%c0_24, %c0_25, %c0_26, %c0_27] : memref<2x18x32x64xbf16, #tpu.memory_space<vmem>>, vector<1x1x32x64xbf16>
      %44 = vector.shape_cast %43 : vector<1x1x32x64xbf16> to vector<1x32x64xbf16>
      %45 = vector.shape_cast %42 : vector<1x32x64xbf16> to vector<1x1x32x64xbf16>
      tpu.vector_store %arg8[%c0_24, %c0_25, %c0_26, %c0_27], %45 {strides = array<i32>} : memref<2x18x32x64xbf16, #tpu.memory_space<vmem>>, vector<1x1x32x64xbf16>,
      %c0_28 = arith.constant 0 : index
      %c17 = arith.constant 17 : index
      %c0_29 = arith.constant 0 : index
      %c0_30 = arith.constant 0 : index
      %46 = vector.load %arg8[%c0_28, %c17, %c0_29, %c0_30] : memref<2x18x32x64xbf16, #tpu.memory_space<vmem>>, vector<1x1x32x64xbf16>
      %47 = vector.shape_cast %46 : vector<1x1x32x64xbf16> to vector<1x32x64xbf16>
      %48 = vector.shape_cast %42 : vector<1x32x64xbf16> to vector<1x1x32x64xbf16>
      tpu.vector_store %arg8[%c0_28, %c17, %c0_29, %c0_30], %48 {strides = array<i32>} : memref<2x18x32x64xbf16, #tpu.memory_space<vmem>>, vector<1x1x32x64xbf16>,
      %cst_31 = arith.constant 0.000000e+00 : bf16
      %49 = vector.broadcast %cst_31 : bf16 to vector<18x8x64xbf16>
      %c1 = arith.constant 1 : index
      %c0_32 = arith.constant 0 : index
      %c0_33 = arith.constant 0 : index
      %c0_34 = arith.constant 0 : index
      %50 = vector.load %arg8[%c1, %c0_32, %c0_33, %c0_34] : memref<2x18x32x64xbf16, #tpu.memory_space<vmem>>, vector<1x18x8x64xbf16>
      %51 = vector.shape_cast %50 : vector<1x18x8x64xbf16> to vector<18x8x64xbf16>
      %52 = vector.shape_cast %49 : vector<18x8x64xbf16> to vector<1x18x8x64xbf16>
      tpu.vector_store %arg8[%c1, %c0_32, %c0_33, %c0_34], %52 {strides = array<i32>} : memref<2x18x32x64xbf16, #tpu.memory_space<vmem>>, vector<1x18x8x64xbf16>,
      %cst_35 = arith.constant 0.000000e+00 : bf16
      %53 = vector.broadcast %cst_35 : bf16 to vector<18x8x64xbf16>
      %c1_36 = arith.constant 1 : index
      %c0_37 = arith.constant 0 : index
      %c24_38 = arith.constant 24 : index
      %c0_39 = arith.constant 0 : index
      %54 = vector.load %arg8[%c1_36, %c0_37, %c24_38, %c0_39] : memref<2x18x32x64xbf16, #tpu.memory_space<vmem>>, vector<1x18x8x64xbf16>
      %55 = vector.shape_cast %54 : vector<1x18x8x64xbf16> to vector<18x8x64xbf16>
      %56 = vector.shape_cast %53 : vector<18x8x64xbf16> to vector<1x18x8x64xbf16>
      tpu.vector_store %arg8[%c1_36, %c0_37, %c24_38, %c0_39], %56 {strides = array<i32>} : memref<2x18x32x64xbf16, #tpu.memory_space<vmem>>, vector<1x18x8x64xbf16>,
      %cst_40 = arith.constant 0.000000e+00 : bf16
      %57 = vector.broadcast %cst_40 : bf16 to vector<1x32x64xbf16>
      %c1_41 = arith.constant 1 : index
      %c0_42 = arith.constant 0 : index
      %c0_43 = arith.constant 0 : index
      %c0_44 = arith.constant 0 : index
      %58 = vector.load %arg8[%c1_41, %c0_42, %c0_43, %c0_44] : memref<2x18x32x64xbf16, #tpu.memory_space<vmem>>, vector<1x1x32x64xbf16>
      %59 = vector.shape_cast %58 : vector<1x1x32x64xbf16> to vector<1x32x64xbf16>
      %60 = vector.shape_cast %57 : vector<1x32x64xbf16> to vector<1x1x32x64xbf16>
      tpu.vector_store %arg8[%c1_41, %c0_42, %c0_43, %c0_44], %60 {strides = array<i32>} : memref<2x18x32x64xbf16, #tpu.memory_space<vmem>>, vector<1x1x32x64xbf16>,
      %c1_45 = arith.constant 1 : index
      %c17_46 = arith.constant 17 : index
      %c0_47 = arith.constant 0 : index
      %c0_48 = arith.constant 0 : index
      %61 = vector.load %arg8[%c1_45, %c17_46, %c0_47, %c0_48] : memref<2x18x32x64xbf16, #tpu.memory_space<vmem>>, vector<1x1x32x64xbf16>
      %62 = vector.shape_cast %61 : vector<1x1x32x64xbf16> to vector<1x32x64xbf16>
      %63 = vector.shape_cast %57 : vector<1x32x64xbf16> to vector<1x1x32x64xbf16>
      tpu.vector_store %arg8[%c1_45, %c17_46, %c0_47, %c0_48], %63 {strides = array<i32>} : memref<2x18x32x64xbf16, #tpu.memory_space<vmem>>, vector<1x1x32x64xbf16>,
      %c0_49 = arith.constant 0 : index
      %c0_50 = arith.constant 0 : index
      %c0_51 = arith.constant 0 : index
      %c0_52 = arith.constant 0 : index
      %64 = vector.load %arg2[%c0_49, %c0_50, %c0_51, %c0_52] : memref<1x16x16x64xbf16, #tpu.memory_space<vmem>>, vector<1x16x16x64xbf16>
      %65 = vector.shape_cast %64 : vector<1x16x16x64xbf16> to vector<16x16x64xbf16>
      %c0_53 = arith.constant 0 : index
      %c1_54 = arith.constant 1 : index
      %c8 = arith.constant 8 : index
      %c0_55 = arith.constant 0 : index
      %66 = vector.load %arg8[%c0_53, %c1_54, %c8, %c0_55] : memref<2x18x32x64xbf16, #tpu.memory_space<vmem>>, vector<1x16x16x64xbf16>
      %67 = vector.shape_cast %66 : vector<1x16x16x64xbf16> to vector<16x16x64xbf16>
      %68 = vector.shape_cast %65 : vector<16x16x64xbf16> to vector<1x16x16x64xbf16>
      tpu.vector_store %arg8[%c0_53, %c1_54, %c8, %c0_55], %68 {strides = array<i32>} : memref<2x18x32x64xbf16, #tpu.memory_space<vmem>>, vector<1x16x16x64xbf16>,
    } else {
    }
    %c0_i32_1 = arith.constant 0 : i32
    %3 = arith.cmpi sgt, %arg1, %c0_i32_1 : i32
    %c5_i32 = arith.constant 5 : i32
    %4 = arith.cmpi slt, %arg1, %c5_i32 : i32
    %5 = arith.andi %3, %4 : i1
    %6 = arith.extui %5 : i1 to i32
    %7 = arith.sitofp %6 : i32 to f32
    %c2_i32 = arith.constant 2 : i32
    %c0_i32_2 = arith.constant 0 : i32
    %8 = arith.cmpi eq, %c2_i32, %c0_i32_2 : i32
    %c1_i32 = arith.constant 1 : i32
    %9 = arith.select %8, %c1_i32, %c2_i32 : i32
    %10 = arith.remsi %arg1, %9 : i32
    %c0_i32_3 = arith.constant 0 : i32
    %11 = arith.cmpi ne, %10, %c0_i32_3 : i32
    %c0_i32_4 = arith.constant 0 : i32
    %12 = arith.cmpi slt, %10, %c0_i32_4 : i32
    %c0_i32_5 = arith.constant 0 : i32
    %13 = arith.cmpi slt, %9, %c0_i32_5 : i32
    %14 = arith.xori %12, %13 : i1
    %15 = arith.andi %14, %11 : i1
    %16 = arith.addi %10, %9 : i32
    %17 = arith.select %15, %16, %10 : i32
    %c0_i32_6 = arith.constant 0 : i32
    %18 = arith.cmpi eq, %17, %c0_i32_6 : i32
    %19 = arith.extui %18 : i1 to i32
    %c0_i32_7 = arith.constant 0 : i32
    %20 = arith.cmpi ne, %19, %c0_i32_7 : i32
    scf.if %20 {
      %c0 = arith.constant 0 : index
      %c0_16 = arith.constant 0 : index
      %c7 = arith.constant 7 : index
      %c0_17 = arith.constant 0 : index
      %34 = vector.load %arg8[%c0, %c0_16, %c7, %c0_17] : memref<2x18x32x64xbf16, #tpu.memory_space<vmem>>, vector<1x16x16x64xbf16>
      %35 = vector.shape_cast %34 : vector<1x16x16x64xbf16> to vector<16x16x64xbf16>
      %36 = vector.shape_cast %35 : vector<16x16x64xbf16> to vector<256x64xbf16>
      %c0_18 = arith.constant 0 : index
      %c1 = arith.constant 1 : index
      %c7_19 = arith.constant 7 : index
      %c0_20 = arith.constant 0 : index
      %37 = vector.load %arg8[%c0_18, %c1, %c7_19, %c0_20] : memref<2x18x32x64xbf16, #tpu.memory_space<vmem>>, vector<1x16x16x64xbf16>
      %38 = vector.shape_cast %37 : vector<1x16x16x64xbf16> to vector<16x16x64xbf16>
      %39 = vector.shape_cast %38 : vector<16x16x64xbf16> to vector<256x64xbf16>
      %c0_21 = arith.constant 0 : index
      %c2 = arith.constant 2 : index
      %c7_22 = arith.constant 7 : index
      %c0_23 = arith.constant 0 : index
      %40 = vector.load %arg8[%c0_21, %c2, %c7_22, %c0_23] : memref<2x18x32x64xbf16, #tpu.memory_space<vmem>>, vector<1x16x16x64xbf16>
      %41 = vector.shape_cast %40 : vector<1x16x16x64xbf16> to vector<16x16x64xbf16>
      %42 = vector.shape_cast %41 : vector<16x16x64xbf16> to vector<256x64xbf16>
      %43 = tpu.concatenate %36, %39, %42 in 1 : vector<256x64xbf16>, vector<256x64xbf16>, vector<256x64xbf16> -> vector<256x192xbf16>
      %c0_24 = arith.constant 0 : index
      %c0_25 = arith.constant 0 : index
      %c0_26 = arith.constant 0 : index
      %c0_27 = arith.constant 0 : index
      %44 = vector.load %arg3[%c0_24, %c0_25, %c0_26, %c0_27] : memref<1x3x192x64xbf16, #tpu.memory_space<vmem>>, vector<1x1x192x64xbf16>
      %45 = vector.shape_cast %44 : vector<1x1x192x64xbf16> to vector<192x64xbf16>
      %cst = arith.constant dense<0.000000e+00> : vector<256x64xf32>
      %46 = tpu.matmul %43, %45, %cst {dimension_numbers = #tpu.dot_dimension_numbers<[1], [0], [0], [1], [0, 0, 1, 1], [], []>} : vector<256x192xbf16>, vector<192x64xbf16>, vector<256x64xf32> -> vector<256x64xf32>
      %c0_28 = arith.constant 0 : index
      %c0_29 = arith.constant 0 : index
      %c8 = arith.constant 8 : index
      %c0_30 = arith.constant 0 : index
      %47 = vector.load %arg8[%c0_28, %c0_29, %c8, %c0_30] : memref<2x18x32x64xbf16, #tpu.memory_space<vmem>>, vector<1x16x16x64xbf16>
      %48 = vector.shape_cast %47 : vector<1x16x16x64xbf16> to vector<16x16x64xbf16>
      %49 = vector.shape_cast %48 : vector<16x16x64xbf16> to vector<256x64xbf16>
      %c0_31 = arith.constant 0 : index
      %c1_32 = arith.constant 1 : index
      %c8_33 = arith.constant 8 : index
      %c0_34 = arith.constant 0 : index
      %50 = vector.load %arg8[%c0_31, %c1_32, %c8_33, %c0_34] : memref<2x18x32x64xbf16, #tpu.memory_space<vmem>>, vector<1x16x16x64xbf16>
      %51 = vector.shape_cast %50 : vector<1x16x16x64xbf16> to vector<16x16x64xbf16>
      %52 = vector.shape_cast %51 : vector<16x16x64xbf16> to vector<256x64xbf16>
      %c0_35 = arith.constant 0 : index
      %c2_36 = arith.constant 2 : index
      %c8_37 = arith.constant 8 : index
      %c0_38 = arith.constant 0 : index
      %53 = vector.load %arg8[%c0_35, %c2_36, %c8_37, %c0_38] : memref<2x18x32x64xbf16, #tpu.memory_space<vmem>>, vector<1x16x16x64xbf16>
      %54 = vector.shape_cast %53 : vector<1x16x16x64xbf16> to vector<16x16x64xbf16>
      %55 = vector.shape_cast %54 : vector<16x16x64xbf16> to vector<256x64xbf16>
      %56 = tpu.concatenate %49, %52, %55 in 1 : vector<256x64xbf16>, vector<256x64xbf16>, vector<256x64xbf16> -> vector<256x192xbf16>
      %c0_39 = arith.constant 0 : index
      %c1_40 = arith.constant 1 : index
      %c0_41 = arith.constant 0 : index
      %c0_42 = arith.constant 0 : index
      %57 = vector.load %arg3[%c0_39, %c1_40, %c0_41, %c0_42] : memref<1x3x192x64xbf16, #tpu.memory_space<vmem>>, vector<1x1x192x64xbf16>
      %58 = vector.shape_cast %57 : vector<1x1x192x64xbf16> to vector<192x64xbf16>
      %cst_43 = arith.constant dense<0.000000e+00> : vector<256x64xf32>
      %59 = tpu.matmul %56, %58, %cst_43 {dimension_numbers = #tpu.dot_dimension_numbers<[1], [0], [0], [1], [0, 0, 1, 1], [], []>} : vector<256x192xbf16>, vector<192x64xbf16>, vector<256x64xf32> -> vector<256x64xf32>
      %60 = arith.addf %46, %59 : vector<256x64xf32>
      %c0_44 = arith.constant 0 : index
      %c0_45 = arith.constant 0 : index
      %c9 = arith.constant 9 : index
      %c0_46 = arith.constant 0 : index
      %61 = vector.load %arg8[%c0_44, %c0_45, %c9, %c0_46] : memref<2x18x32x64xbf16, #tpu.memory_space<vmem>>, vector<1x16x16x64xbf16>
      %62 = vector.shape_cast %61 : vector<1x16x16x64xbf16> to vector<16x16x64xbf16>
      %63 = vector.shape_cast %62 : vector<16x16x64xbf16> to vector<256x64xbf16>
      %c0_47 = arith.constant 0 : index
      %c1_48 = arith.constant 1 : index
      %c9_49 = arith.constant 9 : index
      %c0_50 = arith.constant 0 : index
      %64 = vector.load %arg8[%c0_47, %c1_48, %c9_49, %c0_50] : memref<2x18x32x64xbf16, #tpu.memory_space<vmem>>, vector<1x16x16x64xbf16>
      %65 = vector.shape_cast %64 : vector<1x16x16x64xbf16> to vector<16x16x64xbf16>
      %66 = vector.shape_cast %65 : vector<16x16x64xbf16> to vector<256x64xbf16>
      %c0_51 = arith.constant 0 : index
      %c2_52 = arith.constant 2 : index
      %c9_53 = arith.constant 9 : index
      %c0_54 = arith.constant 0 : index
      %67 = vector.load %arg8[%c0_51, %c2_52, %c9_53, %c0_54] : memref<2x18x32x64xbf16, #tpu.memory_space<vmem>>, vector<1x16x16x64xbf16>
      %68 = vector.shape_cast %67 : vector<1x16x16x64xbf16> to vector<16x16x64xbf16>
      %69 = vector.shape_cast %68 : vector<16x16x64xbf16> to vector<256x64xbf16>
      %70 = tpu.concatenate %63, %66, %69 in 1 : vector<256x64xbf16>, vector<256x64xbf16>, vector<256x64xbf16> -> vector<256x192xbf16>
      %c0_55 = arith.constant 0 : index
      %c2_56 = arith.constant 2 : index
      %c0_57 = arith.constant 0 : index
      %c0_58 = arith.constant 0 : index
      %71 = vector.load %arg3[%c0_55, %c2_56, %c0_57, %c0_58] : memref<1x3x192x64xbf16, #tpu.memory_space<vmem>>, vector<1x1x192x64xbf16>
      %72 = vector.shape_cast %71 : vector<1x1x192x64xbf16> to vector<192x64xbf16>
      %cst_59 = arith.constant dense<0.000000e+00> : vector<256x64xf32>
      %73 = tpu.matmul %70, %72, %cst_59 {dimension_numbers = #tpu.dot_dimension_numbers<[1], [0], [0], [1], [0, 0, 1, 1], [], []>} : vector<256x192xbf16>, vector<192x64xbf16>, vector<256x64xf32> -> vector<256x64xf32>
      %74 = arith.addf %60, %73 : vector<256x64xf32>
      %c0_60 = arith.constant 0 : index
      %c1_61 = arith.constant 1 : index
      %c8_62 = arith.constant 8 : index
      %c0_63 = arith.constant 0 : index
      %75 = vector.load %arg8[%c0_60, %c1_61, %c8_62, %c0_63] : memref<2x18x32x64xbf16, #tpu.memory_space<vmem>>, vector<1x16x16x64xbf16>
      %76 = vector.shape_cast %75 : vector<1x16x16x64xbf16> to vector<16x16x64xbf16>
      %77 = arith.extf %76 : vector<16x16x64xbf16> to vector<16x16x64xf32>
      %78 = vector.shape_cast %77 : vector<16x16x64xf32> to vector<256x64xf32>
      %79 = vector.broadcast %7 : f32 to vector<256x64xf32>
      %80 = arith.mulf %79, %78 : vector<256x64xf32>
      %81 = arith.addf %74, %80 : vector<256x64xf32>
      %c0_64 = arith.constant 0 : index
      %c0_65 = arith.constant 0 : index
      %c0_66 = arith.constant 0 : index
      %82 = vector.load %arg4[%c0_64, %c0_65, %c0_66] : memref<1x1x64xf32, #tpu.memory_space<vmem>>, vector<1x1x64xf32>
      %83 = vector.shape_cast %82 : vector<1x1x64xf32> to vector<1x64xf32>
      %84 = vector.broadcast %83 : vector<1x64xf32> to vector<256x64xf32>
      %85 = arith.mulf %81, %84 : vector<256x64xf32>
      %c0_67 = arith.constant 0 : index
      %c0_68 = arith.constant 0 : index
      %c0_69 = arith.constant 0 : index
      %86 = vector.load %arg5[%c0_67, %c0_68, %c0_69] : memref<1x1x64xf32, #tpu.memory_space<vmem>>, vector<1x1x64xf32>
      %87 = vector.shape_cast %86 : vector<1x1x64xf32> to vector<1x64xf32>
      %88 = vector.broadcast %87 : vector<1x64xf32> to vector<256x64xf32>
      %89 = arith.addf %85, %88 : vector<256x64xf32>
      %cst_70 = arith.constant 0.000000e+00 : f32
      %90 = vector.broadcast %cst_70 : f32 to vector<256x64xf32>
      %91 = arith.cmpf oge, %89, %90 : vector<256x64xf32>
      %c0_71 = arith.constant 0 : index
      %c0_72 = arith.constant 0 : index
      %c0_73 = arith.constant 0 : index
      %92 = vector.load %arg6[%c0_71, %c0_72, %c0_73] : memref<1x1x64xf32, #tpu.memory_space<vmem>>, vector<1x1x64xf32>
      %93 = vector.shape_cast %92 : vector<1x1x64xf32> to vector<1x64xf32>
      %94 = vector.broadcast %93 : vector<1x64xf32> to vector<256x64xf32>
      %95 = arith.mulf %89, %94 : vector<256x64xf32>
      %96 = arith.select %91, %89, %95 : vector<256x64xi1>, vector<256x64xf32>
      %c5_i32_74 = arith.constant 5 : i32
      %97 = arith.cmpi eq, %arg1, %c5_i32_74 : i32
      %98 = arith.extui %97 : i1 to i32
      %c0_i32_75 = arith.constant 0 : i32
      %99 = arith.cmpi ne, %98, %c0_i32_75 : i32
      scf.if %99 {
        %103 = vector.shape_cast %96 : vector<256x64xf32> to vector<1x16x16x64xf32>
        %c0_78 = arith.constant 0 : index
        %c0_79 = arith.constant 0 : index
        %c0_80 = arith.constant 0 : index
        %c0_81 = arith.constant 0 : index
        %104 = vector.load %arg7[%c0_78, %c0_79, %c0_80, %c0_81] : memref<1x16x16x64xf32, #tpu.memory_space<vmem>>, vector<1x16x16x64xf32>
        tpu.vector_store %arg7[%c0_78, %c0_79, %c0_80, %c0_81], %103 {strides = array<i32>} : memref<1x16x16x64xf32, #tpu.memory_space<vmem>>, vector<1x16x16x64xf32>,
      } else {
      }
      %c5_i32_76 = arith.constant 5 : i32
      %100 = arith.cmpi slt, %arg1, %c5_i32_76 : i32
      %101 = arith.extui %100 : i1 to i32
      %c0_i32_77 = arith.constant 0 : i32
      %102 = arith.cmpi ne, %101, %c0_i32_77 : i32
      scf.if %102 {
        %103 = vector.shape_cast %96 : vector<256x64xf32> to vector<16x16x64xf32>
        %104 = arith.truncf %103 : vector<16x16x64xf32> to vector<16x16x64xbf16>
        %c1_78 = arith.constant 1 : index
        %c1_79 = arith.constant 1 : index
        %c8_80 = arith.constant 8 : index
        %c0_81 = arith.constant 0 : index
        %105 = vector.load %arg8[%c1_78, %c1_79, %c8_80, %c0_81] : memref<2x18x32x64xbf16, #tpu.memory_space<vmem>>, vector<1x16x16x64xbf16>
        %106 = vector.shape_cast %105 : vector<1x16x16x64xbf16> to vector<16x16x64xbf16>
        %107 = vector.shape_cast %104 : vector<16x16x64xbf16> to vector<1x16x16x64xbf16>
        tpu.vector_store %arg8[%c1_78, %c1_79, %c8_80, %c0_81], %107 {strides = array<i32>} : memref<2x18x32x64xbf16, #tpu.memory_space<vmem>>, vector<1x16x16x64xbf16>,
      } else {
      }
    } else {
    }
    %c2_i32_8 = arith.constant 2 : i32
    %c0_i32_9 = arith.constant 0 : i32
    %21 = arith.cmpi eq, %c2_i32_8, %c0_i32_9 : i32
    %c1_i32_10 = arith.constant 1 : i32
    %22 = arith.select %21, %c1_i32_10, %c2_i32_8 : i32
    %23 = arith.remsi %arg1, %22 : i32
    %c0_i32_11 = arith.constant 0 : i32
    %24 = arith.cmpi ne, %23, %c0_i32_11 : i32
    %c0_i32_12 = arith.constant 0 : i32
    %25 = arith.cmpi slt, %23, %c0_i32_12 : i32
    %c0_i32_13 = arith.constant 0 : i32
    %26 = arith.cmpi slt, %22, %c0_i32_13 : i32
    %27 = arith.xori %25, %26 : i1
    %28 = arith.andi %27, %24 : i1
    %29 = arith.addi %23, %22 : i32
    %30 = arith.select %28, %29, %23 : i32
    %c1_i32_14 = arith.constant 1 : i32
    %31 = arith.cmpi eq, %30, %c1_i32_14 : i32
    %32 = arith.extui %31 : i1 to i32
    %c0_i32_15 = arith.constant 0 : i32
    %33 = arith.cmpi ne, %32, %c0_i32_15 : i32
    scf.if %33 {
      %c1 = arith.constant 1 : index
      %c0 = arith.constant 0 : index
      %c7 = arith.constant 7 : index
      %c0_16 = arith.constant 0 : index
      %34 = vector.load %arg8[%c1, %c0, %c7, %c0_16] : memref<2x18x32x64xbf16, #tpu.memory_space<vmem>>, vector<1x16x16x64xbf16>
      %35 = vector.shape_cast %34 : vector<1x16x16x64xbf16> to vector<16x16x64xbf16>
      %36 = vector.shape_cast %35 : vector<16x16x64xbf16> to vector<256x64xbf16>
      %c1_17 = arith.constant 1 : index
      %c1_18 = arith.constant 1 : index
      %c7_19 = arith.constant 7 : index
      %c0_20 = arith.constant 0 : index
      %37 = vector.load %arg8[%c1_17, %c1_18, %c7_19, %c0_20] : memref<2x18x32x64xbf16, #tpu.memory_space<vmem>>, vector<1x16x16x64xbf16>
      %38 = vector.shape_cast %37 : vector<1x16x16x64xbf16> to vector<16x16x64xbf16>
      %39 = vector.shape_cast %38 : vector<16x16x64xbf16> to vector<256x64xbf16>
      %c1_21 = arith.constant 1 : index
      %c2 = arith.constant 2 : index
      %c7_22 = arith.constant 7 : index
      %c0_23 = arith.constant 0 : index
      %40 = vector.load %arg8[%c1_21, %c2, %c7_22, %c0_23] : memref<2x18x32x64xbf16, #tpu.memory_space<vmem>>, vector<1x16x16x64xbf16>
      %41 = vector.shape_cast %40 : vector<1x16x16x64xbf16> to vector<16x16x64xbf16>
      %42 = vector.shape_cast %41 : vector<16x16x64xbf16> to vector<256x64xbf16>
      %43 = tpu.concatenate %36, %39, %42 in 1 : vector<256x64xbf16>, vector<256x64xbf16>, vector<256x64xbf16> -> vector<256x192xbf16>
      %c0_24 = arith.constant 0 : index
      %c0_25 = arith.constant 0 : index
      %c0_26 = arith.constant 0 : index
      %c0_27 = arith.constant 0 : index
      %44 = vector.load %arg3[%c0_24, %c0_25, %c0_26, %c0_27] : memref<1x3x192x64xbf16, #tpu.memory_space<vmem>>, vector<1x1x192x64xbf16>
      %45 = vector.shape_cast %44 : vector<1x1x192x64xbf16> to vector<192x64xbf16>
      %cst = arith.constant dense<0.000000e+00> : vector<256x64xf32>
      %46 = tpu.matmul %43, %45, %cst {dimension_numbers = #tpu.dot_dimension_numbers<[1], [0], [0], [1], [0, 0, 1, 1], [], []>} : vector<256x192xbf16>, vector<192x64xbf16>, vector<256x64xf32> -> vector<256x64xf32>
      %c1_28 = arith.constant 1 : index
      %c0_29 = arith.constant 0 : index
      %c8 = arith.constant 8 : index
      %c0_30 = arith.constant 0 : index
      %47 = vector.load %arg8[%c1_28, %c0_29, %c8, %c0_30] : memref<2x18x32x64xbf16, #tpu.memory_space<vmem>>, vector<1x16x16x64xbf16>
      %48 = vector.shape_cast %47 : vector<1x16x16x64xbf16> to vector<16x16x64xbf16>
      %49 = vector.shape_cast %48 : vector<16x16x64xbf16> to vector<256x64xbf16>
      %c1_31 = arith.constant 1 : index
      %c1_32 = arith.constant 1 : index
      %c8_33 = arith.constant 8 : index
      %c0_34 = arith.constant 0 : index
      %50 = vector.load %arg8[%c1_31, %c1_32, %c8_33, %c0_34] : memref<2x18x32x64xbf16, #tpu.memory_space<vmem>>, vector<1x16x16x64xbf16>
      %51 = vector.shape_cast %50 : vector<1x16x16x64xbf16> to vector<16x16x64xbf16>
      %52 = vector.shape_cast %51 : vector<16x16x64xbf16> to vector<256x64xbf16>
      %c1_35 = arith.constant 1 : index
      %c2_36 = arith.constant 2 : index
      %c8_37 = arith.constant 8 : index
      %c0_38 = arith.constant 0 : index
      %53 = vector.load %arg8[%c1_35, %c2_36, %c8_37, %c0_38] : memref<2x18x32x64xbf16, #tpu.memory_space<vmem>>, vector<1x16x16x64xbf16>
      %54 = vector.shape_cast %53 : vector<1x16x16x64xbf16> to vector<16x16x64xbf16>
      %55 = vector.shape_cast %54 : vector<16x16x64xbf16> to vector<256x64xbf16>
      %56 = tpu.concatenate %49, %52, %55 in 1 : vector<256x64xbf16>, vector<256x64xbf16>, vector<256x64xbf16> -> vector<256x192xbf16>
      %c0_39 = arith.constant 0 : index
      %c1_40 = arith.constant 1 : index
      %c0_41 = arith.constant 0 : index
      %c0_42 = arith.constant 0 : index
      %57 = vector.load %arg3[%c0_39, %c1_40, %c0_41, %c0_42] : memref<1x3x192x64xbf16, #tpu.memory_space<vmem>>, vector<1x1x192x64xbf16>
      %58 = vector.shape_cast %57 : vector<1x1x192x64xbf16> to vector<192x64xbf16>
      %cst_43 = arith.constant dense<0.000000e+00> : vector<256x64xf32>
      %59 = tpu.matmul %56, %58, %cst_43 {dimension_numbers = #tpu.dot_dimension_numbers<[1], [0], [0], [1], [0, 0, 1, 1], [], []>} : vector<256x192xbf16>, vector<192x64xbf16>, vector<256x64xf32> -> vector<256x64xf32>
      %60 = arith.addf %46, %59 : vector<256x64xf32>
      %c1_44 = arith.constant 1 : index
      %c0_45 = arith.constant 0 : index
      %c9 = arith.constant 9 : index
      %c0_46 = arith.constant 0 : index
      %61 = vector.load %arg8[%c1_44, %c0_45, %c9, %c0_46] : memref<2x18x32x64xbf16, #tpu.memory_space<vmem>>, vector<1x16x16x64xbf16>
      %62 = vector.shape_cast %61 : vector<1x16x16x64xbf16> to vector<16x16x64xbf16>
      %63 = vector.shape_cast %62 : vector<16x16x64xbf16> to vector<256x64xbf16>
      %c1_47 = arith.constant 1 : index
      %c1_48 = arith.constant 1 : index
      %c9_49 = arith.constant 9 : index
      %c0_50 = arith.constant 0 : index
      %64 = vector.load %arg8[%c1_47, %c1_48, %c9_49, %c0_50] : memref<2x18x32x64xbf16, #tpu.memory_space<vmem>>, vector<1x16x16x64xbf16>
      %65 = vector.shape_cast %64 : vector<1x16x16x64xbf16> to vector<16x16x64xbf16>
      %66 = vector.shape_cast %65 : vector<16x16x64xbf16> to vector<256x64xbf16>
      %c1_51 = arith.constant 1 : index
      %c2_52 = arith.constant 2 : index
      %c9_53 = arith.constant 9 : index
      %c0_54 = arith.constant 0 : index
      %67 = vector.load %arg8[%c1_51, %c2_52, %c9_53, %c0_54] : memref<2x18x32x64xbf16, #tpu.memory_space<vmem>>, vector<1x16x16x64xbf16>
      %68 = vector.shape_cast %67 : vector<1x16x16x64xbf16> to vector<16x16x64xbf16>
      %69 = vector.shape_cast %68 : vector<16x16x64xbf16> to vector<256x64xbf16>
      %70 = tpu.concatenate %63, %66, %69 in 1 : vector<256x64xbf16>, vector<256x64xbf16>, vector<256x64xbf16> -> vector<256x192xbf16>
      %c0_55 = arith.constant 0 : index
      %c2_56 = arith.constant 2 : index
      %c0_57 = arith.constant 0 : index
      %c0_58 = arith.constant 0 : index
      %71 = vector.load %arg3[%c0_55, %c2_56, %c0_57, %c0_58] : memref<1x3x192x64xbf16, #tpu.memory_space<vmem>>, vector<1x1x192x64xbf16>
      %72 = vector.shape_cast %71 : vector<1x1x192x64xbf16> to vector<192x64xbf16>
      %cst_59 = arith.constant dense<0.000000e+00> : vector<256x64xf32>
      %73 = tpu.matmul %70, %72, %cst_59 {dimension_numbers = #tpu.dot_dimension_numbers<[1], [0], [0], [1], [0, 0, 1, 1], [], []>} : vector<256x192xbf16>, vector<192x64xbf16>, vector<256x64xf32> -> vector<256x64xf32>
      %74 = arith.addf %60, %73 : vector<256x64xf32>
      %c1_60 = arith.constant 1 : index
      %c1_61 = arith.constant 1 : index
      %c8_62 = arith.constant 8 : index
      %c0_63 = arith.constant 0 : index
      %75 = vector.load %arg8[%c1_60, %c1_61, %c8_62, %c0_63] : memref<2x18x32x64xbf16, #tpu.memory_space<vmem>>, vector<1x16x16x64xbf16>
      %76 = vector.shape_cast %75 : vector<1x16x16x64xbf16> to vector<16x16x64xbf16>
      %77 = arith.extf %76 : vector<16x16x64xbf16> to vector<16x16x64xf32>
      %78 = vector.shape_cast %77 : vector<16x16x64xf32> to vector<256x64xf32>
      %79 = vector.broadcast %7 : f32 to vector<256x64xf32>
      %80 = arith.mulf %79, %78 : vector<256x64xf32>
      %81 = arith.addf %74, %80 : vector<256x64xf32>
      %c0_64 = arith.constant 0 : index
      %c0_65 = arith.constant 0 : index
      %c0_66 = arith.constant 0 : index
      %82 = vector.load %arg4[%c0_64, %c0_65, %c0_66] : memref<1x1x64xf32, #tpu.memory_space<vmem>>, vector<1x1x64xf32>
      %83 = vector.shape_cast %82 : vector<1x1x64xf32> to vector<1x64xf32>
      %84 = vector.broadcast %83 : vector<1x64xf32> to vector<256x64xf32>
      %85 = arith.mulf %81, %84 : vector<256x64xf32>
      %c0_67 = arith.constant 0 : index
      %c0_68 = arith.constant 0 : index
      %c0_69 = arith.constant 0 : index
      %86 = vector.load %arg5[%c0_67, %c0_68, %c0_69] : memref<1x1x64xf32, #tpu.memory_space<vmem>>, vector<1x1x64xf32>
      %87 = vector.shape_cast %86 : vector<1x1x64xf32> to vector<1x64xf32>
      %88 = vector.broadcast %87 : vector<1x64xf32> to vector<256x64xf32>
      %89 = arith.addf %85, %88 : vector<256x64xf32>
      %cst_70 = arith.constant 0.000000e+00 : f32
      %90 = vector.broadcast %cst_70 : f32 to vector<256x64xf32>
      %91 = arith.cmpf oge, %89, %90 : vector<256x64xf32>
      %c0_71 = arith.constant 0 : index
      %c0_72 = arith.constant 0 : index
      %c0_73 = arith.constant 0 : index
      %92 = vector.load %arg6[%c0_71, %c0_72, %c0_73] : memref<1x1x64xf32, #tpu.memory_space<vmem>>, vector<1x1x64xf32>
      %93 = vector.shape_cast %92 : vector<1x1x64xf32> to vector<1x64xf32>
      %94 = vector.broadcast %93 : vector<1x64xf32> to vector<256x64xf32>
      %95 = arith.mulf %89, %94 : vector<256x64xf32>
      %96 = arith.select %91, %89, %95 : vector<256x64xi1>, vector<256x64xf32>
      %c5_i32_74 = arith.constant 5 : i32
      %97 = arith.cmpi eq, %arg1, %c5_i32_74 : i32
      %98 = arith.extui %97 : i1 to i32
      %c0_i32_75 = arith.constant 0 : i32
      %99 = arith.cmpi ne, %98, %c0_i32_75 : i32
      scf.if %99 {
        %103 = vector.shape_cast %96 : vector<256x64xf32> to vector<1x16x16x64xf32>
        %c0_78 = arith.constant 0 : index
        %c0_79 = arith.constant 0 : index
        %c0_80 = arith.constant 0 : index
        %c0_81 = arith.constant 0 : index
        %104 = vector.load %arg7[%c0_78, %c0_79, %c0_80, %c0_81] : memref<1x16x16x64xf32, #tpu.memory_space<vmem>>, vector<1x16x16x64xf32>
        tpu.vector_store %arg7[%c0_78, %c0_79, %c0_80, %c0_81], %103 {strides = array<i32>} : memref<1x16x16x64xf32, #tpu.memory_space<vmem>>, vector<1x16x16x64xf32>,
      } else {
      }
      %c5_i32_76 = arith.constant 5 : i32
      %100 = arith.cmpi slt, %arg1, %c5_i32_76 : i32
      %101 = arith.extui %100 : i1 to i32
      %c0_i32_77 = arith.constant 0 : i32
      %102 = arith.cmpi ne, %101, %c0_i32_77 : i32
      scf.if %102 {
        %103 = vector.shape_cast %96 : vector<256x64xf32> to vector<16x16x64xf32>
        %104 = arith.truncf %103 : vector<16x16x64xf32> to vector<16x16x64xbf16>
        %c0_78 = arith.constant 0 : index
        %c1_79 = arith.constant 1 : index
        %c8_80 = arith.constant 8 : index
        %c0_81 = arith.constant 0 : index
        %105 = vector.load %arg8[%c0_78, %c1_79, %c8_80, %c0_81] : memref<2x18x32x64xbf16, #tpu.memory_space<vmem>>, vector<1x16x16x64xbf16>
        %106 = vector.shape_cast %105 : vector<1x16x16x64xbf16> to vector<16x16x64xbf16>
        %107 = vector.shape_cast %104 : vector<16x16x64xbf16> to vector<1x16x16x64xbf16>
        tpu.vector_store %arg8[%c0_78, %c1_79, %c8_80, %c0_81], %107 {strides = array<i32>} : memref<2x18x32x64xbf16, #tpu.memory_space<vmem>>, vector<1x16x16x64xbf16>,
      } else {
      }
    } else {
    }
    return
  }
  func.func @transform_0(%arg0: i32, %arg1: i32) -> (i32, i32, i32, i32) {
    %c0_i32 = arith.constant 0 : i32
    %c0_i32_0 = arith.constant 0 : i32
    %c0_i32_1 = arith.constant 0 : i32
    %c0_i32_2 = arith.constant 0 : i32
    return %arg0, %c0_i32, %c0_i32_0, %c0_i32_1 : i32, i32, i32, i32
  }
  func.func @transform_1(%arg0: i32, %arg1: i32) -> (i32, i32, i32, i32) {
    %c0_i32 = arith.constant 0 : i32
    %c0_i32_0 = arith.constant 0 : i32
    %c0_i32_1 = arith.constant 0 : i32
    %c0_i32_2 = arith.constant 0 : i32
    return %arg1, %c0_i32, %c0_i32_0, %c0_i32_1 : i32, i32, i32, i32
  }
  func.func @transform_2(%arg0: i32, %arg1: i32) -> (i32, i32, i32) {
    %c0_i32 = arith.constant 0 : i32
    %c0_i32_0 = arith.constant 0 : i32
    %c0_i32_1 = arith.constant 0 : i32
    return %arg1, %c0_i32, %c0_i32_0 : i32, i32, i32
  }
  func.func @transform_3(%arg0: i32, %arg1: i32) -> (i32, i32, i32) {
    %c0_i32 = arith.constant 0 : i32
    %c0_i32_0 = arith.constant 0 : i32
    %c0_i32_1 = arith.constant 0 : i32
    return %arg1, %c0_i32, %c0_i32_0 : i32, i32, i32
  }
  func.func @transform_4(%arg0: i32, %arg1: i32) -> (i32, i32, i32) {
    %c0_i32 = arith.constant 0 : i32
    %c0_i32_0 = arith.constant 0 : i32
    %c0_i32_1 = arith.constant 0 : i32
    return %arg1, %c0_i32, %c0_i32_0 : i32, i32, i32
  }
  func.func @transform_5(%arg0: i32, %arg1: i32) -> (i32, i32, i32, i32) {
    %c0_i32 = arith.constant 0 : i32
    %c0_i32_0 = arith.constant 0 : i32
    %c0_i32_1 = arith.constant 0 : i32
    %c0_i32_2 = arith.constant 0 : i32
    return %arg0, %c0_i32, %c0_i32_0, %c0_i32_1 : i32, i32, i32, i32
  }
}

</mosaic_0001>

<llo_original>
// kernel: tpu_custom_call.1
$region0: #{tpu_custom_call.1}
  #allocation0 [shape = 'u32[]', space=smem, size = 0x4, offset = 0x4, fixed_abs, tag = 'smem constant byte address 0x4 - core index']
  #allocation1 [shape = 'u32[144,128]{1,0:T(1,128)}', space=vmem, size = 0x12000, scoped, tag = 'internal scratch']
  #allocation2 [shape = 'bf16[2,18,32,64]{3,2,1,0:T(8,128)(2,1)}', space=vmem, size = 0x48000, scoped, tag = 'scratch operand']
  %s0 = inlined_call_operand.vmem [shape: bf16[2,16,16,64], index: 0, kind: input, shape index: {}]
  %s1 = inlined_call_operand.vmem [shape: bf16[6,3,192,64], index: 1, kind: input, shape index: {}]
  %s2 = inlined_call_operand.vmem [shape: f32[6,1,64], index: 2, kind: input, shape index: {}]
  %s3 = inlined_call_operand.vmem [shape: f32[6,1,64], index: 3, kind: input, shape index: {}]
  %s4 = inlined_call_operand.vmem [shape: f32[6,1,64], index: 4, kind: input, shape index: {}]
  %s5 = inlined_call_operand.hbm [shape: f32[2,16,16,64], index: 5, kind: output, shape index: {}]
  %s6 = sld [smem:[#allocation0]]
  $region81: #{tpu_custom_call.1} parent=0
    _
  %s8 = ssub.s32 1, %s6
  %s9 = scalar_select 0, %s8, %s6
  $region1: #{tpu_custom_call.1} parent=0
    #allocation3 [shape = 'u8[262144]{0}', space=vmem, size = 0x40000, scoped, tag = 'output window, operand 0']
    #allocation4 [shape = 's32[2]{0}', space=sflag, size = 0x8, scoped, tag = 'scoped memory for tpu_custom_call.1']
    %10 = vsyncpa [#allocation4], 0
    %s11 = scalar_lea.sflag [#allocation4], 1
    %12 = vsyncpa %s11, 0
    loop: start=0, step=1, limit=14
    $region2: #{tpu_custom_call.1} parent=1 // loop_pre_header
      _
    $region3: #{tpu_custom_call.1} parent=1 // loop_header
      %s14 = sphi 0, %s18
      %p15 = scmp.ge.s32.totalorder %s14, 14
      %s21 = sphi 0, %s33
      %s22 = sphi 0, %s29
      %s23 = sphi 0, %s21
      %s24 = sphi 0, %s22
      %s25 = sphi 0, %s23
      %s26 = sphi 0, %s24
      %s36 = sphi 0, %s38
      %s39 = sphi 0, %s36
      %s40 = sphi 0, %s39
      %s56 = sphi 0, %s40
      %s62 = sphi 0, %s64
      %s65 = sphi 0, %s62
      %s66 = sphi 0, %s65
      %s82 = sphi 0, %s66
      %s88 = sphi 0, %s90
      %s91 = sphi 0, %s88
      %s92 = sphi 0, %s91
      %s108 = sphi 0, %s92
      %s114 = sphi 0, %s116
      %s117 = sphi 0, %s114
      %s118 = sphi 0, %s117
      %s134 = sphi 0, %s118
      %s140 = sphi 0, %s142
      %s143 = sphi 0, %s140
      %s144 = sphi 0, %s143
      %s160 = sphi 0, %s144
      %s166 = sphi 0, %s168
      %s169 = sphi 0, %s166
      %s170 = sphi 0, %s169
      %s186 = sphi 0, %s170
    $region4: #{tpu_custom_call.1} parent=1 // loop_header_branch
      %17 = sbr.rel (%p15) target = $region8
    $region5: #{tpu_custom_call.1} parent=1 // loop_body
      %s19 = ssub.s32 %s14, 1
      %s20 = ssub.s32 %s14, 2
      %s27 = sadd.s32 1, %s22
      %p28 = scmp.ge.s32.totalorder %s27, 6
      %s29 = scalar_select %p28, 0, %s27
      %s30 = sadd.s32 1, %s21
      %s31 = scalar_select %p28, %s30, %s21
      %p32 = scmp.ge.s32.totalorder %s31, 2
      %s33 = scalar_select %p32, 0, %s31
      %s34 = ssub.s32 %s21, %s33
      %p35 = scmp.eq.s32.totalorder %s34, 0
      %s37 = sadd.s32 %s36, 1
      %s38 = scalar_select %p35, %s36, %s37
      %p41 = pneg %p35
      %p42 = scmp.eq.s32.totalorder %s14, 11
      %p43 = por %p41, %p42
      %p44 = scmp.ne.s32.totalorder %s36, %s39
      %p45 = scmp.eq.s32.totalorder %s14, 0
      %p46 = por %p44, %p45
      %p47 = scmp.ne.s32.totalorder %s36, %s39
      %p48 = scmp.eq.s32.totalorder %s19, 11
      %p49 = por %p47, %p48
      %p50 = scmp.ne.s32.totalorder %s39, %s40
      %p51 = scmp.eq.s32.totalorder %s19, 0
      %p52 = por %p50, %p51
      %p53 = scmp.ne.s32.totalorder %s39, %s40
      %p54 = scmp.eq.s32.totalorder %s20, 11
      %p55 = por %p53, %p54
      %p57 = scmp.ne.s32.totalorder %s40, %s56
      %p58 = scmp.eq.s32.totalorder %s20, 0
      %p59 = por %p57, %p58
      %s60 = ssub.s32 %s22, %s29
      %p61 = scmp.eq.s32.totalorder %s60, 0
      %s63 = sadd.s32 %s62, 1
      %s64 = scalar_select %p61, %s62, %s63
      %p67 = pneg %p61
      %p68 = scmp.eq.s32.totalorder %s14, 11
      %p69 = por %p67, %p68
      %p70 = scmp.ne.s32.totalorder %s62, %s65
      %p71 = scmp.eq.s32.totalorder %s14, 0
      %p72 = por %p70, %p71
      %p73 = scmp.ne.s32.totalorder %s62, %s65
      %p74 = scmp.eq.s32.totalorder %s19, 11
      %p75 = por %p73, %p74
      %p76 = scmp.ne.s32.totalorder %s65, %s66
      %p77 = scmp.eq.s32.totalorder %s19, 0
      %p78 = por %p76, %p77
      %p79 = scmp.ne.s32.totalorder %s65, %s66
      %p80 = scmp.eq.s32.totalorder %s20, 11
      %p81 = por %p79, %p80
      %p83 = scmp.ne.s32.totalorder %s66, %s82
      %p84 = scmp.eq.s32.totalorder %s20, 0
      %p85 = por %p83, %p84
      %s86 = ssub.s32 %s22, %s29
      %p87 = scmp.eq.s32.totalorder %s86, 0
      %s89 = sadd.s32 %s88, 1
      %s90 = scalar_select %p87, %s88, %s89
      %p93 = pneg %p87
      %p94 = scmp.eq.s32.totalorder %s14, 11
      %p95 = por %p93, %p94
      %p96 = scmp.ne.s32.totalorder %s88, %s91
      %p97 = scmp.eq.s32.totalorder %s14, 0
      %p98 = por %p96, %p97
      %p99 = scmp.ne.s32.totalorder %s88, %s91
      %p100 = scmp.eq.s32.totalorder %s19, 11
      %p101 = por %p99, %p100
      %p102 = scmp.ne.s32.totalorder %s91, %s92
      %p103 = scmp.eq.s32.totalorder %s19, 0
      %p104 = por %p102, %p103
      %p105 = scmp.ne.s32.totalorder %s91, %s92
      %p106 = scmp.eq.s32.totalorder %s20, 11
      %p107 = por %p105, %p106
      %p109 = scmp.ne.s32.totalorder %s92, %s108
      %p110 = scmp.eq.s32.totalorder %s20, 0
      %p111 = por %p109, %p110
      %s112 = ssub.s32 %s22, %s29
      %p113 = scmp.eq.s32.totalorder %s112, 0
      %s115 = sadd.s32 %s114, 1
      %s116 = scalar_select %p113, %s114, %s115
      %p119 = pneg %p113
      %p120 = scmp.eq.s32.totalorder %s14, 11
      %p121 = por %p119, %p120
      %p122 = scmp.ne.s32.totalorder %s114, %s117
      %p123 = scmp.eq.s32.totalorder %s14, 0
      %p124 = por %p122, %p123
      %p125 = scmp.ne.s32.totalorder %s114, %s117
      %p126 = scmp.eq.s32.totalorder %s19, 11
      %p127 = por %p125, %p126
      %p128 = scmp.ne.s32.totalorder %s117, %s118
      %p129 = scmp.eq.s32.totalorder %s19, 0
      %p130 = por %p128, %p129
      %p131 = scmp.ne.s32.totalorder %s117, %s118
      %p132 = scmp.eq.s32.totalorder %s20, 11
      %p133 = por %p131, %p132
      %p135 = scmp.ne.s32.totalorder %s118, %s134
      %p136 = scmp.eq.s32.totalorder %s20, 0
      %p137 = por %p135, %p136
      %s138 = ssub.s32 %s22, %s29
      %p139 = scmp.eq.s32.totalorder %s138, 0
      %s141 = sadd.s32 %s140, 1
      %s142 = scalar_select %p139, %s140, %s141
      %p145 = pneg %p139
      %p146 = scmp.eq.s32.totalorder %s14, 11
      %p147 = por %p145, %p146
      %p148 = scmp.ne.s32.totalorder %s140, %s143
      %p149 = scmp.eq.s32.totalorder %s14, 0
      %p150 = por %p148, %p149
      %p151 = scmp.ne.s32.totalorder %s140, %s143
      %p152 = scmp.eq.s32.totalorder %s19, 11
      %p153 = por %p151, %p152
      %p154 = scmp.ne.s32.totalorder %s143, %s144
      %p155 = scmp.eq.s32.totalorder %s19, 0
      %p156 = por %p154, %p155
      %p157 = scmp.ne.s32.totalorder %s143, %s144
      %p158 = scmp.eq.s32.totalorder %s20, 11
      %p159 = por %p157, %p158
      %p161 = scmp.ne.s32.totalorder %s144, %s160
      %p162 = scmp.eq.s32.totalorder %s20, 0
      %p163 = por %p161, %p162
      %s164 = ssub.s32 %s21, %s33
      %p165 = scmp.eq.s32.totalorder %s164, 0
      %s167 = sadd.s32 %s166, 1
      %s168 = scalar_select %p165, %s166, %s167
      %p171 = pneg %p165
      %p172 = scmp.eq.s32.totalorder %s14, 11
      %p173 = por %p171, %p172
      %p174 = scmp.ne.s32.totalorder %s166, %s169
      %p175 = scmp.eq.s32.totalorder %s14, 0
      %p176 = por %p174, %p175
      %p177 = scmp.ne.s32.totalorder %s166, %s169
      %p178 = scmp.eq.s32.totalorder %s19, 11
      %p179 = por %p177, %p178
      %p180 = scmp.ne.s32.totalorder %s169, %s170
      %p181 = scmp.eq.s32.totalorder %s19, 0
      %p182 = por %p180, %p181
      %p183 = scmp.ne.s32.totalorder %s169, %s170
      %p184 = scmp.eq.s32.totalorder %s20, 11
      %p185 = por %p183, %p184
      %p187 = scmp.ne.s32.totalorder %s170, %s186
      %p188 = scmp.eq.s32.totalorder %s20, 0
      %p189 = por %p187, %p188
      %p190 = scmp.le.s32.totalorder 1, %s14
      %p191 = scmp.lt.s32.totalorder %s14, 13
      %p192 = pnand %p190, %p191
      %p193 = pneg %p192
      // Predicated region
      $region9: #{tpu_custom_call.1} parent=5 // pred_check
        _
      $region10: #{tpu_custom_call.1} parent=5 // pred_check_branch
        %195 = sbr.rel (%p192) target = $region12
      $region11: #{tpu_custom_call.1} parent=5 // pred_region
        %s196 = ssub.s32 %s14, 1
      $region12: #{tpu_custom_call.1} parent=5 // pred_fallthru
        _
      %p197 = scmp.lt.s32.totalorder %s14, 12
      // Predicated region
      $region13: #{tpu_custom_call.1} parent=5 // pred_check
        %p198 = pneg %p197
      $region14: #{tpu_custom_call.1} parent=5 // pred_check_branch
        %200 = sbr.rel (%p198) target = $region16
      $region15: #{tpu_custom_call.1} parent=5 // pred_region
        // Predicated region
        $region17: #{tpu_custom_call.1} parent=15 // pred_check
          %p201 = pneg %p46
        $region18: #{tpu_custom_call.1} parent=15 // pred_check_branch
          %203 = sbr.rel (%p201) target = $region20
        $region19: #{tpu_custom_call.1} parent=15 // pred_region
          %p204 = scmp.lt.s32.totalorder %s21, 1
          %s205 = scalar_select %p204, %s21, 1
          %s206 = smul.addr %s205, 32
          %s207 = smul.addr %s206, 4
          %s208 = scalar_lea.vmem %s0, %s207
        $region20: #{tpu_custom_call.1} parent=15 // pred_fallthru
          _
        // Predicated region
        $region21: #{tpu_custom_call.1} parent=15 // pred_check
          %p209 = pneg %p72
        $region22: #{tpu_custom_call.1} parent=15 // pred_check_branch
          %211 = sbr.rel (%p209) target = $region24
        $region23: #{tpu_custom_call.1} parent=15 // pred_region
          %p212 = scmp.lt.s32.totalorder %s22, 5
          %s213 = scalar_select %p212, %s22, 5
          %s214 = smul.addr %s213, 72
          %s215 = smul.addr %s214, 4
          %s216 = scalar_lea.vmem %s1, %s215
        $region24: #{tpu_custom_call.1} parent=15 // pred_fallthru
          _
        // Predicated region
        $region25: #{tpu_custom_call.1} parent=15 // pred_check
          %p217 = pneg %p98
        $region26: #{tpu_custom_call.1} parent=15 // pred_check_branch
          %219 = sbr.rel (%p217) target = $region28
        $region27: #{tpu_custom_call.1} parent=15 // pred_region
          %p220 = scmp.lt.s32.totalorder %s22, 5
          %s221 = scalar_select %p220, %s22, 5
          %s222 = scalar_lea.vmem %s2, %s221
        $region28: #{tpu_custom_call.1} parent=15 // pred_fallthru
          _
        // Predicated region
        $region29: #{tpu_custom_call.1} parent=15 // pred_check
          %p223 = pneg %p124
        $region30: #{tpu_custom_call.1} parent=15 // pred_check_branch
          %225 = sbr.rel (%p223) target = $region32
        $region31: #{tpu_custom_call.1} parent=15 // pred_region
          %p226 = scmp.lt.s32.totalorder %s22, 5
          %s227 = scalar_select %p226, %s22, 5
          %s228 = scalar_lea.vmem %s3, %s227
        $region32: #{tpu_custom_call.1} parent=15 // pred_fallthru
          _
        // Predicated region
        $region33: #{tpu_custom_call.1} parent=15 // pred_check
          %p229 = pneg %p150
        $region34: #{tpu_custom_call.1} parent=15 // pred_check_branch
          %231 = sbr.rel (%p229) target = $region36
        $region35: #{tpu_custom_call.1} parent=15 // pred_region
          %p232 = scmp.lt.s32.totalorder %s22, 5
          %s233 = scalar_select %p232, %s22, 5
          %s234 = scalar_lea.vmem %s4, %s233
        $region36: #{tpu_custom_call.1} parent=15 // pred_fallthru
          _
      $region16: #{tpu_custom_call.1} parent=5 // pred_fallthru
        _
      %p235 = scmp.le.s32.totalorder 1, %s14
      %p236 = scmp.lt.s32.totalorder %s14, 13
      %p237 = pnand %p235, %p236
      %p238 = pneg %p237
      // Predicated region
      $region37: #{tpu_custom_call.1} parent=5 // pred_check
        _
      $region38: #{tpu_custom_call.1} parent=5 // pred_check_branch
        %240 = sbr.rel (%p237) target = $region40
      $region39: #{tpu_custom_call.1} parent=5 // pred_region
        %s241 = ssub.s32 %s14, 1
        %p242 = scmp.lt.s32.totalorder %s23, 1
        %s243 = scalar_select %p242, %s23, 1
        %s244 = smul.addr %s243, 32
        %s245 = smul.addr %s244, 4
        %s246 = scalar_lea.vmem %s0, %s245
        %p247 = pneg %p52
        %p248 = pneg %p49
        %p249 = scmp.lt.s32.totalorder %s24, 5
        %s250 = scalar_select %p249, %s24, 5
        %s251 = smul.addr %s250, 72
        %s252 = smul.addr %s251, 4
        %s253 = scalar_lea.vmem %s1, %s252
        %p254 = pneg %p78
        %p255 = pneg %p75
        %p256 = scmp.lt.s32.totalorder %s24, 5
        %s257 = scalar_select %p256, %s24, 5
        %s258 = scalar_lea.vmem %s2, %s257
        %p259 = pneg %p104
        %p260 = pneg %p101
        %p261 = scmp.lt.s32.totalorder %s24, 5
        %s262 = scalar_select %p261, %s24, 5
        %s263 = scalar_lea.vmem %s3, %s262
        %p264 = pneg %p130
        %p265 = pneg %p127
        %p266 = scmp.lt.s32.totalorder %s24, 5
        %s267 = scalar_select %p266, %s24, 5
        %s268 = scalar_lea.vmem %s4, %s267
        %p269 = pneg %p156
        %p270 = pneg %p153
        %p271 = pneg %p182
        %p272 = pneg %p179
        %s273 = sand.u32 %s169, 1
        %s274 = scalar_lea.sflag [#allocation4], %s273
        %s275 = sand.u32 %s169, 1
        %s276 = smul.addr %s275, 256
        %s277 = scalar_lea.vmem [#allocation3], %s276
        %p278 = scmp.lt.s32.totalorder %s23, 1
        %s279 = scalar_select %p278, %s23, 1
        %s280 = smul.addr %s279, 32
        %s281 = smul.addr %s280, 4
        %s282 = scalar_lea.vmem %s0, %s281
        %p283 = scmp.lt.s32.totalorder %s24, 5
        %s284 = scalar_select %p283, %s24, 5
        %s285 = smul.addr %s284, 72
        %s286 = smul.addr %s285, 4
        %s287 = scalar_lea.vmem %s1, %s286
        %p288 = scmp.lt.s32.totalorder %s24, 5
        %s289 = scalar_select %p288, %s24, 5
        %s290 = scalar_lea.vmem %s2, %s289
        %p291 = scmp.lt.s32.totalorder %s24, 5
        %s292 = scalar_select %p291, %s24, 5
        %s293 = scalar_lea.vmem %s3, %s292
        %p294 = scmp.lt.s32.totalorder %s24, 5
        %s295 = scalar_select %p294, %s24, 5
        %s296 = scalar_lea.vmem %s4, %s295
        %p298 = scmp.eq.s32.totalorder %s24, 0
        // Predicated region
        $region41: #{tpu_custom_call.1} parent=39 // pred_check
          %p299 = pneg %p298
        $region42: #{tpu_custom_call.1} parent=39 // pred_check_branch
          %301 = sbr.rel (%p299) target = $region44
        $region43: #{tpu_custom_call.1} parent=39 // pred_region
          %vm302 = vcmask 519168
          %303 = vst.msk [vmem:[#allocation2] sm:$0xf] %vm302, 0
          %304 = vst.msk [vmem:[#allocation2 + $0x10] sm:$0xf] %vm302, 0
          %305 = vst.msk [vmem:[#allocation2 + $0x20] sm:$0xf] %vm302, 0
          %306 = vst.msk [vmem:[#allocation2 + $0x30] sm:$0xf] %vm302, 0
          %307 = vst.msk [vmem:[#allocation2 + $0x40] sm:$0xf] %vm302, 0
          %308 = vst.msk [vmem:[#allocation2 + $0x50] sm:$0xf] %vm302, 0
          %309 = vst.msk [vmem:[#allocation2 + $0x60] sm:$0xf] %vm302, 0
          %310 = vst.msk [vmem:[#allocation2 + $0x70] sm:$0xf] %vm302, 0
          %311 = vst.msk [vmem:[#allocation2 + $0x80] sm:$0xf] %vm302, 0
          %312 = vst.msk [vmem:[#allocation2 + $0x90] sm:$0xf] %vm302, 0
          %313 = vst.msk [vmem:[#allocation2 + $0xa0] sm:$0xf] %vm302, 0
          %314 = vst.msk [vmem:[#allocation2 + $0xb0] sm:$0xf] %vm302, 0
          %315 = vst.msk [vmem:[#allocation2 + $0xc0] sm:$0xf] %vm302, 0
          %316 = vst.msk [vmem:[#allocation2 + $0xd0] sm:$0xf] %vm302, 0
          %317 = vst.msk [vmem:[#allocation2 + $0xe0] sm:$0xf] %vm302, 0
          %318 = vst.msk [vmem:[#allocation2 + $0xf0] sm:$0xf] %vm302, 0
          %319 = vst.msk [vmem:[#allocation2 + $0x100] sm:$0xf] %vm302, 0
          %320 = vst.msk [vmem:[#allocation2 + $0x110] sm:$0xf] %vm302, 0
          %321 = vst.msk [vmem:[#allocation2 + $0xc] sm:$0xf] %vm302, 0
          %322 = vst.msk [vmem:[#allocation2 + $0x1c] sm:$0xf] %vm302, 0
          %323 = vst.msk [vmem:[#allocation2 + $0x2c] sm:$0xf] %vm302, 0
          %324 = vst.msk [vmem:[#allocation2 + $0x3c] sm:$0xf] %vm302, 0
          %325 = vst.msk [vmem:[#allocation2 + $0x4c] sm:$0xf] %vm302, 0
          %326 = vst.msk [vmem:[#allocation2 + $0x5c] sm:$0xf] %vm302, 0
          %327 = vst.msk [vmem:[#allocation2 + $0x6c] sm:$0xf] %vm302, 0
          %328 = vst.msk [vmem:[#allocation2 + $0x7c] sm:$0xf] %vm302, 0
          %329 = vst.msk [vmem:[#allocation2 + $0x8c] sm:$0xf] %vm302, 0
          %330 = vst.msk [vmem:[#allocation2 + $0x9c] sm:$0xf] %vm302, 0
          %331 = vst.msk [vmem:[#allocation2 + $0xac] sm:$0xf] %vm302, 0
          %332 = vst.msk [vmem:[#allocation2 + $0xbc] sm:$0xf] %vm302, 0
          %333 = vst.msk [vmem:[#allocation2 + $0xcc] sm:$0xf] %vm302, 0
          %334 = vst.msk [vmem:[#allocation2 + $0xdc] sm:$0xf] %vm302, 0
          %335 = vst.msk [vmem:[#allocation2 + $0xec] sm:$0xf] %vm302, 0
          %336 = vst.msk [vmem:[#allocation2 + $0xfc] sm:$0xf] %vm302, 0
          %337 = vst.msk [vmem:[#allocation2 + $0x10c] sm:$0xf] %vm302, 0
          %338 = vst.msk [vmem:[#allocation2 + $0x11c] sm:$0xf] %vm302, 0
          %339 = vst.msk [vmem:[#allocation2] sm:$0xf] %vm302, 0
          %340 = vst.msk [vmem:[#allocation2 + $0x4] sm:$0xf] %vm302, 0
          %341 = vst.msk [vmem:[#allocation2 + $0x8] sm:$0xf] %vm302, 0
          %342 = vst.msk [vmem:[#allocation2 + $0xc] sm:$0xf] %vm302, 0
          %s343 = scalar_lea.vmem [#allocation2], 272
          %344 = vst.msk [vmem:[%s343] sm:$0xf] %vm302, 0
          %345 = vst.msk [vmem:[%s343 + $0x4] sm:$0xf] %vm302, 0
          %346 = vst.msk [vmem:[%s343 + $0x8] sm:$0xf] %vm302, 0
          %347 = vst.msk [vmem:[%s343 + $0xc] sm:$0xf] %vm302, 0
          %s348 = scalar_lea.vmem [#allocation2], 288
          %349 = vst.msk [vmem:[%s348] sm:$0xf] %vm302, 0
          %350 = vst.msk [vmem:[%s348 + $0x10] sm:$0xf] %vm302, 0
          %351 = vst.msk [vmem:[%s348 + $0x20] sm:$0xf] %vm302, 0
          %352 = vst.msk [vmem:[%s348 + $0x30] sm:$0xf] %vm302, 0
          %353 = vst.msk [vmem:[%s348 + $0x40] sm:$0xf] %vm302, 0
          %354 = vst.msk [vmem:[%s348 + $0x50] sm:$0xf] %vm302, 0
          %355 = vst.msk [vmem:[%s348 + $0x60] sm:$0xf] %vm302, 0
          %356 = vst.msk [vmem:[%s348 + $0x70] sm:$0xf] %vm302, 0
          %357 = vst.msk [vmem:[%s348 + $0x80] sm:$0xf] %vm302, 0
          %358 = vst.msk [vmem:[%s348 + $0x90] sm:$0xf] %vm302, 0
          %359 = vst.msk [vmem:[%s348 + $0xa0] sm:$0xf] %vm302, 0
          %360 = vst.msk [vmem:[%s348 + $0xb0] sm:$0xf] %vm302, 0
          %361 = vst.msk [vmem:[%s348 + $0xc0] sm:$0xf] %vm302, 0
          %362 = vst.msk [vmem:[%s348 + $0xd0] sm:$0xf] %vm302, 0
          %363 = vst.msk [vmem:[%s348 + $0xe0] sm:$0xf] %vm302, 0
          %364 = vst.msk [vmem:[%s348 + $0xf0] sm:$0xf] %vm302, 0
          %365 = vst.msk [vmem:[%s348 + $0x100] sm:$0xf] %vm302, 0
          %366 = vst.msk [vmem:[%s348 + $0x110] sm:$0xf] %vm302, 0
          %367 = vst.msk [vmem:[%s348 + $0xc] sm:$0xf] %vm302, 0
          %368 = vst.msk [vmem:[%s348 + $0x1c] sm:$0xf] %vm302, 0
          %369 = vst.msk [vmem:[%s348 + $0x2c] sm:$0xf] %vm302, 0
          %370 = vst.msk [vmem:[%s348 + $0x3c] sm:$0xf] %vm302, 0
          %371 = vst.msk [vmem:[%s348 + $0x4c] sm:$0xf] %vm302, 0
          %372 = vst.msk [vmem:[%s348 + $0x5c] sm:$0xf] %vm302, 0
          %373 = vst.msk [vmem:[%s348 + $0x6c] sm:$0xf] %vm302, 0
          %374 = vst.msk [vmem:[%s348 + $0x7c] sm:$0xf] %vm302, 0
          %375 = vst.msk [vmem:[%s348 + $0x8c] sm:$0xf] %vm302, 0
          %376 = vst.msk [vmem:[%s348 + $0x9c] sm:$0xf] %vm302, 0
          %377 = vst.msk [vmem:[%s348 + $0xac] sm:$0xf] %vm302, 0
          %378 = vst.msk [vmem:[%s348 + $0xbc] sm:$0xf] %vm302, 0
          %379 = vst.msk [vmem:[%s348 + $0xcc] sm:$0xf] %vm302, 0
          %380 = vst.msk [vmem:[%s348 + $0xdc] sm:$0xf] %vm302, 0
          %381 = vst.msk [vmem:[%s348 + $0xec] sm:$0xf] %vm302, 0
          %382 = vst.msk [vmem:[%s348 + $0xfc] sm:$0xf] %vm302, 0
          %383 = vst.msk [vmem:[%s348 + $0x10c] sm:$0xf] %vm302, 0
          %384 = vst.msk [vmem:[%s348 + $0x11c] sm:$0xf] %vm302, 0
          %385 = vst.msk [vmem:[%s348] sm:$0xf] %vm302, 0
          %386 = vst.msk [vmem:[%s348 + $0x4] sm:$0xf] %vm302, 0
          %387 = vst.msk [vmem:[%s348 + $0x8] sm:$0xf] %vm302, 0
          %388 = vst.msk [vmem:[%s348 + $0xc] sm:$0xf] %vm302, 0
          %s389 = scalar_lea.vmem [#allocation2], 560
          %390 = vst.msk [vmem:[%s389] sm:$0xf] %vm302, 0
          %391 = vst.msk [vmem:[%s389 + $0x4] sm:$0xf] %vm302, 0
          %392 = vst.msk [vmem:[%s389 + $0x8] sm:$0xf] %vm302, 0
          %393 = vst.msk [vmem:[%s389 + $0xc] sm:$0xf] %vm302, 0
          %v394 = vld [vmem:[%s282] sm:$0xf]
          %v395 = vld [vmem:[%s282 + $0x4] sm:$0xf]
          %v396 = vld [vmem:[%s282 + $0x8] sm:$0xf]
          %v397 = vld [vmem:[%s282 + $0xc] sm:$0xf]
          %v398 = vld [vmem:[%s282 + $0x10] sm:$0xf]
          %v399 = vld [vmem:[%s282 + $0x14] sm:$0xf]
          %v400 = vld [vmem:[%s282 + $0x18] sm:$0xf]
          %v401 = vld [vmem:[%s282 + $0x1c] sm:$0xf]
          %v402 = vld [vmem:[%s282 + $0x20] sm:$0xf]
          %v403 = vld [vmem:[%s282 + $0x24] sm:$0xf]
          %v404 = vld [vmem:[%s282 + $0x28] sm:$0xf]
          %v405 = vld [vmem:[%s282 + $0x2c] sm:$0xf]
          %v406 = vld [vmem:[%s282 + $0x30] sm:$0xf]
          %v407 = vld [vmem:[%s282 + $0x34] sm:$0xf]
          %v408 = vld [vmem:[%s282 + $0x38] sm:$0xf]
          %v409 = vld [vmem:[%s282 + $0x3c] sm:$0xf]
          %v410 = vld [vmem:[%s282 + $0x40] sm:$0xf]
          %v411 = vld [vmem:[%s282 + $0x44] sm:$0xf]
          %v412 = vld [vmem:[%s282 + $0x48] sm:$0xf]
          %v413 = vld [vmem:[%s282 + $0x4c] sm:$0xf]
          %v414 = vld [vmem:[%s282 + $0x50] sm:$0xf]
          %v415 = vld [vmem:[%s282 + $0x54] sm:$0xf]
          %v416 = vld [vmem:[%s282 + $0x58] sm:$0xf]
          %v417 = vld [vmem:[%s282 + $0x5c] sm:$0xf]
          %v418 = vld [vmem:[%s282 + $0x60] sm:$0xf]
          %v419 = vld [vmem:[%s282 + $0x64] sm:$0xf]
          %v420 = vld [vmem:[%s282 + $0x68] sm:$0xf]
          %v421 = vld [vmem:[%s282 + $0x6c] sm:$0xf]
          %v422 = vld [vmem:[%s282 + $0x70] sm:$0xf]
          %v423 = vld [vmem:[%s282 + $0x74] sm:$0xf]
          %v424 = vld [vmem:[%s282 + $0x78] sm:$0xf]
          %v425 = vld [vmem:[%s282 + $0x7c] sm:$0xf]
          %s426 = scalar_lea.vmem [#allocation2], 16
          %427 = vst.msk [vmem:[%s426 + $0x4] sm:$0xf] %vm302, %v394
          %428 = vst.msk [vmem:[%s426 + $0x8] sm:$0xf] %vm302, %v395
          %429 = vst.msk [vmem:[%s426 + $0x14] sm:$0xf] %vm302, %v396
          %430 = vst.msk [vmem:[%s426 + $0x18] sm:$0xf] %vm302, %v397
          %431 = vst.msk [vmem:[%s426 + $0x24] sm:$0xf] %vm302, %v398
          %432 = vst.msk [vmem:[%s426 + $0x28] sm:$0xf] %vm302, %v399
          %433 = vst.msk [vmem:[%s426 + $0x34] sm:$0xf] %vm302, %v400
          %434 = vst.msk [vmem:[%s426 + $0x38] sm:$0xf] %vm302, %v401
          %435 = vst.msk [vmem:[%s426 + $0x44] sm:$0xf] %vm302, %v402
          %436 = vst.msk [vmem:[%s426 + $0x48] sm:$0xf] %vm302, %v403
          %437 = vst.msk [vmem:[%s426 + $0x54] sm:$0xf] %vm302, %v404
          %438 = vst.msk [vmem:[%s426 + $0x58] sm:$0xf] %vm302, %v405
          %439 = vst.msk [vmem:[%s426 + $0x64] sm:$0xf] %vm302, %v406
          %440 = vst.msk [vmem:[%s426 + $0x68] sm:$0xf] %vm302, %v407
          %441 = vst.msk [vmem:[%s426 + $0x74] sm:$0xf] %vm302, %v408
          %442 = vst.msk [vmem:[%s426 + $0x78] sm:$0xf] %vm302, %v409
          %443 = vst.msk [vmem:[%s426 + $0x84] sm:$0xf] %vm302, %v410
          %444 = vst.msk [vmem:[%s426 + $0x88] sm:$0xf] %vm302, %v411
          %445 = vst.msk [vmem:[%s426 + $0x94] sm:$0xf] %vm302, %v412
          %446 = vst.msk [vmem:[%s426 + $0x98] sm:$0xf] %vm302, %v413
          %447 = vst.msk [vmem:[%s426 + $0xa4] sm:$0xf] %vm302, %v414
          %448 = vst.msk [vmem:[%s426 + $0xa8] sm:$0xf] %vm302, %v415
          %449 = vst.msk [vmem:[%s426 + $0xb4] sm:$0xf] %vm302, %v416
          %450 = vst.msk [vmem:[%s426 + $0xb8] sm:$0xf] %vm302, %v417
          %451 = vst.msk [vmem:[%s426 + $0xc4] sm:$0xf] %vm302, %v418
          %452 = vst.msk [vmem:[%s426 + $0xc8] sm:$0xf] %vm302, %v419
          %453 = vst.msk [vmem:[%s426 + $0xd4] sm:$0xf] %vm302, %v420
          %454 = vst.msk [vmem:[%s426 + $0xd8] sm:$0xf] %vm302, %v421
          %455 = vst.msk [vmem:[%s426 + $0xe4] sm:$0xf] %vm302, %v422
          %456 = vst.msk [vmem:[%s426 + $0xe8] sm:$0xf] %vm302, %v423
          %457 = vst.msk [vmem:[%s426 + $0xf4] sm:$0xf] %vm302, %v424
          %458 = vst.msk [vmem:[%s426 + $0xf8] sm:$0xf] %vm302, %v425
        $region44: #{tpu_custom_call.1} parent=39 // pred_fallthru
          _
        %p459 = scmp.gt.s32.totalorder %s24, 0
        %p460 = scmp.lt.s32.totalorder %s24, 5
        %p461 = pnand %p459, %p460
        %p462 = pneg %p461
        %s463 = scalar_select %p462, 1, 0
        %s464 = scvt.s32.f32 %s463
        %p465 = scmp.lt.s32.totalorder %s24, 0
        %s466 = ssub.s32 0, %s24
        %s467 = scalar_select %p465, %s466, %s24
        %s468 = sand.u32 %s467, 1
        %s469 = ssub.s32 0, %s468
        %s470 = scalar_select %p465, %s469, %s468
        %p471 = scmp.ne.s32.totalorder %s470, 0
        %p472 = scmp.lt.s32.totalorder %s470, 0
        %p473 = pnand %p472, %p471
        %p474 = pneg %p473
        %s475 = sadd.s32 %s470, 2
        %s476 = scalar_select %p474, %s475, %s470
        %p477 = scmp.eq.s32.totalorder %s476, 0
        // Predicated region
        $region45: #{tpu_custom_call.1} parent=39 // pred_check
          %p478 = pneg %p477
        $region46: #{tpu_custom_call.1} parent=39 // pred_check_branch
          %480 = sbr.rel (%p478) target = $region48
        $region47: #{tpu_custom_call.1} parent=39 // pred_region
          %v481 = vld [vmem:[#allocation2] sm:$0x8]
          %v482 = vld [vmem:[#allocation2 + $0x4] sm:$0xf]
          %v483 = vld [vmem:[#allocation2 + $0x8] sm:$0xf]
          %v484 = vld [vmem:[#allocation2 + $0x10] sm:$0x8]
          %v485 = vld [vmem:[#allocation2 + $0x14] sm:$0xf]
          %v486 = vld [vmem:[#allocation2 + $0x18] sm:$0xf]
          %v487 = vld [vmem:[#allocation2 + $0x20] sm:$0x8]
          %v488 = vld [vmem:[#allocation2 + $0x24] sm:$0xf]
          %v489 = vld [vmem:[#allocation2 + $0x28] sm:$0xf]
          %v490 = vld [vmem:[#allocation2 + $0x30] sm:$0x8]
          %v491 = vld [vmem:[#allocation2 + $0x34] sm:$0xf]
          %v492 = vld [vmem:[#allocation2 + $0x38] sm:$0xf]
          %v493 = vld [vmem:[#allocation2 + $0x40] sm:$0x8]
          %v494 = vld [vmem:[#allocation2 + $0x44] sm:$0xf]
          %v495 = vld [vmem:[#allocation2 + $0x48] sm:$0xf]
          %v496 = vld [vmem:[#allocation2 + $0x50] sm:$0x8]
          %v497 = vld [vmem:[#allocation2 + $0x54] sm:$0xf]
          %v498 = vld [vmem:[#allocation2 + $0x58] sm:$0xf]
          %v499 = vld [vmem:[#allocation2 + $0x60] sm:$0x8]
          %v500 = vld [vmem:[#allocation2 + $0x64] sm:$0xf]
          %v501 = vld [vmem:[#allocation2 + $0x68] sm:$0xf]
          %v502 = vld [vmem:[#allocation2 + $0x70] sm:$0x8]
          %v503 = vld [vmem:[#allocation2 + $0x74] sm:$0xf]
          %v504 = vld [vmem:[#allocation2 + $0x78] sm:$0xf]
          %v505 = vld [vmem:[#allocation2 + $0x80] sm:$0x8]
          %v506 = vld [vmem:[#allocation2 + $0x84] sm:$0xf]
          %v507 = vld [vmem:[#allocation2 + $0x88] sm:$0xf]
          %v508 = vld [vmem:[#allocation2 + $0x90] sm:$0x8]
          %v509 = vld [vmem:[#allocation2 + $0x94] sm:$0xf]
          %v510 = vld [vmem:[#allocation2 + $0x98] sm:$0xf]
          %v511 = vld [vmem:[#allocation2 + $0xa0] sm:$0x8]
          %v512 = vld [vmem:[#allocation2 + $0xa4] sm:$0xf]
          %v513 = vld [vmem:[#allocation2 + $0xa8] sm:$0xf]
          %v514 = vld [vmem:[#allocation2 + $0xb0] sm:$0x8]
          %v515 = vld [vmem:[#allocation2 + $0xb4] sm:$0xf]
          %v516 = vld [vmem:[#allocation2 + $0xb8] sm:$0xf]
          %v517 = vld [vmem:[#allocation2 + $0xc0] sm:$0x8]
          %v518 = vld [vmem:[#allocation2 + $0xc4] sm:$0xf]
          %v519 = vld [vmem:[#allocation2 + $0xc8] sm:$0xf]
          %v520 = vld [vmem:[#allocation2 + $0xd0] sm:$0x8]
          %v521 = vld [vmem:[#allocation2 + $0xd4] sm:$0xf]
          %v522 = vld [vmem:[#allocation2 + $0xd8] sm:$0xf]
          %v523 = vld [vmem:[#allocation2 + $0xe0] sm:$0x8]
          %v524 = vld [vmem:[#allocation2 + $0xe4] sm:$0xf]
          %v525 = vld [vmem:[#allocation2 + $0xe8] sm:$0xf]
          %v526 = vld [vmem:[#allocation2 + $0xf0] sm:$0x8]
          %v527 = vld [vmem:[#allocation2 + $0xf4] sm:$0xf]
          %v528 = vld [vmem:[#allocation2 + $0xf8] sm:$0xf]
          %vm529 = vsmask.f32 256
          %vm530 = vsmask.f32 4368
          %vm531 = vmor %vm529, %vm530
          %v533 = vshrl.u32 %v481, 16
          %v535 = vrot.slane %v533, 7
          %v536 = vrot.slane %v535, 4
          %v538 = vshrl.u32 %v482, 16
          %v540 = vrot.slane %v538, 7
          %v541 = vshll.u32 %v482, 16
          %v543 = vor.u32 %v540, %v541
          %v544 = vsel %vm531, %v536, %v543
          %v545 = vrot.slane %v540, 4
          %v547 = vshrl.u32 %v483, 16
          %v549 = vrot.slane %v547, 7
          %v550 = vshll.u32 %v483, 16
          %v552 = vor.u32 %v549, %v550
          %v553 = vsel %vm531, %v545, %v552
          %v555 = vshrl.u32 %v484, 16
          %v557 = vrot.slane %v555, 7
          %v558 = vrot.slane %v557, 4
          %v560 = vshrl.u32 %v485, 16
          %v562 = vrot.slane %v560, 7
          %v563 = vshll.u32 %v485, 16
          %v565 = vor.u32 %v562, %v563
          %v566 = vsel %vm531, %v558, %v565
          %v567 = vrot.slane %v562, 4
          %v569 = vshrl.u32 %v486, 16
          %v571 = vrot.slane %v569, 7
          %v572 = vshll.u32 %v486, 16
          %v574 = vor.u32 %v571, %v572
          %v575 = vsel %vm531, %v567, %v574
          %v577 = vshrl.u32 %v487, 16
          %v579 = vrot.slane %v577, 7
          %v580 = vrot.slane %v579, 4
          %v582 = vshrl.u32 %v488, 16
          %v584 = vrot.slane %v582, 7
          %v585 = vshll.u32 %v488, 16
          %v587 = vor.u32 %v584, %v585
          %v588 = vsel %vm531, %v580, %v587
          %v589 = vrot.slane %v584, 4
          %v591 = vshrl.u32 %v489, 16
          %v593 = vrot.slane %v591, 7
          %v594 = vshll.u32 %v489, 16
          %v596 = vor.u32 %v593, %v594
          %v597 = vsel %vm531, %v589, %v596
          %v599 = vshrl.u32 %v490, 16
          %v601 = vrot.slane %v599, 7
          %v602 = vrot.slane %v601, 4
          %v604 = vshrl.u32 %v491, 16
          %v606 = vrot.slane %v604, 7
          %v607 = vshll.u32 %v491, 16
          %v609 = vor.u32 %v606, %v607
          %v610 = vsel %vm531, %v602, %v609
          %v611 = vrot.slane %v606, 4
          %v613 = vshrl.u32 %v492, 16
          %v615 = vrot.slane %v613, 7
          %v616 = vshll.u32 %v492, 16
          %v618 = vor.u32 %v615, %v616
          %v619 = vsel %vm531, %v611, %v618
          %v621 = vshrl.u32 %v493, 16
          %v623 = vrot.slane %v621, 7
          %v624 = vrot.slane %v623, 4
          %v626 = vshrl.u32 %v494, 16
          %v628 = vrot.slane %v626, 7
          %v629 = vshll.u32 %v494, 16
          %v631 = vor.u32 %v628, %v629
          %v632 = vsel %vm531, %v624, %v631
          %v633 = vrot.slane %v628, 4
          %v635 = vshrl.u32 %v495, 16
          %v637 = vrot.slane %v635, 7
          %v638 = vshll.u32 %v495, 16
          %v640 = vor.u32 %v637, %v638
          %v641 = vsel %vm531, %v633, %v640
          %v643 = vshrl.u32 %v496, 16
          %v645 = vrot.slane %v643, 7
          %v646 = vrot.slane %v645, 4
          %v648 = vshrl.u32 %v497, 16
          %v650 = vrot.slane %v648, 7
          %v651 = vshll.u32 %v497, 16
          %v653 = vor.u32 %v650, %v651
          %v654 = vsel %vm531, %v646, %v653
          %v655 = vrot.slane %v650, 4
          %v657 = vshrl.u32 %v498, 16
          %v659 = vrot.slane %v657, 7
          %v660 = vshll.u32 %v498, 16
          %v662 = vor.u32 %v659, %v660
          %v663 = vsel %vm531, %v655, %v662
          %v665 = vshrl.u32 %v499, 16
          %v667 = vrot.slane %v665, 7
          %v668 = vrot.slane %v667, 4
          %v670 = vshrl.u32 %v500, 16
          %v672 = vrot.slane %v670, 7
          %v673 = vshll.u32 %v500, 16
          %v675 = vor.u32 %v672, %v673
          %v676 = vsel %vm531, %v668, %v675
          %v677 = vrot.slane %v672, 4
          %v679 = vshrl.u32 %v501, 16
          %v681 = vrot.slane %v679, 7
          %v682 = vshll.u32 %v501, 16
          %v684 = vor.u32 %v681, %v682
          %v685 = vsel %vm531, %v677, %v684
          %v687 = vshrl.u32 %v502, 16
          %v689 = vrot.slane %v687, 7
          %v690 = vrot.slane %v689, 4
          %v692 = vshrl.u32 %v503, 16
          %v694 = vrot.slane %v692, 7
          %v695 = vshll.u32 %v503, 16
          %v697 = vor.u32 %v694, %v695
          %v698 = vsel %vm531, %v690, %v697
          %v699 = vrot.slane %v694, 4
          %v701 = vshrl.u32 %v504, 16
          %v703 = vrot.slane %v701, 7
          %v704 = vshll.u32 %v504, 16
          %v706 = vor.u32 %v703, %v704
          %v707 = vsel %vm531, %v699, %v706
          %v709 = vshrl.u32 %v505, 16
          %v711 = vrot.slane %v709, 7
          %v712 = vrot.slane %v711, 4
          %v714 = vshrl.u32 %v506, 16
          %v716 = vrot.slane %v714, 7
          %v717 = vshll.u32 %v506, 16
          %v719 = vor.u32 %v716, %v717
          %v720 = vsel %vm531, %v712, %v719
          %v721 = vrot.slane %v716, 4
          %v723 = vshrl.u32 %v507, 16
          %v725 = vrot.slane %v723, 7
          %v726 = vshll.u32 %v507, 16
          %v728 = vor.u32 %v725, %v726
          %v729 = vsel %vm531, %v721, %v728
          %v731 = vshrl.u32 %v508, 16
          %v733 = vrot.slane %v731, 7
          %v734 = vrot.slane %v733, 4
          %v736 = vshrl.u32 %v509, 16
          %v738 = vrot.slane %v736, 7
          %v739 = vshll.u32 %v509, 16
          %v741 = vor.u32 %v738, %v739
          %v742 = vsel %vm531, %v734, %v741
          %v743 = vrot.slane %v738, 4
          %v745 = vshrl.u32 %v510, 16
          %v747 = vrot.slane %v745, 7
          %v748 = vshll.u32 %v510, 16
          %v750 = vor.u32 %v747, %v748
          %v751 = vsel %vm531, %v743, %v750
          %v753 = vshrl.u32 %v511, 16
          %v755 = vrot.slane %v753, 7
          %v756 = vrot.slane %v755, 4
          %v758 = vshrl.u32 %v512, 16
          %v760 = vrot.slane %v758, 7
          %v761 = vshll.u32 %v512, 16
          %v763 = vor.u32 %v760, %v761
          %v764 = vsel %vm531, %v756, %v763
          %v765 = vrot.slane %v760, 4
          %v767 = vshrl.u32 %v513, 16
          %v769 = vrot.slane %v767, 7
          %v770 = vshll.u32 %v513, 16
          %v772 = vor.u32 %v769, %v770
          %v773 = vsel %vm531, %v765, %v772
          %v775 = vshrl.u32 %v514, 16
          %v777 = vrot.slane %v775, 7
          %v778 = vrot.slane %v777, 4
          %v780 = vshrl.u32 %v515, 16
          %v782 = vrot.slane %v780, 7
          %v783 = vshll.u32 %v515, 16
          %v785 = vor.u32 %v782, %v783
          %v786 = vsel %vm531, %v778, %v785
          %v787 = vrot.slane %v782, 4
          %v789 = vshrl.u32 %v516, 16
          %v791 = vrot.slane %v789, 7
          %v792 = vshll.u32 %v516, 16
          %v794 = vor.u32 %v791, %v792
          %v795 = vsel %vm531, %v787, %v794
          %v797 = vshrl.u32 %v517, 16
          %v799 = vrot.slane %v797, 7
          %v800 = vrot.slane %v799, 4
          %v802 = vshrl.u32 %v518, 16
          %v804 = vrot.slane %v802, 7
          %v805 = vshll.u32 %v518, 16
          %v807 = vor.u32 %v804, %v805
          %v808 = vsel %vm531, %v800, %v807
          %v809 = vrot.slane %v804, 4
          %v811 = vshrl.u32 %v519, 16
          %v813 = vrot.slane %v811, 7
          %v814 = vshll.u32 %v519, 16
          %v816 = vor.u32 %v813, %v814
          %v817 = vsel %vm531, %v809, %v816
          %v819 = vshrl.u32 %v520, 16
          %v821 = vrot.slane %v819, 7
          %v822 = vrot.slane %v821, 4
          %v824 = vshrl.u32 %v521, 16
          %v826 = vrot.slane %v824, 7
          %v827 = vshll.u32 %v521, 16
          %v829 = vor.u32 %v826, %v827
          %v830 = vsel %vm531, %v822, %v829
          %v831 = vrot.slane %v826, 4
          %v833 = vshrl.u32 %v522, 16
          %v835 = vrot.slane %v833, 7
          %v836 = vshll.u32 %v522, 16
          %v838 = vor.u32 %v835, %v836
          %v839 = vsel %vm531, %v831, %v838
          %v841 = vshrl.u32 %v523, 16
          %v843 = vrot.slane %v841, 7
          %v844 = vrot.slane %v843, 4
          %v846 = vshrl.u32 %v524, 16
          %v848 = vrot.slane %v846, 7
          %v849 = vshll.u32 %v524, 16
          %v851 = vor.u32 %v848, %v849
          %v852 = vsel %vm531, %v844, %v851
          %v853 = vrot.slane %v848, 4
          %v855 = vshrl.u32 %v525, 16
          %v857 = vrot.slane %v855, 7
          %v858 = vshll.u32 %v525, 16
          %v860 = vor.u32 %v857, %v858
          %v861 = vsel %vm531, %v853, %v860
          %v863 = vshrl.u32 %v526, 16
          %v865 = vrot.slane %v863, 7
          %v866 = vrot.slane %v865, 4
          %v868 = vshrl.u32 %v527, 16
          %v870 = vrot.slane %v868, 7
          %v871 = vshll.u32 %v527, 16
          %v873 = vor.u32 %v870, %v871
          %v874 = vsel %vm531, %v866, %v873
          %v875 = vrot.slane %v870, 4
          %v877 = vshrl.u32 %v528, 16
          %v879 = vrot.slane %v877, 7
          %v880 = vshll.u32 %v528, 16
          %v882 = vor.u32 %v879, %v880
          %v883 = vsel %vm531, %v875, %v882
          %s884 = scalar_lea.vmem [#allocation2], 16
          %v885 = vld [vmem:[%s884] sm:$0x8]
          %v886 = vld [vmem:[%s884 + $0x4] sm:$0xf]
          %v887 = vld [vmem:[%s884 + $0x8] sm:$0xf]
          %v888 = vld [vmem:[%s884 + $0x10] sm:$0x8]
          %v889 = vld [vmem:[%s884 + $0x14] sm:$0xf]
          %v890 = vld [vmem:[%s884 + $0x18] sm:$0xf]
          %v891 = vld [vmem:[%s884 + $0x20] sm:$0x8]
          %v892 = vld [vmem:[%s884 + $0x24] sm:$0xf]
          %v893 = vld [vmem:[%s884 + $0x28] sm:$0xf]
          %v894 = vld [vmem:[%s884 + $0x30] sm:$0x8]
          %v895 = vld [vmem:[%s884 + $0x34] sm:$0xf]
          %v896 = vld [vmem:[%s884 + $0x38] sm:$0xf]
          %v897 = vld [vmem:[%s884 + $0x40] sm:$0x8]
          %v898 = vld [vmem:[%s884 + $0x44] sm:$0xf]
          %v899 = vld [vmem:[%s884 + $0x48] sm:$0xf]
          %v900 = vld [vmem:[%s884 + $0x50] sm:$0x8]
          %v901 = vld [vmem:[%s884 + $0x54] sm:$0xf]
          %v902 = vld [vmem:[%s884 + $0x58] sm:$0xf]
          %v903 = vld [vmem:[%s884 + $0x60] sm:$0x8]
          %v904 = vld [vmem:[%s884 + $0x64] sm:$0xf]
          %v905 = vld [vmem:[%s884 + $0x68] sm:$0xf]
          %v906 = vld [vmem:[%s884 + $0x70] sm:$0x8]
          %v907 = vld [vmem:[%s884 + $0x74] sm:$0xf]
          %v908 = vld [vmem:[%s884 + $0x78] sm:$0xf]
          %v909 = vld [vmem:[%s884 + $0x80] sm:$0x8]
          %v910 = vld [vmem:[%s884 + $0x84] sm:$0xf]
          %v911 = vld [vmem:[%s884 + $0x88] sm:$0xf]
          %v912 = vld [vmem:[%s884 + $0x90] sm:$0x8]
          %v913 = vld [vmem:[%s884 + $0x94] sm:$0xf]
          %v914 = vld [vmem:[%s884 + $0x98] sm:$0xf]
          %v915 = vld [vmem:[%s884 + $0xa0] sm:$0x8]
          %v916 = vld [vmem:[%s884 + $0xa4] sm:$0xf]
          %v917 = vld [vmem:[%s884 + $0xa8] sm:$0xf]
          %v918 = vld [vmem:[%s884 + $0xb0] sm:$0x8]
          %v919 = vld [vmem:[%s884 + $0xb4] sm:$0xf]
          %v920 = vld [vmem:[%s884 + $0xb8] sm:$0xf]
          %v921 = vld [vmem:[%s884 + $0xc0] sm:$0x8]
          %v922 = vld [vmem:[%s884 + $0xc4] sm:$0xf]
          %v923 = vld [vmem:[%s884 + $0xc8] sm:$0xf]
          %v924 = vld [vmem:[%s884 + $0xd0] sm:$0x8]
          %v925 = vld [vmem:[%s884 + $0xd4] sm:$0xf]
          %v926 = vld [vmem:[%s884 + $0xd8] sm:$0xf]
          %v927 = vld [vmem:[%s884 + $0xe0] sm:$0x8]
          %v928 = vld [vmem:[%s884 + $0xe4] sm:$0xf]
          %v929 = vld [vmem:[%s884 + $0xe8] sm:$0xf]
          %v930 = vld [vmem:[%s884 + $0xf0] sm:$0x8]
          %v931 = vld [vmem:[%s884 + $0xf4] sm:$0xf]
          %v932 = vld [vmem:[%s884 + $0xf8] sm:$0xf]
          %v934 = vshrl.u32 %v885, 16
          %v936 = vrot.slane %v934, 7
          %v937 = vrot.slane %v936, 4
          %v939 = vshrl.u32 %v886, 16
          %v941 = vrot.slane %v939, 7
          %v942 = vshll.u32 %v886, 16
          %v944 = vor.u32 %v941, %v942
          %v945 = vsel %vm531, %v937, %v944
          %v946 = vrot.slane %v941, 4
          %v948 = vshrl.u32 %v887, 16
          %v950 = vrot.slane %v948, 7
          %v951 = vshll.u32 %v887, 16
          %v953 = vor.u32 %v950, %v951
          %v954 = vsel %vm531, %v946, %v953
          %v956 = vshrl.u32 %v888, 16
          %v958 = vrot.slane %v956, 7
          %v959 = vrot.slane %v958, 4
          %v961 = vshrl.u32 %v889, 16
          %v963 = vrot.slane %v961, 7
          %v964 = vshll.u32 %v889, 16
          %v966 = vor.u32 %v963, %v964
          %v967 = vsel %vm531, %v959, %v966
          %v968 = vrot.slane %v963, 4
          %v970 = vshrl.u32 %v890, 16
          %v972 = vrot.slane %v970, 7
          %v973 = vshll.u32 %v890, 16
          %v975 = vor.u32 %v972, %v973
          %v976 = vsel %vm531, %v968, %v975
          %v978 = vshrl.u32 %v891, 16
          %v980 = vrot.slane %v978, 7
          %v981 = vrot.slane %v980, 4
          %v983 = vshrl.u32 %v892, 16
          %v985 = vrot.slane %v983, 7
          %v986 = vshll.u32 %v892, 16
          %v988 = vor.u32 %v985, %v986
          %v989 = vsel %vm531, %v981, %v988
          %v990 = vrot.slane %v985, 4
          %v992 = vshrl.u32 %v893, 16
          %v994 = vrot.slane %v992, 7
          %v995 = vshll.u32 %v893, 16
          %v997 = vor.u32 %v994, %v995
          %v998 = vsel %vm531, %v990, %v997
          %v1000 = vshrl.u32 %v894, 16
          %v1002 = vrot.slane %v1000, 7
          %v1003 = vrot.slane %v1002, 4
          %v1005 = vshrl.u32 %v895, 16
          %v1007 = vrot.slane %v1005, 7
          %v1008 = vshll.u32 %v895, 16
          %v1010 = vor.u32 %v1007, %v1008
          %v1011 = vsel %vm531, %v1003, %v1010
          %v1012 = vrot.slane %v1007, 4
          %v1014 = vshrl.u32 %v896, 16
          %v1016 = vrot.slane %v1014, 7
          %v1017 = vshll.u32 %v896, 16
          %v1019 = vor.u32 %v1016, %v1017
          %v1020 = vsel %vm531, %v1012, %v1019
          %v1022 = vshrl.u32 %v897, 16
          %v1024 = vrot.slane %v1022, 7
          %v1025 = vrot.slane %v1024, 4
          %v1027 = vshrl.u32 %v898, 16
          %v1029 = vrot.slane %v1027, 7
          %v1030 = vshll.u32 %v898, 16
          %v1032 = vor.u32 %v1029, %v1030
          %v1033 = vsel %vm531, %v1025, %v1032
          %v1034 = vrot.slane %v1029, 4
          %v1036 = vshrl.u32 %v899, 16
          %v1038 = vrot.slane %v1036, 7
          %v1039 = vshll.u32 %v899, 16
          %v1041 = vor.u32 %v1038, %v1039
          %v1042 = vsel %vm531, %v1034, %v1041
          %v1044 = vshrl.u32 %v900, 16
          %v1046 = vrot.slane %v1044, 7
          %v1047 = vrot.slane %v1046, 4
          %v1049 = vshrl.u32 %v901, 16
          %v1051 = vrot.slane %v1049, 7
          %v1052 = vshll.u32 %v901, 16
          %v1054 = vor.u32 %v1051, %v1052
          %v1055 = vsel %vm531, %v1047, %v1054
          %v1056 = vrot.slane %v1051, 4
          %v1058 = vshrl.u32 %v902, 16
          %v1060 = vrot.slane %v1058, 7
          %v1061 = vshll.u32 %v902, 16
          %v1063 = vor.u32 %v1060, %v1061
          %v1064 = vsel %vm531, %v1056, %v1063
          %v1066 = vshrl.u32 %v903, 16
          %v1068 = vrot.slane %v1066, 7
          %v1069 = vrot.slane %v1068, 4
          %v1071 = vshrl.u32 %v904, 16
          %v1073 = vrot.slane %v1071, 7
          %v1074 = vshll.u32 %v904, 16
          %v1076 = vor.u32 %v1073, %v1074
          %v1077 = vsel %vm531, %v1069, %v1076
          %v1078 = vrot.slane %v1073, 4
          %v1080 = vshrl.u32 %v905, 16
          %v1082 = vrot.slane %v1080, 7
          %v1083 = vshll.u32 %v905, 16
          %v1085 = vor.u32 %v1082, %v1083
          %v1086 = vsel %vm531, %v1078, %v1085
          %v1088 = vshrl.u32 %v906, 16
          %v1090 = vrot.slane %v1088, 7
          %v1091 = vrot.slane %v1090, 4
          %v1093 = vshrl.u32 %v907, 16
          %v1095 = vrot.slane %v1093, 7
          %v1096 = vshll.u32 %v907, 16
          %v1098 = vor.u32 %v1095, %v1096
          %v1099 = vsel %vm531, %v1091, %v1098
          %v1100 = vrot.slane %v1095, 4
          %v1102 = vshrl.u32 %v908, 16
          %v1104 = vrot.slane %v1102, 7
          %v1105 = vshll.u32 %v908, 16
          %v1107 = vor.u32 %v1104, %v1105
          %v1108 = vsel %vm531, %v1100, %v1107
          %v1110 = vshrl.u32 %v909, 16
          %v1112 = vrot.slane %v1110, 7
          %v1113 = vrot.slane %v1112, 4
          %v1115 = vshrl.u32 %v910, 16
          %v1117 = vrot.slane %v1115, 7
          %v1118 = vshll.u32 %v910, 16
          %v1120 = vor.u32 %v1117, %v1118
          %v1121 = vsel %vm531, %v1113, %v1120
          %v1122 = vrot.slane %v1117, 4
          %v1124 = vshrl.u32 %v911, 16
          %v1126 = vrot.slane %v1124, 7
          %v1127 = vshll.u32 %v911, 16
          %v1129 = vor.u32 %v1126, %v1127
          %v1130 = vsel %vm531, %v1122, %v1129
          %v1132 = vshrl.u32 %v912, 16
          %v1134 = vrot.slane %v1132, 7
          %v1135 = vrot.slane %v1134, 4
          %v1137 = vshrl.u32 %v913, 16
          %v1139 = vrot.slane %v1137, 7
          %v1140 = vshll.u32 %v913, 16
          %v1142 = vor.u32 %v1139, %v1140
          %v1143 = vsel %vm531, %v1135, %v1142
          %v1144 = vrot.slane %v1139, 4
          %v1146 = vshrl.u32 %v914, 16
          %v1148 = vrot.slane %v1146, 7
          %v1149 = vshll.u32 %v914, 16
          %v1151 = vor.u32 %v1148, %v1149
          %v1152 = vsel %vm531, %v1144, %v1151
          %v1154 = vshrl.u32 %v915, 16
          %v1156 = vrot.slane %v1154, 7
          %v1157 = vrot.slane %v1156, 4
          %v1159 = vshrl.u32 %v916, 16
          %v1161 = vrot.slane %v1159, 7
          %v1162 = vshll.u32 %v916, 16
          %v1164 = vor.u32 %v1161, %v1162
          %v1165 = vsel %vm531, %v1157, %v1164
          %v1166 = vrot.slane %v1161, 4
          %v1168 = vshrl.u32 %v917, 16
          %v1170 = vrot.slane %v1168, 7
          %v1171 = vshll.u32 %v917, 16
          %v1173 = vor.u32 %v1170, %v1171
          %v1174 = vsel %vm531, %v1166, %v1173
          %v1176 = vshrl.u32 %v918, 16
          %v1178 = vrot.slane %v1176, 7
          %v1179 = vrot.slane %v1178, 4
          %v1181 = vshrl.u32 %v919, 16
          %v1183 = vrot.slane %v1181, 7
          %v1184 = vshll.u32 %v919, 16
          %v1186 = vor.u32 %v1183, %v1184
          %v1187 = vsel %vm531, %v1179, %v1186
          %v1188 = vrot.slane %v1183, 4
          %v1190 = vshrl.u32 %v920, 16
          %v1192 = vrot.slane %v1190, 7
          %v1193 = vshll.u32 %v920, 16
          %v1195 = vor.u32 %v1192, %v1193
          %v1196 = vsel %vm531, %v1188, %v1195
          %v1198 = vshrl.u32 %v921, 16
          %v1200 = vrot.slane %v1198, 7
          %v1201 = vrot.slane %v1200, 4
          %v1203 = vshrl.u32 %v922, 16
          %v1205 = vrot.slane %v1203, 7
          %v1206 = vshll.u32 %v922, 16
          %v1208 = vor.u32 %v1205, %v1206
          %v1209 = vsel %vm531, %v1201, %v1208
          %v1210 = vrot.slane %v1205, 4
          %v1212 = vshrl.u32 %v923, 16
          %v1214 = vrot.slane %v1212, 7
          %v1215 = vshll.u32 %v923, 16
          %v1217 = vor.u32 %v1214, %v1215
          %v1218 = vsel %vm531, %v1210, %v1217
          %v1220 = vshrl.u32 %v924, 16
          %v1222 = vrot.slane %v1220, 7
          %v1223 = vrot.slane %v1222, 4
          %v1225 = vshrl.u32 %v925, 16
          %v1227 = vrot.slane %v1225, 7
          %v1228 = vshll.u32 %v925, 16
          %v1230 = vor.u32 %v1227, %v1228
          %v1231 = vsel %vm531, %v1223, %v1230
          %v1232 = vrot.slane %v1227, 4
          %v1234 = vshrl.u32 %v926, 16
          %v1236 = vrot.slane %v1234, 7
          %v1237 = vshll.u32 %v926, 16
          %v1239 = vor.u32 %v1236, %v1237
          %v1240 = vsel %vm531, %v1232, %v1239
          %v1242 = vshrl.u32 %v927, 16
          %v1244 = vrot.slane %v1242, 7
          %v1245 = vrot.slane %v1244, 4
          %v1247 = vshrl.u32 %v928, 16
          %v1249 = vrot.slane %v1247, 7
          %v1250 = vshll.u32 %v928, 16
          %v1252 = vor.u32 %v1249, %v1250
          %v1253 = vsel %vm531, %v1245, %v1252
          %v1254 = vrot.slane %v1249, 4
          %v1256 = vshrl.u32 %v929, 16
          %v1258 = vrot.slane %v1256, 7
          %v1259 = vshll.u32 %v929, 16
          %v1261 = vor.u32 %v1258, %v1259
          %v1262 = vsel %vm531, %v1254, %v1261
          %v1264 = vshrl.u32 %v930, 16
          %v1266 = vrot.slane %v1264, 7
          %v1267 = vrot.slane %v1266, 4
          %v1269 = vshrl.u32 %v931, 16
          %v1271 = vrot.slane %v1269, 7
          %v1272 = vshll.u32 %v931, 16
          %v1274 = vor.u32 %v1271, %v1272
          %v1275 = vsel %vm531, %v1267, %v1274
          %v1276 = vrot.slane %v1271, 4
          %v1278 = vshrl.u32 %v932, 16
          %v1280 = vrot.slane %v1278, 7
          %v1281 = vshll.u32 %v932, 16
          %v1283 = vor.u32 %v1280, %v1281
          %v1284 = vsel %vm531, %v1276, %v1283
          %s1285 = scalar_lea.vmem [#allocation2], 32
          %v1286 = vld [vmem:[%s1285] sm:$0x8]
          %v1287 = vld [vmem:[%s1285 + $0x4] sm:$0xf]
          %v1288 = vld [vmem:[%s1285 + $0x8] sm:$0xf]
          %v1289 = vld [vmem:[%s1285 + $0x10] sm:$0x8]
          %v1290 = vld [vmem:[%s1285 + $0x14] sm:$0xf]
          %v1291 = vld [vmem:[%s1285 + $0x18] sm:$0xf]
          %v1292 = vld [vmem:[%s1285 + $0x20] sm:$0x8]
          %v1293 = vld [vmem:[%s1285 + $0x24] sm:$0xf]
          %v1294 = vld [vmem:[%s1285 + $0x28] sm:$0xf]
          %v1295 = vld [vmem:[%s1285 + $0x30] sm:$0x8]
          %v1296 = vld [vmem:[%s1285 + $0x34] sm:$0xf]
          %v1297 = vld [vmem:[%s1285 + $0x38] sm:$0xf]
          %v1298 = vld [vmem:[%s1285 + $0x40] sm:$0x8]
          %v1299 = vld [vmem:[%s1285 + $0x44] sm:$0xf]
          %v1300 = vld [vmem:[%s1285 + $0x48] sm:$0xf]
          %v1301 = vld [vmem:[%s1285 + $0x50] sm:$0x8]
          %v1302 = vld [vmem:[%s1285 + $0x54] sm:$0xf]
          %v1303 = vld [vmem:[%s1285 + $0x58] sm:$0xf]
          %v1304 = vld [vmem:[%s1285 + $0x60] sm:$0x8]
          %v1305 = vld [vmem:[%s1285 + $0x64] sm:$0xf]
          %v1306 = vld [vmem:[%s1285 + $0x68] sm:$0xf]
          %v1307 = vld [vmem:[%s1285 + $0x70] sm:$0x8]
          %v1308 = vld [vmem:[%s1285 + $0x74] sm:$0xf]
          %v1309 = vld [vmem:[%s1285 + $0x78] sm:$0xf]
          %v1310 = vld [vmem:[%s1285 + $0x80] sm:$0x8]
          %v1311 = vld [vmem:[%s1285 + $0x84] sm:$0xf]
          %v1312 = vld [vmem:[%s1285 + $0x88] sm:$0xf]
          %v1313 = vld [vmem:[%s1285 + $0x90] sm:$0x8]
          %v1314 = vld [vmem:[%s1285 + $0x94] sm:$0xf]
          %v1315 = vld [vmem:[%s1285 + $0x98] sm:$0xf]
          %v1316 = vld [vmem:[%s1285 + $0xa0] sm:$0x8]
          %v1317 = vld [vmem:[%s1285 + $0xa4] sm:$0xf]
          %v1318 = vld [vmem:[%s1285 + $0xa8] sm:$0xf]
          %v1319 = vld [vmem:[%s1285 + $0xb0] sm:$0x8]
          %v1320 = vld [vmem:[%s1285 + $0xb4] sm:$0xf]
          %v1321 = vld [vmem:[%s1285 + $0xb8] sm:$0xf]
          %v1322 = vld [vmem:[%s1285 + $0xc0] sm:$0x8]
          %v1323 = vld [vmem:[%s1285 + $0xc4] sm:$0xf]
          %v1324 = vld [vmem:[%s1285 + $0xc8] sm:$0xf]
          %v1325 = vld [vmem:[%s1285 + $0xd0] sm:$0x8]
          %v1326 = vld [vmem:[%s1285 + $0xd4] sm:$0xf]
          %v1327 = vld [vmem:[%s1285 + $0xd8] sm:$0xf]
          %v1328 = vld [vmem:[%s1285 + $0xe0] sm:$0x8]
          %v1329 = vld [vmem:[%s1285 + $0xe4] sm:$0xf]
          %v1330 = vld [vmem:[%s1285 + $0xe8] sm:$0xf]
          %v1331 = vld [vmem:[%s1285 + $0xf0] sm:$0x8]
          %v1332 = vld [vmem:[%s1285 + $0xf4] sm:$0xf]
          %v1333 = vld [vmem:[%s1285 + $0xf8] sm:$0xf]
          %v1335 = vshrl.u32 %v1286, 16
          %v1337 = vrot.slane %v1335, 7
          %v1338 = vrot.slane %v1337, 4
          %v1340 = vshrl.u32 %v1287, 16
          %v1342 = vrot.slane %v1340, 7
          %v1343 = vshll.u32 %v1287, 16
          %v1345 = vor.u32 %v1342, %v1343
          %v1346 = vsel %vm531, %v1338, %v1345
          %v1347 = vrot.slane %v1342, 4
          %v1349 = vshrl.u32 %v1288, 16
          %v1351 = vrot.slane %v1349, 7
          %v1352 = vshll.u32 %v1288, 16
          %v1354 = vor.u32 %v1351, %v1352
          %v1355 = vsel %vm531, %v1347, %v1354
          %v1357 = vshrl.u32 %v1289, 16
          %v1359 = vrot.slane %v1357, 7
          %v1360 = vrot.slane %v1359, 4
          %v1362 = vshrl.u32 %v1290, 16
          %v1364 = vrot.slane %v1362, 7
          %v1365 = vshll.u32 %v1290, 16
          %v1367 = vor.u32 %v1364, %v1365
          %v1368 = vsel %vm531, %v1360, %v1367
          %v1369 = vrot.slane %v1364, 4
          %v1371 = vshrl.u32 %v1291, 16
          %v1373 = vrot.slane %v1371, 7
          %v1374 = vshll.u32 %v1291, 16
          %v1376 = vor.u32 %v1373, %v1374
          %v1377 = vsel %vm531, %v1369, %v1376
          %v1379 = vshrl.u32 %v1292, 16
          %v1381 = vrot.slane %v1379, 7
          %v1382 = vrot.slane %v1381, 4
          %v1384 = vshrl.u32 %v1293, 16
          %v1386 = vrot.slane %v1384, 7
          %v1387 = vshll.u32 %v1293, 16
          %v1389 = vor.u32 %v1386, %v1387
          %v1390 = vsel %vm531, %v1382, %v1389
          %v1391 = vrot.slane %v1386, 4
          %v1393 = vshrl.u32 %v1294, 16
          %v1395 = vrot.slane %v1393, 7
          %v1396 = vshll.u32 %v1294, 16
          %v1398 = vor.u32 %v1395, %v1396
          %v1399 = vsel %vm531, %v1391, %v1398
          %v1401 = vshrl.u32 %v1295, 16
          %v1403 = vrot.slane %v1401, 7
          %v1404 = vrot.slane %v1403, 4
          %v1406 = vshrl.u32 %v1296, 16
          %v1408 = vrot.slane %v1406, 7
          %v1409 = vshll.u32 %v1296, 16
          %v1411 = vor.u32 %v1408, %v1409
          %v1412 = vsel %vm531, %v1404, %v1411
          %v1413 = vrot.slane %v1408, 4
          %v1415 = vshrl.u32 %v1297, 16
          %v1417 = vrot.slane %v1415, 7
          %v1418 = vshll.u32 %v1297, 16
          %v1420 = vor.u32 %v1417, %v1418
          %v1421 = vsel %vm531, %v1413, %v1420
          %v1423 = vshrl.u32 %v1298, 16
          %v1425 = vrot.slane %v1423, 7
          %v1426 = vrot.slane %v1425, 4
          %v1428 = vshrl.u32 %v1299, 16
          %v1430 = vrot.slane %v1428, 7
          %v1431 = vshll.u32 %v1299, 16
          %v1433 = vor.u32 %v1430, %v1431
          %v1434 = vsel %vm531, %v1426, %v1433
          %v1435 = vrot.slane %v1430, 4
          %v1437 = vshrl.u32 %v1300, 16
          %v1439 = vrot.slane %v1437, 7
          %v1440 = vshll.u32 %v1300, 16
          %v1442 = vor.u32 %v1439, %v1440
          %v1443 = vsel %vm531, %v1435, %v1442
          %v1445 = vshrl.u32 %v1301, 16
          %v1447 = vrot.slane %v1445, 7
          %v1448 = vrot.slane %v1447, 4
          %v1450 = vshrl.u32 %v1302, 16
          %v1452 = vrot.slane %v1450, 7
          %v1453 = vshll.u32 %v1302, 16
          %v1455 = vor.u32 %v1452, %v1453
          %v1456 = vsel %vm531, %v1448, %v1455
          %v1457 = vrot.slane %v1452, 4
          %v1459 = vshrl.u32 %v1303, 16
          %v1461 = vrot.slane %v1459, 7
          %v1462 = vshll.u32 %v1303, 16
          %v1464 = vor.u32 %v1461, %v1462
          %v1465 = vsel %vm531, %v1457, %v1464
          %v1467 = vshrl.u32 %v1304, 16
          %v1469 = vrot.slane %v1467, 7
          %v1470 = vrot.slane %v1469, 4
          %v1472 = vshrl.u32 %v1305, 16
          %v1474 = vrot.slane %v1472, 7
          %v1475 = vshll.u32 %v1305, 16
          %v1477 = vor.u32 %v1474, %v1475
          %v1478 = vsel %vm531, %v1470, %v1477
          %v1479 = vrot.slane %v1474, 4
          %v1481 = vshrl.u32 %v1306, 16
          %v1483 = vrot.slane %v1481, 7
          %v1484 = vshll.u32 %v1306, 16
          %v1486 = vor.u32 %v1483, %v1484
          %v1487 = vsel %vm531, %v1479, %v1486
          %v1489 = vshrl.u32 %v1307, 16
          %v1491 = vrot.slane %v1489, 7
          %v1492 = vrot.slane %v1491, 4
          %v1494 = vshrl.u32 %v1308, 16
          %v1496 = vrot.slane %v1494, 7
          %v1497 = vshll.u32 %v1308, 16
          %v1499 = vor.u32 %v1496, %v1497
          %v1500 = vsel %vm531, %v1492, %v1499
          %v1501 = vrot.slane %v1496, 4
          %v1503 = vshrl.u32 %v1309, 16
          %v1505 = vrot.slane %v1503, 7
          %v1506 = vshll.u32 %v1309, 16
          %v1508 = vor.u32 %v1505, %v1506
          %v1509 = vsel %vm531, %v1501, %v1508
          %v1511 = vshrl.u32 %v1310, 16
          %v1513 = vrot.slane %v1511, 7
          %v1514 = vrot.slane %v1513, 4
          %v1516 = vshrl.u32 %v1311, 16
          %v1518 = vrot.slane %v1516, 7
          %v1519 = vshll.u32 %v1311, 16
          %v1521 = vor.u32 %v1518, %v1519
          %v1522 = vsel %vm531, %v1514, %v1521
          %v1523 = vrot.slane %v1518, 4
          %v1525 = vshrl.u32 %v1312, 16
          %v1527 = vrot.slane %v1525, 7
          %v1528 = vshll.u32 %v1312, 16
          %v1530 = vor.u32 %v1527, %v1528
          %v1531 = vsel %vm531, %v1523, %v1530
          %v1533 = vshrl.u32 %v1313, 16
          %v1535 = vrot.slane %v1533, 7
          %v1536 = vrot.slane %v1535, 4
          %v1538 = vshrl.u32 %v1314, 16
          %v1540 = vrot.slane %v1538, 7
          %v1541 = vshll.u32 %v1314, 16
          %v1543 = vor.u32 %v1540, %v1541
          %v1544 = vsel %vm531, %v1536, %v1543
          %v1545 = vrot.slane %v1540, 4
          %v1547 = vshrl.u32 %v1315, 16
          %v1549 = vrot.slane %v1547, 7
          %v1550 = vshll.u32 %v1315, 16
          %v1552 = vor.u32 %v1549, %v1550
          %v1553 = vsel %vm531, %v1545, %v1552
          %v1555 = vshrl.u32 %v1316, 16
          %v1557 = vrot.slane %v1555, 7
          %v1558 = vrot.slane %v1557, 4
          %v1560 = vshrl.u32 %v1317, 16
          %v1562 = vrot.slane %v1560, 7
          %v1563 = vshll.u32 %v1317, 16
          %v1565 = vor.u32 %v1562, %v1563
          %v1566 = vsel %vm531, %v1558, %v1565
          %v1567 = vrot.slane %v1562, 4
          %v1569 = vshrl.u32 %v1318, 16
          %v1571 = vrot.slane %v1569, 7
          %v1572 = vshll.u32 %v1318, 16
          %v1574 = vor.u32 %v1571, %v1572
          %v1575 = vsel %vm531, %v1567, %v1574
          %v1577 = vshrl.u32 %v1319, 16
          %v1579 = vrot.slane %v1577, 7
          %v1580 = vrot.slane %v1579, 4
          %v1582 = vshrl.u32 %v1320, 16
          %v1584 = vrot.slane %v1582, 7
          %v1585 = vshll.u32 %v1320, 16
          %v1587 = vor.u32 %v1584, %v1585
          %v1588 = vsel %vm531, %v1580, %v1587
          %v1589 = vrot.slane %v1584, 4
          %v1591 = vshrl.u32 %v1321, 16
          %v1593 = vrot.slane %v1591, 7
          %v1594 = vshll.u32 %v1321, 16
          %v1596 = vor.u32 %v1593, %v1594
          %v1597 = vsel %vm531, %v1589, %v1596
          %v1599 = vshrl.u32 %v1322, 16
          %v1601 = vrot.slane %v1599, 7
          %v1602 = vrot.slane %v1601, 4
          %v1604 = vshrl.u32 %v1323, 16
          %v1606 = vrot.slane %v1604, 7
          %v1607 = vshll.u32 %v1323, 16
          %v1609 = vor.u32 %v1606, %v1607
          %v1610 = vsel %vm531, %v1602, %v1609
          %v1611 = vrot.slane %v1606, 4
          %v1613 = vshrl.u32 %v1324, 16
          %v1615 = vrot.slane %v1613, 7
          %v1616 = vshll.u32 %v1324, 16
          %v1618 = vor.u32 %v1615, %v1616
          %v1619 = vsel %vm531, %v1611, %v1618
          %v1621 = vshrl.u32 %v1325, 16
          %v1623 = vrot.slane %v1621, 7
          %v1624 = vrot.slane %v1623, 4
          %v1626 = vshrl.u32 %v1326, 16
          %v1628 = vrot.slane %v1626, 7
          %v1629 = vshll.u32 %v1326, 16
          %v1631 = vor.u32 %v1628, %v1629
          %v1632 = vsel %vm531, %v1624, %v1631
          %v1633 = vrot.slane %v1628, 4
          %v1635 = vshrl.u32 %v1327, 16
          %v1637 = vrot.slane %v1635, 7
          %v1638 = vshll.u32 %v1327, 16
          %v1640 = vor.u32 %v1637, %v1638
          %v1641 = vsel %vm531, %v1633, %v1640
          %v1643 = vshrl.u32 %v1328, 16
          %v1645 = vrot.slane %v1643, 7
          %v1646 = vrot.slane %v1645, 4
          %v1648 = vshrl.u32 %v1329, 16
          %v1650 = vrot.slane %v1648, 7
          %v1651 = vshll.u32 %v1329, 16
          %v1653 = vor.u32 %v1650, %v1651
          %v1654 = vsel %vm531, %v1646, %v1653
          %v1655 = vrot.slane %v1650, 4
          %v1657 = vshrl.u32 %v1330, 16
          %v1659 = vrot.slane %v1657, 7
          %v1660 = vshll.u32 %v1330, 16
          %v1662 = vor.u32 %v1659, %v1660
          %v1663 = vsel %vm531, %v1655, %v1662
          %v1665 = vshrl.u32 %v1331, 16
          %v1667 = vrot.slane %v1665, 7
          %v1668 = vrot.slane %v1667, 4
          %v1670 = vshrl.u32 %v1332, 16
          %v1672 = vrot.slane %v1670, 7
          %v1673 = vshll.u32 %v1332, 16
          %v1675 = vor.u32 %v1672, %v1673
          %v1676 = vsel %vm531, %v1668, %v1675
          %v1677 = vrot.slane %v1672, 4
          %v1679 = vshrl.u32 %v1333, 16
          %v1681 = vrot.slane %v1679, 7
          %v1682 = vshll.u32 %v1333, 16
          %v1684 = vor.u32 %v1681, %v1682
          %v1685 = vsel %vm531, %v1677, %v1684
          %v1686 = vunpack.c.l.b16 %v544
          %v1687 = vunpack.c.l.b16 %v553
          %v1688 = vunpack.c.l.b16 %v566
          %v1689 = vunpack.c.l.b16 %v575
          %v1690 = vunpack.c.l.b16 %v588
          %v1691 = vunpack.c.l.b16 %v597
          %v1692 = vunpack.c.l.b16 %v610
          %v1693 = vunpack.c.l.b16 %v619
          %v1694 = vunpack.c.l.b16 %v632
          %v1695 = vunpack.c.l.b16 %v641
          %v1696 = vunpack.c.l.b16 %v654
          %v1697 = vunpack.c.l.b16 %v663
          %v1698 = vunpack.c.l.b16 %v676
          %v1699 = vunpack.c.l.b16 %v685
          %v1700 = vunpack.c.l.b16 %v698
          %v1701 = vunpack.c.l.b16 %v707
          %v1702 = vunpack.c.l.b16 %v720
          %v1703 = vunpack.c.l.b16 %v729
          %v1704 = vunpack.c.l.b16 %v742
          %v1705 = vunpack.c.l.b16 %v751
          %v1706 = vunpack.c.l.b16 %v764
          %v1707 = vunpack.c.l.b16 %v773
          %v1708 = vunpack.c.l.b16 %v786
          %v1709 = vunpack.c.l.b16 %v795
          %v1710 = vunpack.c.l.b16 %v808
          %v1711 = vunpack.c.l.b16 %v817
          %v1712 = vunpack.c.l.b16 %v830
          %v1713 = vunpack.c.l.b16 %v839
          %v1714 = vunpack.c.l.b16 %v852
          %v1715 = vunpack.c.l.b16 %v861
          %v1716 = vunpack.c.l.b16 %v874
          %v1717 = vunpack.c.l.b16 %v883
          %v1718 = vpack.c.b16 %v1687, %v1686
          %v1719 = vpack.c.b16 %v1689, %v1688
          %v1720 = vpack.c.b16 %v1691, %v1690
          %v1721 = vpack.c.b16 %v1693, %v1692
          %v1722 = vpack.c.b16 %v1695, %v1694
          %v1723 = vpack.c.b16 %v1697, %v1696
          %v1724 = vpack.c.b16 %v1699, %v1698
          %v1725 = vpack.c.b16 %v1701, %v1700
          %v1726 = vpack.c.b16 %v1703, %v1702
          %v1727 = vpack.c.b16 %v1705, %v1704
          %v1728 = vpack.c.b16 %v1707, %v1706
          %v1729 = vpack.c.b16 %v1709, %v1708
          %v1730 = vpack.c.b16 %v1711, %v1710
          %v1731 = vpack.c.b16 %v1713, %v1712
          %v1732 = vpack.c.b16 %v1715, %v1714
          %v1733 = vpack.c.b16 %v1717, %v1716
          %v1734 = vunpack.c.l.b16 %v945
          %v1735 = vunpack.c.l.b16 %v954
          %v1736 = vunpack.c.l.b16 %v967
          %v1737 = vunpack.c.l.b16 %v976
          %v1738 = vunpack.c.l.b16 %v989
          %v1739 = vunpack.c.l.b16 %v998
          %v1740 = vunpack.c.l.b16 %v1011
          %v1741 = vunpack.c.l.b16 %v1020
          %v1742 = vunpack.c.l.b16 %v1033
          %v1743 = vunpack.c.l.b16 %v1042
          %v1744 = vunpack.c.l.b16 %v1055
          %v1745 = vunpack.c.l.b16 %v1064
          %v1746 = vunpack.c.l.b16 %v1077
          %v1747 = vunpack.c.l.b16 %v1086
          %v1748 = vunpack.c.l.b16 %v1099
          %v1749 = vunpack.c.l.b16 %v1108
          %v1750 = vunpack.c.l.b16 %v1121
          %v1751 = vunpack.c.l.b16 %v1130
          %v1752 = vunpack.c.l.b16 %v1143
          %v1753 = vunpack.c.l.b16 %v1152
          %v1754 = vunpack.c.l.b16 %v1165
          %v1755 = vunpack.c.l.b16 %v1174
          %v1756 = vunpack.c.l.b16 %v1187
          %v1757 = vunpack.c.l.b16 %v1196
          %v1758 = vunpack.c.l.b16 %v1209
          %v1759 = vunpack.c.l.b16 %v1218
          %v1760 = vunpack.c.l.b16 %v1231
          %v1761 = vunpack.c.l.b16 %v1240
          %v1762 = vunpack.c.l.b16 %v1253
          %v1763 = vunpack.c.l.b16 %v1262
          %v1764 = vunpack.c.l.b16 %v1275
          %v1765 = vunpack.c.l.b16 %v1284
          %v1766 = vpack.c.b16 %v1735, %v1734
          %v1767 = vpack.c.b16 %v1737, %v1736
          %v1768 = vpack.c.b16 %v1739, %v1738
          %v1769 = vpack.c.b16 %v1741, %v1740
          %v1770 = vpack.c.b16 %v1743, %v1742
          %v1771 = vpack.c.b16 %v1745, %v1744
          %v1772 = vpack.c.b16 %v1747, %v1746
          %v1773 = vpack.c.b16 %v1749, %v1748
          %v1774 = vpack.c.b16 %v1751, %v1750
          %v1775 = vpack.c.b16 %v1753, %v1752
          %v1776 = vpack.c.b16 %v1755, %v1754
          %v1777 = vpack.c.b16 %v1757, %v1756
          %v1778 = vpack.c.b16 %v1759, %v1758
          %v1779 = vpack.c.b16 %v1761, %v1760
          %v1780 = vpack.c.b16 %v1763, %v1762
          %v1781 = vpack.c.b16 %v1765, %v1764
          %1782 = vrot.lane.b32.xlu0 %v1766, 64
          %v1783 = vpop.permute.xlu0 %1782
          %1784 = vrot.lane.b32.xlu0 %v1767, 64
          %v1785 = vpop.permute.xlu0 %1784
          %1786 = vrot.lane.b32.xlu0 %v1768, 64
          %v1787 = vpop.permute.xlu0 %1786
          %1788 = vrot.lane.b32.xlu0 %v1769, 64
          %v1789 = vpop.permute.xlu0 %1788
          %1790 = vrot.lane.b32.xlu0 %v1770, 64
          %v1791 = vpop.permute.xlu0 %1790
          %1792 = vrot.lane.b32.xlu0 %v1771, 64
          %v1793 = vpop.permute.xlu0 %1792
          %1794 = vrot.lane.b32.xlu0 %v1772, 64
          %v1795 = vpop.permute.xlu0 %1794
          %1796 = vrot.lane.b32.xlu0 %v1773, 64
          %v1797 = vpop.permute.xlu0 %1796
          %1798 = vrot.lane.b32.xlu0 %v1774, 64
          %v1799 = vpop.permute.xlu0 %1798
          %1800 = vrot.lane.b32.xlu0 %v1775, 64
          %v1801 = vpop.permute.xlu0 %1800
          %1802 = vrot.lane.b32.xlu0 %v1776, 64
          %v1803 = vpop.permute.xlu0 %1802
          %1804 = vrot.lane.b32.xlu0 %v1777, 64
          %v1805 = vpop.permute.xlu0 %1804
          %1806 = vrot.lane.b32.xlu0 %v1778, 64
          %v1807 = vpop.permute.xlu0 %1806
          %1808 = vrot.lane.b32.xlu0 %v1779, 64
          %v1809 = vpop.permute.xlu0 %1808
          %1810 = vrot.lane.b32.xlu0 %v1780, 64
          %v1811 = vpop.permute.xlu0 %1810
          %1812 = vrot.lane.b32.xlu0 %v1781, 64
          %v1813 = vpop.permute.xlu0 %1812
          %v1814 = vunpack.c.l.b16 %v1346
          %v1815 = vunpack.c.l.b16 %v1355
          %v1816 = vunpack.c.l.b16 %v1368
          %v1817 = vunpack.c.l.b16 %v1377
          %v1818 = vunpack.c.l.b16 %v1390
          %v1819 = vunpack.c.l.b16 %v1399
          %v1820 = vunpack.c.l.b16 %v1412
          %v1821 = vunpack.c.l.b16 %v1421
          %v1822 = vunpack.c.l.b16 %v1434
          %v1823 = vunpack.c.l.b16 %v1443
          %v1824 = vunpack.c.l.b16 %v1456
          %v1825 = vunpack.c.l.b16 %v1465
          %v1826 = vunpack.c.l.b16 %v1478
          %v1827 = vunpack.c.l.b16 %v1487
          %v1828 = vunpack.c.l.b16 %v1500
          %v1829 = vunpack.c.l.b16 %v1509
          %v1830 = vunpack.c.l.b16 %v1522
          %v1831 = vunpack.c.l.b16 %v1531
          %v1832 = vunpack.c.l.b16 %v1544
          %v1833 = vunpack.c.l.b16 %v1553
          %v1834 = vunpack.c.l.b16 %v1566
          %v1835 = vunpack.c.l.b16 %v1575
          %v1836 = vunpack.c.l.b16 %v1588
          %v1837 = vunpack.c.l.b16 %v1597
          %v1838 = vunpack.c.l.b16 %v1610
          %v1839 = vunpack.c.l.b16 %v1619
          %v1840 = vunpack.c.l.b16 %v1632
          %v1841 = vunpack.c.l.b16 %v1641
          %v1842 = vunpack.c.l.b16 %v1654
          %v1843 = vunpack.c.l.b16 %v1663
          %v1844 = vunpack.c.l.b16 %v1676
          %v1845 = vunpack.c.l.b16 %v1685
          %v1846 = vpack.c.b16 %v1815, %v1814
          %v1847 = vpack.c.b16 %v1817, %v1816
          %v1848 = vpack.c.b16 %v1819, %v1818
          %v1849 = vpack.c.b16 %v1821, %v1820
          %v1850 = vpack.c.b16 %v1823, %v1822
          %v1851 = vpack.c.b16 %v1825, %v1824
          %v1852 = vpack.c.b16 %v1827, %v1826
          %v1853 = vpack.c.b16 %v1829, %v1828
          %v1854 = vpack.c.b16 %v1831, %v1830
          %v1855 = vpack.c.b16 %v1833, %v1832
          %v1856 = vpack.c.b16 %v1835, %v1834
          %v1857 = vpack.c.b16 %v1837, %v1836
          %v1858 = vpack.c.b16 %v1839, %v1838
          %v1859 = vpack.c.b16 %v1841, %v1840
          %v1860 = vpack.c.b16 %v1843, %v1842
          %v1861 = vpack.c.b16 %v1845, %v1844
          %vm1862 = vcmask 523264
          %v1865 = vsel %vm1862, %v1718, %v1783
          %v1869 = vsel %vm1862, %v1719, %v1785
          %v1873 = vsel %vm1862, %v1720, %v1787
          %v1877 = vsel %vm1862, %v1721, %v1789
          %v1881 = vsel %vm1862, %v1722, %v1791
          %v1885 = vsel %vm1862, %v1723, %v1793
          %v1889 = vsel %vm1862, %v1724, %v1795
          %v1893 = vsel %vm1862, %v1725, %v1797
          %v1897 = vsel %vm1862, %v1726, %v1799
          %v1901 = vsel %vm1862, %v1727, %v1801
          %v1905 = vsel %vm1862, %v1728, %v1803
          %v1909 = vsel %vm1862, %v1729, %v1805
          %v1913 = vsel %vm1862, %v1730, %v1807
          %v1917 = vsel %vm1862, %v1731, %v1809
          %v1921 = vsel %vm1862, %v1732, %v1811
          %v1925 = vsel %vm1862, %v1733, %v1813
          %v1927 = vld [vmem:[%s287] sm:$0xf]
          %v1928 = vld [vmem:[%s287 + $0x4] sm:$0xf]
          %v1929 = vld [vmem:[%s287 + $0x8] sm:$0xf]
          %v1930 = vld [vmem:[%s287 + $0xc] sm:$0xf]
          %v1931 = vld [vmem:[%s287 + $0x10] sm:$0xf]
          %v1932 = vld [vmem:[%s287 + $0x14] sm:$0xf]
          %v1933 = vld [vmem:[%s287 + $0x18] sm:$0xf]
          %v1934 = vld [vmem:[%s287 + $0x1c] sm:$0xf]
          %v1935 = vld [vmem:[%s287 + $0x20] sm:$0xf]
          %v1936 = vld [vmem:[%s287 + $0x24] sm:$0xf]
          %v1937 = vld [vmem:[%s287 + $0x28] sm:$0xf]
          %v1938 = vld [vmem:[%s287 + $0x2c] sm:$0xf]
          %v1939 = vld [vmem:[%s287 + $0x30] sm:$0xf]
          %v1940 = vld [vmem:[%s287 + $0x34] sm:$0xf]
          %v1941 = vld [vmem:[%s287 + $0x38] sm:$0xf]
          %v1942 = vld [vmem:[%s287 + $0x3c] sm:$0xf]
          %v1943 = vld [vmem:[%s287 + $0x40] sm:$0xf]
          %v1944 = vld [vmem:[%s287 + $0x44] sm:$0xf]
          %v1945 = vld [vmem:[%s287 + $0x48] sm:$0xf]
          %v1946 = vld [vmem:[%s287 + $0x4c] sm:$0xf]
          %v1947 = vld [vmem:[%s287 + $0x50] sm:$0xf]
          %v1948 = vld [vmem:[%s287 + $0x54] sm:$0xf]
          %v1949 = vld [vmem:[%s287 + $0x58] sm:$0xf]
          %v1950 = vld [vmem:[%s287 + $0x5c] sm:$0xf]
          %v1983 = vunpack.c.l.b16 %v482
          %v1984 = vunpack.c.l.b16 %v483
          %v1985 = vunpack.c.l.b16 %v485
          %v1986 = vunpack.c.l.b16 %v486
          %v1987 = vunpack.c.l.b16 %v488
          %v1988 = vunpack.c.l.b16 %v489
          %v1989 = vunpack.c.l.b16 %v491
          %v1990 = vunpack.c.l.b16 %v492
          %v1991 = vunpack.c.l.b16 %v494
          %v1992 = vunpack.c.l.b16 %v495
          %v1993 = vunpack.c.l.b16 %v497
          %v1994 = vunpack.c.l.b16 %v498
          %v1995 = vunpack.c.l.b16 %v500
          %v1996 = vunpack.c.l.b16 %v501
          %v1997 = vunpack.c.l.b16 %v503
          %v1998 = vunpack.c.l.b16 %v504
          %v1999 = vunpack.c.l.b16 %v506
          %v2000 = vunpack.c.l.b16 %v507
          %v2001 = vunpack.c.l.b16 %v509
          %v2002 = vunpack.c.l.b16 %v510
          %v2003 = vunpack.c.l.b16 %v512
          %v2004 = vunpack.c.l.b16 %v513
          %v2005 = vunpack.c.l.b16 %v515
          %v2006 = vunpack.c.l.b16 %v516
          %v2007 = vunpack.c.l.b16 %v518
          %v2008 = vunpack.c.l.b16 %v519
          %v2009 = vunpack.c.l.b16 %v521
          %v2010 = vunpack.c.l.b16 %v522
          %v2011 = vunpack.c.l.b16 %v524
          %v2012 = vunpack.c.l.b16 %v525
          %v2013 = vunpack.c.l.b16 %v527
          %v2014 = vunpack.c.l.b16 %v528
          %v2015 = vpack.c.b16 %v1984, %v1983
          %v2016 = vpack.c.b16 %v1986, %v1985
          %v2017 = vpack.c.b16 %v1988, %v1987
          %v2018 = vpack.c.b16 %v1990, %v1989
          %v2019 = vpack.c.b16 %v1992, %v1991
          %v2020 = vpack.c.b16 %v1994, %v1993
          %v2021 = vpack.c.b16 %v1996, %v1995
          %v2022 = vpack.c.b16 %v1998, %v1997
          %v2023 = vpack.c.b16 %v2000, %v1999
          %v2024 = vpack.c.b16 %v2002, %v2001
          %v2025 = vpack.c.b16 %v2004, %v2003
          %v2026 = vpack.c.b16 %v2006, %v2005
          %v2027 = vpack.c.b16 %v2008, %v2007
          %v2028 = vpack.c.b16 %v2010, %v2009
          %v2029 = vpack.c.b16 %v2012, %v2011
          %v2030 = vpack.c.b16 %v2014, %v2013
          %v2063 = vunpack.c.l.b16 %v886
          %v2064 = vunpack.c.l.b16 %v887
          %v2065 = vunpack.c.l.b16 %v889
          %v2066 = vunpack.c.l.b16 %v890
          %v2067 = vunpack.c.l.b16 %v892
          %v2068 = vunpack.c.l.b16 %v893
          %v2069 = vunpack.c.l.b16 %v895
          %v2070 = vunpack.c.l.b16 %v896
          %v2071 = vunpack.c.l.b16 %v898
          %v2072 = vunpack.c.l.b16 %v899
          %v2073 = vunpack.c.l.b16 %v901
          %v2074 = vunpack.c.l.b16 %v902
          %v2075 = vunpack.c.l.b16 %v904
          %v2076 = vunpack.c.l.b16 %v905
          %v2077 = vunpack.c.l.b16 %v907
          %v2078 = vunpack.c.l.b16 %v908
          %v2079 = vunpack.c.l.b16 %v910
          %v2080 = vunpack.c.l.b16 %v911
          %v2081 = vunpack.c.l.b16 %v913
          %v2082 = vunpack.c.l.b16 %v914
          %v2083 = vunpack.c.l.b16 %v916
          %v2084 = vunpack.c.l.b16 %v917
          %v2085 = vunpack.c.l.b16 %v919
          %v2086 = vunpack.c.l.b16 %v920
          %v2087 = vunpack.c.l.b16 %v922
          %v2088 = vunpack.c.l.b16 %v923
          %v2089 = vunpack.c.l.b16 %v925
          %v2090 = vunpack.c.l.b16 %v926
          %v2091 = vunpack.c.l.b16 %v928
          %v2092 = vunpack.c.l.b16 %v929
          %v2093 = vunpack.c.l.b16 %v931
          %v2094 = vunpack.c.l.b16 %v932
          %v2095 = vpack.c.b16 %v2064, %v2063
          %v2096 = vpack.c.b16 %v2066, %v2065
          %v2097 = vpack.c.b16 %v2068, %v2067
          %v2098 = vpack.c.b16 %v2070, %v2069
          %v2099 = vpack.c.b16 %v2072, %v2071
          %v2100 = vpack.c.b16 %v2074, %v2073
          %v2101 = vpack.c.b16 %v2076, %v2075
          %v2102 = vpack.c.b16 %v2078, %v2077
          %v2103 = vpack.c.b16 %v2080, %v2079
          %v2104 = vpack.c.b16 %v2082, %v2081
          %v2105 = vpack.c.b16 %v2084, %v2083
          %v2106 = vpack.c.b16 %v2086, %v2085
          %v2107 = vpack.c.b16 %v2088, %v2087
          %v2108 = vpack.c.b16 %v2090, %v2089
          %v2109 = vpack.c.b16 %v2092, %v2091
          %v2110 = vpack.c.b16 %v2094, %v2093
          %2111 = vrot.lane.b32.xlu0 %v2095, 64
          %v2112 = vpop.permute.xlu0 %2111
          %2113 = vrot.lane.b32.xlu0 %v2096, 64
          %v2114 = vpop.permute.xlu0 %2113
          %2115 = vrot.lane.b32.xlu0 %v2097, 64
          %v2116 = vpop.permute.xlu0 %2115
          %2117 = vrot.lane.b32.xlu0 %v2098, 64
          %v2118 = vpop.permute.xlu0 %2117
          %2119 = vrot.lane.b32.xlu0 %v2099, 64
          %v2120 = vpop.permute.xlu0 %2119
          %2121 = vrot.lane.b32.xlu0 %v2100, 64
          %v2122 = vpop.permute.xlu0 %2121
          %2123 = vrot.lane.b32.xlu0 %v2101, 64
          %v2124 = vpop.permute.xlu0 %2123
          %2125 = vrot.lane.b32.xlu0 %v2102, 64
          %v2126 = vpop.permute.xlu0 %2125
          %2127 = vrot.lane.b32.xlu0 %v2103, 64
          %v2128 = vpop.permute.xlu0 %2127
          %2129 = vrot.lane.b32.xlu0 %v2104, 64
          %v2130 = vpop.permute.xlu0 %2129
          %2131 = vrot.lane.b32.xlu0 %v2105, 64
          %v2132 = vpop.permute.xlu0 %2131
          %2133 = vrot.lane.b32.xlu0 %v2106, 64
          %v2134 = vpop.permute.xlu0 %2133
          %2135 = vrot.lane.b32.xlu0 %v2107, 64
          %v2136 = vpop.permute.xlu0 %2135
          %2137 = vrot.lane.b32.xlu0 %v2108, 64
          %v2138 = vpop.permute.xlu0 %2137
          %2139 = vrot.lane.b32.xlu0 %v2109, 64
          %v2140 = vpop.permute.xlu0 %2139
          %2141 = vrot.lane.b32.xlu0 %v2110, 64
          %v2142 = vpop.permute.xlu0 %2141
          %v2175 = vunpack.c.l.b16 %v1287
          %v2176 = vunpack.c.l.b16 %v1288
          %v2177 = vunpack.c.l.b16 %v1290
          %v2178 = vunpack.c.l.b16 %v1291
          %v2179 = vunpack.c.l.b16 %v1293
          %v2180 = vunpack.c.l.b16 %v1294
          %v2181 = vunpack.c.l.b16 %v1296
          %v2182 = vunpack.c.l.b16 %v1297
          %v2183 = vunpack.c.l.b16 %v1299
          %v2184 = vunpack.c.l.b16 %v1300
          %v2185 = vunpack.c.l.b16 %v1302
          %v2186 = vunpack.c.l.b16 %v1303
          %v2187 = vunpack.c.l.b16 %v1305
          %v2188 = vunpack.c.l.b16 %v1306
          %v2189 = vunpack.c.l.b16 %v1308
          %v2190 = vunpack.c.l.b16 %v1309
          %v2191 = vunpack.c.l.b16 %v1311
          %v2192 = vunpack.c.l.b16 %v1312
          %v2193 = vunpack.c.l.b16 %v1314
          %v2194 = vunpack.c.l.b16 %v1315
          %v2195 = vunpack.c.l.b16 %v1317
          %v2196 = vunpack.c.l.b16 %v1318
          %v2197 = vunpack.c.l.b16 %v1320
          %v2198 = vunpack.c.l.b16 %v1321
          %v2199 = vunpack.c.l.b16 %v1323
          %v2200 = vunpack.c.l.b16 %v1324
          %v2201 = vunpack.c.l.b16 %v1326
          %v2202 = vunpack.c.l.b16 %v1327
          %v2203 = vunpack.c.l.b16 %v1329
          %v2204 = vunpack.c.l.b16 %v1330
          %v2205 = vunpack.c.l.b16 %v1332
          %v2206 = vunpack.c.l.b16 %v1333
          %v2207 = vpack.c.b16 %v2176, %v2175
          %v2208 = vpack.c.b16 %v2178, %v2177
          %v2209 = vpack.c.b16 %v2180, %v2179
          %v2210 = vpack.c.b16 %v2182, %v2181
          %v2211 = vpack.c.b16 %v2184, %v2183
          %v2212 = vpack.c.b16 %v2186, %v2185
          %v2213 = vpack.c.b16 %v2188, %v2187
          %v2214 = vpack.c.b16 %v2190, %v2189
          %v2215 = vpack.c.b16 %v2192, %v2191
          %v2216 = vpack.c.b16 %v2194, %v2193
          %v2217 = vpack.c.b16 %v2196, %v2195
          %v2218 = vpack.c.b16 %v2198, %v2197
          %v2219 = vpack.c.b16 %v2200, %v2199
          %v2220 = vpack.c.b16 %v2202, %v2201
          %v2221 = vpack.c.b16 %v2204, %v2203
          %v2222 = vpack.c.b16 %v2206, %v2205
          %v2225 = vsel %vm1862, %v2015, %v2112
          %v2229 = vsel %vm1862, %v2016, %v2114
          %v2233 = vsel %vm1862, %v2017, %v2116
          %v2237 = vsel %vm1862, %v2018, %v2118
          %v2241 = vsel %vm1862, %v2019, %v2120
          %v2245 = vsel %vm1862, %v2020, %v2122
          %v2249 = vsel %vm1862, %v2021, %v2124
          %v2253 = vsel %vm1862, %v2022, %v2126
          %v2257 = vsel %vm1862, %v2023, %v2128
          %v2261 = vsel %vm1862, %v2024, %v2130
          %v2265 = vsel %vm1862, %v2025, %v2132
          %v2269 = vsel %vm1862, %v2026, %v2134
          %v2273 = vsel %vm1862, %v2027, %v2136
          %v2277 = vsel %vm1862, %v2028, %v2138
          %v2281 = vsel %vm1862, %v2029, %v2140
          %v2285 = vsel %vm1862, %v2030, %v2142
          %s2287 = scalar_lea.vmem %s287, 96
          %v2288 = vld [vmem:[%s2287] sm:$0xf]
          %v2289 = vld [vmem:[%s2287 + $0x4] sm:$0xf]
          %v2290 = vld [vmem:[%s2287 + $0x8] sm:$0xf]
          %v2291 = vld [vmem:[%s2287 + $0xc] sm:$0xf]
          %v2292 = vld [vmem:[%s2287 + $0x10] sm:$0xf]
          %v2293 = vld [vmem:[%s2287 + $0x14] sm:$0xf]
          %v2294 = vld [vmem:[%s2287 + $0x18] sm:$0xf]
          %v2295 = vld [vmem:[%s2287 + $0x1c] sm:$0xf]
          %v2296 = vld [vmem:[%s2287 + $0x20] sm:$0xf]
          %v2297 = vld [vmem:[%s2287 + $0x24] sm:$0xf]
          %v2298 = vld [vmem:[%s2287 + $0x28] sm:$0xf]
          %v2299 = vld [vmem:[%s2287 + $0x2c] sm:$0xf]
          %v2300 = vld [vmem:[%s2287 + $0x30] sm:$0xf]
          %v2301 = vld [vmem:[%s2287 + $0x34] sm:$0xf]
          %v2302 = vld [vmem:[%s2287 + $0x38] sm:$0xf]
          %v2303 = vld [vmem:[%s2287 + $0x3c] sm:$0xf]
          %v2304 = vld [vmem:[%s2287 + $0x40] sm:$0xf]
          %v2305 = vld [vmem:[%s2287 + $0x44] sm:$0xf]
          %v2306 = vld [vmem:[%s2287 + $0x48] sm:$0xf]
          %v2307 = vld [vmem:[%s2287 + $0x4c] sm:$0xf]
          %v2308 = vld [vmem:[%s2287 + $0x50] sm:$0xf]
          %v2309 = vld [vmem:[%s2287 + $0x54] sm:$0xf]
          %v2310 = vld [vmem:[%s2287 + $0x58] sm:$0xf]
          %v2311 = vld [vmem:[%s2287 + $0x5c] sm:$0xf]
          %v2336 = vunpack.c.l.b16 %v2288
          %v2337 = vunpack.c.l.b16 %v2289
          %v2338 = vunpack.c.l.b16 %v2290
          %v2339 = vunpack.c.l.b16 %v2291
          %v2340 = vunpack.c.l.b16 %v2292
          %v2341 = vunpack.c.l.b16 %v2293
          %v2342 = vunpack.c.l.b16 %v2294
          %v2343 = vunpack.c.l.b16 %v2295
          %v2344 = vunpack.c.l.b16 %v2296
          %v2345 = vunpack.c.l.b16 %v2297
          %v2346 = vunpack.c.l.b16 %v2298
          %v2347 = vunpack.c.l.b16 %v2299
          %v2348 = vunpack.c.l.b16 %v2300
          %v2349 = vunpack.c.l.b16 %v2301
          %v2350 = vunpack.c.l.b16 %v2302
          %v2351 = vunpack.c.l.b16 %v2303
          %v2352 = vunpack.c.l.b16 %v2304
          %v2353 = vunpack.c.l.b16 %v2305
          %v2354 = vunpack.c.l.b16 %v2306
          %v2355 = vunpack.c.l.b16 %v2307
          %v2356 = vunpack.c.l.b16 %v2308
          %v2357 = vunpack.c.l.b16 %v2309
          %v2358 = vunpack.c.l.b16 %v2310
          %v2359 = vunpack.c.l.b16 %v2311
          %v2360 = vpack.c.b16 %v2337, %v2336
          %v2361 = vpack.c.b16 %v2339, %v2338
          %v2362 = vpack.c.b16 %v2341, %v2340
          %v2363 = vpack.c.b16 %v2343, %v2342
          %v2364 = vpack.c.b16 %v2345, %v2344
          %v2365 = vpack.c.b16 %v2347, %v2346
          %v2366 = vpack.c.b16 %v2349, %v2348
          %v2367 = vpack.c.b16 %v2351, %v2350
          %v2368 = vpack.c.b16 %v2353, %v2352
          %v2369 = vpack.c.b16 %v2355, %v2354
          %v2370 = vpack.c.b16 %v2357, %v2356
          %v2371 = vpack.c.b16 %v2359, %v2358
          %v2385 = vsel %vm1862, %v2207, 0
          %v2388 = vsel %vm1862, %v2208, 0
          %v2391 = vsel %vm1862, %v2209, 0
          %v2394 = vsel %vm1862, %v2210, 0
          %v2397 = vsel %vm1862, %v2211, 0
          %v2400 = vsel %vm1862, %v2212, 0
          %v2403 = vsel %vm1862, %v2213, 0
          %v2406 = vsel %vm1862, %v2214, 0
          %v2409 = vsel %vm1862, %v2215, 0
          %v2412 = vsel %vm1862, %v2216, 0
          %v2415 = vsel %vm1862, %v2217, 0
          %v2418 = vsel %vm1862, %v2218, 0
          %v2421 = vsel %vm1862, %v2219, 0
          %v2424 = vsel %vm1862, %v2220, 0
          %v2427 = vsel %vm1862, %v2221, 0
          %v2430 = vsel %vm1862, %v2222, 0
          %2432 = vmatprep.subr.bf16.mxu0 0
          %2433 = vmatpush1.bf16.msra.mxu0 %v2367
          %2434 = vmatprep.subr.bf16.mxu0 0
          %2435 = vmatpush1.bf16.msra.mxu0 %v2366
          %2436 = vmatprep.subr.bf16.mxu0 0
          %2437 = vmatpush1.bf16.msra.mxu0 %v2365
          %2438 = vmatprep.subr.bf16.mxu0 0
          %2439 = vmatpush1.bf16.msra.mxu0 %v2364
          %2440 = vmatprep.subr.bf16.mxu0 0
          %2441 = vmatpush1.bf16.msra.mxu0 %v2363
          %2442 = vmatprep.subr.bf16.mxu0 0
          %2443 = vmatpush1.bf16.msra.mxu0 %v2362
          %2444 = vmatprep.subr.bf16.mxu0 0
          %2445 = vmatpush1.bf16.msra.mxu0 %v2361
          %2446 = vmatprep.subr.bf16.mxu0 0
          %2447 = vmatpush1.bf16.msra.mxu0 %v2360
          %2448 = vmatprep.subr.bf16.mxu0 0
          %2449 = vmatpush2.bf16.msra.mxu0 0
          %2450 = vmatprep.subr.bf16.mxu0 0
          %2451 = vmatpush2.bf16.msra.mxu0 0
          %2452 = vmatprep.subr.bf16.mxu0 0
          %2453 = vmatpush2.bf16.msra.mxu0 0
          %2454 = vmatprep.subr.bf16.mxu0 0
          %2455 = vmatpush2.bf16.msra.mxu0 0
          %2456 = vmatprep.subr.bf16.mxu0 0
          %2457 = vmatpush2.bf16.msra.mxu0 %v2371
          %2458 = vmatprep.subr.bf16.mxu0 0
          %2459 = vmatpush2.bf16.msra.mxu0 %v2370
          %2460 = vmatprep.subr.bf16.mxu0 0
          %2461 = vmatpush2.bf16.msra.mxu0 %v2369
          %2462 = vmatprep.subr.bf16.mxu0 0
          %2463 = vmatpush2.bf16.msra.mxu0 %v2368
          %2464 = vmatprep.mubr.bf16.mxu0 %v2385
          %2465 = vmatmul.mubr.bf16.gmra.mxu0 %v2225
          %v2466 = vpop.f32.mrf.mxu0
          %v2467 = vadd.f32 0.0, %v2466
          %v2468 = vpop.f32.mrf.mxu0
          %v2469 = vpop.f32.mrf.mxu0
          %v2470 = vadd.f32 0.0, %v2469
          %v2471 = vpop.f32.mrf.mxu0
          %2472 = vmatprep.mubr.bf16.mxu0 %v2388
          %2473 = vmatmul.mubr.bf16.gmra.mxu0 %v2229
          %v2474 = vpop.f32.mrf.mxu0
          %v2475 = vadd.f32 0.0, %v2474
          %v2476 = vpop.f32.mrf.mxu0
          %v2477 = vpop.f32.mrf.mxu0
          %v2478 = vadd.f32 0.0, %v2477
          %v2479 = vpop.f32.mrf.mxu0
          %2480 = vmatprep.mubr.bf16.mxu0 %v2391
          %2481 = vmatmul.mubr.bf16.gmra.mxu0 %v2233
          %v2482 = vpop.f32.mrf.mxu0
          %v2483 = vadd.f32 0.0, %v2482
          %v2484 = vpop.f32.mrf.mxu0
          %v2485 = vpop.f32.mrf.mxu0
          %v2486 = vadd.f32 0.0, %v2485
          %v2487 = vpop.f32.mrf.mxu0
          %2488 = vmatprep.mubr.bf16.mxu0 %v2394
          %2489 = vmatmul.mubr.bf16.gmra.mxu0 %v2237
          %v2490 = vpop.f32.mrf.mxu0
          %v2491 = vadd.f32 0.0, %v2490
          %v2492 = vpop.f32.mrf.mxu0
          %v2493 = vpop.f32.mrf.mxu0
          %v2494 = vadd.f32 0.0, %v2493
          %v2495 = vpop.f32.mrf.mxu0
          %2496 = vmatprep.mubr.bf16.mxu0 %v2397
          %2497 = vmatmul.mubr.bf16.gmra.mxu0 %v2241
          %v2498 = vpop.f32.mrf.mxu0
          %v2499 = vadd.f32 0.0, %v2498
          %v2500 = vpop.f32.mrf.mxu0
          %v2501 = vpop.f32.mrf.mxu0
          %v2502 = vadd.f32 0.0, %v2501
          %v2503 = vpop.f32.mrf.mxu0
          %2504 = vmatprep.mubr.bf16.mxu0 %v2400
          %2505 = vmatmul.mubr.bf16.gmra.mxu0 %v2245
          %v2506 = vpop.f32.mrf.mxu0
          %v2507 = vadd.f32 0.0, %v2506
          %v2508 = vpop.f32.mrf.mxu0
          %v2509 = vpop.f32.mrf.mxu0
          %v2510 = vadd.f32 0.0, %v2509
          %v2511 = vpop.f32.mrf.mxu0
          %2512 = vmatprep.mubr.bf16.mxu0 %v2403
          %2513 = vmatmul.mubr.bf16.gmra.mxu0 %v2249
          %v2514 = vpop.f32.mrf.mxu0
          %v2515 = vadd.f32 0.0, %v2514
          %v2516 = vpop.f32.mrf.mxu0
          %v2517 = vpop.f32.mrf.mxu0
          %v2518 = vadd.f32 0.0, %v2517
          %v2519 = vpop.f32.mrf.mxu0
          %2520 = vmatprep.mubr.bf16.mxu0 %v2406
          %2521 = vmatmul.mubr.bf16.gmra.mxu0 %v2253
          %v2522 = vpop.f32.mrf.mxu0
          %v2523 = vadd.f32 0.0, %v2522
          %v2524 = vpop.f32.mrf.mxu0
          %v2525 = vpop.f32.mrf.mxu0
          %v2526 = vadd.f32 0.0, %v2525
          %v2527 = vpop.f32.mrf.mxu0
          %2528 = vmatprep.mubr.bf16.mxu0 %v2409
          %2529 = vmatmul.mubr.bf16.gmra.mxu0 %v2257
          %v2530 = vpop.f32.mrf.mxu0
          %v2531 = vadd.f32 0.0, %v2530
          %v2532 = vpop.f32.mrf.mxu0
          %v2533 = vpop.f32.mrf.mxu0
          %v2534 = vadd.f32 0.0, %v2533
          %v2535 = vpop.f32.mrf.mxu0
          %2536 = vmatprep.mubr.bf16.mxu0 %v2412
          %2537 = vmatmul.mubr.bf16.gmra.mxu0 %v2261
          %v2538 = vpop.f32.mrf.mxu0
          %v2539 = vadd.f32 0.0, %v2538
          %v2540 = vpop.f32.mrf.mxu0
          %v2541 = vpop.f32.mrf.mxu0
          %v2542 = vadd.f32 0.0, %v2541
          %v2543 = vpop.f32.mrf.mxu0
          %2544 = vmatprep.mubr.bf16.mxu0 %v2415
          %2545 = vmatmul.mubr.bf16.gmra.mxu0 %v2265
          %v2546 = vpop.f32.mrf.mxu0
          %v2547 = vadd.f32 0.0, %v2546
          %v2548 = vpop.f32.mrf.mxu0
          %v2549 = vpop.f32.mrf.mxu0
          %v2550 = vadd.f32 0.0, %v2549
          %v2551 = vpop.f32.mrf.mxu0
          %2552 = vmatprep.mubr.bf16.mxu0 %v2418
          %2553 = vmatmul.mubr.bf16.gmra.mxu0 %v2269
          %v2554 = vpop.f32.mrf.mxu0
          %v2555 = vadd.f32 0.0, %v2554
          %v2556 = vpop.f32.mrf.mxu0
          %v2557 = vpop.f32.mrf.mxu0
          %v2558 = vadd.f32 0.0, %v2557
          %v2559 = vpop.f32.mrf.mxu0
          %2560 = vmatprep.mubr.bf16.mxu0 %v2421
          %2561 = vmatmul.mubr.bf16.gmra.mxu0 %v2273
          %v2562 = vpop.f32.mrf.mxu0
          %v2563 = vadd.f32 0.0, %v2562
          %v2564 = vpop.f32.mrf.mxu0
          %v2565 = vpop.f32.mrf.mxu0
          %v2566 = vadd.f32 0.0, %v2565
          %v2567 = vpop.f32.mrf.mxu0
          %2568 = vmatprep.mubr.bf16.mxu0 %v2424
          %2569 = vmatmul.mubr.bf16.gmra.mxu0 %v2277
          %v2570 = vpop.f32.mrf.mxu0
          %v2571 = vadd.f32 0.0, %v2570
          %v2572 = vpop.f32.mrf.mxu0
          %v2573 = vpop.f32.mrf.mxu0
          %v2574 = vadd.f32 0.0, %v2573
          %v2575 = vpop.f32.mrf.mxu0
          %2576 = vmatprep.mubr.bf16.mxu0 %v2427
          %2577 = vmatmul.mubr.bf16.gmra.mxu0 %v2281
          %v2578 = vpop.f32.mrf.mxu0
          %v2579 = vadd.f32 0.0, %v2578
          %v2580 = vpop.f32.mrf.mxu0
          %v2581 = vpop.f32.mrf.mxu0
          %v2582 = vadd.f32 0.0, %v2581
          %v2583 = vpop.f32.mrf.mxu0
          %2584 = vmatprep.mubr.bf16.mxu0 %v2430
          %2585 = vmatmul.mubr.bf16.gmra.mxu0 %v2285
          %v2586 = vpop.f32.mrf.mxu0
          %v2587 = vadd.f32 0.0, %v2586
          %v2588 = vpop.f32.mrf.mxu0
          %v2589 = vpop.f32.mrf.mxu0
          %v2590 = vadd.f32 0.0, %v2589
          %v2591 = vpop.f32.mrf.mxu0
          %2592 = vdwg.mxu0
          %v2617 = vunpack.c.l.b16 %v1927
          %v2618 = vunpack.c.l.b16 %v1928
          %v2619 = vunpack.c.l.b16 %v1929
          %v2620 = vunpack.c.l.b16 %v1930
          %v2621 = vunpack.c.l.b16 %v1931
          %v2622 = vunpack.c.l.b16 %v1932
          %v2623 = vunpack.c.l.b16 %v1933
          %v2624 = vunpack.c.l.b16 %v1934
          %v2625 = vunpack.c.l.b16 %v1935
          %v2626 = vunpack.c.l.b16 %v1936
          %v2627 = vunpack.c.l.b16 %v1937
          %v2628 = vunpack.c.l.b16 %v1938
          %v2629 = vunpack.c.l.b16 %v1939
          %v2630 = vunpack.c.l.b16 %v1940
          %v2631 = vunpack.c.l.b16 %v1941
          %v2632 = vunpack.c.l.b16 %v1942
          %v2633 = vunpack.c.l.b16 %v1943
          %v2634 = vunpack.c.l.b16 %v1944
          %v2635 = vunpack.c.l.b16 %v1945
          %v2636 = vunpack.c.l.b16 %v1946
          %v2637 = vunpack.c.l.b16 %v1947
          %v2638 = vunpack.c.l.b16 %v1948
          %v2639 = vunpack.c.l.b16 %v1949
          %v2640 = vunpack.c.l.b16 %v1950
          %v2641 = vpack.c.b16 %v2618, %v2617
          %v2642 = vpack.c.b16 %v2620, %v2619
          %v2643 = vpack.c.b16 %v2622, %v2621
          %v2644 = vpack.c.b16 %v2624, %v2623
          %v2645 = vpack.c.b16 %v2626, %v2625
          %v2646 = vpack.c.b16 %v2628, %v2627
          %v2647 = vpack.c.b16 %v2630, %v2629
          %v2648 = vpack.c.b16 %v2632, %v2631
          %v2649 = vpack.c.b16 %v2634, %v2633
          %v2650 = vpack.c.b16 %v2636, %v2635
          %v2651 = vpack.c.b16 %v2638, %v2637
          %v2652 = vpack.c.b16 %v2640, %v2639
          %v2666 = vsel %vm1862, %v1846, 0
          %v2669 = vsel %vm1862, %v1847, 0
          %v2672 = vsel %vm1862, %v1848, 0
          %v2675 = vsel %vm1862, %v1849, 0
          %v2678 = vsel %vm1862, %v1850, 0
          %v2681 = vsel %vm1862, %v1851, 0
          %v2684 = vsel %vm1862, %v1852, 0
          %v2687 = vsel %vm1862, %v1853, 0
          %v2690 = vsel %vm1862, %v1854, 0
          %v2693 = vsel %vm1862, %v1855, 0
          %v2696 = vsel %vm1862, %v1856, 0
          %v2699 = vsel %vm1862, %v1857, 0
          %v2702 = vsel %vm1862, %v1858, 0
          %v2705 = vsel %vm1862, %v1859, 0
          %v2708 = vsel %vm1862, %v1860, 0
          %v2711 = vsel %vm1862, %v1861, 0
          %2713 = vmatprep.subr.bf16.mxu0 0
          %2714 = vmatpush1.bf16.msra.mxu0 %v2648
          %2715 = vmatprep.subr.bf16.mxu0 0
          %2716 = vmatpush1.bf16.msra.mxu0 %v2647
          %2717 = vmatprep.subr.bf16.mxu0 0
          %2718 = vmatpush1.bf16.msra.mxu0 %v2646
          %2719 = vmatprep.subr.bf16.mxu0 0
          %2720 = vmatpush1.bf16.msra.mxu0 %v2645
          %2721 = vmatprep.subr.bf16.mxu0 0
          %2722 = vmatpush1.bf16.msra.mxu0 %v2644
          %2723 = vmatprep.subr.bf16.mxu0 0
          %2724 = vmatpush1.bf16.msra.mxu0 %v2643
          %2725 = vmatprep.subr.bf16.mxu0 0
          %2726 = vmatpush1.bf16.msra.mxu0 %v2642
          %2727 = vmatprep.subr.bf16.mxu0 0
          %2728 = vmatpush1.bf16.msra.mxu0 %v2641
          %2729 = vmatprep.subr.bf16.mxu0 0
          %2730 = vmatpush2.bf16.msra.mxu0 0
          %2731 = vmatprep.subr.bf16.mxu0 0
          %2732 = vmatpush2.bf16.msra.mxu0 0
          %2733 = vmatprep.subr.bf16.mxu0 0
          %2734 = vmatpush2.bf16.msra.mxu0 0
          %2735 = vmatprep.subr.bf16.mxu0 0
          %2736 = vmatpush2.bf16.msra.mxu0 0
          %2737 = vmatprep.subr.bf16.mxu0 0
          %2738 = vmatpush2.bf16.msra.mxu0 %v2652
          %2739 = vmatprep.subr.bf16.mxu0 0
          %2740 = vmatpush2.bf16.msra.mxu0 %v2651
          %2741 = vmatprep.subr.bf16.mxu0 0
          %2742 = vmatpush2.bf16.msra.mxu0 %v2650
          %2743 = vmatprep.subr.bf16.mxu0 0
          %2744 = vmatpush2.bf16.msra.mxu0 %v2649
          %2745 = vmatprep.mubr.bf16.mxu0 %v2666
          %2746 = vmatmul.mubr.bf16.gmra.mxu0 %v1865
          %v2747 = vpop.f32.mrf.mxu0
          %v2748 = vadd.f32 %v2467, %v2747
          %v2749 = vpop.f32.mrf.mxu0
          %v2750 = vpop.f32.mrf.mxu0
          %v2751 = vadd.f32 %v2470, %v2750
          %v2752 = vpop.f32.mrf.mxu0
          %2753 = vmatprep.mubr.bf16.mxu0 %v2669
          %2754 = vmatmul.mubr.bf16.gmra.mxu0 %v1869
          %v2755 = vpop.f32.mrf.mxu0
          %v2756 = vadd.f32 %v2475, %v2755
          %v2757 = vpop.f32.mrf.mxu0
          %v2758 = vpop.f32.mrf.mxu0
          %v2759 = vadd.f32 %v2478, %v2758
          %v2760 = vpop.f32.mrf.mxu0
          %2761 = vmatprep.mubr.bf16.mxu0 %v2672
          %2762 = vmatmul.mubr.bf16.gmra.mxu0 %v1873
          %v2763 = vpop.f32.mrf.mxu0
          %v2764 = vadd.f32 %v2483, %v2763
          %v2765 = vpop.f32.mrf.mxu0
          %v2766 = vpop.f32.mrf.mxu0
          %v2767 = vadd.f32 %v2486, %v2766
          %v2768 = vpop.f32.mrf.mxu0
          %2769 = vmatprep.mubr.bf16.mxu0 %v2675
          %2770 = vmatmul.mubr.bf16.gmra.mxu0 %v1877
          %v2771 = vpop.f32.mrf.mxu0
          %v2772 = vadd.f32 %v2491, %v2771
          %v2773 = vpop.f32.mrf.mxu0
          %v2774 = vpop.f32.mrf.mxu0
          %v2775 = vadd.f32 %v2494, %v2774
          %v2776 = vpop.f32.mrf.mxu0
          %2777 = vmatprep.mubr.bf16.mxu0 %v2678
          %2778 = vmatmul.mubr.bf16.gmra.mxu0 %v1881
          %v2779 = vpop.f32.mrf.mxu0
          %v2780 = vadd.f32 %v2499, %v2779
          %v2781 = vpop.f32.mrf.mxu0
          %v2782 = vpop.f32.mrf.mxu0
          %v2783 = vadd.f32 %v2502, %v2782
          %v2784 = vpop.f32.mrf.mxu0
          %2785 = vmatprep.mubr.bf16.mxu0 %v2681
          %2786 = vmatmul.mubr.bf16.gmra.mxu0 %v1885
          %v2787 = vpop.f32.mrf.mxu0
          %v2788 = vadd.f32 %v2507, %v2787
          %v2789 = vpop.f32.mrf.mxu0
          %v2790 = vpop.f32.mrf.mxu0
          %v2791 = vadd.f32 %v2510, %v2790
          %v2792 = vpop.f32.mrf.mxu0
          %2793 = vmatprep.mubr.bf16.mxu0 %v2684
          %2794 = vmatmul.mubr.bf16.gmra.mxu0 %v1889
          %v2795 = vpop.f32.mrf.mxu0
          %v2796 = vadd.f32 %v2515, %v2795
          %v2797 = vpop.f32.mrf.mxu0
          %v2798 = vpop.f32.mrf.mxu0
          %v2799 = vadd.f32 %v2518, %v2798
          %v2800 = vpop.f32.mrf.mxu0
          %2801 = vmatprep.mubr.bf16.mxu0 %v2687
          %2802 = vmatmul.mubr.bf16.gmra.mxu0 %v1893
          %v2803 = vpop.f32.mrf.mxu0
          %v2804 = vadd.f32 %v2523, %v2803
          %v2805 = vpop.f32.mrf.mxu0
          %v2806 = vpop.f32.mrf.mxu0
          %v2807 = vadd.f32 %v2526, %v2806
          %v2808 = vpop.f32.mrf.mxu0
          %2809 = vmatprep.mubr.bf16.mxu0 %v2690
          %2810 = vmatmul.mubr.bf16.gmra.mxu0 %v1897
          %v2811 = vpop.f32.mrf.mxu0
          %v2812 = vadd.f32 %v2531, %v2811
          %v2813 = vpop.f32.mrf.mxu0
          %v2814 = vpop.f32.mrf.mxu0
          %v2815 = vadd.f32 %v2534, %v2814
          %v2816 = vpop.f32.mrf.mxu0
          %2817 = vmatprep.mubr.bf16.mxu0 %v2693
          %2818 = vmatmul.mubr.bf16.gmra.mxu0 %v1901
          %v2819 = vpop.f32.mrf.mxu0
          %v2820 = vadd.f32 %v2539, %v2819
          %v2821 = vpop.f32.mrf.mxu0
          %v2822 = vpop.f32.mrf.mxu0
          %v2823 = vadd.f32 %v2542, %v2822
          %v2824 = vpop.f32.mrf.mxu0
          %2825 = vmatprep.mubr.bf16.mxu0 %v2696
          %2826 = vmatmul.mubr.bf16.gmra.mxu0 %v1905
          %v2827 = vpop.f32.mrf.mxu0
          %v2828 = vadd.f32 %v2547, %v2827
          %v2829 = vpop.f32.mrf.mxu0
          %v2830 = vpop.f32.mrf.mxu0
          %v2831 = vadd.f32 %v2550, %v2830
          %v2832 = vpop.f32.mrf.mxu0
          %2833 = vmatprep.mubr.bf16.mxu0 %v2699
          %2834 = vmatmul.mubr.bf16.gmra.mxu0 %v1909
          %v2835 = vpop.f32.mrf.mxu0
          %v2836 = vadd.f32 %v2555, %v2835
          %v2837 = vpop.f32.mrf.mxu0
          %v2838 = vpop.f32.mrf.mxu0
          %v2839 = vadd.f32 %v2558, %v2838
          %v2840 = vpop.f32.mrf.mxu0
          %2841 = vmatprep.mubr.bf16.mxu0 %v2702
          %2842 = vmatmul.mubr.bf16.gmra.mxu0 %v1913
          %v2843 = vpop.f32.mrf.mxu0
          %v2844 = vadd.f32 %v2563, %v2843
          %v2845 = vpop.f32.mrf.mxu0
          %v2846 = vpop.f32.mrf.mxu0
          %v2847 = vadd.f32 %v2566, %v2846
          %v2848 = vpop.f32.mrf.mxu0
          %2849 = vmatprep.mubr.bf16.mxu0 %v2705
          %2850 = vmatmul.mubr.bf16.gmra.mxu0 %v1917
          %v2851 = vpop.f32.mrf.mxu0
          %v2852 = vadd.f32 %v2571, %v2851
          %v2853 = vpop.f32.mrf.mxu0
          %v2854 = vpop.f32.mrf.mxu0
          %v2855 = vadd.f32 %v2574, %v2854
          %v2856 = vpop.f32.mrf.mxu0
          %2857 = vmatprep.mubr.bf16.mxu0 %v2708
          %2858 = vmatmul.mubr.bf16.gmra.mxu0 %v1921
          %v2859 = vpop.f32.mrf.mxu0
          %v2860 = vadd.f32 %v2579, %v2859
          %v2861 = vpop.f32.mrf.mxu0
          %v2862 = vpop.f32.mrf.mxu0
          %v2863 = vadd.f32 %v2582, %v2862
          %v2864 = vpop.f32.mrf.mxu0
          %2865 = vmatprep.mubr.bf16.mxu0 %v2711
          %2866 = vmatmul.mubr.bf16.gmra.mxu0 %v1925
          %v2867 = vpop.f32.mrf.mxu0
          %v2868 = vadd.f32 %v2587, %v2867
          %v2869 = vpop.f32.mrf.mxu0
          %v2870 = vpop.f32.mrf.mxu0
          %v2871 = vadd.f32 %v2590, %v2870
          %v2872 = vpop.f32.mrf.mxu0
          %2873 = vdwg.mxu0
          %v2874 = vld [vmem:[#allocation2 + $0x4] sm:$0xf]
          %v2875 = vld [vmem:[#allocation2 + $0x8] sm:$0xf]
          %v2876 = vld [vmem:[#allocation2 + $0xc] sm:$0x1]
          %v2877 = vld [vmem:[#allocation2 + $0x14] sm:$0xf]
          %v2878 = vld [vmem:[#allocation2 + $0x18] sm:$0xf]
          %v2879 = vld [vmem:[#allocation2 + $0x1c] sm:$0x1]
          %v2880 = vld [vmem:[#allocation2 + $0x24] sm:$0xf]
          %v2881 = vld [vmem:[#allocation2 + $0x28] sm:$0xf]
          %v2882 = vld [vmem:[#allocation2 + $0x2c] sm:$0x1]
          %v2883 = vld [vmem:[#allocation2 + $0x34] sm:$0xf]
          %v2884 = vld [vmem:[#allocation2 + $0x38] sm:$0xf]
          %v2885 = vld [vmem:[#allocation2 + $0x3c] sm:$0x1]
          %v2886 = vld [vmem:[#allocation2 + $0x44] sm:$0xf]
          %v2887 = vld [vmem:[#allocation2 + $0x48] sm:$0xf]
          %v2888 = vld [vmem:[#allocation2 + $0x4c] sm:$0x1]
          %v2889 = vld [vmem:[#allocation2 + $0x54] sm:$0xf]
          %v2890 = vld [vmem:[#allocation2 + $0x58] sm:$0xf]
          %v2891 = vld [vmem:[#allocation2 + $0x5c] sm:$0x1]
          %v2892 = vld [vmem:[#allocation2 + $0x64] sm:$0xf]
          %v2893 = vld [vmem:[#allocation2 + $0x68] sm:$0xf]
          %v2894 = vld [vmem:[#allocation2 + $0x6c] sm:$0x1]
          %v2895 = vld [vmem:[#allocation2 + $0x74] sm:$0xf]
          %v2896 = vld [vmem:[#allocation2 + $0x78] sm:$0xf]
          %v2897 = vld [vmem:[#allocation2 + $0x7c] sm:$0x1]
          %v2898 = vld [vmem:[#allocation2 + $0x84] sm:$0xf]
          %v2899 = vld [vmem:[#allocation2 + $0x88] sm:$0xf]
          %v2900 = vld [vmem:[#allocation2 + $0x8c] sm:$0x1]
          %v2901 = vld [vmem:[#allocation2 + $0x94] sm:$0xf]
          %v2902 = vld [vmem:[#allocation2 + $0x98] sm:$0xf]
          %v2903 = vld [vmem:[#allocation2 + $0x9c] sm:$0x1]
          %v2904 = vld [vmem:[#allocation2 + $0xa4] sm:$0xf]
          %v2905 = vld [vmem:[#allocation2 + $0xa8] sm:$0xf]
          %v2906 = vld [vmem:[#allocation2 + $0xac] sm:$0x1]
          %v2907 = vld [vmem:[#allocation2 + $0xb4] sm:$0xf]
          %v2908 = vld [vmem:[#allocation2 + $0xb8] sm:$0xf]
          %v2909 = vld [vmem:[#allocation2 + $0xbc] sm:$0x1]
          %v2910 = vld [vmem:[#allocation2 + $0xc4] sm:$0xf]
          %v2911 = vld [vmem:[#allocation2 + $0xc8] sm:$0xf]
          %v2912 = vld [vmem:[#allocation2 + $0xcc] sm:$0x1]
          %v2913 = vld [vmem:[#allocation2 + $0xd4] sm:$0xf]
          %v2914 = vld [vmem:[#allocation2 + $0xd8] sm:$0xf]
          %v2915 = vld [vmem:[#allocation2 + $0xdc] sm:$0x1]
          %v2916 = vld [vmem:[#allocation2 + $0xe4] sm:$0xf]
          %v2917 = vld [vmem:[#allocation2 + $0xe8] sm:$0xf]
          %v2918 = vld [vmem:[#allocation2 + $0xec] sm:$0x1]
          %v2919 = vld [vmem:[#allocation2 + $0xf4] sm:$0xf]
          %v2920 = vld [vmem:[#allocation2 + $0xf8] sm:$0xf]
          %v2921 = vld [vmem:[#allocation2 + $0xfc] sm:$0x1]
          %vm2922 = vsmask.f32 3328
          %vm2923 = vsmask.f32 7440
          %vm2924 = vmor %vm2922, %vm2923
          %v2926 = vshrl.u32 %v2874, 16
          %v2928 = vrot.slane %v2926, 4
          %v2929 = vshll.u32 %v2874, 16
          %v2931 = vrot.slane %v2929, 5
          %v2932 = vor.u32 %v2928, %v2931
          %v2933 = vrot.slane %v2932, 4
          %v2935 = vshll.u32 %v2875, 16
          %v2937 = vrot.slane %v2935, 5
          %v2938 = vsel %vm2924, %v2933, %v2937
          %v2939 = vshrl.u32 %v2875, 16
          %v2941 = vrot.slane %v2939, 4
          %v2942 = vor.u32 %v2941, %v2937
          %v2943 = vrot.slane %v2942, 4
          %v2945 = vshll.u32 %v2876, 16
          %v2947 = vrot.slane %v2945, 5
          %v2948 = vsel %vm2924, %v2943, %v2947
          %v2950 = vshrl.u32 %v2877, 16
          %v2952 = vrot.slane %v2950, 4
          %v2953 = vshll.u32 %v2877, 16
          %v2955 = vrot.slane %v2953, 5
          %v2956 = vor.u32 %v2952, %v2955
          %v2957 = vrot.slane %v2956, 4
          %v2959 = vshll.u32 %v2878, 16
          %v2961 = vrot.slane %v2959, 5
          %v2962 = vsel %vm2924, %v2957, %v2961
          %v2963 = vshrl.u32 %v2878, 16
          %v2965 = vrot.slane %v2963, 4
          %v2966 = vor.u32 %v2965, %v2961
          %v2967 = vrot.slane %v2966, 4
          %v2969 = vshll.u32 %v2879, 16
          %v2971 = vrot.slane %v2969, 5
          %v2972 = vsel %vm2924, %v2967, %v2971
          %v2974 = vshrl.u32 %v2880, 16
          %v2976 = vrot.slane %v2974, 4
          %v2977 = vshll.u32 %v2880, 16
          %v2979 = vrot.slane %v2977, 5
          %v2980 = vor.u32 %v2976, %v2979
          %v2981 = vrot.slane %v2980, 4
          %v2983 = vshll.u32 %v2881, 16
          %v2985 = vrot.slane %v2983, 5
          %v2986 = vsel %vm2924, %v2981, %v2985
          %v2987 = vshrl.u32 %v2881, 16
          %v2989 = vrot.slane %v2987, 4
          %v2990 = vor.u32 %v2989, %v2985
          %v2991 = vrot.slane %v2990, 4
          %v2993 = vshll.u32 %v2882, 16
          %v2995 = vrot.slane %v2993, 5
          %v2996 = vsel %vm2924, %v2991, %v2995
          %v2998 = vshrl.u32 %v2883, 16
          %v3000 = vrot.slane %v2998, 4
          %v3001 = vshll.u32 %v2883, 16
          %v3003 = vrot.slane %v3001, 5
          %v3004 = vor.u32 %v3000, %v3003
          %v3005 = vrot.slane %v3004, 4
          %v3007 = vshll.u32 %v2884, 16
          %v3009 = vrot.slane %v3007, 5
          %v3010 = vsel %vm2924, %v3005, %v3009
          %v3011 = vshrl.u32 %v2884, 16
          %v3013 = vrot.slane %v3011, 4
          %v3014 = vor.u32 %v3013, %v3009
          %v3015 = vrot.slane %v3014, 4
          %v3017 = vshll.u32 %v2885, 16
          %v3019 = vrot.slane %v3017, 5
          %v3020 = vsel %vm2924, %v3015, %v3019
          %v3022 = vshrl.u32 %v2886, 16
          %v3024 = vrot.slane %v3022, 4
          %v3025 = vshll.u32 %v2886, 16
          %v3027 = vrot.slane %v3025, 5
          %v3028 = vor.u32 %v3024, %v3027
          %v3029 = vrot.slane %v3028, 4
          %v3031 = vshll.u32 %v2887, 16
          %v3033 = vrot.slane %v3031, 5
          %v3034 = vsel %vm2924, %v3029, %v3033
          %v3035 = vshrl.u32 %v2887, 16
          %v3037 = vrot.slane %v3035, 4
          %v3038 = vor.u32 %v3037, %v3033
          %v3039 = vrot.slane %v3038, 4
          %v3041 = vshll.u32 %v2888, 16
          %v3043 = vrot.slane %v3041, 5
          %v3044 = vsel %vm2924, %v3039, %v3043
          %v3046 = vshrl.u32 %v2889, 16
          %v3048 = vrot.slane %v3046, 4
          %v3049 = vshll.u32 %v2889, 16
          %v3051 = vrot.slane %v3049, 5
          %v3052 = vor.u32 %v3048, %v3051
          %v3053 = vrot.slane %v3052, 4
          %v3055 = vshll.u32 %v2890, 16
          %v3057 = vrot.slane %v3055, 5
          %v3058 = vsel %vm2924, %v3053, %v3057
          %v3059 = vshrl.u32 %v2890, 16
          %v3061 = vrot.slane %v3059, 4
          %v3062 = vor.u32 %v3061, %v3057
          %v3063 = vrot.slane %v3062, 4
          %v3065 = vshll.u32 %v2891, 16
          %v3067 = vrot.slane %v3065, 5
          %v3068 = vsel %vm2924, %v3063, %v3067
          %v3070 = vshrl.u32 %v2892, 16
          %v3072 = vrot.slane %v3070, 4
          %v3073 = vshll.u32 %v2892, 16
          %v3075 = vrot.slane %v3073, 5
          %v3076 = vor.u32 %v3072, %v3075
          %v3077 = vrot.slane %v3076, 4
          %v3079 = vshll.u32 %v2893, 16
          %v3081 = vrot.slane %v3079, 5
          %v3082 = vsel %vm2924, %v3077, %v3081
          %v3083 = vshrl.u32 %v2893, 16
          %v3085 = vrot.slane %v3083, 4
          %v3086 = vor.u32 %v3085, %v3081
          %v3087 = vrot.slane %v3086, 4
          %v3089 = vshll.u32 %v2894, 16
          %v3091 = vrot.slane %v3089, 5
          %v3092 = vsel %vm2924, %v3087, %v3091
          %v3094 = vshrl.u32 %v2895, 16
          %v3096 = vrot.slane %v3094, 4
          %v3097 = vshll.u32 %v2895, 16
          %v3099 = vrot.slane %v3097, 5
          %v3100 = vor.u32 %v3096, %v3099
          %v3101 = vrot.slane %v3100, 4
          %v3103 = vshll.u32 %v2896, 16
          %v3105 = vrot.slane %v3103, 5
          %v3106 = vsel %vm2924, %v3101, %v3105
          %v3107 = vshrl.u32 %v2896, 16
          %v3109 = vrot.slane %v3107, 4
          %v3110 = vor.u32 %v3109, %v3105
          %v3111 = vrot.slane %v3110, 4
          %v3113 = vshll.u32 %v2897, 16
          %v3115 = vrot.slane %v3113, 5
          %v3116 = vsel %vm2924, %v3111, %v3115
          %v3118 = vshrl.u32 %v2898, 16
          %v3120 = vrot.slane %v3118, 4
          %v3121 = vshll.u32 %v2898, 16
          %v3123 = vrot.slane %v3121, 5
          %v3124 = vor.u32 %v3120, %v3123
          %v3125 = vrot.slane %v3124, 4
          %v3127 = vshll.u32 %v2899, 16
          %v3129 = vrot.slane %v3127, 5
          %v3130 = vsel %vm2924, %v3125, %v3129
          %v3131 = vshrl.u32 %v2899, 16
          %v3133 = vrot.slane %v3131, 4
          %v3134 = vor.u32 %v3133, %v3129
          %v3135 = vrot.slane %v3134, 4
          %v3137 = vshll.u32 %v2900, 16
          %v3139 = vrot.slane %v3137, 5
          %v3140 = vsel %vm2924, %v3135, %v3139
          %v3142 = vshrl.u32 %v2901, 16
          %v3144 = vrot.slane %v3142, 4
          %v3145 = vshll.u32 %v2901, 16
          %v3147 = vrot.slane %v3145, 5
          %v3148 = vor.u32 %v3144, %v3147
          %v3149 = vrot.slane %v3148, 4
          %v3151 = vshll.u32 %v2902, 16
          %v3153 = vrot.slane %v3151, 5
          %v3154 = vsel %vm2924, %v3149, %v3153
          %v3155 = vshrl.u32 %v2902, 16
          %v3157 = vrot.slane %v3155, 4
          %v3158 = vor.u32 %v3157, %v3153
          %v3159 = vrot.slane %v3158, 4
          %v3161 = vshll.u32 %v2903, 16
          %v3163 = vrot.slane %v3161, 5
          %v3164 = vsel %vm2924, %v3159, %v3163
          %v3166 = vshrl.u32 %v2904, 16
          %v3168 = vrot.slane %v3166, 4
          %v3169 = vshll.u32 %v2904, 16
          %v3171 = vrot.slane %v3169, 5
          %v3172 = vor.u32 %v3168, %v3171
          %v3173 = vrot.slane %v3172, 4
          %v3175 = vshll.u32 %v2905, 16
          %v3177 = vrot.slane %v3175, 5
          %v3178 = vsel %vm2924, %v3173, %v3177
          %v3179 = vshrl.u32 %v2905, 16
          %v3181 = vrot.slane %v3179, 4
          %v3182 = vor.u32 %v3181, %v3177
          %v3183 = vrot.slane %v3182, 4
          %v3185 = vshll.u32 %v2906, 16
          %v3187 = vrot.slane %v3185, 5
          %v3188 = vsel %vm2924, %v3183, %v3187
          %v3190 = vshrl.u32 %v2907, 16
          %v3192 = vrot.slane %v3190, 4
          %v3193 = vshll.u32 %v2907, 16
          %v3195 = vrot.slane %v3193, 5
          %v3196 = vor.u32 %v3192, %v3195
          %v3197 = vrot.slane %v3196, 4
          %v3199 = vshll.u32 %v2908, 16
          %v3201 = vrot.slane %v3199, 5
          %v3202 = vsel %vm2924, %v3197, %v3201
          %v3203 = vshrl.u32 %v2908, 16
          %v3205 = vrot.slane %v3203, 4
          %v3206 = vor.u32 %v3205, %v3201
          %v3207 = vrot.slane %v3206, 4
          %v3209 = vshll.u32 %v2909, 16
          %v3211 = vrot.slane %v3209, 5
          %v3212 = vsel %vm2924, %v3207, %v3211
          %v3214 = vshrl.u32 %v2910, 16
          %v3216 = vrot.slane %v3214, 4
          %v3217 = vshll.u32 %v2910, 16
          %v3219 = vrot.slane %v3217, 5
          %v3220 = vor.u32 %v3216, %v3219
          %v3221 = vrot.slane %v3220, 4
          %v3223 = vshll.u32 %v2911, 16
          %v3225 = vrot.slane %v3223, 5
          %v3226 = vsel %vm2924, %v3221, %v3225
          %v3227 = vshrl.u32 %v2911, 16
          %v3229 = vrot.slane %v3227, 4
          %v3230 = vor.u32 %v3229, %v3225
          %v3231 = vrot.slane %v3230, 4
          %v3233 = vshll.u32 %v2912, 16
          %v3235 = vrot.slane %v3233, 5
          %v3236 = vsel %vm2924, %v3231, %v3235
          %v3238 = vshrl.u32 %v2913, 16
          %v3240 = vrot.slane %v3238, 4
          %v3241 = vshll.u32 %v2913, 16
          %v3243 = vrot.slane %v3241, 5
          %v3244 = vor.u32 %v3240, %v3243
          %v3245 = vrot.slane %v3244, 4
          %v3247 = vshll.u32 %v2914, 16
          %v3249 = vrot.slane %v3247, 5
          %v3250 = vsel %vm2924, %v3245, %v3249
          %v3251 = vshrl.u32 %v2914, 16
          %v3253 = vrot.slane %v3251, 4
          %v3254 = vor.u32 %v3253, %v3249
          %v3255 = vrot.slane %v3254, 4
          %v3257 = vshll.u32 %v2915, 16
          %v3259 = vrot.slane %v3257, 5
          %v3260 = vsel %vm2924, %v3255, %v3259
          %v3262 = vshrl.u32 %v2916, 16
          %v3264 = vrot.slane %v3262, 4
          %v3265 = vshll.u32 %v2916, 16
          %v3267 = vrot.slane %v3265, 5
          %v3268 = vor.u32 %v3264, %v3267
          %v3269 = vrot.slane %v3268, 4
          %v3271 = vshll.u32 %v2917, 16
          %v3273 = vrot.slane %v3271, 5
          %v3274 = vsel %vm2924, %v3269, %v3273
          %v3275 = vshrl.u32 %v2917, 16
          %v3277 = vrot.slane %v3275, 4
          %v3278 = vor.u32 %v3277, %v3273
          %v3279 = vrot.slane %v3278, 4
          %v3281 = vshll.u32 %v2918, 16
          %v3283 = vrot.slane %v3281, 5
          %v3284 = vsel %vm2924, %v3279, %v3283
          %v3286 = vshrl.u32 %v2919, 16
          %v3288 = vrot.slane %v3286, 4
          %v3289 = vshll.u32 %v2919, 16
          %v3291 = vrot.slane %v3289, 5
          %v3292 = vor.u32 %v3288, %v3291
          %v3293 = vrot.slane %v3292, 4
          %v3295 = vshll.u32 %v2920, 16
          %v3297 = vrot.slane %v3295, 5
          %v3298 = vsel %vm2924, %v3293, %v3297
          %v3299 = vshrl.u32 %v2920, 16
          %v3301 = vrot.slane %v3299, 4
          %v3302 = vor.u32 %v3301, %v3297
          %v3303 = vrot.slane %v3302, 4
          %v3305 = vshll.u32 %v2921, 16
          %v3307 = vrot.slane %v3305, 5
          %v3308 = vsel %vm2924, %v3303, %v3307
          %v3309 = vld [vmem:[%s884 + $0x4] sm:$0xf]
          %v3310 = vld [vmem:[%s884 + $0x8] sm:$0xf]
          %v3311 = vld [vmem:[%s884 + $0xc] sm:$0x1]
          %v3312 = vld [vmem:[%s884 + $0x14] sm:$0xf]
          %v3313 = vld [vmem:[%s884 + $0x18] sm:$0xf]
          %v3314 = vld [vmem:[%s884 + $0x1c] sm:$0x1]
          %v3315 = vld [vmem:[%s884 + $0x24] sm:$0xf]
          %v3316 = vld [vmem:[%s884 + $0x28] sm:$0xf]
          %v3317 = vld [vmem:[%s884 + $0x2c] sm:$0x1]
          %v3318 = vld [vmem:[%s884 + $0x34] sm:$0xf]
          %v3319 = vld [vmem:[%s884 + $0x38] sm:$0xf]
          %v3320 = vld [vmem:[%s884 + $0x3c] sm:$0x1]
          %v3321 = vld [vmem:[%s884 + $0x44] sm:$0xf]
          %v3322 = vld [vmem:[%s884 + $0x48] sm:$0xf]
          %v3323 = vld [vmem:[%s884 + $0x4c] sm:$0x1]
          %v3324 = vld [vmem:[%s884 + $0x54] sm:$0xf]
          %v3325 = vld [vmem:[%s884 + $0x58] sm:$0xf]
          %v3326 = vld [vmem:[%s884 + $0x5c] sm:$0x1]
          %v3327 = vld [vmem:[%s884 + $0x64] sm:$0xf]
          %v3328 = vld [vmem:[%s884 + $0x68] sm:$0xf]
          %v3329 = vld [vmem:[%s884 + $0x6c] sm:$0x1]
          %v3330 = vld [vmem:[%s884 + $0x74] sm:$0xf]
          %v3331 = vld [vmem:[%s884 + $0x78] sm:$0xf]
          %v3332 = vld [vmem:[%s884 + $0x7c] sm:$0x1]
          %v3333 = vld [vmem:[%s884 + $0x84] sm:$0xf]
          %v3334 = vld [vmem:[%s884 + $0x88] sm:$0xf]
          %v3335 = vld [vmem:[%s884 + $0x8c] sm:$0x1]
          %v3336 = vld [vmem:[%s884 + $0x94] sm:$0xf]
          %v3337 = vld [vmem:[%s884 + $0x98] sm:$0xf]
          %v3338 = vld [vmem:[%s884 + $0x9c] sm:$0x1]
          %v3339 = vld [vmem:[%s884 + $0xa4] sm:$0xf]
          %v3340 = vld [vmem:[%s884 + $0xa8] sm:$0xf]
          %v3341 = vld [vmem:[%s884 + $0xac] sm:$0x1]
          %v3342 = vld [vmem:[%s884 + $0xb4] sm:$0xf]
          %v3343 = vld [vmem:[%s884 + $0xb8] sm:$0xf]
          %v3344 = vld [vmem:[%s884 + $0xbc] sm:$0x1]
          %v3345 = vld [vmem:[%s884 + $0xc4] sm:$0xf]
          %v3346 = vld [vmem:[%s884 + $0xc8] sm:$0xf]
          %v3347 = vld [vmem:[%s884 + $0xcc] sm:$0x1]
          %v3348 = vld [vmem:[%s884 + $0xd4] sm:$0xf]
          %v3349 = vld [vmem:[%s884 + $0xd8] sm:$0xf]
          %v3350 = vld [vmem:[%s884 + $0xdc] sm:$0x1]
          %v3351 = vld [vmem:[%s884 + $0xe4] sm:$0xf]
          %v3352 = vld [vmem:[%s884 + $0xe8] sm:$0xf]
          %v3353 = vld [vmem:[%s884 + $0xec] sm:$0x1]
          %v3354 = vld [vmem:[%s884 + $0xf4] sm:$0xf]
          %v3355 = vld [vmem:[%s884 + $0xf8] sm:$0xf]
          %v3356 = vld [vmem:[%s884 + $0xfc] sm:$0x1]
          %v3358 = vshrl.u32 %v3309, 16
          %v3360 = vrot.slane %v3358, 4
          %v3361 = vshll.u32 %v3309, 16
          %v3363 = vrot.slane %v3361, 5
          %v3364 = vor.u32 %v3360, %v3363
          %v3365 = vrot.slane %v3364, 4
          %v3367 = vshll.u32 %v3310, 16
          %v3369 = vrot.slane %v3367, 5
          %v3370 = vsel %vm2924, %v3365, %v3369
          %v3371 = vshrl.u32 %v3310, 16
          %v3373 = vrot.slane %v3371, 4
          %v3374 = vor.u32 %v3373, %v3369
          %v3375 = vrot.slane %v3374, 4
          %v3377 = vshll.u32 %v3311, 16
          %v3379 = vrot.slane %v3377, 5
          %v3380 = vsel %vm2924, %v3375, %v3379
          %v3382 = vshrl.u32 %v3312, 16
          %v3384 = vrot.slane %v3382, 4
          %v3385 = vshll.u32 %v3312, 16
          %v3387 = vrot.slane %v3385, 5
          %v3388 = vor.u32 %v3384, %v3387
          %v3389 = vrot.slane %v3388, 4
          %v3391 = vshll.u32 %v3313, 16
          %v3393 = vrot.slane %v3391, 5
          %v3394 = vsel %vm2924, %v3389, %v3393
          %v3395 = vshrl.u32 %v3313, 16
          %v3397 = vrot.slane %v3395, 4
          %v3398 = vor.u32 %v3397, %v3393
          %v3399 = vrot.slane %v3398, 4
          %v3401 = vshll.u32 %v3314, 16
          %v3403 = vrot.slane %v3401, 5
          %v3404 = vsel %vm2924, %v3399, %v3403
          %v3406 = vshrl.u32 %v3315, 16
          %v3408 = vrot.slane %v3406, 4
          %v3409 = vshll.u32 %v3315, 16
          %v3411 = vrot.slane %v3409, 5
          %v3412 = vor.u32 %v3408, %v3411
          %v3413 = vrot.slane %v3412, 4
          %v3415 = vshll.u32 %v3316, 16
          %v3417 = vrot.slane %v3415, 5
          %v3418 = vsel %vm2924, %v3413, %v3417
          %v3419 = vshrl.u32 %v3316, 16
          %v3421 = vrot.slane %v3419, 4
          %v3422 = vor.u32 %v3421, %v3417
          %v3423 = vrot.slane %v3422, 4
          %v3425 = vshll.u32 %v3317, 16
          %v3427 = vrot.slane %v3425, 5
          %v3428 = vsel %vm2924, %v3423, %v3427
          %v3430 = vshrl.u32 %v3318, 16
          %v3432 = vrot.slane %v3430, 4
          %v3433 = vshll.u32 %v3318, 16
          %v3435 = vrot.slane %v3433, 5
          %v3436 = vor.u32 %v3432, %v3435
          %v3437 = vrot.slane %v3436, 4
          %v3439 = vshll.u32 %v3319, 16
          %v3441 = vrot.slane %v3439, 5
          %v3442 = vsel %vm2924, %v3437, %v3441
          %v3443 = vshrl.u32 %v3319, 16
          %v3445 = vrot.slane %v3443, 4
          %v3446 = vor.u32 %v3445, %v3441
          %v3447 = vrot.slane %v3446, 4
          %v3449 = vshll.u32 %v3320, 16
          %v3451 = vrot.slane %v3449, 5
          %v3452 = vsel %vm2924, %v3447, %v3451
          %v3454 = vshrl.u32 %v3321, 16
          %v3456 = vrot.slane %v3454, 4
          %v3457 = vshll.u32 %v3321, 16
          %v3459 = vrot.slane %v3457, 5
          %v3460 = vor.u32 %v3456, %v3459
          %v3461 = vrot.slane %v3460, 4
          %v3463 = vshll.u32 %v3322, 16
          %v3465 = vrot.slane %v3463, 5
          %v3466 = vsel %vm2924, %v3461, %v3465
          %v3467 = vshrl.u32 %v3322, 16
          %v3469 = vrot.slane %v3467, 4
          %v3470 = vor.u32 %v3469, %v3465
          %v3471 = vrot.slane %v3470, 4
          %v3473 = vshll.u32 %v3323, 16
          %v3475 = vrot.slane %v3473, 5
          %v3476 = vsel %vm2924, %v3471, %v3475
          %v3478 = vshrl.u32 %v3324, 16
          %v3480 = vrot.slane %v3478, 4
          %v3481 = vshll.u32 %v3324, 16
          %v3483 = vrot.slane %v3481, 5
          %v3484 = vor.u32 %v3480, %v3483
          %v3485 = vrot.slane %v3484, 4
          %v3487 = vshll.u32 %v3325, 16
          %v3489 = vrot.slane %v3487, 5
          %v3490 = vsel %vm2924, %v3485, %v3489
          %v3491 = vshrl.u32 %v3325, 16
          %v3493 = vrot.slane %v3491, 4
          %v3494 = vor.u32 %v3493, %v3489
          %v3495 = vrot.slane %v3494, 4
          %v3497 = vshll.u32 %v3326, 16
          %v3499 = vrot.slane %v3497, 5
          %v3500 = vsel %vm2924, %v3495, %v3499
          %v3502 = vshrl.u32 %v3327, 16
          %v3504 = vrot.slane %v3502, 4
          %v3505 = vshll.u32 %v3327, 16
          %v3507 = vrot.slane %v3505, 5
          %v3508 = vor.u32 %v3504, %v3507
          %v3509 = vrot.slane %v3508, 4
          %v3511 = vshll.u32 %v3328, 16
          %v3513 = vrot.slane %v3511, 5
          %v3514 = vsel %vm2924, %v3509, %v3513
          %v3515 = vshrl.u32 %v3328, 16
          %v3517 = vrot.slane %v3515, 4
          %v3518 = vor.u32 %v3517, %v3513
          %v3519 = vrot.slane %v3518, 4
          %v3521 = vshll.u32 %v3329, 16
          %v3523 = vrot.slane %v3521, 5
          %v3524 = vsel %vm2924, %v3519, %v3523
          %v3526 = vshrl.u32 %v3330, 16
          %v3528 = vrot.slane %v3526, 4
          %v3529 = vshll.u32 %v3330, 16
          %v3531 = vrot.slane %v3529, 5
          %v3532 = vor.u32 %v3528, %v3531
          %v3533 = vrot.slane %v3532, 4
          %v3535 = vshll.u32 %v3331, 16
          %v3537 = vrot.slane %v3535, 5
          %v3538 = vsel %vm2924, %v3533, %v3537
          %v3539 = vshrl.u32 %v3331, 16
          %v3541 = vrot.slane %v3539, 4
          %v3542 = vor.u32 %v3541, %v3537
          %v3543 = vrot.slane %v3542, 4
          %v3545 = vshll.u32 %v3332, 16
          %v3547 = vrot.slane %v3545, 5
          %v3548 = vsel %vm2924, %v3543, %v3547
          %v3550 = vshrl.u32 %v3333, 16
          %v3552 = vrot.slane %v3550, 4
          %v3553 = vshll.u32 %v3333, 16
          %v3555 = vrot.slane %v3553, 5
          %v3556 = vor.u32 %v3552, %v3555
          %v3557 = vrot.slane %v3556, 4
          %v3559 = vshll.u32 %v3334, 16
          %v3561 = vrot.slane %v3559, 5
          %v3562 = vsel %vm2924, %v3557, %v3561
          %v3563 = vshrl.u32 %v3334, 16
          %v3565 = vrot.slane %v3563, 4
          %v3566 = vor.u32 %v3565, %v3561
          %v3567 = vrot.slane %v3566, 4
          %v3569 = vshll.u32 %v3335, 16
          %v3571 = vrot.slane %v3569, 5
          %v3572 = vsel %vm2924, %v3567, %v3571
          %v3574 = vshrl.u32 %v3336, 16
          %v3576 = vrot.slane %v3574, 4
          %v3577 = vshll.u32 %v3336, 16
          %v3579 = vrot.slane %v3577, 5
          %v3580 = vor.u32 %v3576, %v3579
          %v3581 = vrot.slane %v3580, 4
          %v3583 = vshll.u32 %v3337, 16
          %v3585 = vrot.slane %v3583, 5
          %v3586 = vsel %vm2924, %v3581, %v3585
          %v3587 = vshrl.u32 %v3337, 16
          %v3589 = vrot.slane %v3587, 4
          %v3590 = vor.u32 %v3589, %v3585
          %v3591 = vrot.slane %v3590, 4
          %v3593 = vshll.u32 %v3338, 16
          %v3595 = vrot.slane %v3593, 5
          %v3596 = vsel %vm2924, %v3591, %v3595
          %v3598 = vshrl.u32 %v3339, 16
          %v3600 = vrot.slane %v3598, 4
          %v3601 = vshll.u32 %v3339, 16
          %v3603 = vrot.slane %v3601, 5
          %v3604 = vor.u32 %v3600, %v3603
          %v3605 = vrot.slane %v3604, 4
          %v3607 = vshll.u32 %v3340, 16
          %v3609 = vrot.slane %v3607, 5
          %v3610 = vsel %vm2924, %v3605, %v3609
          %v3611 = vshrl.u32 %v3340, 16
          %v3613 = vrot.slane %v3611, 4
          %v3614 = vor.u32 %v3613, %v3609
          %v3615 = vrot.slane %v3614, 4
          %v3617 = vshll.u32 %v3341, 16
          %v3619 = vrot.slane %v3617, 5
          %v3620 = vsel %vm2924, %v3615, %v3619
          %v3622 = vshrl.u32 %v3342, 16
          %v3624 = vrot.slane %v3622, 4
          %v3625 = vshll.u32 %v3342, 16
          %v3627 = vrot.slane %v3625, 5
          %v3628 = vor.u32 %v3624, %v3627
          %v3629 = vrot.slane %v3628, 4
          %v3631 = vshll.u32 %v3343, 16
          %v3633 = vrot.slane %v3631, 5
          %v3634 = vsel %vm2924, %v3629, %v3633
          %v3635 = vshrl.u32 %v3343, 16
          %v3637 = vrot.slane %v3635, 4
          %v3638 = vor.u32 %v3637, %v3633
          %v3639 = vrot.slane %v3638, 4
          %v3641 = vshll.u32 %v3344, 16
          %v3643 = vrot.slane %v3641, 5
          %v3644 = vsel %vm2924, %v3639, %v3643
          %v3646 = vshrl.u32 %v3345, 16
          %v3648 = vrot.slane %v3646, 4
          %v3649 = vshll.u32 %v3345, 16
          %v3651 = vrot.slane %v3649, 5
          %v3652 = vor.u32 %v3648, %v3651
          %v3653 = vrot.slane %v3652, 4
          %v3655 = vshll.u32 %v3346, 16
          %v3657 = vrot.slane %v3655, 5
          %v3658 = vsel %vm2924, %v3653, %v3657
          %v3659 = vshrl.u32 %v3346, 16
          %v3661 = vrot.slane %v3659, 4
          %v3662 = vor.u32 %v3661, %v3657
          %v3663 = vrot.slane %v3662, 4
          %v3665 = vshll.u32 %v3347, 16
          %v3667 = vrot.slane %v3665, 5
          %v3668 = vsel %vm2924, %v3663, %v3667
          %v3670 = vshrl.u32 %v3348, 16
          %v3672 = vrot.slane %v3670, 4
          %v3673 = vshll.u32 %v3348, 16
          %v3675 = vrot.slane %v3673, 5
          %v3676 = vor.u32 %v3672, %v3675
          %v3677 = vrot.slane %v3676, 4
          %v3679 = vshll.u32 %v3349, 16
          %v3681 = vrot.slane %v3679, 5
          %v3682 = vsel %vm2924, %v3677, %v3681
          %v3683 = vshrl.u32 %v3349, 16
          %v3685 = vrot.slane %v3683, 4
          %v3686 = vor.u32 %v3685, %v3681
          %v3687 = vrot.slane %v3686, 4
          %v3689 = vshll.u32 %v3350, 16
          %v3691 = vrot.slane %v3689, 5
          %v3692 = vsel %vm2924, %v3687, %v3691
          %v3694 = vshrl.u32 %v3351, 16
          %v3696 = vrot.slane %v3694, 4
          %v3697 = vshll.u32 %v3351, 16
          %v3699 = vrot.slane %v3697, 5
          %v3700 = vor.u32 %v3696, %v3699
          %v3701 = vrot.slane %v3700, 4
          %v3703 = vshll.u32 %v3352, 16
          %v3705 = vrot.slane %v3703, 5
          %v3706 = vsel %vm2924, %v3701, %v3705
          %v3707 = vshrl.u32 %v3352, 16
          %v3709 = vrot.slane %v3707, 4
          %v3710 = vor.u32 %v3709, %v3705
          %v3711 = vrot.slane %v3710, 4
          %v3713 = vshll.u32 %v3353, 16
          %v3715 = vrot.slane %v3713, 5
          %v3716 = vsel %vm2924, %v3711, %v3715
          %v3718 = vshrl.u32 %v3354, 16
          %v3720 = vrot.slane %v3718, 4
          %v3721 = vshll.u32 %v3354, 16
          %v3723 = vrot.slane %v3721, 5
          %v3724 = vor.u32 %v3720, %v3723
          %v3725 = vrot.slane %v3724, 4
          %v3727 = vshll.u32 %v3355, 16
          %v3729 = vrot.slane %v3727, 5
          %v3730 = vsel %vm2924, %v3725, %v3729
          %v3731 = vshrl.u32 %v3355, 16
          %v3733 = vrot.slane %v3731, 4
          %v3734 = vor.u32 %v3733, %v3729
          %v3735 = vrot.slane %v3734, 4
          %v3737 = vshll.u32 %v3356, 16
          %v3739 = vrot.slane %v3737, 5
          %v3740 = vsel %vm2924, %v3735, %v3739
          %v3741 = vld [vmem:[%s1285 + $0x4] sm:$0xf]
          %v3742 = vld [vmem:[%s1285 + $0x8] sm:$0xf]
          %v3743 = vld [vmem:[%s1285 + $0xc] sm:$0x1]
          %v3744 = vld [vmem:[%s1285 + $0x14] sm:$0xf]
          %v3745 = vld [vmem:[%s1285 + $0x18] sm:$0xf]
          %v3746 = vld [vmem:[%s1285 + $0x1c] sm:$0x1]
          %v3747 = vld [vmem:[%s1285 + $0x24] sm:$0xf]
          %v3748 = vld [vmem:[%s1285 + $0x28] sm:$0xf]
          %v3749 = vld [vmem:[%s1285 + $0x2c] sm:$0x1]
          %v3750 = vld [vmem:[%s1285 + $0x34] sm:$0xf]
          %v3751 = vld [vmem:[%s1285 + $0x38] sm:$0xf]
          %v3752 = vld [vmem:[%s1285 + $0x3c] sm:$0x1]
          %v3753 = vld [vmem:[%s1285 + $0x44] sm:$0xf]
          %v3754 = vld [vmem:[%s1285 + $0x48] sm:$0xf]
          %v3755 = vld [vmem:[%s1285 + $0x4c] sm:$0x1]
          %v3756 = vld [vmem:[%s1285 + $0x54] sm:$0xf]
          %v3757 = vld [vmem:[%s1285 + $0x58] sm:$0xf]
          %v3758 = vld [vmem:[%s1285 + $0x5c] sm:$0x1]
          %v3759 = vld [vmem:[%s1285 + $0x64] sm:$0xf]
          %v3760 = vld [vmem:[%s1285 + $0x68] sm:$0xf]
          %v3761 = vld [vmem:[%s1285 + $0x6c] sm:$0x1]
          %v3762 = vld [vmem:[%s1285 + $0x74] sm:$0xf]
          %v3763 = vld [vmem:[%s1285 + $0x78] sm:$0xf]
          %v3764 = vld [vmem:[%s1285 + $0x7c] sm:$0x1]
          %v3765 = vld [vmem:[%s1285 + $0x84] sm:$0xf]
          %v3766 = vld [vmem:[%s1285 + $0x88] sm:$0xf]
          %v3767 = vld [vmem:[%s1285 + $0x8c] sm:$0x1]
          %v3768 = vld [vmem:[%s1285 + $0x94] sm:$0xf]
          %v3769 = vld [vmem:[%s1285 + $0x98] sm:$0xf]
          %v3770 = vld [vmem:[%s1285 + $0x9c] sm:$0x1]
          %v3771 = vld [vmem:[%s1285 + $0xa4] sm:$0xf]
          %v3772 = vld [vmem:[%s1285 + $0xa8] sm:$0xf]
          %v3773 = vld [vmem:[%s1285 + $0xac] sm:$0x1]
          %v3774 = vld [vmem:[%s1285 + $0xb4] sm:$0xf]
          %v3775 = vld [vmem:[%s1285 + $0xb8] sm:$0xf]
          %v3776 = vld [vmem:[%s1285 + $0xbc] sm:$0x1]
          %v3777 = vld [vmem:[%s1285 + $0xc4] sm:$0xf]
          %v3778 = vld [vmem:[%s1285 + $0xc8] sm:$0xf]
          %v3779 = vld [vmem:[%s1285 + $0xcc] sm:$0x1]
          %v3780 = vld [vmem:[%s1285 + $0xd4] sm:$0xf]
          %v3781 = vld [vmem:[%s1285 + $0xd8] sm:$0xf]
          %v3782 = vld [vmem:[%s1285 + $0xdc] sm:$0x1]
          %v3783 = vld [vmem:[%s1285 + $0xe4] sm:$0xf]
          %v3784 = vld [vmem:[%s1285 + $0xe8] sm:$0xf]
          %v3785 = vld [vmem:[%s1285 + $0xec] sm:$0x1]
          %v3786 = vld [vmem:[%s1285 + $0xf4] sm:$0xf]
          %v3787 = vld [vmem:[%s1285 + $0xf8] sm:$0xf]
          %v3788 = vld [vmem:[%s1285 + $0xfc] sm:$0x1]
          %v3790 = vshrl.u32 %v3741, 16
          %v3792 = vrot.slane %v3790, 4
          %v3793 = vshll.u32 %v3741, 16
          %v3795 = vrot.slane %v3793, 5
          %v3796 = vor.u32 %v3792, %v3795
          %v3797 = vrot.slane %v3796, 4
          %v3799 = vshll.u32 %v3742, 16
          %v3801 = vrot.slane %v3799, 5
          %v3802 = vsel %vm2924, %v3797, %v3801
          %v3803 = vshrl.u32 %v3742, 16
          %v3805 = vrot.slane %v3803, 4
          %v3806 = vor.u32 %v3805, %v3801
          %v3807 = vrot.slane %v3806, 4
          %v3809 = vshll.u32 %v3743, 16
          %v3811 = vrot.slane %v3809, 5
          %v3812 = vsel %vm2924, %v3807, %v3811
          %v3814 = vshrl.u32 %v3744, 16
          %v3816 = vrot.slane %v3814, 4
          %v3817 = vshll.u32 %v3744, 16
          %v3819 = vrot.slane %v3817, 5
          %v3820 = vor.u32 %v3816, %v3819
          %v3821 = vrot.slane %v3820, 4
          %v3823 = vshll.u32 %v3745, 16
          %v3825 = vrot.slane %v3823, 5
          %v3826 = vsel %vm2924, %v3821, %v3825
          %v3827 = vshrl.u32 %v3745, 16
          %v3829 = vrot.slane %v3827, 4
          %v3830 = vor.u32 %v3829, %v3825
          %v3831 = vrot.slane %v3830, 4
          %v3833 = vshll.u32 %v3746, 16
          %v3835 = vrot.slane %v3833, 5
          %v3836 = vsel %vm2924, %v3831, %v3835
          %v3838 = vshrl.u32 %v3747, 16
          %v3840 = vrot.slane %v3838, 4
          %v3841 = vshll.u32 %v3747, 16
          %v3843 = vrot.slane %v3841, 5
          %v3844 = vor.u32 %v3840, %v3843
          %v3845 = vrot.slane %v3844, 4
          %v3847 = vshll.u32 %v3748, 16
          %v3849 = vrot.slane %v3847, 5
          %v3850 = vsel %vm2924, %v3845, %v3849
          %v3851 = vshrl.u32 %v3748, 16
          %v3853 = vrot.slane %v3851, 4
          %v3854 = vor.u32 %v3853, %v3849
          %v3855 = vrot.slane %v3854, 4
          %v3857 = vshll.u32 %v3749, 16
          %v3859 = vrot.slane %v3857, 5
          %v3860 = vsel %vm2924, %v3855, %v3859
          %v3862 = vshrl.u32 %v3750, 16
          %v3864 = vrot.slane %v3862, 4
          %v3865 = vshll.u32 %v3750, 16
          %v3867 = vrot.slane %v3865, 5
          %v3868 = vor.u32 %v3864, %v3867
          %v3869 = vrot.slane %v3868, 4
          %v3871 = vshll.u32 %v3751, 16
          %v3873 = vrot.slane %v3871, 5
          %v3874 = vsel %vm2924, %v3869, %v3873
          %v3875 = vshrl.u32 %v3751, 16
          %v3877 = vrot.slane %v3875, 4
          %v3878 = vor.u32 %v3877, %v3873
          %v3879 = vrot.slane %v3878, 4
          %v3881 = vshll.u32 %v3752, 16
          %v3883 = vrot.slane %v3881, 5
          %v3884 = vsel %vm2924, %v3879, %v3883
          %v3886 = vshrl.u32 %v3753, 16
          %v3888 = vrot.slane %v3886, 4
          %v3889 = vshll.u32 %v3753, 16
          %v3891 = vrot.slane %v3889, 5
          %v3892 = vor.u32 %v3888, %v3891
          %v3893 = vrot.slane %v3892, 4
          %v3895 = vshll.u32 %v3754, 16
          %v3897 = vrot.slane %v3895, 5
          %v3898 = vsel %vm2924, %v3893, %v3897
          %v3899 = vshrl.u32 %v3754, 16
          %v3901 = vrot.slane %v3899, 4
          %v3902 = vor.u32 %v3901, %v3897
          %v3903 = vrot.slane %v3902, 4
          %v3905 = vshll.u32 %v3755, 16
          %v3907 = vrot.slane %v3905, 5
          %v3908 = vsel %vm2924, %v3903, %v3907
          %v3910 = vshrl.u32 %v3756, 16
          %v3912 = vrot.slane %v3910, 4
          %v3913 = vshll.u32 %v3756, 16
          %v3915 = vrot.slane %v3913, 5
          %v3916 = vor.u32 %v3912, %v3915
          %v3917 = vrot.slane %v3916, 4
          %v3919 = vshll.u32 %v3757, 16
          %v3921 = vrot.slane %v3919, 5
          %v3922 = vsel %vm2924, %v3917, %v3921
          %v3923 = vshrl.u32 %v3757, 16
          %v3925 = vrot.slane %v3923, 4
          %v3926 = vor.u32 %v3925, %v3921
          %v3927 = vrot.slane %v3926, 4
          %v3929 = vshll.u32 %v3758, 16
          %v3931 = vrot.slane %v3929, 5
          %v3932 = vsel %vm2924, %v3927, %v3931
          %v3934 = vshrl.u32 %v3759, 16
          %v3936 = vrot.slane %v3934, 4
          %v3937 = vshll.u32 %v3759, 16
          %v3939 = vrot.slane %v3937, 5
          %v3940 = vor.u32 %v3936, %v3939
          %v3941 = vrot.slane %v3940, 4
          %v3943 = vshll.u32 %v3760, 16
          %v3945 = vrot.slane %v3943, 5
          %v3946 = vsel %vm2924, %v3941, %v3945
          %v3947 = vshrl.u32 %v3760, 16
          %v3949 = vrot.slane %v3947, 4
          %v3950 = vor.u32 %v3949, %v3945
          %v3951 = vrot.slane %v3950, 4
          %v3953 = vshll.u32 %v3761, 16
          %v3955 = vrot.slane %v3953, 5
          %v3956 = vsel %vm2924, %v3951, %v3955
          %v3958 = vshrl.u32 %v3762, 16
          %v3960 = vrot.slane %v3958, 4
          %v3961 = vshll.u32 %v3762, 16
          %v3963 = vrot.slane %v3961, 5
          %v3964 = vor.u32 %v3960, %v3963
          %v3965 = vrot.slane %v3964, 4
          %v3967 = vshll.u32 %v3763, 16
          %v3969 = vrot.slane %v3967, 5
          %v3970 = vsel %vm2924, %v3965, %v3969
          %v3971 = vshrl.u32 %v3763, 16
          %v3973 = vrot.slane %v3971, 4
          %v3974 = vor.u32 %v3973, %v3969
          %v3975 = vrot.slane %v3974, 4
          %v3977 = vshll.u32 %v3764, 16
          %v3979 = vrot.slane %v3977, 5
          %v3980 = vsel %vm2924, %v3975, %v3979
          %v3982 = vshrl.u32 %v3765, 16
          %v3984 = vrot.slane %v3982, 4
          %v3985 = vshll.u32 %v3765, 16
          %v3987 = vrot.slane %v3985, 5
          %v3988 = vor.u32 %v3984, %v3987
          %v3989 = vrot.slane %v3988, 4
          %v3991 = vshll.u32 %v3766, 16
          %v3993 = vrot.slane %v3991, 5
          %v3994 = vsel %vm2924, %v3989, %v3993
          %v3995 = vshrl.u32 %v3766, 16
          %v3997 = vrot.slane %v3995, 4
          %v3998 = vor.u32 %v3997, %v3993
          %v3999 = vrot.slane %v3998, 4
          %v4001 = vshll.u32 %v3767, 16
          %v4003 = vrot.slane %v4001, 5
          %v4004 = vsel %vm2924, %v3999, %v4003
          %v4006 = vshrl.u32 %v3768, 16
          %v4008 = vrot.slane %v4006, 4
          %v4009 = vshll.u32 %v3768, 16
          %v4011 = vrot.slane %v4009, 5
          %v4012 = vor.u32 %v4008, %v4011
          %v4013 = vrot.slane %v4012, 4
          %v4015 = vshll.u32 %v3769, 16
          %v4017 = vrot.slane %v4015, 5
          %v4018 = vsel %vm2924, %v4013, %v4017
          %v4019 = vshrl.u32 %v3769, 16
          %v4021 = vrot.slane %v4019, 4
          %v4022 = vor.u32 %v4021, %v4017
          %v4023 = vrot.slane %v4022, 4
          %v4025 = vshll.u32 %v3770, 16
          %v4027 = vrot.slane %v4025, 5
          %v4028 = vsel %vm2924, %v4023, %v4027
          %v4030 = vshrl.u32 %v3771, 16
          %v4032 = vrot.slane %v4030, 4
          %v4033 = vshll.u32 %v3771, 16
          %v4035 = vrot.slane %v4033, 5
          %v4036 = vor.u32 %v4032, %v4035
          %v4037 = vrot.slane %v4036, 4
          %v4039 = vshll.u32 %v3772, 16
          %v4041 = vrot.slane %v4039, 5
          %v4042 = vsel %vm2924, %v4037, %v4041
          %v4043 = vshrl.u32 %v3772, 16
          %v4045 = vrot.slane %v4043, 4
          %v4046 = vor.u32 %v4045, %v4041
          %v4047 = vrot.slane %v4046, 4
          %v4049 = vshll.u32 %v3773, 16
          %v4051 = vrot.slane %v4049, 5
          %v4052 = vsel %vm2924, %v4047, %v4051
          %v4054 = vshrl.u32 %v3774, 16
          %v4056 = vrot.slane %v4054, 4
          %v4057 = vshll.u32 %v3774, 16
          %v4059 = vrot.slane %v4057, 5
          %v4060 = vor.u32 %v4056, %v4059
          %v4061 = vrot.slane %v4060, 4
          %v4063 = vshll.u32 %v3775, 16
          %v4065 = vrot.slane %v4063, 5
          %v4066 = vsel %vm2924, %v4061, %v4065
          %v4067 = vshrl.u32 %v3775, 16
          %v4069 = vrot.slane %v4067, 4
          %v4070 = vor.u32 %v4069, %v4065
          %v4071 = vrot.slane %v4070, 4
          %v4073 = vshll.u32 %v3776, 16
          %v4075 = vrot.slane %v4073, 5
          %v4076 = vsel %vm2924, %v4071, %v4075
          %v4078 = vshrl.u32 %v3777, 16
          %v4080 = vrot.slane %v4078, 4
          %v4081 = vshll.u32 %v3777, 16
          %v4083 = vrot.slane %v4081, 5
          %v4084 = vor.u32 %v4080, %v4083
          %v4085 = vrot.slane %v4084, 4
          %v4087 = vshll.u32 %v3778, 16
          %v4089 = vrot.slane %v4087, 5
          %v4090 = vsel %vm2924, %v4085, %v4089
          %v4091 = vshrl.u32 %v3778, 16
          %v4093 = vrot.slane %v4091, 4
          %v4094 = vor.u32 %v4093, %v4089
          %v4095 = vrot.slane %v4094, 4
          %v4097 = vshll.u32 %v3779, 16
          %v4099 = vrot.slane %v4097, 5
          %v4100 = vsel %vm2924, %v4095, %v4099
          %v4102 = vshrl.u32 %v3780, 16
          %v4104 = vrot.slane %v4102, 4
          %v4105 = vshll.u32 %v3780, 16
          %v4107 = vrot.slane %v4105, 5
          %v4108 = vor.u32 %v4104, %v4107
          %v4109 = vrot.slane %v4108, 4
          %v4111 = vshll.u32 %v3781, 16
          %v4113 = vrot.slane %v4111, 5
          %v4114 = vsel %vm2924, %v4109, %v4113
          %v4115 = vshrl.u32 %v3781, 16
          %v4117 = vrot.slane %v4115, 4
          %v4118 = vor.u32 %v4117, %v4113
          %v4119 = vrot.slane %v4118, 4
          %v4121 = vshll.u32 %v3782, 16
          %v4123 = vrot.slane %v4121, 5
          %v4124 = vsel %vm2924, %v4119, %v4123
          %v4126 = vshrl.u32 %v3783, 16
          %v4128 = vrot.slane %v4126, 4
          %v4129 = vshll.u32 %v3783, 16
          %v4131 = vrot.slane %v4129, 5
          %v4132 = vor.u32 %v4128, %v4131
          %v4133 = vrot.slane %v4132, 4
          %v4135 = vshll.u32 %v3784, 16
          %v4137 = vrot.slane %v4135, 5
          %v4138 = vsel %vm2924, %v4133, %v4137
          %v4139 = vshrl.u32 %v3784, 16
          %v4141 = vrot.slane %v4139, 4
          %v4142 = vor.u32 %v4141, %v4137
          %v4143 = vrot.slane %v4142, 4
          %v4145 = vshll.u32 %v3785, 16
          %v4147 = vrot.slane %v4145, 5
          %v4148 = vsel %vm2924, %v4143, %v4147
          %v4150 = vshrl.u32 %v3786, 16
          %v4152 = vrot.slane %v4150, 4
          %v4153 = vshll.u32 %v3786, 16
          %v4155 = vrot.slane %v4153, 5
          %v4156 = vor.u32 %v4152, %v4155
          %v4157 = vrot.slane %v4156, 4
          %v4159 = vshll.u32 %v3787, 16
          %v4161 = vrot.slane %v4159, 5
          %v4162 = vsel %vm2924, %v4157, %v4161
          %v4163 = vshrl.u32 %v3787, 16
          %v4165 = vrot.slane %v4163, 4
          %v4166 = vor.u32 %v4165, %v4161
          %v4167 = vrot.slane %v4166, 4
          %v4169 = vshll.u32 %v3788, 16
          %v4171 = vrot.slane %v4169, 5
          %v4172 = vsel %vm2924, %v4167, %v4171
          %v4173 = vunpack.c.l.b16 %v2938
          %v4174 = vunpack.c.l.b16 %v2948
          %v4175 = vunpack.c.l.b16 %v2962
          %v4176 = vunpack.c.l.b16 %v2972
          %v4177 = vunpack.c.l.b16 %v2986
          %v4178 = vunpack.c.l.b16 %v2996
          %v4179 = vunpack.c.l.b16 %v3010
          %v4180 = vunpack.c.l.b16 %v3020
          %v4181 = vunpack.c.l.b16 %v3034
          %v4182 = vunpack.c.l.b16 %v3044
          %v4183 = vunpack.c.l.b16 %v3058
          %v4184 = vunpack.c.l.b16 %v3068
          %v4185 = vunpack.c.l.b16 %v3082
          %v4186 = vunpack.c.l.b16 %v3092
          %v4187 = vunpack.c.l.b16 %v3106
          %v4188 = vunpack.c.l.b16 %v3116
          %v4189 = vunpack.c.l.b16 %v3130
          %v4190 = vunpack.c.l.b16 %v3140
          %v4191 = vunpack.c.l.b16 %v3154
          %v4192 = vunpack.c.l.b16 %v3164
          %v4193 = vunpack.c.l.b16 %v3178
          %v4194 = vunpack.c.l.b16 %v3188
          %v4195 = vunpack.c.l.b16 %v3202
          %v4196 = vunpack.c.l.b16 %v3212
          %v4197 = vunpack.c.l.b16 %v3226
          %v4198 = vunpack.c.l.b16 %v3236
          %v4199 = vunpack.c.l.b16 %v3250
          %v4200 = vunpack.c.l.b16 %v3260
          %v4201 = vunpack.c.l.b16 %v3274
          %v4202 = vunpack.c.l.b16 %v3284
          %v4203 = vunpack.c.l.b16 %v3298
          %v4204 = vunpack.c.l.b16 %v3308
          %v4205 = vpack.c.b16 %v4174, %v4173
          %v4206 = vpack.c.b16 %v4176, %v4175
          %v4207 = vpack.c.b16 %v4178, %v4177
          %v4208 = vpack.c.b16 %v4180, %v4179
          %v4209 = vpack.c.b16 %v4182, %v4181
          %v4210 = vpack.c.b16 %v4184, %v4183
          %v4211 = vpack.c.b16 %v4186, %v4185
          %v4212 = vpack.c.b16 %v4188, %v4187
          %v4213 = vpack.c.b16 %v4190, %v4189
          %v4214 = vpack.c.b16 %v4192, %v4191
          %v4215 = vpack.c.b16 %v4194, %v4193
          %v4216 = vpack.c.b16 %v4196, %v4195
          %v4217 = vpack.c.b16 %v4198, %v4197
          %v4218 = vpack.c.b16 %v4200, %v4199
          %v4219 = vpack.c.b16 %v4202, %v4201
          %v4220 = vpack.c.b16 %v4204, %v4203
          %v4221 = vunpack.c.l.b16 %v3370
          %v4222 = vunpack.c.l.b16 %v3380
          %v4223 = vunpack.c.l.b16 %v3394
          %v4224 = vunpack.c.l.b16 %v3404
          %v4225 = vunpack.c.l.b16 %v3418
          %v4226 = vunpack.c.l.b16 %v3428
          %v4227 = vunpack.c.l.b16 %v3442
          %v4228 = vunpack.c.l.b16 %v3452
          %v4229 = vunpack.c.l.b16 %v3466
          %v4230 = vunpack.c.l.b16 %v3476
          %v4231 = vunpack.c.l.b16 %v3490
          %v4232 = vunpack.c.l.b16 %v3500
          %v4233 = vunpack.c.l.b16 %v3514
          %v4234 = vunpack.c.l.b16 %v3524
          %v4235 = vunpack.c.l.b16 %v3538
          %v4236 = vunpack.c.l.b16 %v3548
          %v4237 = vunpack.c.l.b16 %v3562
          %v4238 = vunpack.c.l.b16 %v3572
          %v4239 = vunpack.c.l.b16 %v3586
          %v4240 = vunpack.c.l.b16 %v3596
          %v4241 = vunpack.c.l.b16 %v3610
          %v4242 = vunpack.c.l.b16 %v3620
          %v4243 = vunpack.c.l.b16 %v3634
          %v4244 = vunpack.c.l.b16 %v3644
          %v4245 = vunpack.c.l.b16 %v3658
          %v4246 = vunpack.c.l.b16 %v3668
          %v4247 = vunpack.c.l.b16 %v3682
          %v4248 = vunpack.c.l.b16 %v3692
          %v4249 = vunpack.c.l.b16 %v3706
          %v4250 = vunpack.c.l.b16 %v3716
          %v4251 = vunpack.c.l.b16 %v3730
          %v4252 = vunpack.c.l.b16 %v3740
          %v4253 = vpack.c.b16 %v4222, %v4221
          %v4254 = vpack.c.b16 %v4224, %v4223
          %v4255 = vpack.c.b16 %v4226, %v4225
          %v4256 = vpack.c.b16 %v4228, %v4227
          %v4257 = vpack.c.b16 %v4230, %v4229
          %v4258 = vpack.c.b16 %v4232, %v4231
          %v4259 = vpack.c.b16 %v4234, %v4233
          %v4260 = vpack.c.b16 %v4236, %v4235
          %v4261 = vpack.c.b16 %v4238, %v4237
          %v4262 = vpack.c.b16 %v4240, %v4239
          %v4263 = vpack.c.b16 %v4242, %v4241
          %v4264 = vpack.c.b16 %v4244, %v4243
          %v4265 = vpack.c.b16 %v4246, %v4245
          %v4266 = vpack.c.b16 %v4248, %v4247
          %v4267 = vpack.c.b16 %v4250, %v4249
          %v4268 = vpack.c.b16 %v4252, %v4251
          %4269 = vrot.lane.b32.xlu0 %v4253, 64
          %v4270 = vpop.permute.xlu0 %4269
          %4271 = vrot.lane.b32.xlu0 %v4254, 64
          %v4272 = vpop.permute.xlu0 %4271
          %4273 = vrot.lane.b32.xlu0 %v4255, 64
          %v4274 = vpop.permute.xlu0 %4273
          %4275 = vrot.lane.b32.xlu0 %v4256, 64
          %v4276 = vpop.permute.xlu0 %4275
          %4277 = vrot.lane.b32.xlu0 %v4257, 64
          %v4278 = vpop.permute.xlu0 %4277
          %4279 = vrot.lane.b32.xlu0 %v4258, 64
          %v4280 = vpop.permute.xlu0 %4279
          %4281 = vrot.lane.b32.xlu0 %v4259, 64
          %v4282 = vpop.permute.xlu0 %4281
          %4283 = vrot.lane.b32.xlu0 %v4260, 64
          %v4284 = vpop.permute.xlu0 %4283
          %4285 = vrot.lane.b32.xlu0 %v4261, 64
          %v4286 = vpop.permute.xlu0 %4285
          %4287 = vrot.lane.b32.xlu0 %v4262, 64
          %v4288 = vpop.permute.xlu0 %4287
          %4289 = vrot.lane.b32.xlu0 %v4263, 64
          %v4290 = vpop.permute.xlu0 %4289
          %4291 = vrot.lane.b32.xlu0 %v4264, 64
          %v4292 = vpop.permute.xlu0 %4291
          %4293 = vrot.lane.b32.xlu0 %v4265, 64
          %v4294 = vpop.permute.xlu0 %4293
          %4295 = vrot.lane.b32.xlu0 %v4266, 64
          %v4296 = vpop.permute.xlu0 %4295
          %4297 = vrot.lane.b32.xlu0 %v4267, 64
          %v4298 = vpop.permute.xlu0 %4297
          %4299 = vrot.lane.b32.xlu0 %v4268, 64
          %v4300 = vpop.permute.xlu0 %4299
          %v4301 = vunpack.c.l.b16 %v3802
          %v4302 = vunpack.c.l.b16 %v3812
          %v4303 = vunpack.c.l.b16 %v3826
          %v4304 = vunpack.c.l.b16 %v3836
          %v4305 = vunpack.c.l.b16 %v3850
          %v4306 = vunpack.c.l.b16 %v3860
          %v4307 = vunpack.c.l.b16 %v3874
          %v4308 = vunpack.c.l.b16 %v3884
          %v4309 = vunpack.c.l.b16 %v3898
          %v4310 = vunpack.c.l.b16 %v3908
          %v4311 = vunpack.c.l.b16 %v3922
          %v4312 = vunpack.c.l.b16 %v3932
          %v4313 = vunpack.c.l.b16 %v3946
          %v4314 = vunpack.c.l.b16 %v3956
          %v4315 = vunpack.c.l.b16 %v3970
          %v4316 = vunpack.c.l.b16 %v3980
          %v4317 = vunpack.c.l.b16 %v3994
          %v4318 = vunpack.c.l.b16 %v4004
          %v4319 = vunpack.c.l.b16 %v4018
          %v4320 = vunpack.c.l.b16 %v4028
          %v4321 = vunpack.c.l.b16 %v4042
          %v4322 = vunpack.c.l.b16 %v4052
          %v4323 = vunpack.c.l.b16 %v4066
          %v4324 = vunpack.c.l.b16 %v4076
          %v4325 = vunpack.c.l.b16 %v4090
          %v4326 = vunpack.c.l.b16 %v4100
          %v4327 = vunpack.c.l.b16 %v4114
          %v4328 = vunpack.c.l.b16 %v4124
          %v4329 = vunpack.c.l.b16 %v4138
          %v4330 = vunpack.c.l.b16 %v4148
          %v4331 = vunpack.c.l.b16 %v4162
          %v4332 = vunpack.c.l.b16 %v4172
          %v4333 = vpack.c.b16 %v4302, %v4301
          %v4334 = vpack.c.b16 %v4304, %v4303
          %v4335 = vpack.c.b16 %v4306, %v4305
          %v4336 = vpack.c.b16 %v4308, %v4307
          %v4337 = vpack.c.b16 %v4310, %v4309
          %v4338 = vpack.c.b16 %v4312, %v4311
          %v4339 = vpack.c.b16 %v4314, %v4313
          %v4340 = vpack.c.b16 %v4316, %v4315
          %v4341 = vpack.c.b16 %v4318, %v4317
          %v4342 = vpack.c.b16 %v4320, %v4319
          %v4343 = vpack.c.b16 %v4322, %v4321
          %v4344 = vpack.c.b16 %v4324, %v4323
          %v4345 = vpack.c.b16 %v4326, %v4325
          %v4346 = vpack.c.b16 %v4328, %v4327
          %v4347 = vpack.c.b16 %v4330, %v4329
          %v4348 = vpack.c.b16 %v4332, %v4331
          %v4351 = vsel %vm1862, %v4205, %v4270
          %v4355 = vsel %vm1862, %v4206, %v4272
          %v4359 = vsel %vm1862, %v4207, %v4274
          %v4363 = vsel %vm1862, %v4208, %v4276
          %v4367 = vsel %vm1862, %v4209, %v4278
          %v4371 = vsel %vm1862, %v4210, %v4280
          %v4375 = vsel %vm1862, %v4211, %v4282
          %v4379 = vsel %vm1862, %v4212, %v4284
          %v4383 = vsel %vm1862, %v4213, %v4286
          %v4387 = vsel %vm1862, %v4214, %v4288
          %v4391 = vsel %vm1862, %v4215, %v4290
          %v4395 = vsel %vm1862, %v4216, %v4292
          %v4399 = vsel %vm1862, %v4217, %v4294
          %v4403 = vsel %vm1862, %v4218, %v4296
          %v4407 = vsel %vm1862, %v4219, %v4298
          %v4411 = vsel %vm1862, %v4220, %v4300
          %s4413 = scalar_lea.vmem %s287, 192
          %v4414 = vld [vmem:[%s4413] sm:$0xf]
          %v4415 = vld [vmem:[%s4413 + $0x4] sm:$0xf]
          %v4416 = vld [vmem:[%s4413 + $0x8] sm:$0xf]
          %v4417 = vld [vmem:[%s4413 + $0xc] sm:$0xf]
          %v4418 = vld [vmem:[%s4413 + $0x10] sm:$0xf]
          %v4419 = vld [vmem:[%s4413 + $0x14] sm:$0xf]
          %v4420 = vld [vmem:[%s4413 + $0x18] sm:$0xf]
          %v4421 = vld [vmem:[%s4413 + $0x1c] sm:$0xf]
          %v4422 = vld [vmem:[%s4413 + $0x20] sm:$0xf]
          %v4423 = vld [vmem:[%s4413 + $0x24] sm:$0xf]
          %v4424 = vld [vmem:[%s4413 + $0x28] sm:$0xf]
          %v4425 = vld [vmem:[%s4413 + $0x2c] sm:$0xf]
          %v4426 = vld [vmem:[%s4413 + $0x30] sm:$0xf]
          %v4427 = vld [vmem:[%s4413 + $0x34] sm:$0xf]
          %v4428 = vld [vmem:[%s4413 + $0x38] sm:$0xf]
          %v4429 = vld [vmem:[%s4413 + $0x3c] sm:$0xf]
          %v4430 = vld [vmem:[%s4413 + $0x40] sm:$0xf]
          %v4431 = vld [vmem:[%s4413 + $0x44] sm:$0xf]
          %v4432 = vld [vmem:[%s4413 + $0x48] sm:$0xf]
          %v4433 = vld [vmem:[%s4413 + $0x4c] sm:$0xf]
          %v4434 = vld [vmem:[%s4413 + $0x50] sm:$0xf]
          %v4435 = vld [vmem:[%s4413 + $0x54] sm:$0xf]
          %v4436 = vld [vmem:[%s4413 + $0x58] sm:$0xf]
          %v4437 = vld [vmem:[%s4413 + $0x5c] sm:$0xf]
          %v4462 = vunpack.c.l.b16 %v4414
          %v4463 = vunpack.c.l.b16 %v4415
          %v4464 = vunpack.c.l.b16 %v4416
          %v4465 = vunpack.c.l.b16 %v4417
          %v4466 = vunpack.c.l.b16 %v4418
          %v4467 = vunpack.c.l.b16 %v4419
          %v4468 = vunpack.c.l.b16 %v4420
          %v4469 = vunpack.c.l.b16 %v4421
          %v4470 = vunpack.c.l.b16 %v4422
          %v4471 = vunpack.c.l.b16 %v4423
          %v4472 = vunpack.c.l.b16 %v4424
          %v4473 = vunpack.c.l.b16 %v4425
          %v4474 = vunpack.c.l.b16 %v4426
          %v4475 = vunpack.c.l.b16 %v4427
          %v4476 = vunpack.c.l.b16 %v4428
          %v4477 = vunpack.c.l.b16 %v4429
          %v4478 = vunpack.c.l.b16 %v4430
          %v4479 = vunpack.c.l.b16 %v4431
          %v4480 = vunpack.c.l.b16 %v4432
          %v4481 = vunpack.c.l.b16 %v4433
          %v4482 = vunpack.c.l.b16 %v4434
          %v4483 = vunpack.c.l.b16 %v4435
          %v4484 = vunpack.c.l.b16 %v4436
          %v4485 = vunpack.c.l.b16 %v4437
          %v4486 = vpack.c.b16 %v4463, %v4462
          %v4487 = vpack.c.b16 %v4465, %v4464
          %v4488 = vpack.c.b16 %v4467, %v4466
          %v4489 = vpack.c.b16 %v4469, %v4468
          %v4490 = vpack.c.b16 %v4471, %v4470
          %v4491 = vpack.c.b16 %v4473, %v4472
          %v4492 = vpack.c.b16 %v4475, %v4474
          %v4493 = vpack.c.b16 %v4477, %v4476
          %v4494 = vpack.c.b16 %v4479, %v4478
          %v4495 = vpack.c.b16 %v4481, %v4480
          %v4496 = vpack.c.b16 %v4483, %v4482
          %v4497 = vpack.c.b16 %v4485, %v4484
          %v4511 = vsel %vm1862, %v4333, 0
          %v4514 = vsel %vm1862, %v4334, 0
          %v4517 = vsel %vm1862, %v4335, 0
          %v4520 = vsel %vm1862, %v4336, 0
          %v4523 = vsel %vm1862, %v4337, 0
          %v4526 = vsel %vm1862, %v4338, 0
          %v4529 = vsel %vm1862, %v4339, 0
          %v4532 = vsel %vm1862, %v4340, 0
          %v4535 = vsel %vm1862, %v4341, 0
          %v4538 = vsel %vm1862, %v4342, 0
          %v4541 = vsel %vm1862, %v4343, 0
          %v4544 = vsel %vm1862, %v4344, 0
          %v4547 = vsel %vm1862, %v4345, 0
          %v4550 = vsel %vm1862, %v4346, 0
          %v4553 = vsel %vm1862, %v4347, 0
          %v4556 = vsel %vm1862, %v4348, 0
          %4558 = vmatprep.subr.bf16.mxu0 0
          %4559 = vmatpush1.bf16.msra.mxu0 %v4493
          %4560 = vmatprep.subr.bf16.mxu0 0
          %4561 = vmatpush1.bf16.msra.mxu0 %v4492
          %4562 = vmatprep.subr.bf16.mxu0 0
          %4563 = vmatpush1.bf16.msra.mxu0 %v4491
          %4564 = vmatprep.subr.bf16.mxu0 0
          %4565 = vmatpush1.bf16.msra.mxu0 %v4490
          %4566 = vmatprep.subr.bf16.mxu0 0
          %4567 = vmatpush1.bf16.msra.mxu0 %v4489
          %4568 = vmatprep.subr.bf16.mxu0 0
          %4569 = vmatpush1.bf16.msra.mxu0 %v4488
          %4570 = vmatprep.subr.bf16.mxu0 0
          %4571 = vmatpush1.bf16.msra.mxu0 %v4487
          %4572 = vmatprep.subr.bf16.mxu0 0
          %4573 = vmatpush1.bf16.msra.mxu0 %v4486
          %4574 = vmatprep.subr.bf16.mxu0 0
          %4575 = vmatpush2.bf16.msra.mxu0 0
          %4576 = vmatprep.subr.bf16.mxu0 0
          %4577 = vmatpush2.bf16.msra.mxu0 0
          %4578 = vmatprep.subr.bf16.mxu0 0
          %4579 = vmatpush2.bf16.msra.mxu0 0
          %4580 = vmatprep.subr.bf16.mxu0 0
          %4581 = vmatpush2.bf16.msra.mxu0 0
          %4582 = vmatprep.subr.bf16.mxu0 0
          %4583 = vmatpush2.bf16.msra.mxu0 %v4497
          %4584 = vmatprep.subr.bf16.mxu0 0
          %4585 = vmatpush2.bf16.msra.mxu0 %v4496
          %4586 = vmatprep.subr.bf16.mxu0 0
          %4587 = vmatpush2.bf16.msra.mxu0 %v4495
          %4588 = vmatprep.subr.bf16.mxu0 0
          %4589 = vmatpush2.bf16.msra.mxu0 %v4494
          %4590 = vmatprep.mubr.bf16.mxu0 %v4511
          %4591 = vmatmul.mubr.bf16.gmra.mxu0 %v4351
          %v4592 = vpop.f32.mrf.mxu0
          %v4593 = vadd.f32 0.0, %v4592
          %v4594 = vpop.f32.mrf.mxu0
          %v4595 = vpop.f32.mrf.mxu0
          %v4596 = vadd.f32 0.0, %v4595
          %v4597 = vpop.f32.mrf.mxu0
          %4598 = vmatprep.mubr.bf16.mxu0 %v4514
          %4599 = vmatmul.mubr.bf16.gmra.mxu0 %v4355
          %v4600 = vpop.f32.mrf.mxu0
          %v4601 = vadd.f32 0.0, %v4600
          %v4602 = vpop.f32.mrf.mxu0
          %v4603 = vpop.f32.mrf.mxu0
          %v4604 = vadd.f32 0.0, %v4603
          %v4605 = vpop.f32.mrf.mxu0
          %4606 = vmatprep.mubr.bf16.mxu0 %v4517
          %4607 = vmatmul.mubr.bf16.gmra.mxu0 %v4359
          %v4608 = vpop.f32.mrf.mxu0
          %v4609 = vadd.f32 0.0, %v4608
          %v4610 = vpop.f32.mrf.mxu0
          %v4611 = vpop.f32.mrf.mxu0
          %v4612 = vadd.f32 0.0, %v4611
          %v4613 = vpop.f32.mrf.mxu0
          %4614 = vmatprep.mubr.bf16.mxu0 %v4520
          %4615 = vmatmul.mubr.bf16.gmra.mxu0 %v4363
          %v4616 = vpop.f32.mrf.mxu0
          %v4617 = vadd.f32 0.0, %v4616
          %v4618 = vpop.f32.mrf.mxu0
          %v4619 = vpop.f32.mrf.mxu0
          %v4620 = vadd.f32 0.0, %v4619
          %v4621 = vpop.f32.mrf.mxu0
          %4622 = vmatprep.mubr.bf16.mxu0 %v4523
          %4623 = vmatmul.mubr.bf16.gmra.mxu0 %v4367
          %v4624 = vpop.f32.mrf.mxu0
          %v4625 = vadd.f32 0.0, %v4624
          %v4626 = vpop.f32.mrf.mxu0
          %v4627 = vpop.f32.mrf.mxu0
          %v4628 = vadd.f32 0.0, %v4627
          %v4629 = vpop.f32.mrf.mxu0
          %4630 = vmatprep.mubr.bf16.mxu0 %v4526
          %4631 = vmatmul.mubr.bf16.gmra.mxu0 %v4371
          %v4632 = vpop.f32.mrf.mxu0
          %v4633 = vadd.f32 0.0, %v4632
          %v4634 = vpop.f32.mrf.mxu0
          %v4635 = vpop.f32.mrf.mxu0
          %v4636 = vadd.f32 0.0, %v4635
          %v4637 = vpop.f32.mrf.mxu0
          %4638 = vmatprep.mubr.bf16.mxu0 %v4529
          %4639 = vmatmul.mubr.bf16.gmra.mxu0 %v4375
          %v4640 = vpop.f32.mrf.mxu0
          %v4641 = vadd.f32 0.0, %v4640
          %v4642 = vpop.f32.mrf.mxu0
          %v4643 = vpop.f32.mrf.mxu0
          %v4644 = vadd.f32 0.0, %v4643
          %v4645 = vpop.f32.mrf.mxu0
          %4646 = vmatprep.mubr.bf16.mxu0 %v4532
          %4647 = vmatmul.mubr.bf16.gmra.mxu0 %v4379
          %v4648 = vpop.f32.mrf.mxu0
          %v4649 = vadd.f32 0.0, %v4648
          %v4650 = vpop.f32.mrf.mxu0
          %v4651 = vpop.f32.mrf.mxu0
          %v4652 = vadd.f32 0.0, %v4651
          %v4653 = vpop.f32.mrf.mxu0
          %4654 = vmatprep.mubr.bf16.mxu0 %v4535
          %4655 = vmatmul.mubr.bf16.gmra.mxu0 %v4383
          %v4656 = vpop.f32.mrf.mxu0
          %v4657 = vadd.f32 0.0, %v4656
          %v4658 = vpop.f32.mrf.mxu0
          %v4659 = vpop.f32.mrf.mxu0
          %v4660 = vadd.f32 0.0, %v4659
          %v4661 = vpop.f32.mrf.mxu0
          %4662 = vmatprep.mubr.bf16.mxu0 %v4538
          %4663 = vmatmul.mubr.bf16.gmra.mxu0 %v4387
          %v4664 = vpop.f32.mrf.mxu0
          %v4665 = vadd.f32 0.0, %v4664
          %v4666 = vpop.f32.mrf.mxu0
          %v4667 = vpop.f32.mrf.mxu0
          %v4668 = vadd.f32 0.0, %v4667
          %v4669 = vpop.f32.mrf.mxu0
          %4670 = vmatprep.mubr.bf16.mxu0 %v4541
          %4671 = vmatmul.mubr.bf16.gmra.mxu0 %v4391
          %v4672 = vpop.f32.mrf.mxu0
          %v4673 = vadd.f32 0.0, %v4672
          %v4674 = vpop.f32.mrf.mxu0
          %v4675 = vpop.f32.mrf.mxu0
          %v4676 = vadd.f32 0.0, %v4675
          %v4677 = vpop.f32.mrf.mxu0
          %4678 = vmatprep.mubr.bf16.mxu0 %v4544
          %4679 = vmatmul.mubr.bf16.gmra.mxu0 %v4395
          %v4680 = vpop.f32.mrf.mxu0
          %v4681 = vadd.f32 0.0, %v4680
          %v4682 = vpop.f32.mrf.mxu0
          %v4683 = vpop.f32.mrf.mxu0
          %v4684 = vadd.f32 0.0, %v4683
          %v4685 = vpop.f32.mrf.mxu0
          %4686 = vmatprep.mubr.bf16.mxu0 %v4547
          %4687 = vmatmul.mubr.bf16.gmra.mxu0 %v4399
          %v4688 = vpop.f32.mrf.mxu0
          %v4689 = vadd.f32 0.0, %v4688
          %v4690 = vpop.f32.mrf.mxu0
          %v4691 = vpop.f32.mrf.mxu0
          %v4692 = vadd.f32 0.0, %v4691
          %v4693 = vpop.f32.mrf.mxu0
          %4694 = vmatprep.mubr.bf16.mxu0 %v4550
          %4695 = vmatmul.mubr.bf16.gmra.mxu0 %v4403
          %v4696 = vpop.f32.mrf.mxu0
          %v4697 = vadd.f32 0.0, %v4696
          %v4698 = vpop.f32.mrf.mxu0
          %v4699 = vpop.f32.mrf.mxu0
          %v4700 = vadd.f32 0.0, %v4699
          %v4701 = vpop.f32.mrf.mxu0
          %4702 = vmatprep.mubr.bf16.mxu0 %v4553
          %4703 = vmatmul.mubr.bf16.gmra.mxu0 %v4407
          %v4704 = vpop.f32.mrf.mxu0
          %v4705 = vadd.f32 0.0, %v4704
          %v4706 = vpop.f32.mrf.mxu0
          %v4707 = vpop.f32.mrf.mxu0
          %v4708 = vadd.f32 0.0, %v4707
          %v4709 = vpop.f32.mrf.mxu0
          %4710 = vmatprep.mubr.bf16.mxu0 %v4556
          %4711 = vmatmul.mubr.bf16.gmra.mxu0 %v4411
          %v4712 = vpop.f32.mrf.mxu0
          %v4713 = vadd.f32 0.0, %v4712
          %v4714 = vpop.f32.mrf.mxu0
          %v4715 = vpop.f32.mrf.mxu0
          %v4716 = vadd.f32 0.0, %v4715
          %v4717 = vpop.f32.mrf.mxu0
          %4718 = vdwg.mxu0
          %v4719 = vadd.f32 %v2748, %v4593
          %v4720 = vadd.f32 %v2751, %v4596
          %v4721 = vadd.f32 %v2756, %v4601
          %v4722 = vadd.f32 %v2759, %v4604
          %v4723 = vadd.f32 %v2764, %v4609
          %v4724 = vadd.f32 %v2767, %v4612
          %v4725 = vadd.f32 %v2772, %v4617
          %v4726 = vadd.f32 %v2775, %v4620
          %v4727 = vadd.f32 %v2780, %v4625
          %v4728 = vadd.f32 %v2783, %v4628
          %v4729 = vadd.f32 %v2788, %v4633
          %v4730 = vadd.f32 %v2791, %v4636
          %v4731 = vadd.f32 %v2796, %v4641
          %v4732 = vadd.f32 %v2799, %v4644
          %v4733 = vadd.f32 %v2804, %v4649
          %v4734 = vadd.f32 %v2807, %v4652
          %v4735 = vadd.f32 %v2812, %v4657
          %v4736 = vadd.f32 %v2815, %v4660
          %v4737 = vadd.f32 %v2820, %v4665
          %v4738 = vadd.f32 %v2823, %v4668
          %v4739 = vadd.f32 %v2828, %v4673
          %v4740 = vadd.f32 %v2831, %v4676
          %v4741 = vadd.f32 %v2836, %v4681
          %v4742 = vadd.f32 %v2839, %v4684
          %v4743 = vadd.f32 %v2844, %v4689
          %v4744 = vadd.f32 %v2847, %v4692
          %v4745 = vadd.f32 %v2852, %v4697
          %v4746 = vadd.f32 %v2855, %v4700
          %v4747 = vadd.f32 %v2860, %v4705
          %v4748 = vadd.f32 %v2863, %v4708
          %v4749 = vadd.f32 %v2868, %v4713
          %v4750 = vadd.f32 %v2871, %v4716
          %v4751 = vunpack.c.l.bf16 %v886
          %v4752 = vunpack.c.l.bf16 %v887
          %v4753 = vunpack.c.l.bf16 %v889
          %v4754 = vunpack.c.l.bf16 %v890
          %v4755 = vunpack.c.l.bf16 %v892
          %v4756 = vunpack.c.l.bf16 %v893
          %v4757 = vunpack.c.l.bf16 %v895
          %v4758 = vunpack.c.l.bf16 %v896
          %v4759 = vunpack.c.l.bf16 %v898
          %v4760 = vunpack.c.l.bf16 %v899
          %v4761 = vunpack.c.l.bf16 %v901
          %v4762 = vunpack.c.l.bf16 %v902
          %v4763 = vunpack.c.l.bf16 %v904
          %v4764 = vunpack.c.l.bf16 %v905
          %v4765 = vunpack.c.l.bf16 %v907
          %v4766 = vunpack.c.l.bf16 %v908
          %v4767 = vunpack.c.l.bf16 %v910
          %v4768 = vunpack.c.l.bf16 %v911
          %v4769 = vunpack.c.l.bf16 %v913
          %v4770 = vunpack.c.l.bf16 %v914
          %v4771 = vunpack.c.l.bf16 %v916
          %v4772 = vunpack.c.l.bf16 %v917
          %v4773 = vunpack.c.l.bf16 %v919
          %v4774 = vunpack.c.l.bf16 %v920
          %v4775 = vunpack.c.l.bf16 %v922
          %v4776 = vunpack.c.l.bf16 %v923
          %v4777 = vunpack.c.l.bf16 %v925
          %v4778 = vunpack.c.l.bf16 %v926
          %v4779 = vunpack.c.l.bf16 %v928
          %v4780 = vunpack.c.l.bf16 %v929
          %v4781 = vunpack.c.l.bf16 %v931
          %v4782 = vunpack.c.l.bf16 %v932
          %v4783 = vstv %s464
          %v4784 = vmul.f32 %v4783, %v4751
          %v4785 = vmul.f32 %v4783, %v4752
          %v4786 = vmul.f32 %v4783, %v4753
          %v4787 = vmul.f32 %v4783, %v4754
          %v4788 = vmul.f32 %v4783, %v4755
          %v4789 = vmul.f32 %v4783, %v4756
          %v4790 = vmul.f32 %v4783, %v4757
          %v4791 = vmul.f32 %v4783, %v4758
          %v4792 = vmul.f32 %v4783, %v4759
          %v4793 = vmul.f32 %v4783, %v4760
          %v4794 = vmul.f32 %v4783, %v4761
          %v4795 = vmul.f32 %v4783, %v4762
          %v4796 = vmul.f32 %v4783, %v4763
          %v4797 = vmul.f32 %v4783, %v4764
          %v4798 = vmul.f32 %v4783, %v4765
          %v4799 = vmul.f32 %v4783, %v4766
          %v4800 = vmul.f32 %v4783, %v4767
          %v4801 = vmul.f32 %v4783, %v4768
          %v4802 = vmul.f32 %v4783, %v4769
          %v4803 = vmul.f32 %v4783, %v4770
          %v4804 = vmul.f32 %v4783, %v4771
          %v4805 = vmul.f32 %v4783, %v4772
          %v4806 = vmul.f32 %v4783, %v4773
          %v4807 = vmul.f32 %v4783, %v4774
          %v4808 = vmul.f32 %v4783, %v4775
          %v4809 = vmul.f32 %v4783, %v4776
          %v4810 = vmul.f32 %v4783, %v4777
          %v4811 = vmul.f32 %v4783, %v4778
          %v4812 = vmul.f32 %v4783, %v4779
          %v4813 = vmul.f32 %v4783, %v4780
          %v4814 = vmul.f32 %v4783, %v4781
          %v4815 = vmul.f32 %v4783, %v4782
          %v4816 = vadd.f32 %v4719, %v4784
          %v4817 = vadd.f32 %v4720, %v4785
          %v4818 = vadd.f32 %v4721, %v4786
          %v4819 = vadd.f32 %v4722, %v4787
          %v4820 = vadd.f32 %v4723, %v4788
          %v4821 = vadd.f32 %v4724, %v4789
          %v4822 = vadd.f32 %v4725, %v4790
          %v4823 = vadd.f32 %v4726, %v4791
          %v4824 = vadd.f32 %v4727, %v4792
          %v4825 = vadd.f32 %v4728, %v4793
          %v4826 = vadd.f32 %v4729, %v4794
          %v4827 = vadd.f32 %v4730, %v4795
          %v4828 = vadd.f32 %v4731, %v4796
          %v4829 = vadd.f32 %v4732, %v4797
          %v4830 = vadd.f32 %v4733, %v4798
          %v4831 = vadd.f32 %v4734, %v4799
          %v4832 = vadd.f32 %v4735, %v4800
          %v4833 = vadd.f32 %v4736, %v4801
          %v4834 = vadd.f32 %v4737, %v4802
          %v4835 = vadd.f32 %v4738, %v4803
          %v4836 = vadd.f32 %v4739, %v4804
          %v4837 = vadd.f32 %v4740, %v4805
          %v4838 = vadd.f32 %v4741, %v4806
          %v4839 = vadd.f32 %v4742, %v4807
          %v4840 = vadd.f32 %v4743, %v4808
          %v4841 = vadd.f32 %v4744, %v4809
          %v4842 = vadd.f32 %v4745, %v4810
          %v4843 = vadd.f32 %v4746, %v4811
          %v4844 = vadd.f32 %v4747, %v4812
          %v4845 = vadd.f32 %v4748, %v4813
          %v4846 = vadd.f32 %v4749, %v4814
          %v4847 = vadd.f32 %v4750, %v4815
          %v4848 = vld [vmem:[%s290] sm:$0x1]
          %v4850 = vlaneseq
          %v4851 = vshrl.u32 %v4850, 7
          %v4852 = vsub.s32 0, %v4851
          %v4853 = vrot.slane %v4848, %v4852
          %v4855 = vmul.f32 %v4816, %v4853
          %v4856 = vmul.f32 %v4817, %v4853
          %v4857 = vmul.f32 %v4818, %v4853
          %v4858 = vmul.f32 %v4819, %v4853
          %v4859 = vmul.f32 %v4820, %v4853
          %v4860 = vmul.f32 %v4821, %v4853
          %v4861 = vmul.f32 %v4822, %v4853
          %v4862 = vmul.f32 %v4823, %v4853
          %v4863 = vmul.f32 %v4824, %v4853
          %v4864 = vmul.f32 %v4825, %v4853
          %v4865 = vmul.f32 %v4826, %v4853
          %v4866 = vmul.f32 %v4827, %v4853
          %v4867 = vmul.f32 %v4828, %v4853
          %v4868 = vmul.f32 %v4829, %v4853
          %v4869 = vmul.f32 %v4830, %v4853
          %v4870 = vmul.f32 %v4831, %v4853
          %v4871 = vmul.f32 %v4832, %v4853
          %v4872 = vmul.f32 %v4833, %v4853
          %v4873 = vmul.f32 %v4834, %v4853
          %v4874 = vmul.f32 %v4835, %v4853
          %v4875 = vmul.f32 %v4836, %v4853
          %v4876 = vmul.f32 %v4837, %v4853
          %v4877 = vmul.f32 %v4838, %v4853
          %v4878 = vmul.f32 %v4839, %v4853
          %v4879 = vmul.f32 %v4840, %v4853
          %v4880 = vmul.f32 %v4841, %v4853
          %v4881 = vmul.f32 %v4842, %v4853
          %v4882 = vmul.f32 %v4843, %v4853
          %v4883 = vmul.f32 %v4844, %v4853
          %v4884 = vmul.f32 %v4845, %v4853
          %v4885 = vmul.f32 %v4846, %v4853
          %v4886 = vmul.f32 %v4847, %v4853
          %v4887 = vld [vmem:[%s293] sm:$0x1]
          %v4889 = vlaneseq
          %v4890 = vshrl.u32 %v4889, 7
          %v4891 = vsub.s32 0, %v4890
          %v4892 = vrot.slane %v4887, %v4891
          %v4894 = vadd.f32 %v4855, %v4892
          %v4895 = vadd.f32 %v4856, %v4892
          %v4896 = vadd.f32 %v4857, %v4892
          %v4897 = vadd.f32 %v4858, %v4892
          %v4898 = vadd.f32 %v4859, %v4892
          %v4899 = vadd.f32 %v4860, %v4892
          %v4900 = vadd.f32 %v4861, %v4892
          %v4901 = vadd.f32 %v4862, %v4892
          %v4902 = vadd.f32 %v4863, %v4892
          %v4903 = vadd.f32 %v4864, %v4892
          %v4904 = vadd.f32 %v4865, %v4892
          %v4905 = vadd.f32 %v4866, %v4892
          %v4906 = vadd.f32 %v4867, %v4892
          %v4907 = vadd.f32 %v4868, %v4892
          %v4908 = vadd.f32 %v4869, %v4892
          %v4909 = vadd.f32 %v4870, %v4892
          %v4910 = vadd.f32 %v4871, %v4892
          %v4911 = vadd.f32 %v4872, %v4892
          %v4912 = vadd.f32 %v4873, %v4892
          %v4913 = vadd.f32 %v4874, %v4892
          %v4914 = vadd.f32 %v4875, %v4892
          %v4915 = vadd.f32 %v4876, %v4892
          %v4916 = vadd.f32 %v4877, %v4892
          %v4917 = vadd.f32 %v4878, %v4892
          %v4918 = vadd.f32 %v4879, %v4892
          %v4919 = vadd.f32 %v4880, %v4892
          %v4920 = vadd.f32 %v4881, %v4892
          %v4921 = vadd.f32 %v4882, %v4892
          %v4922 = vadd.f32 %v4883, %v4892
          %v4923 = vadd.f32 %v4884, %v4892
          %v4924 = vadd.f32 %v4885, %v4892
          %v4925 = vadd.f32 %v4886, %v4892
          %vm4926 = vcmp.ge.f32.partialorder %v4894, 0.0
          %vm4927 = vcmp.ge.f32.partialorder %v4895, 0.0
          %vm4928 = vcmp.ge.f32.partialorder %v4896, 0.0
          %vm4929 = vcmp.ge.f32.partialorder %v4897, 0.0
          %vm4930 = vcmp.ge.f32.partialorder %v4898, 0.0
          %vm4931 = vcmp.ge.f32.partialorder %v4899, 0.0
          %vm4932 = vcmp.ge.f32.partialorder %v4900, 0.0
          %vm4933 = vcmp.ge.f32.partialorder %v4901, 0.0
          %vm4934 = vcmp.ge.f32.partialorder %v4902, 0.0
          %vm4935 = vcmp.ge.f32.partialorder %v4903, 0.0
          %vm4936 = vcmp.ge.f32.partialorder %v4904, 0.0
          %vm4937 = vcmp.ge.f32.partialorder %v4905, 0.0
          %vm4938 = vcmp.ge.f32.partialorder %v4906, 0.0
          %vm4939 = vcmp.ge.f32.partialorder %v4907, 0.0
          %vm4940 = vcmp.ge.f32.partialorder %v4908, 0.0
          %vm4941 = vcmp.ge.f32.partialorder %v4909, 0.0
          %vm4942 = vcmp.ge.f32.partialorder %v4910, 0.0
          %vm4943 = vcmp.ge.f32.partialorder %v4911, 0.0
          %vm4944 = vcmp.ge.f32.partialorder %v4912, 0.0
          %vm4945 = vcmp.ge.f32.partialorder %v4913, 0.0
          %vm4946 = vcmp.ge.f32.partialorder %v4914, 0.0
          %vm4947 = vcmp.ge.f32.partialorder %v4915, 0.0
          %vm4948 = vcmp.ge.f32.partialorder %v4916, 0.0
          %vm4949 = vcmp.ge.f32.partialorder %v4917, 0.0
          %vm4950 = vcmp.ge.f32.partialorder %v4918, 0.0
          %vm4951 = vcmp.ge.f32.partialorder %v4919, 0.0
          %vm4952 = vcmp.ge.f32.partialorder %v4920, 0.0
          %vm4953 = vcmp.ge.f32.partialorder %v4921, 0.0
          %vm4954 = vcmp.ge.f32.partialorder %v4922, 0.0
          %vm4955 = vcmp.ge.f32.partialorder %v4923, 0.0
          %vm4956 = vcmp.ge.f32.partialorder %v4924, 0.0
          %vm4957 = vcmp.ge.f32.partialorder %v4925, 0.0
          %v4958 = vld [vmem:[%s296] sm:$0x1]
          %v4960 = vlaneseq
          %v4961 = vshrl.u32 %v4960, 7
          %v4962 = vsub.s32 0, %v4961
          %v4963 = vrot.slane %v4958, %v4962
          %v4965 = vmul.f32 %v4894, %v4963
          %v4966 = vmul.f32 %v4895, %v4963
          %v4967 = vmul.f32 %v4896, %v4963
          %v4968 = vmul.f32 %v4897, %v4963
          %v4969 = vmul.f32 %v4898, %v4963
          %v4970 = vmul.f32 %v4899, %v4963
          %v4971 = vmul.f32 %v4900, %v4963
          %v4972 = vmul.f32 %v4901, %v4963
          %v4973 = vmul.f32 %v4902, %v4963
          %v4974 = vmul.f32 %v4903, %v4963
          %v4975 = vmul.f32 %v4904, %v4963
          %v4976 = vmul.f32 %v4905, %v4963
          %v4977 = vmul.f32 %v4906, %v4963
          %v4978 = vmul.f32 %v4907, %v4963
          %v4979 = vmul.f32 %v4908, %v4963
          %v4980 = vmul.f32 %v4909, %v4963
          %v4981 = vmul.f32 %v4910, %v4963
          %v4982 = vmul.f32 %v4911, %v4963
          %v4983 = vmul.f32 %v4912, %v4963
          %v4984 = vmul.f32 %v4913, %v4963
          %v4985 = vmul.f32 %v4914, %v4963
          %v4986 = vmul.f32 %v4915, %v4963
          %v4987 = vmul.f32 %v4916, %v4963
          %v4988 = vmul.f32 %v4917, %v4963
          %v4989 = vmul.f32 %v4918, %v4963
          %v4990 = vmul.f32 %v4919, %v4963
          %v4991 = vmul.f32 %v4920, %v4963
          %v4992 = vmul.f32 %v4921, %v4963
          %v4993 = vmul.f32 %v4922, %v4963
          %v4994 = vmul.f32 %v4923, %v4963
          %v4995 = vmul.f32 %v4924, %v4963
          %v4996 = vmul.f32 %v4925, %v4963
          %v4997 = vsel %vm4926, %v4894, %v4965
          %v4998 = vsel %vm4927, %v4895, %v4966
          %v4999 = vsel %vm4928, %v4896, %v4967
          %v5000 = vsel %vm4929, %v4897, %v4968
          %v5001 = vsel %vm4930, %v4898, %v4969
          %v5002 = vsel %vm4931, %v4899, %v4970
          %v5003 = vsel %vm4932, %v4900, %v4971
          %v5004 = vsel %vm4933, %v4901, %v4972
          %v5005 = vsel %vm4934, %v4902, %v4973
          %v5006 = vsel %vm4935, %v4903, %v4974
          %v5007 = vsel %vm4936, %v4904, %v4975
          %v5008 = vsel %vm4937, %v4905, %v4976
          %v5009 = vsel %vm4938, %v4906, %v4977
          %v5010 = vsel %vm4939, %v4907, %v4978
          %v5011 = vsel %vm4940, %v4908, %v4979
          %v5012 = vsel %vm4941, %v4909, %v4980
          %v5013 = vsel %vm4942, %v4910, %v4981
          %v5014 = vsel %vm4943, %v4911, %v4982
          %v5015 = vsel %vm4944, %v4912, %v4983
          %v5016 = vsel %vm4945, %v4913, %v4984
          %v5017 = vsel %vm4946, %v4914, %v4985
          %v5018 = vsel %vm4947, %v4915, %v4986
          %v5019 = vsel %vm4948, %v4916, %v4987
          %v5020 = vsel %vm4949, %v4917, %v4988
          %v5021 = vsel %vm4950, %v4918, %v4989
          %v5022 = vsel %vm4951, %v4919, %v4990
          %v5023 = vsel %vm4952, %v4920, %v4991
          %v5024 = vsel %vm4953, %v4921, %v4992
          %v5025 = vsel %vm4954, %v4922, %v4993
          %v5026 = vsel %vm4955, %v4923, %v4994
          %v5027 = vsel %vm4956, %v4924, %v4995
          %v5028 = vsel %vm4957, %v4925, %v4996
          %p5029 = scmp.eq.s32.totalorder %s24, 5
          // Predicated region
          $region49: #{tpu_custom_call.1} parent=47 // pred_check
            %p5030 = pneg %p5029
          $region50: #{tpu_custom_call.1} parent=47 // pred_check_branch
            %5032 = sbr.rel (%p5030) target = $region52
          $region51: #{tpu_custom_call.1} parent=47 // pred_region
            %5033 = vst.msk [vmem:[%s277] sm:$0xff] %vm1862, %v4997
            %5034 = vst.msk [vmem:[%s277 + $0x8] sm:$0xff] %vm1862, %v4998
            %5035 = vst.msk [vmem:[%s277 + $0x10] sm:$0xff] %vm1862, %v4999
            %5036 = vst.msk [vmem:[%s277 + $0x18] sm:$0xff] %vm1862, %v5000
            %5037 = vst.msk [vmem:[%s277 + $0x20] sm:$0xff] %vm1862, %v5001
            %5038 = vst.msk [vmem:[%s277 + $0x28] sm:$0xff] %vm1862, %v5002
            %5039 = vst.msk [vmem:[%s277 + $0x30] sm:$0xff] %vm1862, %v5003
            %5040 = vst.msk [vmem:[%s277 + $0x38] sm:$0xff] %vm1862, %v5004
            %5041 = vst.msk [vmem:[%s277 + $0x40] sm:$0xff] %vm1862, %v5005
            %5042 = vst.msk [vmem:[%s277 + $0x48] sm:$0xff] %vm1862, %v5006
            %5043 = vst.msk [vmem:[%s277 + $0x50] sm:$0xff] %vm1862, %v5007
            %5044 = vst.msk [vmem:[%s277 + $0x58] sm:$0xff] %vm1862, %v5008
            %5045 = vst.msk [vmem:[%s277 + $0x60] sm:$0xff] %vm1862, %v5009
            %5046 = vst.msk [vmem:[%s277 + $0x68] sm:$0xff] %vm1862, %v5010
            %5047 = vst.msk [vmem:[%s277 + $0x70] sm:$0xff] %vm1862, %v5011
            %5048 = vst.msk [vmem:[%s277 + $0x78] sm:$0xff] %vm1862, %v5012
            %5049 = vst.msk [vmem:[%s277 + $0x80] sm:$0xff] %vm1862, %v5013
            %5050 = vst.msk [vmem:[%s277 + $0x88] sm:$0xff] %vm1862, %v5014
            %5051 = vst.msk [vmem:[%s277 + $0x90] sm:$0xff] %vm1862, %v5015
            %5052 = vst.msk [vmem:[%s277 + $0x98] sm:$0xff] %vm1862, %v5016
            %5053 = vst.msk [vmem:[%s277 + $0xa0] sm:$0xff] %vm1862, %v5017
            %5054 = vst.msk [vmem:[%s277 + $0xa8] sm:$0xff] %vm1862, %v5018
            %5055 = vst.msk [vmem:[%s277 + $0xb0] sm:$0xff] %vm1862, %v5019
            %5056 = vst.msk [vmem:[%s277 + $0xb8] sm:$0xff] %vm1862, %v5020
            %5057 = vst.msk [vmem:[%s277 + $0xc0] sm:$0xff] %vm1862, %v5021
            %5058 = vst.msk [vmem:[%s277 + $0xc8] sm:$0xff] %vm1862, %v5022
            %5059 = vst.msk [vmem:[%s277 + $0xd0] sm:$0xff] %vm1862, %v5023
            %5060 = vst.msk [vmem:[%s277 + $0xd8] sm:$0xff] %vm1862, %v5024
            %5061 = vst.msk [vmem:[%s277 + $0xe0] sm:$0xff] %vm1862, %v5025
            %5062 = vst.msk [vmem:[%s277 + $0xe8] sm:$0xff] %vm1862, %v5026
            %5063 = vst.msk [vmem:[%s277 + $0xf0] sm:$0xff] %vm1862, %v5027
            %5064 = vst.msk [vmem:[%s277 + $0xf8] sm:$0xff] %vm1862, %v5028
          $region52: #{tpu_custom_call.1} parent=47 // pred_fallthru
            _
          // Predicated region
          $region53: #{tpu_custom_call.1} parent=47 // pred_check
            %p5065 = pneg %p460
          $region54: #{tpu_custom_call.1} parent=47 // pred_check_branch
            %5067 = sbr.rel (%p5065) target = $region56
          $region55: #{tpu_custom_call.1} parent=47 // pred_region
            %v5068 = vpack.c.bf16 %v4998, %v4997
            %v5069 = vpack.c.bf16 %v5000, %v4999
            %v5070 = vpack.c.bf16 %v5002, %v5001
            %v5071 = vpack.c.bf16 %v5004, %v5003
            %v5072 = vpack.c.bf16 %v5006, %v5005
            %v5073 = vpack.c.bf16 %v5008, %v5007
            %v5074 = vpack.c.bf16 %v5010, %v5009
            %v5075 = vpack.c.bf16 %v5012, %v5011
            %v5076 = vpack.c.bf16 %v5014, %v5013
            %v5077 = vpack.c.bf16 %v5016, %v5015
            %v5078 = vpack.c.bf16 %v5018, %v5017
            %v5079 = vpack.c.bf16 %v5020, %v5019
            %v5080 = vpack.c.bf16 %v5022, %v5021
            %v5081 = vpack.c.bf16 %v5024, %v5023
            %v5082 = vpack.c.bf16 %v5026, %v5025
            %v5083 = vpack.c.bf16 %v5028, %v5027
            %v5100 = vunpack.c.l.b16 %v5068
            %v5101 = vunpack.c.h.b16 %v5068
            %v5102 = vunpack.c.l.b16 %v5069
            %v5103 = vunpack.c.h.b16 %v5069
            %v5104 = vunpack.c.l.b16 %v5070
            %v5105 = vunpack.c.h.b16 %v5070
            %v5106 = vunpack.c.l.b16 %v5071
            %v5107 = vunpack.c.h.b16 %v5071
            %v5108 = vunpack.c.l.b16 %v5072
            %v5109 = vunpack.c.h.b16 %v5072
            %v5110 = vunpack.c.l.b16 %v5073
            %v5111 = vunpack.c.h.b16 %v5073
            %v5112 = vunpack.c.l.b16 %v5074
            %v5113 = vunpack.c.h.b16 %v5074
            %v5114 = vunpack.c.l.b16 %v5075
            %v5115 = vunpack.c.h.b16 %v5075
            %v5116 = vunpack.c.l.b16 %v5076
            %v5117 = vunpack.c.h.b16 %v5076
            %v5118 = vunpack.c.l.b16 %v5077
            %v5119 = vunpack.c.h.b16 %v5077
            %v5120 = vunpack.c.l.b16 %v5078
            %v5121 = vunpack.c.h.b16 %v5078
            %v5122 = vunpack.c.l.b16 %v5079
            %v5123 = vunpack.c.h.b16 %v5079
            %v5124 = vunpack.c.l.b16 %v5080
            %v5125 = vunpack.c.h.b16 %v5080
            %v5126 = vunpack.c.l.b16 %v5081
            %v5127 = vunpack.c.h.b16 %v5081
            %v5128 = vunpack.c.l.b16 %v5082
            %v5129 = vunpack.c.h.b16 %v5082
            %v5130 = vunpack.c.l.b16 %v5083
            %v5131 = vunpack.c.h.b16 %v5083
            %v5132 = vpack.c.b16 %v5100, %v5100
            %v5133 = vpack.c.b16 %v5101, %v5101
            %v5134 = vpack.c.b16 %v5102, %v5102
            %v5135 = vpack.c.b16 %v5103, %v5103
            %v5136 = vpack.c.b16 %v5104, %v5104
            %v5137 = vpack.c.b16 %v5105, %v5105
            %v5138 = vpack.c.b16 %v5106, %v5106
            %v5139 = vpack.c.b16 %v5107, %v5107
            %v5140 = vpack.c.b16 %v5108, %v5108
            %v5141 = vpack.c.b16 %v5109, %v5109
            %v5142 = vpack.c.b16 %v5110, %v5110
            %v5143 = vpack.c.b16 %v5111, %v5111
            %v5144 = vpack.c.b16 %v5112, %v5112
            %v5145 = vpack.c.b16 %v5113, %v5113
            %v5146 = vpack.c.b16 %v5114, %v5114
            %v5147 = vpack.c.b16 %v5115, %v5115
            %v5148 = vpack.c.b16 %v5116, %v5116
            %v5149 = vpack.c.b16 %v5117, %v5117
            %v5150 = vpack.c.b16 %v5118, %v5118
            %v5151 = vpack.c.b16 %v5119, %v5119
            %v5152 = vpack.c.b16 %v5120, %v5120
            %v5153 = vpack.c.b16 %v5121, %v5121
            %v5154 = vpack.c.b16 %v5122, %v5122
            %v5155 = vpack.c.b16 %v5123, %v5123
            %v5156 = vpack.c.b16 %v5124, %v5124
            %v5157 = vpack.c.b16 %v5125, %v5125
            %v5158 = vpack.c.b16 %v5126, %v5126
            %v5159 = vpack.c.b16 %v5127, %v5127
            %v5160 = vpack.c.b16 %v5128, %v5128
            %v5161 = vpack.c.b16 %v5129, %v5129
            %v5162 = vpack.c.b16 %v5130, %v5130
            %v5163 = vpack.c.b16 %v5131, %v5131
            %s5196 = scalar_lea.vmem [#allocation2], 304
            %vm5197 = vcmask 519168
            %5198 = vst.msk [vmem:[%s5196 + $0x4] sm:$0xf] %vm5197, %v5132
            %5199 = vst.msk [vmem:[%s5196 + $0x8] sm:$0xf] %vm5197, %v5133
            %5200 = vst.msk [vmem:[%s5196 + $0x14] sm:$0xf] %vm5197, %v5134
            %5201 = vst.msk [vmem:[%s5196 + $0x18] sm:$0xf] %vm5197, %v5135
            %5202 = vst.msk [vmem:[%s5196 + $0x24] sm:$0xf] %vm5197, %v5136
            %5203 = vst.msk [vmem:[%s5196 + $0x28] sm:$0xf] %vm5197, %v5137
            %5204 = vst.msk [vmem:[%s5196 + $0x34] sm:$0xf] %vm5197, %v5138
            %5205 = vst.msk [vmem:[%s5196 + $0x38] sm:$0xf] %vm5197, %v5139
            %5206 = vst.msk [vmem:[%s5196 + $0x44] sm:$0xf] %vm5197, %v5140
            %5207 = vst.msk [vmem:[%s5196 + $0x48] sm:$0xf] %vm5197, %v5141
            %5208 = vst.msk [vmem:[%s5196 + $0x54] sm:$0xf] %vm5197, %v5142
            %5209 = vst.msk [vmem:[%s5196 + $0x58] sm:$0xf] %vm5197, %v5143
            %5210 = vst.msk [vmem:[%s5196 + $0x64] sm:$0xf] %vm5197, %v5144
            %5211 = vst.msk [vmem:[%s5196 + $0x68] sm:$0xf] %vm5197, %v5145
            %5212 = vst.msk [vmem:[%s5196 + $0x74] sm:$0xf] %vm5197, %v5146
            %5213 = vst.msk [vmem:[%s5196 + $0x78] sm:$0xf] %vm5197, %v5147
            %5214 = vst.msk [vmem:[%s5196 + $0x84] sm:$0xf] %vm5197, %v5148
            %5215 = vst.msk [vmem:[%s5196 + $0x88] sm:$0xf] %vm5197, %v5149
            %5216 = vst.msk [vmem:[%s5196 + $0x94] sm:$0xf] %vm5197, %v5150
            %5217 = vst.msk [vmem:[%s5196 + $0x98] sm:$0xf] %vm5197, %v5151
            %5218 = vst.msk [vmem:[%s5196 + $0xa4] sm:$0xf] %vm5197, %v5152
            %5219 = vst.msk [vmem:[%s5196 + $0xa8] sm:$0xf] %vm5197, %v5153
            %5220 = vst.msk [vmem:[%s5196 + $0xb4] sm:$0xf] %vm5197, %v5154
            %5221 = vst.msk [vmem:[%s5196 + $0xb8] sm:$0xf] %vm5197, %v5155
            %5222 = vst.msk [vmem:[%s5196 + $0xc4] sm:$0xf] %vm5197, %v5156
            %5223 = vst.msk [vmem:[%s5196 + $0xc8] sm:$0xf] %vm5197, %v5157
            %5224 = vst.msk [vmem:[%s5196 + $0xd4] sm:$0xf] %vm5197, %v5158
            %5225 = vst.msk [vmem:[%s5196 + $0xd8] sm:$0xf] %vm5197, %v5159
            %5226 = vst.msk [vmem:[%s5196 + $0xe4] sm:$0xf] %vm5197, %v5160
            %5227 = vst.msk [vmem:[%s5196 + $0xe8] sm:$0xf] %vm5197, %v5161
            %5228 = vst.msk [vmem:[%s5196 + $0xf4] sm:$0xf] %vm5197, %v5162
            %5229 = vst.msk [vmem:[%s5196 + $0xf8] sm:$0xf] %vm5197, %v5163
          $region56: #{tpu_custom_call.1} parent=47 // pred_fallthru
            _
        $region48: #{tpu_custom_call.1} parent=39 // pred_fallthru
          _
        %p5230 = scmp.eq.s32.totalorder %s476, 1
        // Predicated region
        $region57: #{tpu_custom_call.1} parent=39 // pred_check
          %p5231 = pneg %p5230
        $region58: #{tpu_custom_call.1} parent=39 // pred_check_branch
          %5233 = sbr.rel (%p5231) target = $region60
        $region59: #{tpu_custom_call.1} parent=39 // pred_region
          %s5234 = scalar_lea.vmem [#allocation2], 288
          %v5235 = vld [vmem:[%s5234] sm:$0x8]
          %v5236 = vld [vmem:[%s5234 + $0x4] sm:$0xf]
          %v5237 = vld [vmem:[%s5234 + $0x8] sm:$0xf]
          %v5238 = vld [vmem:[%s5234 + $0x10] sm:$0x8]
          %v5239 = vld [vmem:[%s5234 + $0x14] sm:$0xf]
          %v5240 = vld [vmem:[%s5234 + $0x18] sm:$0xf]
          %v5241 = vld [vmem:[%s5234 + $0x20] sm:$0x8]
          %v5242 = vld [vmem:[%s5234 + $0x24] sm:$0xf]
          %v5243 = vld [vmem:[%s5234 + $0x28] sm:$0xf]
          %v5244 = vld [vmem:[%s5234 + $0x30] sm:$0x8]
          %v5245 = vld [vmem:[%s5234 + $0x34] sm:$0xf]
          %v5246 = vld [vmem:[%s5234 + $0x38] sm:$0xf]
          %v5247 = vld [vmem:[%s5234 + $0x40] sm:$0x8]
          %v5248 = vld [vmem:[%s5234 + $0x44] sm:$0xf]
          %v5249 = vld [vmem:[%s5234 + $0x48] sm:$0xf]
          %v5250 = vld [vmem:[%s5234 + $0x50] sm:$0x8]
          %v5251 = vld [vmem:[%s5234 + $0x54] sm:$0xf]
          %v5252 = vld [vmem:[%s5234 + $0x58] sm:$0xf]
          %v5253 = vld [vmem:[%s5234 + $0x60] sm:$0x8]
          %v5254 = vld [vmem:[%s5234 + $0x64] sm:$0xf]
          %v5255 = vld [vmem:[%s5234 + $0x68] sm:$0xf]
          %v5256 = vld [vmem:[%s5234 + $0x70] sm:$0x8]
          %v5257 = vld [vmem:[%s5234 + $0x74] sm:$0xf]
          %v5258 = vld [vmem:[%s5234 + $0x78] sm:$0xf]
          %v5259 = vld [vmem:[%s5234 + $0x80] sm:$0x8]
          %v5260 = vld [vmem:[%s5234 + $0x84] sm:$0xf]
          %v5261 = vld [vmem:[%s5234 + $0x88] sm:$0xf]
          %v5262 = vld [vmem:[%s5234 + $0x90] sm:$0x8]
          %v5263 = vld [vmem:[%s5234 + $0x94] sm:$0xf]
          %v5264 = vld [vmem:[%s5234 + $0x98] sm:$0xf]
          %v5265 = vld [vmem:[%s5234 + $0xa0] sm:$0x8]
          %v5266 = vld [vmem:[%s5234 + $0xa4] sm:$0xf]
          %v5267 = vld [vmem:[%s5234 + $0xa8] sm:$0xf]
          %v5268 = vld [vmem:[%s5234 + $0xb0] sm:$0x8]
          %v5269 = vld [vmem:[%s5234 + $0xb4] sm:$0xf]
          %v5270 = vld [vmem:[%s5234 + $0xb8] sm:$0xf]
          %v5271 = vld [vmem:[%s5234 + $0xc0] sm:$0x8]
          %v5272 = vld [vmem:[%s5234 + $0xc4] sm:$0xf]
          %v5273 = vld [vmem:[%s5234 + $0xc8] sm:$0xf]
          %v5274 = vld [vmem:[%s5234 + $0xd0] sm:$0x8]
          %v5275 = vld [vmem:[%s5234 + $0xd4] sm:$0xf]
          %v5276 = vld [vmem:[%s5234 + $0xd8] sm:$0xf]
          %v5277 = vld [vmem:[%s5234 + $0xe0] sm:$0x8]
          %v5278 = vld [vmem:[%s5234 + $0xe4] sm:$0xf]
          %v5279 = vld [vmem:[%s5234 + $0xe8] sm:$0xf]
          %v5280 = vld [vmem:[%s5234 + $0xf0] sm:$0x8]
          %v5281 = vld [vmem:[%s5234 + $0xf4] sm:$0xf]
          %v5282 = vld [vmem:[%s5234 + $0xf8] sm:$0xf]
          %vm5283 = vsmask.f32 256
          %vm5284 = vsmask.f32 4368
          %vm5285 = vmor %vm5283, %vm5284
          %v5287 = vshrl.u32 %v5235, 16
          %v5289 = vrot.slane %v5287, 7
          %v5290 = vrot.slane %v5289, 4
          %v5292 = vshrl.u32 %v5236, 16
          %v5294 = vrot.slane %v5292, 7
          %v5295 = vshll.u32 %v5236, 16
          %v5297 = vor.u32 %v5294, %v5295
          %v5298 = vsel %vm5285, %v5290, %v5297
          %v5299 = vrot.slane %v5294, 4
          %v5301 = vshrl.u32 %v5237, 16
          %v5303 = vrot.slane %v5301, 7
          %v5304 = vshll.u32 %v5237, 16
          %v5306 = vor.u32 %v5303, %v5304
          %v5307 = vsel %vm5285, %v5299, %v5306
          %v5309 = vshrl.u32 %v5238, 16
          %v5311 = vrot.slane %v5309, 7
          %v5312 = vrot.slane %v5311, 4
          %v5314 = vshrl.u32 %v5239, 16
          %v5316 = vrot.slane %v5314, 7
          %v5317 = vshll.u32 %v5239, 16
          %v5319 = vor.u32 %v5316, %v5317
          %v5320 = vsel %vm5285, %v5312, %v5319
          %v5321 = vrot.slane %v5316, 4
          %v5323 = vshrl.u32 %v5240, 16
          %v5325 = vrot.slane %v5323, 7
          %v5326 = vshll.u32 %v5240, 16
          %v5328 = vor.u32 %v5325, %v5326
          %v5329 = vsel %vm5285, %v5321, %v5328
          %v5331 = vshrl.u32 %v5241, 16
          %v5333 = vrot.slane %v5331, 7
          %v5334 = vrot.slane %v5333, 4
          %v5336 = vshrl.u32 %v5242, 16
          %v5338 = vrot.slane %v5336, 7
          %v5339 = vshll.u32 %v5242, 16
          %v5341 = vor.u32 %v5338, %v5339
          %v5342 = vsel %vm5285, %v5334, %v5341
          %v5343 = vrot.slane %v5338, 4
          %v5345 = vshrl.u32 %v5243, 16
          %v5347 = vrot.slane %v5345, 7
          %v5348 = vshll.u32 %v5243, 16
          %v5350 = vor.u32 %v5347, %v5348
          %v5351 = vsel %vm5285, %v5343, %v5350
          %v5353 = vshrl.u32 %v5244, 16
          %v5355 = vrot.slane %v5353, 7
          %v5356 = vrot.slane %v5355, 4
          %v5358 = vshrl.u32 %v5245, 16
          %v5360 = vrot.slane %v5358, 7
          %v5361 = vshll.u32 %v5245, 16
          %v5363 = vor.u32 %v5360, %v5361
          %v5364 = vsel %vm5285, %v5356, %v5363
          %v5365 = vrot.slane %v5360, 4
          %v5367 = vshrl.u32 %v5246, 16
          %v5369 = vrot.slane %v5367, 7
          %v5370 = vshll.u32 %v5246, 16
          %v5372 = vor.u32 %v5369, %v5370
          %v5373 = vsel %vm5285, %v5365, %v5372
          %v5375 = vshrl.u32 %v5247, 16
          %v5377 = vrot.slane %v5375, 7
          %v5378 = vrot.slane %v5377, 4
          %v5380 = vshrl.u32 %v5248, 16
          %v5382 = vrot.slane %v5380, 7
          %v5383 = vshll.u32 %v5248, 16
          %v5385 = vor.u32 %v5382, %v5383
          %v5386 = vsel %vm5285, %v5378, %v5385
          %v5387 = vrot.slane %v5382, 4
          %v5389 = vshrl.u32 %v5249, 16
          %v5391 = vrot.slane %v5389, 7
          %v5392 = vshll.u32 %v5249, 16
          %v5394 = vor.u32 %v5391, %v5392
          %v5395 = vsel %vm5285, %v5387, %v5394
          %v5397 = vshrl.u32 %v5250, 16
          %v5399 = vrot.slane %v5397, 7
          %v5400 = vrot.slane %v5399, 4
          %v5402 = vshrl.u32 %v5251, 16
          %v5404 = vrot.slane %v5402, 7
          %v5405 = vshll.u32 %v5251, 16
          %v5407 = vor.u32 %v5404, %v5405
          %v5408 = vsel %vm5285, %v5400, %v5407
          %v5409 = vrot.slane %v5404, 4
          %v5411 = vshrl.u32 %v5252, 16
          %v5413 = vrot.slane %v5411, 7
          %v5414 = vshll.u32 %v5252, 16
          %v5416 = vor.u32 %v5413, %v5414
          %v5417 = vsel %vm5285, %v5409, %v5416
          %v5419 = vshrl.u32 %v5253, 16
          %v5421 = vrot.slane %v5419, 7
          %v5422 = vrot.slane %v5421, 4
          %v5424 = vshrl.u32 %v5254, 16
          %v5426 = vrot.slane %v5424, 7
          %v5427 = vshll.u32 %v5254, 16
          %v5429 = vor.u32 %v5426, %v5427
          %v5430 = vsel %vm5285, %v5422, %v5429
          %v5431 = vrot.slane %v5426, 4
          %v5433 = vshrl.u32 %v5255, 16
          %v5435 = vrot.slane %v5433, 7
          %v5436 = vshll.u32 %v5255, 16
          %v5438 = vor.u32 %v5435, %v5436
          %v5439 = vsel %vm5285, %v5431, %v5438
          %v5441 = vshrl.u32 %v5256, 16
          %v5443 = vrot.slane %v5441, 7
          %v5444 = vrot.slane %v5443, 4
          %v5446 = vshrl.u32 %v5257, 16
          %v5448 = vrot.slane %v5446, 7
          %v5449 = vshll.u32 %v5257, 16
          %v5451 = vor.u32 %v5448, %v5449
          %v5452 = vsel %vm5285, %v5444, %v5451
          %v5453 = vrot.slane %v5448, 4
          %v5455 = vshrl.u32 %v5258, 16
          %v5457 = vrot.slane %v5455, 7
          %v5458 = vshll.u32 %v5258, 16
          %v5460 = vor.u32 %v5457, %v5458
          %v5461 = vsel %vm5285, %v5453, %v5460
          %v5463 = vshrl.u32 %v5259, 16
          %v5465 = vrot.slane %v5463, 7
          %v5466 = vrot.slane %v5465, 4
          %v5468 = vshrl.u32 %v5260, 16
          %v5470 = vrot.slane %v5468, 7
          %v5471 = vshll.u32 %v5260, 16
          %v5473 = vor.u32 %v5470, %v5471
          %v5474 = vsel %vm5285, %v5466, %v5473
          %v5475 = vrot.slane %v5470, 4
          %v5477 = vshrl.u32 %v5261, 16
          %v5479 = vrot.slane %v5477, 7
          %v5480 = vshll.u32 %v5261, 16
          %v5482 = vor.u32 %v5479, %v5480
          %v5483 = vsel %vm5285, %v5475, %v5482
          %v5485 = vshrl.u32 %v5262, 16
          %v5487 = vrot.slane %v5485, 7
          %v5488 = vrot.slane %v5487, 4
          %v5490 = vshrl.u32 %v5263, 16
          %v5492 = vrot.slane %v5490, 7
          %v5493 = vshll.u32 %v5263, 16
          %v5495 = vor.u32 %v5492, %v5493
          %v5496 = vsel %vm5285, %v5488, %v5495
          %v5497 = vrot.slane %v5492, 4
          %v5499 = vshrl.u32 %v5264, 16
          %v5501 = vrot.slane %v5499, 7
          %v5502 = vshll.u32 %v5264, 16
          %v5504 = vor.u32 %v5501, %v5502
          %v5505 = vsel %vm5285, %v5497, %v5504
          %v5507 = vshrl.u32 %v5265, 16
          %v5509 = vrot.slane %v5507, 7
          %v5510 = vrot.slane %v5509, 4
          %v5512 = vshrl.u32 %v5266, 16
          %v5514 = vrot.slane %v5512, 7
          %v5515 = vshll.u32 %v5266, 16
          %v5517 = vor.u32 %v5514, %v5515
          %v5518 = vsel %vm5285, %v5510, %v5517
          %v5519 = vrot.slane %v5514, 4
          %v5521 = vshrl.u32 %v5267, 16
          %v5523 = vrot.slane %v5521, 7
          %v5524 = vshll.u32 %v5267, 16
          %v5526 = vor.u32 %v5523, %v5524
          %v5527 = vsel %vm5285, %v5519, %v5526
          %v5529 = vshrl.u32 %v5268, 16
          %v5531 = vrot.slane %v5529, 7
          %v5532 = vrot.slane %v5531, 4
          %v5534 = vshrl.u32 %v5269, 16
          %v5536 = vrot.slane %v5534, 7
          %v5537 = vshll.u32 %v5269, 16
          %v5539 = vor.u32 %v5536, %v5537
          %v5540 = vsel %vm5285, %v5532, %v5539
          %v5541 = vrot.slane %v5536, 4
          %v5543 = vshrl.u32 %v5270, 16
          %v5545 = vrot.slane %v5543, 7
          %v5546 = vshll.u32 %v5270, 16
          %v5548 = vor.u32 %v5545, %v5546
          %v5549 = vsel %vm5285, %v5541, %v5548
          %v5551 = vshrl.u32 %v5271, 16
          %v5553 = vrot.slane %v5551, 7
          %v5554 = vrot.slane %v5553, 4
          %v5556 = vshrl.u32 %v5272, 16
          %v5558 = vrot.slane %v5556, 7
          %v5559 = vshll.u32 %v5272, 16
          %v5561 = vor.u32 %v5558, %v5559
          %v5562 = vsel %vm5285, %v5554, %v5561
          %v5563 = vrot.slane %v5558, 4
          %v5565 = vshrl.u32 %v5273, 16
          %v5567 = vrot.slane %v5565, 7
          %v5568 = vshll.u32 %v5273, 16
          %v5570 = vor.u32 %v5567, %v5568
          %v5571 = vsel %vm5285, %v5563, %v5570
          %v5573 = vshrl.u32 %v5274, 16
          %v5575 = vrot.slane %v5573, 7
          %v5576 = vrot.slane %v5575, 4
          %v5578 = vshrl.u32 %v5275, 16
          %v5580 = vrot.slane %v5578, 7
          %v5581 = vshll.u32 %v5275, 16
          %v5583 = vor.u32 %v5580, %v5581
          %v5584 = vsel %vm5285, %v5576, %v5583
          %v5585 = vrot.slane %v5580, 4
          %v5587 = vshrl.u32 %v5276, 16
          %v5589 = vrot.slane %v5587, 7
          %v5590 = vshll.u32 %v5276, 16
          %v5592 = vor.u32 %v5589, %v5590
          %v5593 = vsel %vm5285, %v5585, %v5592
          %v5595 = vshrl.u32 %v5277, 16
          %v5597 = vrot.slane %v5595, 7
          %v5598 = vrot.slane %v5597, 4
          %v5600 = vshrl.u32 %v5278, 16
          %v5602 = vrot.slane %v5600, 7
          %v5603 = vshll.u32 %v5278, 16
          %v5605 = vor.u32 %v5602, %v5603
          %v5606 = vsel %vm5285, %v5598, %v5605
          %v5607 = vrot.slane %v5602, 4
          %v5609 = vshrl.u32 %v5279, 16
          %v5611 = vrot.slane %v5609, 7
          %v5612 = vshll.u32 %v5279, 16
          %v5614 = vor.u32 %v5611, %v5612
          %v5615 = vsel %vm5285, %v5607, %v5614
          %v5617 = vshrl.u32 %v5280, 16
          %v5619 = vrot.slane %v5617, 7
          %v5620 = vrot.slane %v5619, 4
          %v5622 = vshrl.u32 %v5281, 16
          %v5624 = vrot.slane %v5622, 7
          %v5625 = vshll.u32 %v5281, 16
          %v5627 = vor.u32 %v5624, %v5625
          %v5628 = vsel %vm5285, %v5620, %v5627
          %v5629 = vrot.slane %v5624, 4
          %v5631 = vshrl.u32 %v5282, 16
          %v5633 = vrot.slane %v5631, 7
          %v5634 = vshll.u32 %v5282, 16
          %v5636 = vor.u32 %v5633, %v5634
          %v5637 = vsel %vm5285, %v5629, %v5636
          %s5638 = scalar_lea.vmem [#allocation2], 304
          %v5639 = vld [vmem:[%s5638] sm:$0x8]
          %v5640 = vld [vmem:[%s5638 + $0x4] sm:$0xf]
          %v5641 = vld [vmem:[%s5638 + $0x8] sm:$0xf]
          %v5642 = vld [vmem:[%s5638 + $0x10] sm:$0x8]
          %v5643 = vld [vmem:[%s5638 + $0x14] sm:$0xf]
          %v5644 = vld [vmem:[%s5638 + $0x18] sm:$0xf]
          %v5645 = vld [vmem:[%s5638 + $0x20] sm:$0x8]
          %v5646 = vld [vmem:[%s5638 + $0x24] sm:$0xf]
          %v5647 = vld [vmem:[%s5638 + $0x28] sm:$0xf]
          %v5648 = vld [vmem:[%s5638 + $0x30] sm:$0x8]
          %v5649 = vld [vmem:[%s5638 + $0x34] sm:$0xf]
          %v5650 = vld [vmem:[%s5638 + $0x38] sm:$0xf]
          %v5651 = vld [vmem:[%s5638 + $0x40] sm:$0x8]
          %v5652 = vld [vmem:[%s5638 + $0x44] sm:$0xf]
          %v5653 = vld [vmem:[%s5638 + $0x48] sm:$0xf]
          %v5654 = vld [vmem:[%s5638 + $0x50] sm:$0x8]
          %v5655 = vld [vmem:[%s5638 + $0x54] sm:$0xf]
          %v5656 = vld [vmem:[%s5638 + $0x58] sm:$0xf]
          %v5657 = vld [vmem:[%s5638 + $0x60] sm:$0x8]
          %v5658 = vld [vmem:[%s5638 + $0x64] sm:$0xf]
          %v5659 = vld [vmem:[%s5638 + $0x68] sm:$0xf]
          %v5660 = vld [vmem:[%s5638 + $0x70] sm:$0x8]
          %v5661 = vld [vmem:[%s5638 + $0x74] sm:$0xf]
          %v5662 = vld [vmem:[%s5638 + $0x78] sm:$0xf]
          %v5663 = vld [vmem:[%s5638 + $0x80] sm:$0x8]
          %v5664 = vld [vmem:[%s5638 + $0x84] sm:$0xf]
          %v5665 = vld [vmem:[%s5638 + $0x88] sm:$0xf]
          %v5666 = vld [vmem:[%s5638 + $0x90] sm:$0x8]
          %v5667 = vld [vmem:[%s5638 + $0x94] sm:$0xf]
          %v5668 = vld [vmem:[%s5638 + $0x98] sm:$0xf]
          %v5669 = vld [vmem:[%s5638 + $0xa0] sm:$0x8]
          %v5670 = vld [vmem:[%s5638 + $0xa4] sm:$0xf]
          %v5671 = vld [vmem:[%s5638 + $0xa8] sm:$0xf]
          %v5672 = vld [vmem:[%s5638 + $0xb0] sm:$0x8]
          %v5673 = vld [vmem:[%s5638 + $0xb4] sm:$0xf]
          %v5674 = vld [vmem:[%s5638 + $0xb8] sm:$0xf]
          %v5675 = vld [vmem:[%s5638 + $0xc0] sm:$0x8]
          %v5676 = vld [vmem:[%s5638 + $0xc4] sm:$0xf]
          %v5677 = vld [vmem:[%s5638 + $0xc8] sm:$0xf]
          %v5678 = vld [vmem:[%s5638 + $0xd0] sm:$0x8]
          %v5679 = vld [vmem:[%s5638 + $0xd4] sm:$0xf]
          %v5680 = vld [vmem:[%s5638 + $0xd8] sm:$0xf]
          %v5681 = vld [vmem:[%s5638 + $0xe0] sm:$0x8]
          %v5682 = vld [vmem:[%s5638 + $0xe4] sm:$0xf]
          %v5683 = vld [vmem:[%s5638 + $0xe8] sm:$0xf]
          %v5684 = vld [vmem:[%s5638 + $0xf0] sm:$0x8]
          %v5685 = vld [vmem:[%s5638 + $0xf4] sm:$0xf]
          %v5686 = vld [vmem:[%s5638 + $0xf8] sm:$0xf]
          %v5688 = vshrl.u32 %v5639, 16
          %v5690 = vrot.slane %v5688, 7
          %v5691 = vrot.slane %v5690, 4
          %v5693 = vshrl.u32 %v5640, 16
          %v5695 = vrot.slane %v5693, 7
          %v5696 = vshll.u32 %v5640, 16
          %v5698 = vor.u32 %v5695, %v5696
          %v5699 = vsel %vm5285, %v5691, %v5698
          %v5700 = vrot.slane %v5695, 4
          %v5702 = vshrl.u32 %v5641, 16
          %v5704 = vrot.slane %v5702, 7
          %v5705 = vshll.u32 %v5641, 16
          %v5707 = vor.u32 %v5704, %v5705
          %v5708 = vsel %vm5285, %v5700, %v5707
          %v5710 = vshrl.u32 %v5642, 16
          %v5712 = vrot.slane %v5710, 7
          %v5713 = vrot.slane %v5712, 4
          %v5715 = vshrl.u32 %v5643, 16
          %v5717 = vrot.slane %v5715, 7
          %v5718 = vshll.u32 %v5643, 16
          %v5720 = vor.u32 %v5717, %v5718
          %v5721 = vsel %vm5285, %v5713, %v5720
          %v5722 = vrot.slane %v5717, 4
          %v5724 = vshrl.u32 %v5644, 16
          %v5726 = vrot.slane %v5724, 7
          %v5727 = vshll.u32 %v5644, 16
          %v5729 = vor.u32 %v5726, %v5727
          %v5730 = vsel %vm5285, %v5722, %v5729
          %v5732 = vshrl.u32 %v5645, 16
          %v5734 = vrot.slane %v5732, 7
          %v5735 = vrot.slane %v5734, 4
          %v5737 = vshrl.u32 %v5646, 16
          %v5739 = vrot.slane %v5737, 7
          %v5740 = vshll.u32 %v5646, 16
          %v5742 = vor.u32 %v5739, %v5740
          %v5743 = vsel %vm5285, %v5735, %v5742
          %v5744 = vrot.slane %v5739, 4
          %v5746 = vshrl.u32 %v5647, 16
          %v5748 = vrot.slane %v5746, 7
          %v5749 = vshll.u32 %v5647, 16
          %v5751 = vor.u32 %v5748, %v5749
          %v5752 = vsel %vm5285, %v5744, %v5751
          %v5754 = vshrl.u32 %v5648, 16
          %v5756 = vrot.slane %v5754, 7
          %v5757 = vrot.slane %v5756, 4
          %v5759 = vshrl.u32 %v5649, 16
          %v5761 = vrot.slane %v5759, 7
          %v5762 = vshll.u32 %v5649, 16
          %v5764 = vor.u32 %v5761, %v5762
          %v5765 = vsel %vm5285, %v5757, %v5764
          %v5766 = vrot.slane %v5761, 4
          %v5768 = vshrl.u32 %v5650, 16
          %v5770 = vrot.slane %v5768, 7
          %v5771 = vshll.u32 %v5650, 16
          %v5773 = vor.u32 %v5770, %v5771
          %v5774 = vsel %vm5285, %v5766, %v5773
          %v5776 = vshrl.u32 %v5651, 16
          %v5778 = vrot.slane %v5776, 7
          %v5779 = vrot.slane %v5778, 4
          %v5781 = vshrl.u32 %v5652, 16
          %v5783 = vrot.slane %v5781, 7
          %v5784 = vshll.u32 %v5652, 16
          %v5786 = vor.u32 %v5783, %v5784
          %v5787 = vsel %vm5285, %v5779, %v5786
          %v5788 = vrot.slane %v5783, 4
          %v5790 = vshrl.u32 %v5653, 16
          %v5792 = vrot.slane %v5790, 7
          %v5793 = vshll.u32 %v5653, 16
          %v5795 = vor.u32 %v5792, %v5793
          %v5796 = vsel %vm5285, %v5788, %v5795
          %v5798 = vshrl.u32 %v5654, 16
          %v5800 = vrot.slane %v5798, 7
          %v5801 = vrot.slane %v5800, 4
          %v5803 = vshrl.u32 %v5655, 16
          %v5805 = vrot.slane %v5803, 7
          %v5806 = vshll.u32 %v5655, 16
          %v5808 = vor.u32 %v5805, %v5806
          %v5809 = vsel %vm5285, %v5801, %v5808
          %v5810 = vrot.slane %v5805, 4
          %v5812 = vshrl.u32 %v5656, 16
          %v5814 = vrot.slane %v5812, 7
          %v5815 = vshll.u32 %v5656, 16
          %v5817 = vor.u32 %v5814, %v5815
          %v5818 = vsel %vm5285, %v5810, %v5817
          %v5820 = vshrl.u32 %v5657, 16
          %v5822 = vrot.slane %v5820, 7
          %v5823 = vrot.slane %v5822, 4
          %v5825 = vshrl.u32 %v5658, 16
          %v5827 = vrot.slane %v5825, 7
          %v5828 = vshll.u32 %v5658, 16
          %v5830 = vor.u32 %v5827, %v5828
          %v5831 = vsel %vm5285, %v5823, %v5830
          %v5832 = vrot.slane %v5827, 4
          %v5834 = vshrl.u32 %v5659, 16
          %v5836 = vrot.slane %v5834, 7
          %v5837 = vshll.u32 %v5659, 16
          %v5839 = vor.u32 %v5836, %v5837
          %v5840 = vsel %vm5285, %v5832, %v5839
          %v5842 = vshrl.u32 %v5660, 16
          %v5844 = vrot.slane %v5842, 7
          %v5845 = vrot.slane %v5844, 4
          %v5847 = vshrl.u32 %v5661, 16
          %v5849 = vrot.slane %v5847, 7
          %v5850 = vshll.u32 %v5661, 16
          %v5852 = vor.u32 %v5849, %v5850
          %v5853 = vsel %vm5285, %v5845, %v5852
          %v5854 = vrot.slane %v5849, 4
          %v5856 = vshrl.u32 %v5662, 16
          %v5858 = vrot.slane %v5856, 7
          %v5859 = vshll.u32 %v5662, 16
          %v5861 = vor.u32 %v5858, %v5859
          %v5862 = vsel %vm5285, %v5854, %v5861
          %v5864 = vshrl.u32 %v5663, 16
          %v5866 = vrot.slane %v5864, 7
          %v5867 = vrot.slane %v5866, 4
          %v5869 = vshrl.u32 %v5664, 16
          %v5871 = vrot.slane %v5869, 7
          %v5872 = vshll.u32 %v5664, 16
          %v5874 = vor.u32 %v5871, %v5872
          %v5875 = vsel %vm5285, %v5867, %v5874
          %v5876 = vrot.slane %v5871, 4
          %v5878 = vshrl.u32 %v5665, 16
          %v5880 = vrot.slane %v5878, 7
          %v5881 = vshll.u32 %v5665, 16
          %v5883 = vor.u32 %v5880, %v5881
          %v5884 = vsel %vm5285, %v5876, %v5883
          %v5886 = vshrl.u32 %v5666, 16
          %v5888 = vrot.slane %v5886, 7
          %v5889 = vrot.slane %v5888, 4
          %v5891 = vshrl.u32 %v5667, 16
          %v5893 = vrot.slane %v5891, 7
          %v5894 = vshll.u32 %v5667, 16
          %v5896 = vor.u32 %v5893, %v5894
          %v5897 = vsel %vm5285, %v5889, %v5896
          %v5898 = vrot.slane %v5893, 4
          %v5900 = vshrl.u32 %v5668, 16
          %v5902 = vrot.slane %v5900, 7
          %v5903 = vshll.u32 %v5668, 16
          %v5905 = vor.u32 %v5902, %v5903
          %v5906 = vsel %vm5285, %v5898, %v5905
          %v5908 = vshrl.u32 %v5669, 16
          %v5910 = vrot.slane %v5908, 7
          %v5911 = vrot.slane %v5910, 4
          %v5913 = vshrl.u32 %v5670, 16
          %v5915 = vrot.slane %v5913, 7
          %v5916 = vshll.u32 %v5670, 16
          %v5918 = vor.u32 %v5915, %v5916
          %v5919 = vsel %vm5285, %v5911, %v5918
          %v5920 = vrot.slane %v5915, 4
          %v5922 = vshrl.u32 %v5671, 16
          %v5924 = vrot.slane %v5922, 7
          %v5925 = vshll.u32 %v5671, 16
          %v5927 = vor.u32 %v5924, %v5925
          %v5928 = vsel %vm5285, %v5920, %v5927
          %v5930 = vshrl.u32 %v5672, 16
          %v5932 = vrot.slane %v5930, 7
          %v5933 = vrot.slane %v5932, 4
          %v5935 = vshrl.u32 %v5673, 16
          %v5937 = vrot.slane %v5935, 7
          %v5938 = vshll.u32 %v5673, 16
          %v5940 = vor.u32 %v5937, %v5938
          %v5941 = vsel %vm5285, %v5933, %v5940
          %v5942 = vrot.slane %v5937, 4
          %v5944 = vshrl.u32 %v5674, 16
          %v5946 = vrot.slane %v5944, 7
          %v5947 = vshll.u32 %v5674, 16
          %v5949 = vor.u32 %v5946, %v5947
          %v5950 = vsel %vm5285, %v5942, %v5949
          %v5952 = vshrl.u32 %v5675, 16
          %v5954 = vrot.slane %v5952, 7
          %v5955 = vrot.slane %v5954, 4
          %v5957 = vshrl.u32 %v5676, 16
          %v5959 = vrot.slane %v5957, 7
          %v5960 = vshll.u32 %v5676, 16
          %v5962 = vor.u32 %v5959, %v5960
          %v5963 = vsel %vm5285, %v5955, %v5962
          %v5964 = vrot.slane %v5959, 4
          %v5966 = vshrl.u32 %v5677, 16
          %v5968 = vrot.slane %v5966, 7
          %v5969 = vshll.u32 %v5677, 16
          %v5971 = vor.u32 %v5968, %v5969
          %v5972 = vsel %vm5285, %v5964, %v5971
          %v5974 = vshrl.u32 %v5678, 16
          %v5976 = vrot.slane %v5974, 7
          %v5977 = vrot.slane %v5976, 4
          %v5979 = vshrl.u32 %v5679, 16
          %v5981 = vrot.slane %v5979, 7
          %v5982 = vshll.u32 %v5679, 16
          %v5984 = vor.u32 %v5981, %v5982
          %v5985 = vsel %vm5285, %v5977, %v5984
          %v5986 = vrot.slane %v5981, 4
          %v5988 = vshrl.u32 %v5680, 16
          %v5990 = vrot.slane %v5988, 7
          %v5991 = vshll.u32 %v5680, 16
          %v5993 = vor.u32 %v5990, %v5991
          %v5994 = vsel %vm5285, %v5986, %v5993
          %v5996 = vshrl.u32 %v5681, 16
          %v5998 = vrot.slane %v5996, 7
          %v5999 = vrot.slane %v5998, 4
          %v6001 = vshrl.u32 %v5682, 16
          %v6003 = vrot.slane %v6001, 7
          %v6004 = vshll.u32 %v5682, 16
          %v6006 = vor.u32 %v6003, %v6004
          %v6007 = vsel %vm5285, %v5999, %v6006
          %v6008 = vrot.slane %v6003, 4
          %v6010 = vshrl.u32 %v5683, 16
          %v6012 = vrot.slane %v6010, 7
          %v6013 = vshll.u32 %v5683, 16
          %v6015 = vor.u32 %v6012, %v6013
          %v6016 = vsel %vm5285, %v6008, %v6015
          %v6018 = vshrl.u32 %v5684, 16
          %v6020 = vrot.slane %v6018, 7
          %v6021 = vrot.slane %v6020, 4
          %v6023 = vshrl.u32 %v5685, 16
          %v6025 = vrot.slane %v6023, 7
          %v6026 = vshll.u32 %v5685, 16
          %v6028 = vor.u32 %v6025, %v6026
          %v6029 = vsel %vm5285, %v6021, %v6028
          %v6030 = vrot.slane %v6025, 4
          %v6032 = vshrl.u32 %v5686, 16
          %v6034 = vrot.slane %v6032, 7
          %v6035 = vshll.u32 %v5686, 16
          %v6037 = vor.u32 %v6034, %v6035
          %v6038 = vsel %vm5285, %v6030, %v6037
          %s6039 = scalar_lea.vmem [#allocation2], 320
          %v6040 = vld [vmem:[%s6039] sm:$0x8]
          %v6041 = vld [vmem:[%s6039 + $0x4] sm:$0xf]
          %v6042 = vld [vmem:[%s6039 + $0x8] sm:$0xf]
          %v6043 = vld [vmem:[%s6039 + $0x10] sm:$0x8]
          %v6044 = vld [vmem:[%s6039 + $0x14] sm:$0xf]
          %v6045 = vld [vmem:[%s6039 + $0x18] sm:$0xf]
          %v6046 = vld [vmem:[%s6039 + $0x20] sm:$0x8]
          %v6047 = vld [vmem:[%s6039 + $0x24] sm:$0xf]
          %v6048 = vld [vmem:[%s6039 + $0x28] sm:$0xf]
          %v6049 = vld [vmem:[%s6039 + $0x30] sm:$0x8]
          %v6050 = vld [vmem:[%s6039 + $0x34] sm:$0xf]
          %v6051 = vld [vmem:[%s6039 + $0x38] sm:$0xf]
          %v6052 = vld [vmem:[%s6039 + $0x40] sm:$0x8]
          %v6053 = vld [vmem:[%s6039 + $0x44] sm:$0xf]
          %v6054 = vld [vmem:[%s6039 + $0x48] sm:$0xf]
          %v6055 = vld [vmem:[%s6039 + $0x50] sm:$0x8]
          %v6056 = vld [vmem:[%s6039 + $0x54] sm:$0xf]
          %v6057 = vld [vmem:[%s6039 + $0x58] sm:$0xf]
          %v6058 = vld [vmem:[%s6039 + $0x60] sm:$0x8]
          %v6059 = vld [vmem:[%s6039 + $0x64] sm:$0xf]
          %v6060 = vld [vmem:[%s6039 + $0x68] sm:$0xf]
          %v6061 = vld [vmem:[%s6039 + $0x70] sm:$0x8]
          %v6062 = vld [vmem:[%s6039 + $0x74] sm:$0xf]
          %v6063 = vld [vmem:[%s6039 + $0x78] sm:$0xf]
          %v6064 = vld [vmem:[%s6039 + $0x80] sm:$0x8]
          %v6065 = vld [vmem:[%s6039 + $0x84] sm:$0xf]
          %v6066 = vld [vmem:[%s6039 + $0x88] sm:$0xf]
          %v6067 = vld [vmem:[%s6039 + $0x90] sm:$0x8]
          %v6068 = vld [vmem:[%s6039 + $0x94] sm:$0xf]
          %v6069 = vld [vmem:[%s6039 + $0x98] sm:$0xf]
          %v6070 = vld [vmem:[%s6039 + $0xa0] sm:$0x8]
          %v6071 = vld [vmem:[%s6039 + $0xa4] sm:$0xf]
          %v6072 = vld [vmem:[%s6039 + $0xa8] sm:$0xf]
          %v6073 = vld [vmem:[%s6039 + $0xb0] sm:$0x8]
          %v6074 = vld [vmem:[%s6039 + $0xb4] sm:$0xf]
          %v6075 = vld [vmem:[%s6039 + $0xb8] sm:$0xf]
          %v6076 = vld [vmem:[%s6039 + $0xc0] sm:$0x8]
          %v6077 = vld [vmem:[%s6039 + $0xc4] sm:$0xf]
          %v6078 = vld [vmem:[%s6039 + $0xc8] sm:$0xf]
          %v6079 = vld [vmem:[%s6039 + $0xd0] sm:$0x8]
          %v6080 = vld [vmem:[%s6039 + $0xd4] sm:$0xf]
          %v6081 = vld [vmem:[%s6039 + $0xd8] sm:$0xf]
          %v6082 = vld [vmem:[%s6039 + $0xe0] sm:$0x8]
          %v6083 = vld [vmem:[%s6039 + $0xe4] sm:$0xf]
          %v6084 = vld [vmem:[%s6039 + $0xe8] sm:$0xf]
          %v6085 = vld [vmem:[%s6039 + $0xf0] sm:$0x8]
          %v6086 = vld [vmem:[%s6039 + $0xf4] sm:$0xf]
          %v6087 = vld [vmem:[%s6039 + $0xf8] sm:$0xf]
          %v6089 = vshrl.u32 %v6040, 16
          %v6091 = vrot.slane %v6089, 7
          %v6092 = vrot.slane %v6091, 4
          %v6094 = vshrl.u32 %v6041, 16
          %v6096 = vrot.slane %v6094, 7
          %v6097 = vshll.u32 %v6041, 16
          %v6099 = vor.u32 %v6096, %v6097
          %v6100 = vsel %vm5285, %v6092, %v6099
          %v6101 = vrot.slane %v6096, 4
          %v6103 = vshrl.u32 %v6042, 16
          %v6105 = vrot.slane %v6103, 7
          %v6106 = vshll.u32 %v6042, 16
          %v6108 = vor.u32 %v6105, %v6106
          %v6109 = vsel %vm5285, %v6101, %v6108
          %v6111 = vshrl.u32 %v6043, 16
          %v6113 = vrot.slane %v6111, 7
          %v6114 = vrot.slane %v6113, 4
          %v6116 = vshrl.u32 %v6044, 16
          %v6118 = vrot.slane %v6116, 7
          %v6119 = vshll.u32 %v6044, 16
          %v6121 = vor.u32 %v6118, %v6119
          %v6122 = vsel %vm5285, %v6114, %v6121
          %v6123 = vrot.slane %v6118, 4
          %v6125 = vshrl.u32 %v6045, 16
          %v6127 = vrot.slane %v6125, 7
          %v6128 = vshll.u32 %v6045, 16
          %v6130 = vor.u32 %v6127, %v6128
          %v6131 = vsel %vm5285, %v6123, %v6130
          %v6133 = vshrl.u32 %v6046, 16
          %v6135 = vrot.slane %v6133, 7
          %v6136 = vrot.slane %v6135, 4
          %v6138 = vshrl.u32 %v6047, 16
          %v6140 = vrot.slane %v6138, 7
          %v6141 = vshll.u32 %v6047, 16
          %v6143 = vor.u32 %v6140, %v6141
          %v6144 = vsel %vm5285, %v6136, %v6143
          %v6145 = vrot.slane %v6140, 4
          %v6147 = vshrl.u32 %v6048, 16
          %v6149 = vrot.slane %v6147, 7
          %v6150 = vshll.u32 %v6048, 16
          %v6152 = vor.u32 %v6149, %v6150
          %v6153 = vsel %vm5285, %v6145, %v6152
          %v6155 = vshrl.u32 %v6049, 16
          %v6157 = vrot.slane %v6155, 7
          %v6158 = vrot.slane %v6157, 4
          %v6160 = vshrl.u32 %v6050, 16
          %v6162 = vrot.slane %v6160, 7
          %v6163 = vshll.u32 %v6050, 16
          %v6165 = vor.u32 %v6162, %v6163
          %v6166 = vsel %vm5285, %v6158, %v6165
          %v6167 = vrot.slane %v6162, 4
          %v6169 = vshrl.u32 %v6051, 16
          %v6171 = vrot.slane %v6169, 7
          %v6172 = vshll.u32 %v6051, 16
          %v6174 = vor.u32 %v6171, %v6172
          %v6175 = vsel %vm5285, %v6167, %v6174
          %v6177 = vshrl.u32 %v6052, 16
          %v6179 = vrot.slane %v6177, 7
          %v6180 = vrot.slane %v6179, 4
          %v6182 = vshrl.u32 %v6053, 16
          %v6184 = vrot.slane %v6182, 7
          %v6185 = vshll.u32 %v6053, 16
          %v6187 = vor.u32 %v6184, %v6185
          %v6188 = vsel %vm5285, %v6180, %v6187
          %v6189 = vrot.slane %v6184, 4
          %v6191 = vshrl.u32 %v6054, 16
          %v6193 = vrot.slane %v6191, 7
          %v6194 = vshll.u32 %v6054, 16
          %v6196 = vor.u32 %v6193, %v6194
          %v6197 = vsel %vm5285, %v6189, %v6196
          %v6199 = vshrl.u32 %v6055, 16
          %v6201 = vrot.slane %v6199, 7
          %v6202 = vrot.slane %v6201, 4
          %v6204 = vshrl.u32 %v6056, 16
          %v6206 = vrot.slane %v6204, 7
          %v6207 = vshll.u32 %v6056, 16
          %v6209 = vor.u32 %v6206, %v6207
          %v6210 = vsel %vm5285, %v6202, %v6209
          %v6211 = vrot.slane %v6206, 4
          %v6213 = vshrl.u32 %v6057, 16
          %v6215 = vrot.slane %v6213, 7
          %v6216 = vshll.u32 %v6057, 16
          %v6218 = vor.u32 %v6215, %v6216
          %v6219 = vsel %vm5285, %v6211, %v6218
          %v6221 = vshrl.u32 %v6058, 16
          %v6223 = vrot.slane %v6221, 7
          %v6224 = vrot.slane %v6223, 4
          %v6226 = vshrl.u32 %v6059, 16
          %v6228 = vrot.slane %v6226, 7
          %v6229 = vshll.u32 %v6059, 16
          %v6231 = vor.u32 %v6228, %v6229
          %v6232 = vsel %vm5285, %v6224, %v6231
          %v6233 = vrot.slane %v6228, 4
          %v6235 = vshrl.u32 %v6060, 16
          %v6237 = vrot.slane %v6235, 7
          %v6238 = vshll.u32 %v6060, 16
          %v6240 = vor.u32 %v6237, %v6238
          %v6241 = vsel %vm5285, %v6233, %v6240
          %v6243 = vshrl.u32 %v6061, 16
          %v6245 = vrot.slane %v6243, 7
          %v6246 = vrot.slane %v6245, 4
          %v6248 = vshrl.u32 %v6062, 16
          %v6250 = vrot.slane %v6248, 7
          %v6251 = vshll.u32 %v6062, 16
          %v6253 = vor.u32 %v6250, %v6251
          %v6254 = vsel %vm5285, %v6246, %v6253
          %v6255 = vrot.slane %v6250, 4
          %v6257 = vshrl.u32 %v6063, 16
          %v6259 = vrot.slane %v6257, 7
          %v6260 = vshll.u32 %v6063, 16
          %v6262 = vor.u32 %v6259, %v6260
          %v6263 = vsel %vm5285, %v6255, %v6262
          %v6265 = vshrl.u32 %v6064, 16
          %v6267 = vrot.slane %v6265, 7
          %v6268 = vrot.slane %v6267, 4
          %v6270 = vshrl.u32 %v6065, 16
          %v6272 = vrot.slane %v6270, 7
          %v6273 = vshll.u32 %v6065, 16
          %v6275 = vor.u32 %v6272, %v6273
          %v6276 = vsel %vm5285, %v6268, %v6275
          %v6277 = vrot.slane %v6272, 4
          %v6279 = vshrl.u32 %v6066, 16
          %v6281 = vrot.slane %v6279, 7
          %v6282 = vshll.u32 %v6066, 16
          %v6284 = vor.u32 %v6281, %v6282
          %v6285 = vsel %vm5285, %v6277, %v6284
          %v6287 = vshrl.u32 %v6067, 16
          %v6289 = vrot.slane %v6287, 7
          %v6290 = vrot.slane %v6289, 4
          %v6292 = vshrl.u32 %v6068, 16
          %v6294 = vrot.slane %v6292, 7
          %v6295 = vshll.u32 %v6068, 16
          %v6297 = vor.u32 %v6294, %v6295
          %v6298 = vsel %vm5285, %v6290, %v6297
          %v6299 = vrot.slane %v6294, 4
          %v6301 = vshrl.u32 %v6069, 16
          %v6303 = vrot.slane %v6301, 7
          %v6304 = vshll.u32 %v6069, 16
          %v6306 = vor.u32 %v6303, %v6304
          %v6307 = vsel %vm5285, %v6299, %v6306
          %v6309 = vshrl.u32 %v6070, 16
          %v6311 = vrot.slane %v6309, 7
          %v6312 = vrot.slane %v6311, 4
          %v6314 = vshrl.u32 %v6071, 16
          %v6316 = vrot.slane %v6314, 7
          %v6317 = vshll.u32 %v6071, 16
          %v6319 = vor.u32 %v6316, %v6317
          %v6320 = vsel %vm5285, %v6312, %v6319
          %v6321 = vrot.slane %v6316, 4
          %v6323 = vshrl.u32 %v6072, 16
          %v6325 = vrot.slane %v6323, 7
          %v6326 = vshll.u32 %v6072, 16
          %v6328 = vor.u32 %v6325, %v6326
          %v6329 = vsel %vm5285, %v6321, %v6328
          %v6331 = vshrl.u32 %v6073, 16
          %v6333 = vrot.slane %v6331, 7
          %v6334 = vrot.slane %v6333, 4
          %v6336 = vshrl.u32 %v6074, 16
          %v6338 = vrot.slane %v6336, 7
          %v6339 = vshll.u32 %v6074, 16
          %v6341 = vor.u32 %v6338, %v6339
          %v6342 = vsel %vm5285, %v6334, %v6341
          %v6343 = vrot.slane %v6338, 4
          %v6345 = vshrl.u32 %v6075, 16
          %v6347 = vrot.slane %v6345, 7
          %v6348 = vshll.u32 %v6075, 16
          %v6350 = vor.u32 %v6347, %v6348
          %v6351 = vsel %vm5285, %v6343, %v6350
          %v6353 = vshrl.u32 %v6076, 16
          %v6355 = vrot.slane %v6353, 7
          %v6356 = vrot.slane %v6355, 4
          %v6358 = vshrl.u32 %v6077, 16
          %v6360 = vrot.slane %v6358, 7
          %v6361 = vshll.u32 %v6077, 16
          %v6363 = vor.u32 %v6360, %v6361
          %v6364 = vsel %vm5285, %v6356, %v6363
          %v6365 = vrot.slane %v6360, 4
          %v6367 = vshrl.u32 %v6078, 16
          %v6369 = vrot.slane %v6367, 7
          %v6370 = vshll.u32 %v6078, 16
          %v6372 = vor.u32 %v6369, %v6370
          %v6373 = vsel %vm5285, %v6365, %v6372
          %v6375 = vshrl.u32 %v6079, 16
          %v6377 = vrot.slane %v6375, 7
          %v6378 = vrot.slane %v6377, 4
          %v6380 = vshrl.u32 %v6080, 16
          %v6382 = vrot.slane %v6380, 7
          %v6383 = vshll.u32 %v6080, 16
          %v6385 = vor.u32 %v6382, %v6383
          %v6386 = vsel %vm5285, %v6378, %v6385
          %v6387 = vrot.slane %v6382, 4
          %v6389 = vshrl.u32 %v6081, 16
          %v6391 = vrot.slane %v6389, 7
          %v6392 = vshll.u32 %v6081, 16
          %v6394 = vor.u32 %v6391, %v6392
          %v6395 = vsel %vm5285, %v6387, %v6394
          %v6397 = vshrl.u32 %v6082, 16
          %v6399 = vrot.slane %v6397, 7
          %v6400 = vrot.slane %v6399, 4
          %v6402 = vshrl.u32 %v6083, 16
          %v6404 = vrot.slane %v6402, 7
          %v6405 = vshll.u32 %v6083, 16
          %v6407 = vor.u32 %v6404, %v6405
          %v6408 = vsel %vm5285, %v6400, %v6407
          %v6409 = vrot.slane %v6404, 4
          %v6411 = vshrl.u32 %v6084, 16
          %v6413 = vrot.slane %v6411, 7
          %v6414 = vshll.u32 %v6084, 16
          %v6416 = vor.u32 %v6413, %v6414
          %v6417 = vsel %vm5285, %v6409, %v6416
          %v6419 = vshrl.u32 %v6085, 16
          %v6421 = vrot.slane %v6419, 7
          %v6422 = vrot.slane %v6421, 4
          %v6424 = vshrl.u32 %v6086, 16
          %v6426 = vrot.slane %v6424, 7
          %v6427 = vshll.u32 %v6086, 16
          %v6429 = vor.u32 %v6426, %v6427
          %v6430 = vsel %vm5285, %v6422, %v6429
          %v6431 = vrot.slane %v6426, 4
          %v6433 = vshrl.u32 %v6087, 16
          %v6435 = vrot.slane %v6433, 7
          %v6436 = vshll.u32 %v6087, 16
          %v6438 = vor.u32 %v6435, %v6436
          %v6439 = vsel %vm5285, %v6431, %v6438
          %v6440 = vunpack.c.l.b16 %v5298
          %v6441 = vunpack.c.l.b16 %v5307
          %v6442 = vunpack.c.l.b16 %v5320
          %v6443 = vunpack.c.l.b16 %v5329
          %v6444 = vunpack.c.l.b16 %v5342
          %v6445 = vunpack.c.l.b16 %v5351
          %v6446 = vunpack.c.l.b16 %v5364
          %v6447 = vunpack.c.l.b16 %v5373
          %v6448 = vunpack.c.l.b16 %v5386
          %v6449 = vunpack.c.l.b16 %v5395
          %v6450 = vunpack.c.l.b16 %v5408
          %v6451 = vunpack.c.l.b16 %v5417
          %v6452 = vunpack.c.l.b16 %v5430
          %v6453 = vunpack.c.l.b16 %v5439
          %v6454 = vunpack.c.l.b16 %v5452
          %v6455 = vunpack.c.l.b16 %v5461
          %v6456 = vunpack.c.l.b16 %v5474
          %v6457 = vunpack.c.l.b16 %v5483
          %v6458 = vunpack.c.l.b16 %v5496
          %v6459 = vunpack.c.l.b16 %v5505
          %v6460 = vunpack.c.l.b16 %v5518
          %v6461 = vunpack.c.l.b16 %v5527
          %v6462 = vunpack.c.l.b16 %v5540
          %v6463 = vunpack.c.l.b16 %v5549
          %v6464 = vunpack.c.l.b16 %v5562
          %v6465 = vunpack.c.l.b16 %v5571
          %v6466 = vunpack.c.l.b16 %v5584
          %v6467 = vunpack.c.l.b16 %v5593
          %v6468 = vunpack.c.l.b16 %v5606
          %v6469 = vunpack.c.l.b16 %v5615
          %v6470 = vunpack.c.l.b16 %v5628
          %v6471 = vunpack.c.l.b16 %v5637
          %v6472 = vpack.c.b16 %v6441, %v6440
          %v6473 = vpack.c.b16 %v6443, %v6442
          %v6474 = vpack.c.b16 %v6445, %v6444
          %v6475 = vpack.c.b16 %v6447, %v6446
          %v6476 = vpack.c.b16 %v6449, %v6448
          %v6477 = vpack.c.b16 %v6451, %v6450
          %v6478 = vpack.c.b16 %v6453, %v6452
          %v6479 = vpack.c.b16 %v6455, %v6454
          %v6480 = vpack.c.b16 %v6457, %v6456
          %v6481 = vpack.c.b16 %v6459, %v6458
          %v6482 = vpack.c.b16 %v6461, %v6460
          %v6483 = vpack.c.b16 %v6463, %v6462
          %v6484 = vpack.c.b16 %v6465, %v6464
          %v6485 = vpack.c.b16 %v6467, %v6466
          %v6486 = vpack.c.b16 %v6469, %v6468
          %v6487 = vpack.c.b16 %v6471, %v6470
          %v6488 = vunpack.c.l.b16 %v5699
          %v6489 = vunpack.c.l.b16 %v5708
          %v6490 = vunpack.c.l.b16 %v5721
          %v6491 = vunpack.c.l.b16 %v5730
          %v6492 = vunpack.c.l.b16 %v5743
          %v6493 = vunpack.c.l.b16 %v5752
          %v6494 = vunpack.c.l.b16 %v5765
          %v6495 = vunpack.c.l.b16 %v5774
          %v6496 = vunpack.c.l.b16 %v5787
          %v6497 = vunpack.c.l.b16 %v5796
          %v6498 = vunpack.c.l.b16 %v5809
          %v6499 = vunpack.c.l.b16 %v5818
          %v6500 = vunpack.c.l.b16 %v5831
          %v6501 = vunpack.c.l.b16 %v5840
          %v6502 = vunpack.c.l.b16 %v5853
          %v6503 = vunpack.c.l.b16 %v5862
          %v6504 = vunpack.c.l.b16 %v5875
          %v6505 = vunpack.c.l.b16 %v5884
          %v6506 = vunpack.c.l.b16 %v5897
          %v6507 = vunpack.c.l.b16 %v5906
          %v6508 = vunpack.c.l.b16 %v5919
          %v6509 = vunpack.c.l.b16 %v5928
          %v6510 = vunpack.c.l.b16 %v5941
          %v6511 = vunpack.c.l.b16 %v5950
          %v6512 = vunpack.c.l.b16 %v5963
          %v6513 = vunpack.c.l.b16 %v5972
          %v6514 = vunpack.c.l.b16 %v5985
          %v6515 = vunpack.c.l.b16 %v5994
          %v6516 = vunpack.c.l.b16 %v6007
          %v6517 = vunpack.c.l.b16 %v6016
          %v6518 = vunpack.c.l.b16 %v6029
          %v6519 = vunpack.c.l.b16 %v6038
          %v6520 = vpack.c.b16 %v6489, %v6488
          %v6521 = vpack.c.b16 %v6491, %v6490
          %v6522 = vpack.c.b16 %v6493, %v6492
          %v6523 = vpack.c.b16 %v6495, %v6494
          %v6524 = vpack.c.b16 %v6497, %v6496
          %v6525 = vpack.c.b16 %v6499, %v6498
          %v6526 = vpack.c.b16 %v6501, %v6500
          %v6527 = vpack.c.b16 %v6503, %v6502
          %v6528 = vpack.c.b16 %v6505, %v6504
          %v6529 = vpack.c.b16 %v6507, %v6506
          %v6530 = vpack.c.b16 %v6509, %v6508
          %v6531 = vpack.c.b16 %v6511, %v6510
          %v6532 = vpack.c.b16 %v6513, %v6512
          %v6533 = vpack.c.b16 %v6515, %v6514
          %v6534 = vpack.c.b16 %v6517, %v6516
          %v6535 = vpack.c.b16 %v6519, %v6518
          %6536 = vrot.lane.b32.xlu0 %v6520, 64
          %v6537 = vpop.permute.xlu0 %6536
          %6538 = vrot.lane.b32.xlu0 %v6521, 64
          %v6539 = vpop.permute.xlu0 %6538
          %6540 = vrot.lane.b32.xlu0 %v6522, 64
          %v6541 = vpop.permute.xlu0 %6540
          %6542 = vrot.lane.b32.xlu0 %v6523, 64
          %v6543 = vpop.permute.xlu0 %6542
          %6544 = vrot.lane.b32.xlu0 %v6524, 64
          %v6545 = vpop.permute.xlu0 %6544
          %6546 = vrot.lane.b32.xlu0 %v6525, 64
          %v6547 = vpop.permute.xlu0 %6546
          %6548 = vrot.lane.b32.xlu0 %v6526, 64
          %v6549 = vpop.permute.xlu0 %6548
          %6550 = vrot.lane.b32.xlu0 %v6527, 64
          %v6551 = vpop.permute.xlu0 %6550
          %6552 = vrot.lane.b32.xlu0 %v6528, 64
          %v6553 = vpop.permute.xlu0 %6552
          %6554 = vrot.lane.b32.xlu0 %v6529, 64
          %v6555 = vpop.permute.xlu0 %6554
          %6556 = vrot.lane.b32.xlu0 %v6530, 64
          %v6557 = vpop.permute.xlu0 %6556
          %6558 = vrot.lane.b32.xlu0 %v6531, 64
          %v6559 = vpop.permute.xlu0 %6558
          %6560 = vrot.lane.b32.xlu0 %v6532, 64
          %v6561 = vpop.permute.xlu0 %6560
          %6562 = vrot.lane.b32.xlu0 %v6533, 64
          %v6563 = vpop.permute.xlu0 %6562
          %6564 = vrot.lane.b32.xlu0 %v6534, 64
          %v6565 = vpop.permute.xlu0 %6564
          %6566 = vrot.lane.b32.xlu0 %v6535, 64
          %v6567 = vpop.permute.xlu0 %6566
          %v6568 = vunpack.c.l.b16 %v6100
          %v6569 = vunpack.c.l.b16 %v6109
          %v6570 = vunpack.c.l.b16 %v6122
          %v6571 = vunpack.c.l.b16 %v6131
          %v6572 = vunpack.c.l.b16 %v6144
          %v6573 = vunpack.c.l.b16 %v6153
          %v6574 = vunpack.c.l.b16 %v6166
          %v6575 = vunpack.c.l.b16 %v6175
          %v6576 = vunpack.c.l.b16 %v6188
          %v6577 = vunpack.c.l.b16 %v6197
          %v6578 = vunpack.c.l.b16 %v6210
          %v6579 = vunpack.c.l.b16 %v6219
          %v6580 = vunpack.c.l.b16 %v6232
          %v6581 = vunpack.c.l.b16 %v6241
          %v6582 = vunpack.c.l.b16 %v6254
          %v6583 = vunpack.c.l.b16 %v6263
          %v6584 = vunpack.c.l.b16 %v6276
          %v6585 = vunpack.c.l.b16 %v6285
          %v6586 = vunpack.c.l.b16 %v6298
          %v6587 = vunpack.c.l.b16 %v6307
          %v6588 = vunpack.c.l.b16 %v6320
          %v6589 = vunpack.c.l.b16 %v6329
          %v6590 = vunpack.c.l.b16 %v6342
          %v6591 = vunpack.c.l.b16 %v6351
          %v6592 = vunpack.c.l.b16 %v6364
          %v6593 = vunpack.c.l.b16 %v6373
          %v6594 = vunpack.c.l.b16 %v6386
          %v6595 = vunpack.c.l.b16 %v6395
          %v6596 = vunpack.c.l.b16 %v6408
          %v6597 = vunpack.c.l.b16 %v6417
          %v6598 = vunpack.c.l.b16 %v6430
          %v6599 = vunpack.c.l.b16 %v6439
          %v6600 = vpack.c.b16 %v6569, %v6568
          %v6601 = vpack.c.b16 %v6571, %v6570
          %v6602 = vpack.c.b16 %v6573, %v6572
          %v6603 = vpack.c.b16 %v6575, %v6574
          %v6604 = vpack.c.b16 %v6577, %v6576
          %v6605 = vpack.c.b16 %v6579, %v6578
          %v6606 = vpack.c.b16 %v6581, %v6580
          %v6607 = vpack.c.b16 %v6583, %v6582
          %v6608 = vpack.c.b16 %v6585, %v6584
          %v6609 = vpack.c.b16 %v6587, %v6586
          %v6610 = vpack.c.b16 %v6589, %v6588
          %v6611 = vpack.c.b16 %v6591, %v6590
          %v6612 = vpack.c.b16 %v6593, %v6592
          %v6613 = vpack.c.b16 %v6595, %v6594
          %v6614 = vpack.c.b16 %v6597, %v6596
          %v6615 = vpack.c.b16 %v6599, %v6598
          %vm6616 = vcmask 523264
          %v6619 = vsel %vm6616, %v6472, %v6537
          %v6623 = vsel %vm6616, %v6473, %v6539
          %v6627 = vsel %vm6616, %v6474, %v6541
          %v6631 = vsel %vm6616, %v6475, %v6543
          %v6635 = vsel %vm6616, %v6476, %v6545
          %v6639 = vsel %vm6616, %v6477, %v6547
          %v6643 = vsel %vm6616, %v6478, %v6549
          %v6647 = vsel %vm6616, %v6479, %v6551
          %v6651 = vsel %vm6616, %v6480, %v6553
          %v6655 = vsel %vm6616, %v6481, %v6555
          %v6659 = vsel %vm6616, %v6482, %v6557
          %v6663 = vsel %vm6616, %v6483, %v6559
          %v6667 = vsel %vm6616, %v6484, %v6561
          %v6671 = vsel %vm6616, %v6485, %v6563
          %v6675 = vsel %vm6616, %v6486, %v6565
          %v6679 = vsel %vm6616, %v6487, %v6567
          %v6681 = vld [vmem:[%s287] sm:$0xf]
          %v6682 = vld [vmem:[%s287 + $0x4] sm:$0xf]
          %v6683 = vld [vmem:[%s287 + $0x8] sm:$0xf]
          %v6684 = vld [vmem:[%s287 + $0xc] sm:$0xf]
          %v6685 = vld [vmem:[%s287 + $0x10] sm:$0xf]
          %v6686 = vld [vmem:[%s287 + $0x14] sm:$0xf]
          %v6687 = vld [vmem:[%s287 + $0x18] sm:$0xf]
          %v6688 = vld [vmem:[%s287 + $0x1c] sm:$0xf]
          %v6689 = vld [vmem:[%s287 + $0x20] sm:$0xf]
          %v6690 = vld [vmem:[%s287 + $0x24] sm:$0xf]
          %v6691 = vld [vmem:[%s287 + $0x28] sm:$0xf]
          %v6692 = vld [vmem:[%s287 + $0x2c] sm:$0xf]
          %v6693 = vld [vmem:[%s287 + $0x30] sm:$0xf]
          %v6694 = vld [vmem:[%s287 + $0x34] sm:$0xf]
          %v6695 = vld [vmem:[%s287 + $0x38] sm:$0xf]
          %v6696 = vld [vmem:[%s287 + $0x3c] sm:$0xf]
          %v6697 = vld [vmem:[%s287 + $0x40] sm:$0xf]
          %v6698 = vld [vmem:[%s287 + $0x44] sm:$0xf]
          %v6699 = vld [vmem:[%s287 + $0x48] sm:$0xf]
          %v6700 = vld [vmem:[%s287 + $0x4c] sm:$0xf]
          %v6701 = vld [vmem:[%s287 + $0x50] sm:$0xf]
          %v6702 = vld [vmem:[%s287 + $0x54] sm:$0xf]
          %v6703 = vld [vmem:[%s287 + $0x58] sm:$0xf]
          %v6704 = vld [vmem:[%s287 + $0x5c] sm:$0xf]
          %v6737 = vunpack.c.l.b16 %v5236
          %v6738 = vunpack.c.l.b16 %v5237
          %v6739 = vunpack.c.l.b16 %v5239
          %v6740 = vunpack.c.l.b16 %v5240
          %v6741 = vunpack.c.l.b16 %v5242
          %v6742 = vunpack.c.l.b16 %v5243
          %v6743 = vunpack.c.l.b16 %v5245
          %v6744 = vunpack.c.l.b16 %v5246
          %v6745 = vunpack.c.l.b16 %v5248
          %v6746 = vunpack.c.l.b16 %v5249
          %v6747 = vunpack.c.l.b16 %v5251
          %v6748 = vunpack.c.l.b16 %v5252
          %v6749 = vunpack.c.l.b16 %v5254
          %v6750 = vunpack.c.l.b16 %v5255
          %v6751 = vunpack.c.l.b16 %v5257
          %v6752 = vunpack.c.l.b16 %v5258
          %v6753 = vunpack.c.l.b16 %v5260
          %v6754 = vunpack.c.l.b16 %v5261
          %v6755 = vunpack.c.l.b16 %v5263
          %v6756 = vunpack.c.l.b16 %v5264
          %v6757 = vunpack.c.l.b16 %v5266
          %v6758 = vunpack.c.l.b16 %v5267
          %v6759 = vunpack.c.l.b16 %v5269
          %v6760 = vunpack.c.l.b16 %v5270
          %v6761 = vunpack.c.l.b16 %v5272
          %v6762 = vunpack.c.l.b16 %v5273
          %v6763 = vunpack.c.l.b16 %v5275
          %v6764 = vunpack.c.l.b16 %v5276
          %v6765 = vunpack.c.l.b16 %v5278
          %v6766 = vunpack.c.l.b16 %v5279
          %v6767 = vunpack.c.l.b16 %v5281
          %v6768 = vunpack.c.l.b16 %v5282
          %v6769 = vpack.c.b16 %v6738, %v6737
          %v6770 = vpack.c.b16 %v6740, %v6739
          %v6771 = vpack.c.b16 %v6742, %v6741
          %v6772 = vpack.c.b16 %v6744, %v6743
          %v6773 = vpack.c.b16 %v6746, %v6745
          %v6774 = vpack.c.b16 %v6748, %v6747
          %v6775 = vpack.c.b16 %v6750, %v6749
          %v6776 = vpack.c.b16 %v6752, %v6751
          %v6777 = vpack.c.b16 %v6754, %v6753
          %v6778 = vpack.c.b16 %v6756, %v6755
          %v6779 = vpack.c.b16 %v6758, %v6757
          %v6780 = vpack.c.b16 %v6760, %v6759
          %v6781 = vpack.c.b16 %v6762, %v6761
          %v6782 = vpack.c.b16 %v6764, %v6763
          %v6783 = vpack.c.b16 %v6766, %v6765
          %v6784 = vpack.c.b16 %v6768, %v6767
          %v6817 = vunpack.c.l.b16 %v5640
          %v6818 = vunpack.c.l.b16 %v5641
          %v6819 = vunpack.c.l.b16 %v5643
          %v6820 = vunpack.c.l.b16 %v5644
          %v6821 = vunpack.c.l.b16 %v5646
          %v6822 = vunpack.c.l.b16 %v5647
          %v6823 = vunpack.c.l.b16 %v5649
          %v6824 = vunpack.c.l.b16 %v5650
          %v6825 = vunpack.c.l.b16 %v5652
          %v6826 = vunpack.c.l.b16 %v5653
          %v6827 = vunpack.c.l.b16 %v5655
          %v6828 = vunpack.c.l.b16 %v5656
          %v6829 = vunpack.c.l.b16 %v5658
          %v6830 = vunpack.c.l.b16 %v5659
          %v6831 = vunpack.c.l.b16 %v5661
          %v6832 = vunpack.c.l.b16 %v5662
          %v6833 = vunpack.c.l.b16 %v5664
          %v6834 = vunpack.c.l.b16 %v5665
          %v6835 = vunpack.c.l.b16 %v5667
          %v6836 = vunpack.c.l.b16 %v5668
          %v6837 = vunpack.c.l.b16 %v5670
          %v6838 = vunpack.c.l.b16 %v5671
          %v6839 = vunpack.c.l.b16 %v5673
          %v6840 = vunpack.c.l.b16 %v5674
          %v6841 = vunpack.c.l.b16 %v5676
          %v6842 = vunpack.c.l.b16 %v5677
          %v6843 = vunpack.c.l.b16 %v5679
          %v6844 = vunpack.c.l.b16 %v5680
          %v6845 = vunpack.c.l.b16 %v5682
          %v6846 = vunpack.c.l.b16 %v5683
          %v6847 = vunpack.c.l.b16 %v5685
          %v6848 = vunpack.c.l.b16 %v5686
          %v6849 = vpack.c.b16 %v6818, %v6817
          %v6850 = vpack.c.b16 %v6820, %v6819
          %v6851 = vpack.c.b16 %v6822, %v6821
          %v6852 = vpack.c.b16 %v6824, %v6823
          %v6853 = vpack.c.b16 %v6826, %v6825
          %v6854 = vpack.c.b16 %v6828, %v6827
          %v6855 = vpack.c.b16 %v6830, %v6829
          %v6856 = vpack.c.b16 %v6832, %v6831
          %v6857 = vpack.c.b16 %v6834, %v6833
          %v6858 = vpack.c.b16 %v6836, %v6835
          %v6859 = vpack.c.b16 %v6838, %v6837
          %v6860 = vpack.c.b16 %v6840, %v6839
          %v6861 = vpack.c.b16 %v6842, %v6841
          %v6862 = vpack.c.b16 %v6844, %v6843
          %v6863 = vpack.c.b16 %v6846, %v6845
          %v6864 = vpack.c.b16 %v6848, %v6847
          %6865 = vrot.lane.b32.xlu0 %v6849, 64
          %v6866 = vpop.permute.xlu0 %6865
          %6867 = vrot.lane.b32.xlu0 %v6850, 64
          %v6868 = vpop.permute.xlu0 %6867
          %6869 = vrot.lane.b32.xlu0 %v6851, 64
          %v6870 = vpop.permute.xlu0 %6869
          %6871 = vrot.lane.b32.xlu0 %v6852, 64
          %v6872 = vpop.permute.xlu0 %6871
          %6873 = vrot.lane.b32.xlu0 %v6853, 64
          %v6874 = vpop.permute.xlu0 %6873
          %6875 = vrot.lane.b32.xlu0 %v6854, 64
          %v6876 = vpop.permute.xlu0 %6875
          %6877 = vrot.lane.b32.xlu0 %v6855, 64
          %v6878 = vpop.permute.xlu0 %6877
          %6879 = vrot.lane.b32.xlu0 %v6856, 64
          %v6880 = vpop.permute.xlu0 %6879
          %6881 = vrot.lane.b32.xlu0 %v6857, 64
          %v6882 = vpop.permute.xlu0 %6881
          %6883 = vrot.lane.b32.xlu0 %v6858, 64
          %v6884 = vpop.permute.xlu0 %6883
          %6885 = vrot.lane.b32.xlu0 %v6859, 64
          %v6886 = vpop.permute.xlu0 %6885
          %6887 = vrot.lane.b32.xlu0 %v6860, 64
          %v6888 = vpop.permute.xlu0 %6887
          %6889 = vrot.lane.b32.xlu0 %v6861, 64
          %v6890 = vpop.permute.xlu0 %6889
          %6891 = vrot.lane.b32.xlu0 %v6862, 64
          %v6892 = vpop.permute.xlu0 %6891
          %6893 = vrot.lane.b32.xlu0 %v6863, 64
          %v6894 = vpop.permute.xlu0 %6893
          %6895 = vrot.lane.b32.xlu0 %v6864, 64
          %v6896 = vpop.permute.xlu0 %6895
          %v6929 = vunpack.c.l.b16 %v6041
          %v6930 = vunpack.c.l.b16 %v6042
          %v6931 = vunpack.c.l.b16 %v6044
          %v6932 = vunpack.c.l.b16 %v6045
          %v6933 = vunpack.c.l.b16 %v6047
          %v6934 = vunpack.c.l.b16 %v6048
          %v6935 = vunpack.c.l.b16 %v6050
          %v6936 = vunpack.c.l.b16 %v6051
          %v6937 = vunpack.c.l.b16 %v6053
          %v6938 = vunpack.c.l.b16 %v6054
          %v6939 = vunpack.c.l.b16 %v6056
          %v6940 = vunpack.c.l.b16 %v6057
          %v6941 = vunpack.c.l.b16 %v6059
          %v6942 = vunpack.c.l.b16 %v6060
          %v6943 = vunpack.c.l.b16 %v6062
          %v6944 = vunpack.c.l.b16 %v6063
          %v6945 = vunpack.c.l.b16 %v6065
          %v6946 = vunpack.c.l.b16 %v6066
          %v6947 = vunpack.c.l.b16 %v6068
          %v6948 = vunpack.c.l.b16 %v6069
          %v6949 = vunpack.c.l.b16 %v6071
          %v6950 = vunpack.c.l.b16 %v6072
          %v6951 = vunpack.c.l.b16 %v6074
          %v6952 = vunpack.c.l.b16 %v6075
          %v6953 = vunpack.c.l.b16 %v6077
          %v6954 = vunpack.c.l.b16 %v6078
          %v6955 = vunpack.c.l.b16 %v6080
          %v6956 = vunpack.c.l.b16 %v6081
          %v6957 = vunpack.c.l.b16 %v6083
          %v6958 = vunpack.c.l.b16 %v6084
          %v6959 = vunpack.c.l.b16 %v6086
          %v6960 = vunpack.c.l.b16 %v6087
          %v6961 = vpack.c.b16 %v6930, %v6929
          %v6962 = vpack.c.b16 %v6932, %v6931
          %v6963 = vpack.c.b16 %v6934, %v6933
          %v6964 = vpack.c.b16 %v6936, %v6935
          %v6965 = vpack.c.b16 %v6938, %v6937
          %v6966 = vpack.c.b16 %v6940, %v6939
          %v6967 = vpack.c.b16 %v6942, %v6941
          %v6968 = vpack.c.b16 %v6944, %v6943
          %v6969 = vpack.c.b16 %v6946, %v6945
          %v6970 = vpack.c.b16 %v6948, %v6947
          %v6971 = vpack.c.b16 %v6950, %v6949
          %v6972 = vpack.c.b16 %v6952, %v6951
          %v6973 = vpack.c.b16 %v6954, %v6953
          %v6974 = vpack.c.b16 %v6956, %v6955
          %v6975 = vpack.c.b16 %v6958, %v6957
          %v6976 = vpack.c.b16 %v6960, %v6959
          %v6979 = vsel %vm6616, %v6769, %v6866
          %v6983 = vsel %vm6616, %v6770, %v6868
          %v6987 = vsel %vm6616, %v6771, %v6870
          %v6991 = vsel %vm6616, %v6772, %v6872
          %v6995 = vsel %vm6616, %v6773, %v6874
          %v6999 = vsel %vm6616, %v6774, %v6876
          %v7003 = vsel %vm6616, %v6775, %v6878
          %v7007 = vsel %vm6616, %v6776, %v6880
          %v7011 = vsel %vm6616, %v6777, %v6882
          %v7015 = vsel %vm6616, %v6778, %v6884
          %v7019 = vsel %vm6616, %v6779, %v6886
          %v7023 = vsel %vm6616, %v6780, %v6888
          %v7027 = vsel %vm6616, %v6781, %v6890
          %v7031 = vsel %vm6616, %v6782, %v6892
          %v7035 = vsel %vm6616, %v6783, %v6894
          %v7039 = vsel %vm6616, %v6784, %v6896
          %s7041 = scalar_lea.vmem %s287, 96
          %v7042 = vld [vmem:[%s7041] sm:$0xf]
          %v7043 = vld [vmem:[%s7041 + $0x4] sm:$0xf]
          %v7044 = vld [vmem:[%s7041 + $0x8] sm:$0xf]
          %v7045 = vld [vmem:[%s7041 + $0xc] sm:$0xf]
          %v7046 = vld [vmem:[%s7041 + $0x10] sm:$0xf]
          %v7047 = vld [vmem:[%s7041 + $0x14] sm:$0xf]
          %v7048 = vld [vmem:[%s7041 + $0x18] sm:$0xf]
          %v7049 = vld [vmem:[%s7041 + $0x1c] sm:$0xf]
          %v7050 = vld [vmem:[%s7041 + $0x20] sm:$0xf]
          %v7051 = vld [vmem:[%s7041 + $0x24] sm:$0xf]
          %v7052 = vld [vmem:[%s7041 + $0x28] sm:$0xf]
          %v7053 = vld [vmem:[%s7041 + $0x2c] sm:$0xf]
          %v7054 = vld [vmem:[%s7041 + $0x30] sm:$0xf]
          %v7055 = vld [vmem:[%s7041 + $0x34] sm:$0xf]
          %v7056 = vld [vmem:[%s7041 + $0x38] sm:$0xf]
          %v7057 = vld [vmem:[%s7041 + $0x3c] sm:$0xf]
          %v7058 = vld [vmem:[%s7041 + $0x40] sm:$0xf]
          %v7059 = vld [vmem:[%s7041 + $0x44] sm:$0xf]
          %v7060 = vld [vmem:[%s7041 + $0x48] sm:$0xf]
          %v7061 = vld [vmem:[%s7041 + $0x4c] sm:$0xf]
          %v7062 = vld [vmem:[%s7041 + $0x50] sm:$0xf]
          %v7063 = vld [vmem:[%s7041 + $0x54] sm:$0xf]
          %v7064 = vld [vmem:[%s7041 + $0x58] sm:$0xf]
          %v7065 = vld [vmem:[%s7041 + $0x5c] sm:$0xf]
          %v7090 = vunpack.c.l.b16 %v7042
          %v7091 = vunpack.c.l.b16 %v7043
          %v7092 = vunpack.c.l.b16 %v7044
          %v7093 = vunpack.c.l.b16 %v7045
          %v7094 = vunpack.c.l.b16 %v7046
          %v7095 = vunpack.c.l.b16 %v7047
          %v7096 = vunpack.c.l.b16 %v7048
          %v7097 = vunpack.c.l.b16 %v7049
          %v7098 = vunpack.c.l.b16 %v7050
          %v7099 = vunpack.c.l.b16 %v7051
          %v7100 = vunpack.c.l.b16 %v7052
          %v7101 = vunpack.c.l.b16 %v7053
          %v7102 = vunpack.c.l.b16 %v7054
          %v7103 = vunpack.c.l.b16 %v7055
          %v7104 = vunpack.c.l.b16 %v7056
          %v7105 = vunpack.c.l.b16 %v7057
          %v7106 = vunpack.c.l.b16 %v7058
          %v7107 = vunpack.c.l.b16 %v7059
          %v7108 = vunpack.c.l.b16 %v7060
          %v7109 = vunpack.c.l.b16 %v7061
          %v7110 = vunpack.c.l.b16 %v7062
          %v7111 = vunpack.c.l.b16 %v7063
          %v7112 = vunpack.c.l.b16 %v7064
          %v7113 = vunpack.c.l.b16 %v7065
          %v7114 = vpack.c.b16 %v7091, %v7090
          %v7115 = vpack.c.b16 %v7093, %v7092
          %v7116 = vpack.c.b16 %v7095, %v7094
          %v7117 = vpack.c.b16 %v7097, %v7096
          %v7118 = vpack.c.b16 %v7099, %v7098
          %v7119 = vpack.c.b16 %v7101, %v7100
          %v7120 = vpack.c.b16 %v7103, %v7102
          %v7121 = vpack.c.b16 %v7105, %v7104
          %v7122 = vpack.c.b16 %v7107, %v7106
          %v7123 = vpack.c.b16 %v7109, %v7108
          %v7124 = vpack.c.b16 %v7111, %v7110
          %v7125 = vpack.c.b16 %v7113, %v7112
          %v7139 = vsel %vm6616, %v6961, 0
          %v7142 = vsel %vm6616, %v6962, 0
          %v7145 = vsel %vm6616, %v6963, 0
          %v7148 = vsel %vm6616, %v6964, 0
          %v7151 = vsel %vm6616, %v6965, 0
          %v7154 = vsel %vm6616, %v6966, 0
          %v7157 = vsel %vm6616, %v6967, 0
          %v7160 = vsel %vm6616, %v6968, 0
          %v7163 = vsel %vm6616, %v6969, 0
          %v7166 = vsel %vm6616, %v6970, 0
          %v7169 = vsel %vm6616, %v6971, 0
          %v7172 = vsel %vm6616, %v6972, 0
          %v7175 = vsel %vm6616, %v6973, 0
          %v7178 = vsel %vm6616, %v6974, 0
          %v7181 = vsel %vm6616, %v6975, 0
          %v7184 = vsel %vm6616, %v6976, 0
          %7186 = vmatprep.subr.bf16.mxu0 0
          %7187 = vmatpush1.bf16.msra.mxu0 %v7121
          %7188 = vmatprep.subr.bf16.mxu0 0
          %7189 = vmatpush1.bf16.msra.mxu0 %v7120
          %7190 = vmatprep.subr.bf16.mxu0 0
          %7191 = vmatpush1.bf16.msra.mxu0 %v7119
          %7192 = vmatprep.subr.bf16.mxu0 0
          %7193 = vmatpush1.bf16.msra.mxu0 %v7118
          %7194 = vmatprep.subr.bf16.mxu0 0
          %7195 = vmatpush1.bf16.msra.mxu0 %v7117
          %7196 = vmatprep.subr.bf16.mxu0 0
          %7197 = vmatpush1.bf16.msra.mxu0 %v7116
          %7198 = vmatprep.subr.bf16.mxu0 0
          %7199 = vmatpush1.bf16.msra.mxu0 %v7115
          %7200 = vmatprep.subr.bf16.mxu0 0
          %7201 = vmatpush1.bf16.msra.mxu0 %v7114
          %7202 = vmatprep.subr.bf16.mxu0 0
          %7203 = vmatpush2.bf16.msra.mxu0 0
          %7204 = vmatprep.subr.bf16.mxu0 0
          %7205 = vmatpush2.bf16.msra.mxu0 0
          %7206 = vmatprep.subr.bf16.mxu0 0
          %7207 = vmatpush2.bf16.msra.mxu0 0
          %7208 = vmatprep.subr.bf16.mxu0 0
          %7209 = vmatpush2.bf16.msra.mxu0 0
          %7210 = vmatprep.subr.bf16.mxu0 0
          %7211 = vmatpush2.bf16.msra.mxu0 %v7125
          %7212 = vmatprep.subr.bf16.mxu0 0
          %7213 = vmatpush2.bf16.msra.mxu0 %v7124
          %7214 = vmatprep.subr.bf16.mxu0 0
          %7215 = vmatpush2.bf16.msra.mxu0 %v7123
          %7216 = vmatprep.subr.bf16.mxu0 0
          %7217 = vmatpush2.bf16.msra.mxu0 %v7122
          %7218 = vmatprep.mubr.bf16.mxu0 %v7139
          %7219 = vmatmul.mubr.bf16.gmra.mxu0 %v6979
          %v7220 = vpop.f32.mrf.mxu0
          %v7221 = vadd.f32 0.0, %v7220
          %v7222 = vpop.f32.mrf.mxu0
          %v7223 = vpop.f32.mrf.mxu0
          %v7224 = vadd.f32 0.0, %v7223
          %v7225 = vpop.f32.mrf.mxu0
          %7226 = vmatprep.mubr.bf16.mxu0 %v7142
          %7227 = vmatmul.mubr.bf16.gmra.mxu0 %v6983
          %v7228 = vpop.f32.mrf.mxu0
          %v7229 = vadd.f32 0.0, %v7228
          %v7230 = vpop.f32.mrf.mxu0
          %v7231 = vpop.f32.mrf.mxu0
          %v7232 = vadd.f32 0.0, %v7231
          %v7233 = vpop.f32.mrf.mxu0
          %7234 = vmatprep.mubr.bf16.mxu0 %v7145
          %7235 = vmatmul.mubr.bf16.gmra.mxu0 %v6987
          %v7236 = vpop.f32.mrf.mxu0
          %v7237 = vadd.f32 0.0, %v7236
          %v7238 = vpop.f32.mrf.mxu0
          %v7239 = vpop.f32.mrf.mxu0
          %v7240 = vadd.f32 0.0, %v7239
          %v7241 = vpop.f32.mrf.mxu0
          %7242 = vmatprep.mubr.bf16.mxu0 %v7148
          %7243 = vmatmul.mubr.bf16.gmra.mxu0 %v6991
          %v7244 = vpop.f32.mrf.mxu0
          %v7245 = vadd.f32 0.0, %v7244
          %v7246 = vpop.f32.mrf.mxu0
          %v7247 = vpop.f32.mrf.mxu0
          %v7248 = vadd.f32 0.0, %v7247
          %v7249 = vpop.f32.mrf.mxu0
          %7250 = vmatprep.mubr.bf16.mxu0 %v7151
          %7251 = vmatmul.mubr.bf16.gmra.mxu0 %v6995
          %v7252 = vpop.f32.mrf.mxu0
          %v7253 = vadd.f32 0.0, %v7252
          %v7254 = vpop.f32.mrf.mxu0
          %v7255 = vpop.f32.mrf.mxu0
          %v7256 = vadd.f32 0.0, %v7255
          %v7257 = vpop.f32.mrf.mxu0
          %7258 = vmatprep.mubr.bf16.mxu0 %v7154
          %7259 = vmatmul.mubr.bf16.gmra.mxu0 %v6999
          %v7260 = vpop.f32.mrf.mxu0
          %v7261 = vadd.f32 0.0, %v7260
          %v7262 = vpop.f32.mrf.mxu0
          %v7263 = vpop.f32.mrf.mxu0
          %v7264 = vadd.f32 0.0, %v7263
          %v7265 = vpop.f32.mrf.mxu0
          %7266 = vmatprep.mubr.bf16.mxu0 %v7157
          %7267 = vmatmul.mubr.bf16.gmra.mxu0 %v7003
          %v7268 = vpop.f32.mrf.mxu0
          %v7269 = vadd.f32 0.0, %v7268
          %v7270 = vpop.f32.mrf.mxu0
          %v7271 = vpop.f32.mrf.mxu0
          %v7272 = vadd.f32 0.0, %v7271
          %v7273 = vpop.f32.mrf.mxu0
          %7274 = vmatprep.mubr.bf16.mxu0 %v7160
          %7275 = vmatmul.mubr.bf16.gmra.mxu0 %v7007
          %v7276 = vpop.f32.mrf.mxu0
          %v7277 = vadd.f32 0.0, %v7276
          %v7278 = vpop.f32.mrf.mxu0
          %v7279 = vpop.f32.mrf.mxu0
          %v7280 = vadd.f32 0.0, %v7279
          %v7281 = vpop.f32.mrf.mxu0
          %7282 = vmatprep.mubr.bf16.mxu0 %v7163
          %7283 = vmatmul.mubr.bf16.gmra.mxu0 %v7011
          %v7284 = vpop.f32.mrf.mxu0
          %v7285 = vadd.f32 0.0, %v7284
          %v7286 = vpop.f32.mrf.mxu0
          %v7287 = vpop.f32.mrf.mxu0
          %v7288 = vadd.f32 0.0, %v7287
          %v7289 = vpop.f32.mrf.mxu0
          %7290 = vmatprep.mubr.bf16.mxu0 %v7166
          %7291 = vmatmul.mubr.bf16.gmra.mxu0 %v7015
          %v7292 = vpop.f32.mrf.mxu0
          %v7293 = vadd.f32 0.0, %v7292
          %v7294 = vpop.f32.mrf.mxu0
          %v7295 = vpop.f32.mrf.mxu0
          %v7296 = vadd.f32 0.0, %v7295
          %v7297 = vpop.f32.mrf.mxu0
          %7298 = vmatprep.mubr.bf16.mxu0 %v7169
          %7299 = vmatmul.mubr.bf16.gmra.mxu0 %v7019
          %v7300 = vpop.f32.mrf.mxu0
          %v7301 = vadd.f32 0.0, %v7300
          %v7302 = vpop.f32.mrf.mxu0
          %v7303 = vpop.f32.mrf.mxu0
          %v7304 = vadd.f32 0.0, %v7303
          %v7305 = vpop.f32.mrf.mxu0
          %7306 = vmatprep.mubr.bf16.mxu0 %v7172
          %7307 = vmatmul.mubr.bf16.gmra.mxu0 %v7023
          %v7308 = vpop.f32.mrf.mxu0
          %v7309 = vadd.f32 0.0, %v7308
          %v7310 = vpop.f32.mrf.mxu0
          %v7311 = vpop.f32.mrf.mxu0
          %v7312 = vadd.f32 0.0, %v7311
          %v7313 = vpop.f32.mrf.mxu0
          %7314 = vmatprep.mubr.bf16.mxu0 %v7175
          %7315 = vmatmul.mubr.bf16.gmra.mxu0 %v7027
          %v7316 = vpop.f32.mrf.mxu0
          %v7317 = vadd.f32 0.0, %v7316
          %v7318 = vpop.f32.mrf.mxu0
          %v7319 = vpop.f32.mrf.mxu0
          %v7320 = vadd.f32 0.0, %v7319
          %v7321 = vpop.f32.mrf.mxu0
          %7322 = vmatprep.mubr.bf16.mxu0 %v7178
          %7323 = vmatmul.mubr.bf16.gmra.mxu0 %v7031
          %v7324 = vpop.f32.mrf.mxu0
          %v7325 = vadd.f32 0.0, %v7324
          %v7326 = vpop.f32.mrf.mxu0
          %v7327 = vpop.f32.mrf.mxu0
          %v7328 = vadd.f32 0.0, %v7327
          %v7329 = vpop.f32.mrf.mxu0
          %7330 = vmatprep.mubr.bf16.mxu0 %v7181
          %7331 = vmatmul.mubr.bf16.gmra.mxu0 %v7035
          %v7332 = vpop.f32.mrf.mxu0
          %v7333 = vadd.f32 0.0, %v7332
          %v7334 = vpop.f32.mrf.mxu0
          %v7335 = vpop.f32.mrf.mxu0
          %v7336 = vadd.f32 0.0, %v7335
          %v7337 = vpop.f32.mrf.mxu0
          %7338 = vmatprep.mubr.bf16.mxu0 %v7184
          %7339 = vmatmul.mubr.bf16.gmra.mxu0 %v7039
          %v7340 = vpop.f32.mrf.mxu0
          %v7341 = vadd.f32 0.0, %v7340
          %v7342 = vpop.f32.mrf.mxu0
          %v7343 = vpop.f32.mrf.mxu0
          %v7344 = vadd.f32 0.0, %v7343
          %v7345 = vpop.f32.mrf.mxu0
          %7346 = vdwg.mxu0
          %v7371 = vunpack.c.l.b16 %v6681
          %v7372 = vunpack.c.l.b16 %v6682
          %v7373 = vunpack.c.l.b16 %v6683
          %v7374 = vunpack.c.l.b16 %v6684
          %v7375 = vunpack.c.l.b16 %v6685
          %v7376 = vunpack.c.l.b16 %v6686
          %v7377 = vunpack.c.l.b16 %v6687
          %v7378 = vunpack.c.l.b16 %v6688
          %v7379 = vunpack.c.l.b16 %v6689
          %v7380 = vunpack.c.l.b16 %v6690
          %v7381 = vunpack.c.l.b16 %v6691
          %v7382 = vunpack.c.l.b16 %v6692
          %v7383 = vunpack.c.l.b16 %v6693
          %v7384 = vunpack.c.l.b16 %v6694
          %v7385 = vunpack.c.l.b16 %v6695
          %v7386 = vunpack.c.l.b16 %v6696
          %v7387 = vunpack.c.l.b16 %v6697
          %v7388 = vunpack.c.l.b16 %v6698
          %v7389 = vunpack.c.l.b16 %v6699
          %v7390 = vunpack.c.l.b16 %v6700
          %v7391 = vunpack.c.l.b16 %v6701
          %v7392 = vunpack.c.l.b16 %v6702
          %v7393 = vunpack.c.l.b16 %v6703
          %v7394 = vunpack.c.l.b16 %v6704
          %v7395 = vpack.c.b16 %v7372, %v7371
          %v7396 = vpack.c.b16 %v7374, %v7373
          %v7397 = vpack.c.b16 %v7376, %v7375
          %v7398 = vpack.c.b16 %v7378, %v7377
          %v7399 = vpack.c.b16 %v7380, %v7379
          %v7400 = vpack.c.b16 %v7382, %v7381
          %v7401 = vpack.c.b16 %v7384, %v7383
          %v7402 = vpack.c.b16 %v7386, %v7385
          %v7403 = vpack.c.b16 %v7388, %v7387
          %v7404 = vpack.c.b16 %v7390, %v7389
          %v7405 = vpack.c.b16 %v7392, %v7391
          %v7406 = vpack.c.b16 %v7394, %v7393
          %v7420 = vsel %vm6616, %v6600, 0
          %v7423 = vsel %vm6616, %v6601, 0
          %v7426 = vsel %vm6616, %v6602, 0
          %v7429 = vsel %vm6616, %v6603, 0
          %v7432 = vsel %vm6616, %v6604, 0
          %v7435 = vsel %vm6616, %v6605, 0
          %v7438 = vsel %vm6616, %v6606, 0
          %v7441 = vsel %vm6616, %v6607, 0
          %v7444 = vsel %vm6616, %v6608, 0
          %v7447 = vsel %vm6616, %v6609, 0
          %v7450 = vsel %vm6616, %v6610, 0
          %v7453 = vsel %vm6616, %v6611, 0
          %v7456 = vsel %vm6616, %v6612, 0
          %v7459 = vsel %vm6616, %v6613, 0
          %v7462 = vsel %vm6616, %v6614, 0
          %v7465 = vsel %vm6616, %v6615, 0
          %7467 = vmatprep.subr.bf16.mxu0 0
          %7468 = vmatpush1.bf16.msra.mxu0 %v7402
          %7469 = vmatprep.subr.bf16.mxu0 0
          %7470 = vmatpush1.bf16.msra.mxu0 %v7401
          %7471 = vmatprep.subr.bf16.mxu0 0
          %7472 = vmatpush1.bf16.msra.mxu0 %v7400
          %7473 = vmatprep.subr.bf16.mxu0 0
          %7474 = vmatpush1.bf16.msra.mxu0 %v7399
          %7475 = vmatprep.subr.bf16.mxu0 0
          %7476 = vmatpush1.bf16.msra.mxu0 %v7398
          %7477 = vmatprep.subr.bf16.mxu0 0
          %7478 = vmatpush1.bf16.msra.mxu0 %v7397
          %7479 = vmatprep.subr.bf16.mxu0 0
          %7480 = vmatpush1.bf16.msra.mxu0 %v7396
          %7481 = vmatprep.subr.bf16.mxu0 0
          %7482 = vmatpush1.bf16.msra.mxu0 %v7395
          %7483 = vmatprep.subr.bf16.mxu0 0
          %7484 = vmatpush2.bf16.msra.mxu0 0
          %7485 = vmatprep.subr.bf16.mxu0 0
          %7486 = vmatpush2.bf16.msra.mxu0 0
          %7487 = vmatprep.subr.bf16.mxu0 0
          %7488 = vmatpush2.bf16.msra.mxu0 0
          %7489 = vmatprep.subr.bf16.mxu0 0
          %7490 = vmatpush2.bf16.msra.mxu0 0
          %7491 = vmatprep.subr.bf16.mxu0 0
          %7492 = vmatpush2.bf16.msra.mxu0 %v7406
          %7493 = vmatprep.subr.bf16.mxu0 0
          %7494 = vmatpush2.bf16.msra.mxu0 %v7405
          %7495 = vmatprep.subr.bf16.mxu0 0
          %7496 = vmatpush2.bf16.msra.mxu0 %v7404
          %7497 = vmatprep.subr.bf16.mxu0 0
          %7498 = vmatpush2.bf16.msra.mxu0 %v7403
          %7499 = vmatprep.mubr.bf16.mxu0 %v7420
          %7500 = vmatmul.mubr.bf16.gmra.mxu0 %v6619
          %v7501 = vpop.f32.mrf.mxu0
          %v7502 = vadd.f32 %v7221, %v7501
          %v7503 = vpop.f32.mrf.mxu0
          %v7504 = vpop.f32.mrf.mxu0
          %v7505 = vadd.f32 %v7224, %v7504
          %v7506 = vpop.f32.mrf.mxu0
          %7507 = vmatprep.mubr.bf16.mxu0 %v7423
          %7508 = vmatmul.mubr.bf16.gmra.mxu0 %v6623
          %v7509 = vpop.f32.mrf.mxu0
          %v7510 = vadd.f32 %v7229, %v7509
          %v7511 = vpop.f32.mrf.mxu0
          %v7512 = vpop.f32.mrf.mxu0
          %v7513 = vadd.f32 %v7232, %v7512
          %v7514 = vpop.f32.mrf.mxu0
          %7515 = vmatprep.mubr.bf16.mxu0 %v7426
          %7516 = vmatmul.mubr.bf16.gmra.mxu0 %v6627
          %v7517 = vpop.f32.mrf.mxu0
          %v7518 = vadd.f32 %v7237, %v7517
          %v7519 = vpop.f32.mrf.mxu0
          %v7520 = vpop.f32.mrf.mxu0
          %v7521 = vadd.f32 %v7240, %v7520
          %v7522 = vpop.f32.mrf.mxu0
          %7523 = vmatprep.mubr.bf16.mxu0 %v7429
          %7524 = vmatmul.mubr.bf16.gmra.mxu0 %v6631
          %v7525 = vpop.f32.mrf.mxu0
          %v7526 = vadd.f32 %v7245, %v7525
          %v7527 = vpop.f32.mrf.mxu0
          %v7528 = vpop.f32.mrf.mxu0
          %v7529 = vadd.f32 %v7248, %v7528
          %v7530 = vpop.f32.mrf.mxu0
          %7531 = vmatprep.mubr.bf16.mxu0 %v7432
          %7532 = vmatmul.mubr.bf16.gmra.mxu0 %v6635
          %v7533 = vpop.f32.mrf.mxu0
          %v7534 = vadd.f32 %v7253, %v7533
          %v7535 = vpop.f32.mrf.mxu0
          %v7536 = vpop.f32.mrf.mxu0
          %v7537 = vadd.f32 %v7256, %v7536
          %v7538 = vpop.f32.mrf.mxu0
          %7539 = vmatprep.mubr.bf16.mxu0 %v7435
          %7540 = vmatmul.mubr.bf16.gmra.mxu0 %v6639
          %v7541 = vpop.f32.mrf.mxu0
          %v7542 = vadd.f32 %v7261, %v7541
          %v7543 = vpop.f32.mrf.mxu0
          %v7544 = vpop.f32.mrf.mxu0
          %v7545 = vadd.f32 %v7264, %v7544
          %v7546 = vpop.f32.mrf.mxu0
          %7547 = vmatprep.mubr.bf16.mxu0 %v7438
          %7548 = vmatmul.mubr.bf16.gmra.mxu0 %v6643
          %v7549 = vpop.f32.mrf.mxu0
          %v7550 = vadd.f32 %v7269, %v7549
          %v7551 = vpop.f32.mrf.mxu0
          %v7552 = vpop.f32.mrf.mxu0
          %v7553 = vadd.f32 %v7272, %v7552
          %v7554 = vpop.f32.mrf.mxu0
          %7555 = vmatprep.mubr.bf16.mxu0 %v7441
          %7556 = vmatmul.mubr.bf16.gmra.mxu0 %v6647
          %v7557 = vpop.f32.mrf.mxu0
          %v7558 = vadd.f32 %v7277, %v7557
          %v7559 = vpop.f32.mrf.mxu0
          %v7560 = vpop.f32.mrf.mxu0
          %v7561 = vadd.f32 %v7280, %v7560
          %v7562 = vpop.f32.mrf.mxu0
          %7563 = vmatprep.mubr.bf16.mxu0 %v7444
          %7564 = vmatmul.mubr.bf16.gmra.mxu0 %v6651
          %v7565 = vpop.f32.mrf.mxu0
          %v7566 = vadd.f32 %v7285, %v7565
          %v7567 = vpop.f32.mrf.mxu0
          %v7568 = vpop.f32.mrf.mxu0
          %v7569 = vadd.f32 %v7288, %v7568
          %v7570 = vpop.f32.mrf.mxu0
          %7571 = vmatprep.mubr.bf16.mxu0 %v7447
          %7572 = vmatmul.mubr.bf16.gmra.mxu0 %v6655
          %v7573 = vpop.f32.mrf.mxu0
          %v7574 = vadd.f32 %v7293, %v7573
          %v7575 = vpop.f32.mrf.mxu0
          %v7576 = vpop.f32.mrf.mxu0
          %v7577 = vadd.f32 %v7296, %v7576
          %v7578 = vpop.f32.mrf.mxu0
          %7579 = vmatprep.mubr.bf16.mxu0 %v7450
          %7580 = vmatmul.mubr.bf16.gmra.mxu0 %v6659
          %v7581 = vpop.f32.mrf.mxu0
          %v7582 = vadd.f32 %v7301, %v7581
          %v7583 = vpop.f32.mrf.mxu0
          %v7584 = vpop.f32.mrf.mxu0
          %v7585 = vadd.f32 %v7304, %v7584
          %v7586 = vpop.f32.mrf.mxu0
          %7587 = vmatprep.mubr.bf16.mxu0 %v7453
          %7588 = vmatmul.mubr.bf16.gmra.mxu0 %v6663
          %v7589 = vpop.f32.mrf.mxu0
          %v7590 = vadd.f32 %v7309, %v7589
          %v7591 = vpop.f32.mrf.mxu0
          %v7592 = vpop.f32.mrf.mxu0
          %v7593 = vadd.f32 %v7312, %v7592
          %v7594 = vpop.f32.mrf.mxu0
          %7595 = vmatprep.mubr.bf16.mxu0 %v7456
          %7596 = vmatmul.mubr.bf16.gmra.mxu0 %v6667
          %v7597 = vpop.f32.mrf.mxu0
          %v7598 = vadd.f32 %v7317, %v7597
          %v7599 = vpop.f32.mrf.mxu0
          %v7600 = vpop.f32.mrf.mxu0
          %v7601 = vadd.f32 %v7320, %v7600
          %v7602 = vpop.f32.mrf.mxu0
          %7603 = vmatprep.mubr.bf16.mxu0 %v7459
          %7604 = vmatmul.mubr.bf16.gmra.mxu0 %v6671
          %v7605 = vpop.f32.mrf.mxu0
          %v7606 = vadd.f32 %v7325, %v7605
          %v7607 = vpop.f32.mrf.mxu0
          %v7608 = vpop.f32.mrf.mxu0
          %v7609 = vadd.f32 %v7328, %v7608
          %v7610 = vpop.f32.mrf.mxu0
          %7611 = vmatprep.mubr.bf16.mxu0 %v7462
          %7612 = vmatmul.mubr.bf16.gmra.mxu0 %v6675
          %v7613 = vpop.f32.mrf.mxu0
          %v7614 = vadd.f32 %v7333, %v7613
          %v7615 = vpop.f32.mrf.mxu0
          %v7616 = vpop.f32.mrf.mxu0
          %v7617 = vadd.f32 %v7336, %v7616
          %v7618 = vpop.f32.mrf.mxu0
          %7619 = vmatprep.mubr.bf16.mxu0 %v7465
          %7620 = vmatmul.mubr.bf16.gmra.mxu0 %v6679
          %v7621 = vpop.f32.mrf.mxu0
          %v7622 = vadd.f32 %v7341, %v7621
          %v7623 = vpop.f32.mrf.mxu0
          %v7624 = vpop.f32.mrf.mxu0
          %v7625 = vadd.f32 %v7344, %v7624
          %v7626 = vpop.f32.mrf.mxu0
          %7627 = vdwg.mxu0
          %v7628 = vld [vmem:[%s5234 + $0x4] sm:$0xf]
          %v7629 = vld [vmem:[%s5234 + $0x8] sm:$0xf]
          %v7630 = vld [vmem:[%s5234 + $0xc] sm:$0x1]
          %v7631 = vld [vmem:[%s5234 + $0x14] sm:$0xf]
          %v7632 = vld [vmem:[%s5234 + $0x18] sm:$0xf]
          %v7633 = vld [vmem:[%s5234 + $0x1c] sm:$0x1]
          %v7634 = vld [vmem:[%s5234 + $0x24] sm:$0xf]
          %v7635 = vld [vmem:[%s5234 + $0x28] sm:$0xf]
          %v7636 = vld [vmem:[%s5234 + $0x2c] sm:$0x1]
          %v7637 = vld [vmem:[%s5234 + $0x34] sm:$0xf]
          %v7638 = vld [vmem:[%s5234 + $0x38] sm:$0xf]
          %v7639 = vld [vmem:[%s5234 + $0x3c] sm:$0x1]
          %v7640 = vld [vmem:[%s5234 + $0x44] sm:$0xf]
          %v7641 = vld [vmem:[%s5234 + $0x48] sm:$0xf]
          %v7642 = vld [vmem:[%s5234 + $0x4c] sm:$0x1]
          %v7643 = vld [vmem:[%s5234 + $0x54] sm:$0xf]
          %v7644 = vld [vmem:[%s5234 + $0x58] sm:$0xf]
          %v7645 = vld [vmem:[%s5234 + $0x5c] sm:$0x1]
          %v7646 = vld [vmem:[%s5234 + $0x64] sm:$0xf]
          %v7647 = vld [vmem:[%s5234 + $0x68] sm:$0xf]
          %v7648 = vld [vmem:[%s5234 + $0x6c] sm:$0x1]
          %v7649 = vld [vmem:[%s5234 + $0x74] sm:$0xf]
          %v7650 = vld [vmem:[%s5234 + $0x78] sm:$0xf]
          %v7651 = vld [vmem:[%s5234 + $0x7c] sm:$0x1]
          %v7652 = vld [vmem:[%s5234 + $0x84] sm:$0xf]
          %v7653 = vld [vmem:[%s5234 + $0x88] sm:$0xf]
          %v7654 = vld [vmem:[%s5234 + $0x8c] sm:$0x1]
          %v7655 = vld [vmem:[%s5234 + $0x94] sm:$0xf]
          %v7656 = vld [vmem:[%s5234 + $0x98] sm:$0xf]
          %v7657 = vld [vmem:[%s5234 + $0x9c] sm:$0x1]
          %v7658 = vld [vmem:[%s5234 + $0xa4] sm:$0xf]
          %v7659 = vld [vmem:[%s5234 + $0xa8] sm:$0xf]
          %v7660 = vld [vmem:[%s5234 + $0xac] sm:$0x1]
          %v7661 = vld [vmem:[%s5234 + $0xb4] sm:$0xf]
          %v7662 = vld [vmem:[%s5234 + $0xb8] sm:$0xf]
          %v7663 = vld [vmem:[%s5234 + $0xbc] sm:$0x1]
          %v7664 = vld [vmem:[%s5234 + $0xc4] sm:$0xf]
          %v7665 = vld [vmem:[%s5234 + $0xc8] sm:$0xf]
          %v7666 = vld [vmem:[%s5234 + $0xcc] sm:$0x1]
          %v7667 = vld [vmem:[%s5234 + $0xd4] sm:$0xf]
          %v7668 = vld [vmem:[%s5234 + $0xd8] sm:$0xf]
          %v7669 = vld [vmem:[%s5234 + $0xdc] sm:$0x1]
          %v7670 = vld [vmem:[%s5234 + $0xe4] sm:$0xf]
          %v7671 = vld [vmem:[%s5234 + $0xe8] sm:$0xf]
          %v7672 = vld [vmem:[%s5234 + $0xec] sm:$0x1]
          %v7673 = vld [vmem:[%s5234 + $0xf4] sm:$0xf]
          %v7674 = vld [vmem:[%s5234 + $0xf8] sm:$0xf]
          %v7675 = vld [vmem:[%s5234 + $0xfc] sm:$0x1]
          %vm7676 = vsmask.f32 3328
          %vm7677 = vsmask.f32 7440
          %vm7678 = vmor %vm7676, %vm7677
          %v7680 = vshrl.u32 %v7628, 16
          %v7682 = vrot.slane %v7680, 4
          %v7683 = vshll.u32 %v7628, 16
          %v7685 = vrot.slane %v7683, 5
          %v7686 = vor.u32 %v7682, %v7685
          %v7687 = vrot.slane %v7686, 4
          %v7689 = vshll.u32 %v7629, 16
          %v7691 = vrot.slane %v7689, 5
          %v7692 = vsel %vm7678, %v7687, %v7691
          %v7693 = vshrl.u32 %v7629, 16
          %v7695 = vrot.slane %v7693, 4
          %v7696 = vor.u32 %v7695, %v7691
          %v7697 = vrot.slane %v7696, 4
          %v7699 = vshll.u32 %v7630, 16
          %v7701 = vrot.slane %v7699, 5
          %v7702 = vsel %vm7678, %v7697, %v7701
          %v7704 = vshrl.u32 %v7631, 16
          %v7706 = vrot.slane %v7704, 4
          %v7707 = vshll.u32 %v7631, 16
          %v7709 = vrot.slane %v7707, 5
          %v7710 = vor.u32 %v7706, %v7709
          %v7711 = vrot.slane %v7710, 4
          %v7713 = vshll.u32 %v7632, 16
          %v7715 = vrot.slane %v7713, 5
          %v7716 = vsel %vm7678, %v7711, %v7715
          %v7717 = vshrl.u32 %v7632, 16
          %v7719 = vrot.slane %v7717, 4
          %v7720 = vor.u32 %v7719, %v7715
          %v7721 = vrot.slane %v7720, 4
          %v7723 = vshll.u32 %v7633, 16
          %v7725 = vrot.slane %v7723, 5
          %v7726 = vsel %vm7678, %v7721, %v7725
          %v7728 = vshrl.u32 %v7634, 16
          %v7730 = vrot.slane %v7728, 4
          %v7731 = vshll.u32 %v7634, 16
          %v7733 = vrot.slane %v7731, 5
          %v7734 = vor.u32 %v7730, %v7733
          %v7735 = vrot.slane %v7734, 4
          %v7737 = vshll.u32 %v7635, 16
          %v7739 = vrot.slane %v7737, 5
          %v7740 = vsel %vm7678, %v7735, %v7739
          %v7741 = vshrl.u32 %v7635, 16
          %v7743 = vrot.slane %v7741, 4
          %v7744 = vor.u32 %v7743, %v7739
          %v7745 = vrot.slane %v7744, 4
          %v7747 = vshll.u32 %v7636, 16
          %v7749 = vrot.slane %v7747, 5
          %v7750 = vsel %vm7678, %v7745, %v7749
          %v7752 = vshrl.u32 %v7637, 16
          %v7754 = vrot.slane %v7752, 4
          %v7755 = vshll.u32 %v7637, 16
          %v7757 = vrot.slane %v7755, 5
          %v7758 = vor.u32 %v7754, %v7757
          %v7759 = vrot.slane %v7758, 4
          %v7761 = vshll.u32 %v7638, 16
          %v7763 = vrot.slane %v7761, 5
          %v7764 = vsel %vm7678, %v7759, %v7763
          %v7765 = vshrl.u32 %v7638, 16
          %v7767 = vrot.slane %v7765, 4
          %v7768 = vor.u32 %v7767, %v7763
          %v7769 = vrot.slane %v7768, 4
          %v7771 = vshll.u32 %v7639, 16
          %v7773 = vrot.slane %v7771, 5
          %v7774 = vsel %vm7678, %v7769, %v7773
          %v7776 = vshrl.u32 %v7640, 16
          %v7778 = vrot.slane %v7776, 4
          %v7779 = vshll.u32 %v7640, 16
          %v7781 = vrot.slane %v7779, 5
          %v7782 = vor.u32 %v7778, %v7781
          %v7783 = vrot.slane %v7782, 4
          %v7785 = vshll.u32 %v7641, 16
          %v7787 = vrot.slane %v7785, 5
          %v7788 = vsel %vm7678, %v7783, %v7787
          %v7789 = vshrl.u32 %v7641, 16
          %v7791 = vrot.slane %v7789, 4
          %v7792 = vor.u32 %v7791, %v7787
          %v7793 = vrot.slane %v7792, 4
          %v7795 = vshll.u32 %v7642, 16
          %v7797 = vrot.slane %v7795, 5
          %v7798 = vsel %vm7678, %v7793, %v7797
          %v7800 = vshrl.u32 %v7643, 16
          %v7802 = vrot.slane %v7800, 4
          %v7803 = vshll.u32 %v7643, 16
          %v7805 = vrot.slane %v7803, 5
          %v7806 = vor.u32 %v7802, %v7805
          %v7807 = vrot.slane %v7806, 4
          %v7809 = vshll.u32 %v7644, 16
          %v7811 = vrot.slane %v7809, 5
          %v7812 = vsel %vm7678, %v7807, %v7811
          %v7813 = vshrl.u32 %v7644, 16
          %v7815 = vrot.slane %v7813, 4
          %v7816 = vor.u32 %v7815, %v7811
          %v7817 = vrot.slane %v7816, 4
          %v7819 = vshll.u32 %v7645, 16
          %v7821 = vrot.slane %v7819, 5
          %v7822 = vsel %vm7678, %v7817, %v7821
          %v7824 = vshrl.u32 %v7646, 16
          %v7826 = vrot.slane %v7824, 4
          %v7827 = vshll.u32 %v7646, 16
          %v7829 = vrot.slane %v7827, 5
          %v7830 = vor.u32 %v7826, %v7829
          %v7831 = vrot.slane %v7830, 4
          %v7833 = vshll.u32 %v7647, 16
          %v7835 = vrot.slane %v7833, 5
          %v7836 = vsel %vm7678, %v7831, %v7835
          %v7837 = vshrl.u32 %v7647, 16
          %v7839 = vrot.slane %v7837, 4
          %v7840 = vor.u32 %v7839, %v7835
          %v7841 = vrot.slane %v7840, 4
          %v7843 = vshll.u32 %v7648, 16
          %v7845 = vrot.slane %v7843, 5
          %v7846 = vsel %vm7678, %v7841, %v7845
          %v7848 = vshrl.u32 %v7649, 16
          %v7850 = vrot.slane %v7848, 4
          %v7851 = vshll.u32 %v7649, 16
          %v7853 = vrot.slane %v7851, 5
          %v7854 = vor.u32 %v7850, %v7853
          %v7855 = vrot.slane %v7854, 4
          %v7857 = vshll.u32 %v7650, 16
          %v7859 = vrot.slane %v7857, 5
          %v7860 = vsel %vm7678, %v7855, %v7859
          %v7861 = vshrl.u32 %v7650, 16
          %v7863 = vrot.slane %v7861, 4
          %v7864 = vor.u32 %v7863, %v7859
          %v7865 = vrot.slane %v7864, 4
          %v7867 = vshll.u32 %v7651, 16
          %v7869 = vrot.slane %v7867, 5
          %v7870 = vsel %vm7678, %v7865, %v7869
          %v7872 = vshrl.u32 %v7652, 16
          %v7874 = vrot.slane %v7872, 4
          %v7875 = vshll.u32 %v7652, 16
          %v7877 = vrot.slane %v7875, 5
          %v7878 = vor.u32 %v7874, %v7877
          %v7879 = vrot.slane %v7878, 4
          %v7881 = vshll.u32 %v7653, 16
          %v7883 = vrot.slane %v7881, 5
          %v7884 = vsel %vm7678, %v7879, %v7883
          %v7885 = vshrl.u32 %v7653, 16
          %v7887 = vrot.slane %v7885, 4
          %v7888 = vor.u32 %v7887, %v7883
          %v7889 = vrot.slane %v7888, 4
          %v7891 = vshll.u32 %v7654, 16
          %v7893 = vrot.slane %v7891, 5
          %v7894 = vsel %vm7678, %v7889, %v7893
          %v7896 = vshrl.u32 %v7655, 16
          %v7898 = vrot.slane %v7896, 4
          %v7899 = vshll.u32 %v7655, 16
          %v7901 = vrot.slane %v7899, 5
          %v7902 = vor.u32 %v7898, %v7901
          %v7903 = vrot.slane %v7902, 4
          %v7905 = vshll.u32 %v7656, 16
          %v7907 = vrot.slane %v7905, 5
          %v7908 = vsel %vm7678, %v7903, %v7907
          %v7909 = vshrl.u32 %v7656, 16
          %v7911 = vrot.slane %v7909, 4
          %v7912 = vor.u32 %v7911, %v7907
          %v7913 = vrot.slane %v7912, 4
          %v7915 = vshll.u32 %v7657, 16
          %v7917 = vrot.slane %v7915, 5
          %v7918 = vsel %vm7678, %v7913, %v7917
          %v7920 = vshrl.u32 %v7658, 16
          %v7922 = vrot.slane %v7920, 4
          %v7923 = vshll.u32 %v7658, 16
          %v7925 = vrot.slane %v7923, 5
          %v7926 = vor.u32 %v7922, %v7925
          %v7927 = vrot.slane %v7926, 4
          %v7929 = vshll.u32 %v7659, 16
          %v7931 = vrot.slane %v7929, 5
          %v7932 = vsel %vm7678, %v7927, %v7931
          %v7933 = vshrl.u32 %v7659, 16
          %v7935 = vrot.slane %v7933, 4
          %v7936 = vor.u32 %v7935, %v7931
          %v7937 = vrot.slane %v7936, 4
          %v7939 = vshll.u32 %v7660, 16
          %v7941 = vrot.slane %v7939, 5
          %v7942 = vsel %vm7678, %v7937, %v7941
          %v7944 = vshrl.u32 %v7661, 16
          %v7946 = vrot.slane %v7944, 4
          %v7947 = vshll.u32 %v7661, 16
          %v7949 = vrot.slane %v7947, 5
          %v7950 = vor.u32 %v7946, %v7949
          %v7951 = vrot.slane %v7950, 4
          %v7953 = vshll.u32 %v7662, 16
          %v7955 = vrot.slane %v7953, 5
          %v7956 = vsel %vm7678, %v7951, %v7955
          %v7957 = vshrl.u32 %v7662, 16
          %v7959 = vrot.slane %v7957, 4
          %v7960 = vor.u32 %v7959, %v7955
          %v7961 = vrot.slane %v7960, 4
          %v7963 = vshll.u32 %v7663, 16
          %v7965 = vrot.slane %v7963, 5
          %v7966 = vsel %vm7678, %v7961, %v7965
          %v7968 = vshrl.u32 %v7664, 16
          %v7970 = vrot.slane %v7968, 4
          %v7971 = vshll.u32 %v7664, 16
          %v7973 = vrot.slane %v7971, 5
          %v7974 = vor.u32 %v7970, %v7973
          %v7975 = vrot.slane %v7974, 4
          %v7977 = vshll.u32 %v7665, 16
          %v7979 = vrot.slane %v7977, 5
          %v7980 = vsel %vm7678, %v7975, %v7979
          %v7981 = vshrl.u32 %v7665, 16
          %v7983 = vrot.slane %v7981, 4
          %v7984 = vor.u32 %v7983, %v7979
          %v7985 = vrot.slane %v7984, 4
          %v7987 = vshll.u32 %v7666, 16
          %v7989 = vrot.slane %v7987, 5
          %v7990 = vsel %vm7678, %v7985, %v7989
          %v7992 = vshrl.u32 %v7667, 16
          %v7994 = vrot.slane %v7992, 4
          %v7995 = vshll.u32 %v7667, 16
          %v7997 = vrot.slane %v7995, 5
          %v7998 = vor.u32 %v7994, %v7997
          %v7999 = vrot.slane %v7998, 4
          %v8001 = vshll.u32 %v7668, 16
          %v8003 = vrot.slane %v8001, 5
          %v8004 = vsel %vm7678, %v7999, %v8003
          %v8005 = vshrl.u32 %v7668, 16
          %v8007 = vrot.slane %v8005, 4
          %v8008 = vor.u32 %v8007, %v8003
          %v8009 = vrot.slane %v8008, 4
          %v8011 = vshll.u32 %v7669, 16
          %v8013 = vrot.slane %v8011, 5
          %v8014 = vsel %vm7678, %v8009, %v8013
          %v8016 = vshrl.u32 %v7670, 16
          %v8018 = vrot.slane %v8016, 4
          %v8019 = vshll.u32 %v7670, 16
          %v8021 = vrot.slane %v8019, 5
          %v8022 = vor.u32 %v8018, %v8021
          %v8023 = vrot.slane %v8022, 4
          %v8025 = vshll.u32 %v7671, 16
          %v8027 = vrot.slane %v8025, 5
          %v8028 = vsel %vm7678, %v8023, %v8027
          %v8029 = vshrl.u32 %v7671, 16
          %v8031 = vrot.slane %v8029, 4
          %v8032 = vor.u32 %v8031, %v8027
          %v8033 = vrot.slane %v8032, 4
          %v8035 = vshll.u32 %v7672, 16
          %v8037 = vrot.slane %v8035, 5
          %v8038 = vsel %vm7678, %v8033, %v8037
          %v8040 = vshrl.u32 %v7673, 16
          %v8042 = vrot.slane %v8040, 4
          %v8043 = vshll.u32 %v7673, 16
          %v8045 = vrot.slane %v8043, 5
          %v8046 = vor.u32 %v8042, %v8045
          %v8047 = vrot.slane %v8046, 4
          %v8049 = vshll.u32 %v7674, 16
          %v8051 = vrot.slane %v8049, 5
          %v8052 = vsel %vm7678, %v8047, %v8051
          %v8053 = vshrl.u32 %v7674, 16
          %v8055 = vrot.slane %v8053, 4
          %v8056 = vor.u32 %v8055, %v8051
          %v8057 = vrot.slane %v8056, 4
          %v8059 = vshll.u32 %v7675, 16
          %v8061 = vrot.slane %v8059, 5
          %v8062 = vsel %vm7678, %v8057, %v8061
          %v8063 = vld [vmem:[%s5638 + $0x4] sm:$0xf]
          %v8064 = vld [vmem:[%s5638 + $0x8] sm:$0xf]
          %v8065 = vld [vmem:[%s5638 + $0xc] sm:$0x1]
          %v8066 = vld [vmem:[%s5638 + $0x14] sm:$0xf]
          %v8067 = vld [vmem:[%s5638 + $0x18] sm:$0xf]
          %v8068 = vld [vmem:[%s5638 + $0x1c] sm:$0x1]
          %v8069 = vld [vmem:[%s5638 + $0x24] sm:$0xf]
          %v8070 = vld [vmem:[%s5638 + $0x28] sm:$0xf]
          %v8071 = vld [vmem:[%s5638 + $0x2c] sm:$0x1]
          %v8072 = vld [vmem:[%s5638 + $0x34] sm:$0xf]
          %v8073 = vld [vmem:[%s5638 + $0x38] sm:$0xf]
          %v8074 = vld [vmem:[%s5638 + $0x3c] sm:$0x1]
          %v8075 = vld [vmem:[%s5638 + $0x44] sm:$0xf]
          %v8076 = vld [vmem:[%s5638 + $0x48] sm:$0xf]
          %v8077 = vld [vmem:[%s5638 + $0x4c] sm:$0x1]
          %v8078 = vld [vmem:[%s5638 + $0x54] sm:$0xf]
          %v8079 = vld [vmem:[%s5638 + $0x58] sm:$0xf]
          %v8080 = vld [vmem:[%s5638 + $0x5c] sm:$0x1]
          %v8081 = vld [vmem:[%s5638 + $0x64] sm:$0xf]
          %v8082 = vld [vmem:[%s5638 + $0x68] sm:$0xf]
          %v8083 = vld [vmem:[%s5638 + $0x6c] sm:$0x1]
          %v8084 = vld [vmem:[%s5638 + $0x74] sm:$0xf]
          %v8085 = vld [vmem:[%s5638 + $0x78] sm:$0xf]
          %v8086 = vld [vmem:[%s5638 + $0x7c] sm:$0x1]
          %v8087 = vld [vmem:[%s5638 + $0x84] sm:$0xf]
          %v8088 = vld [vmem:[%s5638 + $0x88] sm:$0xf]
          %v8089 = vld [vmem:[%s5638 + $0x8c] sm:$0x1]
          %v8090 = vld [vmem:[%s5638 + $0x94] sm:$0xf]
          %v8091 = vld [vmem:[%s5638 + $0x98] sm:$0xf]
          %v8092 = vld [vmem:[%s5638 + $0x9c] sm:$0x1]
          %v8093 = vld [vmem:[%s5638 + $0xa4] sm:$0xf]
          %v8094 = vld [vmem:[%s5638 + $0xa8] sm:$0xf]
          %v8095 = vld [vmem:[%s5638 + $0xac] sm:$0x1]
          %v8096 = vld [vmem:[%s5638 + $0xb4] sm:$0xf]
          %v8097 = vld [vmem:[%s5638 + $0xb8] sm:$0xf]
          %v8098 = vld [vmem:[%s5638 + $0xbc] sm:$0x1]
          %v8099 = vld [vmem:[%s5638 + $0xc4] sm:$0xf]
          %v8100 = vld [vmem:[%s5638 + $0xc8] sm:$0xf]
          %v8101 = vld [vmem:[%s5638 + $0xcc] sm:$0x1]
          %v8102 = vld [vmem:[%s5638 + $0xd4] sm:$0xf]
          %v8103 = vld [vmem:[%s5638 + $0xd8] sm:$0xf]
          %v8104 = vld [vmem:[%s5638 + $0xdc] sm:$0x1]
          %v8105 = vld [vmem:[%s5638 + $0xe4] sm:$0xf]
          %v8106 = vld [vmem:[%s5638 + $0xe8] sm:$0xf]
          %v8107 = vld [vmem:[%s5638 + $0xec] sm:$0x1]
          %v8108 = vld [vmem:[%s5638 + $0xf4] sm:$0xf]
          %v8109 = vld [vmem:[%s5638 + $0xf8] sm:$0xf]
          %v8110 = vld [vmem:[%s5638 + $0xfc] sm:$0x1]
          %v8112 = vshrl.u32 %v8063, 16
          %v8114 = vrot.slane %v8112, 4
          %v8115 = vshll.u32 %v8063, 16
          %v8117 = vrot.slane %v8115, 5
          %v8118 = vor.u32 %v8114, %v8117
          %v8119 = vrot.slane %v8118, 4
          %v8121 = vshll.u32 %v8064, 16
          %v8123 = vrot.slane %v8121, 5
          %v8124 = vsel %vm7678, %v8119, %v8123
          %v8125 = vshrl.u32 %v8064, 16
          %v8127 = vrot.slane %v8125, 4
          %v8128 = vor.u32 %v8127, %v8123
          %v8129 = vrot.slane %v8128, 4
          %v8131 = vshll.u32 %v8065, 16
          %v8133 = vrot.slane %v8131, 5
          %v8134 = vsel %vm7678, %v8129, %v8133
          %v8136 = vshrl.u32 %v8066, 16
          %v8138 = vrot.slane %v8136, 4
          %v8139 = vshll.u32 %v8066, 16
          %v8141 = vrot.slane %v8139, 5
          %v8142 = vor.u32 %v8138, %v8141
          %v8143 = vrot.slane %v8142, 4
          %v8145 = vshll.u32 %v8067, 16
          %v8147 = vrot.slane %v8145, 5
          %v8148 = vsel %vm7678, %v8143, %v8147
          %v8149 = vshrl.u32 %v8067, 16
          %v8151 = vrot.slane %v8149, 4
          %v8152 = vor.u32 %v8151, %v8147
          %v8153 = vrot.slane %v8152, 4
          %v8155 = vshll.u32 %v8068, 16
          %v8157 = vrot.slane %v8155, 5
          %v8158 = vsel %vm7678, %v8153, %v8157
          %v8160 = vshrl.u32 %v8069, 16
          %v8162 = vrot.slane %v8160, 4
          %v8163 = vshll.u32 %v8069, 16
          %v8165 = vrot.slane %v8163, 5
          %v8166 = vor.u32 %v8162, %v8165
          %v8167 = vrot.slane %v8166, 4
          %v8169 = vshll.u32 %v8070, 16
          %v8171 = vrot.slane %v8169, 5
          %v8172 = vsel %vm7678, %v8167, %v8171
          %v8173 = vshrl.u32 %v8070, 16
          %v8175 = vrot.slane %v8173, 4
          %v8176 = vor.u32 %v8175, %v8171
          %v8177 = vrot.slane %v8176, 4
          %v8179 = vshll.u32 %v8071, 16
          %v8181 = vrot.slane %v8179, 5
          %v8182 = vsel %vm7678, %v8177, %v8181
          %v8184 = vshrl.u32 %v8072, 16
          %v8186 = vrot.slane %v8184, 4
          %v8187 = vshll.u32 %v8072, 16
          %v8189 = vrot.slane %v8187, 5
          %v8190 = vor.u32 %v8186, %v8189
          %v8191 = vrot.slane %v8190, 4
          %v8193 = vshll.u32 %v8073, 16
          %v8195 = vrot.slane %v8193, 5
          %v8196 = vsel %vm7678, %v8191, %v8195
          %v8197 = vshrl.u32 %v8073, 16
          %v8199 = vrot.slane %v8197, 4
          %v8200 = vor.u32 %v8199, %v8195
          %v8201 = vrot.slane %v8200, 4
          %v8203 = vshll.u32 %v8074, 16
          %v8205 = vrot.slane %v8203, 5
          %v8206 = vsel %vm7678, %v8201, %v8205
          %v8208 = vshrl.u32 %v8075, 16
          %v8210 = vrot.slane %v8208, 4
          %v8211 = vshll.u32 %v8075, 16
          %v8213 = vrot.slane %v8211, 5
          %v8214 = vor.u32 %v8210, %v8213
          %v8215 = vrot.slane %v8214, 4
          %v8217 = vshll.u32 %v8076, 16
          %v8219 = vrot.slane %v8217, 5
          %v8220 = vsel %vm7678, %v8215, %v8219
          %v8221 = vshrl.u32 %v8076, 16
          %v8223 = vrot.slane %v8221, 4
          %v8224 = vor.u32 %v8223, %v8219
          %v8225 = vrot.slane %v8224, 4
          %v8227 = vshll.u32 %v8077, 16
          %v8229 = vrot.slane %v8227, 5
          %v8230 = vsel %vm7678, %v8225, %v8229
          %v8232 = vshrl.u32 %v8078, 16
          %v8234 = vrot.slane %v8232, 4
          %v8235 = vshll.u32 %v8078, 16
          %v8237 = vrot.slane %v8235, 5
          %v8238 = vor.u32 %v8234, %v8237
          %v8239 = vrot.slane %v8238, 4
          %v8241 = vshll.u32 %v8079, 16
          %v8243 = vrot.slane %v8241, 5
          %v8244 = vsel %vm7678, %v8239, %v8243
          %v8245 = vshrl.u32 %v8079, 16
          %v8247 = vrot.slane %v8245, 4
          %v8248 = vor.u32 %v8247, %v8243
          %v8249 = vrot.slane %v8248, 4
          %v8251 = vshll.u32 %v8080, 16
          %v8253 = vrot.slane %v8251, 5
          %v8254 = vsel %vm7678, %v8249, %v8253
          %v8256 = vshrl.u32 %v8081, 16
          %v8258 = vrot.slane %v8256, 4
          %v8259 = vshll.u32 %v8081, 16
          %v8261 = vrot.slane %v8259, 5
          %v8262 = vor.u32 %v8258, %v8261
          %v8263 = vrot.slane %v8262, 4
          %v8265 = vshll.u32 %v8082, 16
          %v8267 = vrot.slane %v8265, 5
          %v8268 = vsel %vm7678, %v8263, %v8267
          %v8269 = vshrl.u32 %v8082, 16
          %v8271 = vrot.slane %v8269, 4
          %v8272 = vor.u32 %v8271, %v8267
          %v8273 = vrot.slane %v8272, 4
          %v8275 = vshll.u32 %v8083, 16
          %v8277 = vrot.slane %v8275, 5
          %v8278 = vsel %vm7678, %v8273, %v8277
          %v8280 = vshrl.u32 %v8084, 16
          %v8282 = vrot.slane %v8280, 4
          %v8283 = vshll.u32 %v8084, 16
          %v8285 = vrot.slane %v8283, 5
          %v8286 = vor.u32 %v8282, %v8285
          %v8287 = vrot.slane %v8286, 4
          %v8289 = vshll.u32 %v8085, 16
          %v8291 = vrot.slane %v8289, 5
          %v8292 = vsel %vm7678, %v8287, %v8291
          %v8293 = vshrl.u32 %v8085, 16
          %v8295 = vrot.slane %v8293, 4
          %v8296 = vor.u32 %v8295, %v8291
          %v8297 = vrot.slane %v8296, 4
          %v8299 = vshll.u32 %v8086, 16
          %v8301 = vrot.slane %v8299, 5
          %v8302 = vsel %vm7678, %v8297, %v8301
          %v8304 = vshrl.u32 %v8087, 16
          %v8306 = vrot.slane %v8304, 4
          %v8307 = vshll.u32 %v8087, 16
          %v8309 = vrot.slane %v8307, 5
          %v8310 = vor.u32 %v8306, %v8309
          %v8311 = vrot.slane %v8310, 4
          %v8313 = vshll.u32 %v8088, 16
          %v8315 = vrot.slane %v8313, 5
          %v8316 = vsel %vm7678, %v8311, %v8315
          %v8317 = vshrl.u32 %v8088, 16
          %v8319 = vrot.slane %v8317, 4
          %v8320 = vor.u32 %v8319, %v8315
          %v8321 = vrot.slane %v8320, 4
          %v8323 = vshll.u32 %v8089, 16
          %v8325 = vrot.slane %v8323, 5
          %v8326 = vsel %vm7678, %v8321, %v8325
          %v8328 = vshrl.u32 %v8090, 16
          %v8330 = vrot.slane %v8328, 4
          %v8331 = vshll.u32 %v8090, 16
          %v8333 = vrot.slane %v8331, 5
          %v8334 = vor.u32 %v8330, %v8333
          %v8335 = vrot.slane %v8334, 4
          %v8337 = vshll.u32 %v8091, 16
          %v8339 = vrot.slane %v8337, 5
          %v8340 = vsel %vm7678, %v8335, %v8339
          %v8341 = vshrl.u32 %v8091, 16
          %v8343 = vrot.slane %v8341, 4
          %v8344 = vor.u32 %v8343, %v8339
          %v8345 = vrot.slane %v8344, 4
          %v8347 = vshll.u32 %v8092, 16
          %v8349 = vrot.slane %v8347, 5
          %v8350 = vsel %vm7678, %v8345, %v8349
          %v8352 = vshrl.u32 %v8093, 16
          %v8354 = vrot.slane %v8352, 4
          %v8355 = vshll.u32 %v8093, 16
          %v8357 = vrot.slane %v8355, 5
          %v8358 = vor.u32 %v8354, %v8357
          %v8359 = vrot.slane %v8358, 4
          %v8361 = vshll.u32 %v8094, 16
          %v8363 = vrot.slane %v8361, 5
          %v8364 = vsel %vm7678, %v8359, %v8363
          %v8365 = vshrl.u32 %v8094, 16
          %v8367 = vrot.slane %v8365, 4
          %v8368 = vor.u32 %v8367, %v8363
          %v8369 = vrot.slane %v8368, 4
          %v8371 = vshll.u32 %v8095, 16
          %v8373 = vrot.slane %v8371, 5
          %v8374 = vsel %vm7678, %v8369, %v8373
          %v8376 = vshrl.u32 %v8096, 16
          %v8378 = vrot.slane %v8376, 4
          %v8379 = vshll.u32 %v8096, 16
          %v8381 = vrot.slane %v8379, 5
          %v8382 = vor.u32 %v8378, %v8381
          %v8383 = vrot.slane %v8382, 4
          %v8385 = vshll.u32 %v8097, 16
          %v8387 = vrot.slane %v8385, 5
          %v8388 = vsel %vm7678, %v8383, %v8387
          %v8389 = vshrl.u32 %v8097, 16
          %v8391 = vrot.slane %v8389, 4
          %v8392 = vor.u32 %v8391, %v8387
          %v8393 = vrot.slane %v8392, 4
          %v8395 = vshll.u32 %v8098, 16
          %v8397 = vrot.slane %v8395, 5
          %v8398 = vsel %vm7678, %v8393, %v8397
          %v8400 = vshrl.u32 %v8099, 16
          %v8402 = vrot.slane %v8400, 4
          %v8403 = vshll.u32 %v8099, 16
          %v8405 = vrot.slane %v8403, 5
          %v8406 = vor.u32 %v8402, %v8405
          %v8407 = vrot.slane %v8406, 4
          %v8409 = vshll.u32 %v8100, 16
          %v8411 = vrot.slane %v8409, 5
          %v8412 = vsel %vm7678, %v8407, %v8411
          %v8413 = vshrl.u32 %v8100, 16
          %v8415 = vrot.slane %v8413, 4
          %v8416 = vor.u32 %v8415, %v8411
          %v8417 = vrot.slane %v8416, 4
          %v8419 = vshll.u32 %v8101, 16
          %v8421 = vrot.slane %v8419, 5
          %v8422 = vsel %vm7678, %v8417, %v8421
          %v8424 = vshrl.u32 %v8102, 16
          %v8426 = vrot.slane %v8424, 4
          %v8427 = vshll.u32 %v8102, 16
          %v8429 = vrot.slane %v8427, 5
          %v8430 = vor.u32 %v8426, %v8429
          %v8431 = vrot.slane %v8430, 4
          %v8433 = vshll.u32 %v8103, 16
          %v8435 = vrot.slane %v8433, 5
          %v8436 = vsel %vm7678, %v8431, %v8435
          %v8437 = vshrl.u32 %v8103, 16
          %v8439 = vrot.slane %v8437, 4
          %v8440 = vor.u32 %v8439, %v8435
          %v8441 = vrot.slane %v8440, 4
          %v8443 = vshll.u32 %v8104, 16
          %v8445 = vrot.slane %v8443, 5
          %v8446 = vsel %vm7678, %v8441, %v8445
          %v8448 = vshrl.u32 %v8105, 16
          %v8450 = vrot.slane %v8448, 4
          %v8451 = vshll.u32 %v8105, 16
          %v8453 = vrot.slane %v8451, 5
          %v8454 = vor.u32 %v8450, %v8453
          %v8455 = vrot.slane %v8454, 4
          %v8457 = vshll.u32 %v8106, 16
          %v8459 = vrot.slane %v8457, 5
          %v8460 = vsel %vm7678, %v8455, %v8459
          %v8461 = vshrl.u32 %v8106, 16
          %v8463 = vrot.slane %v8461, 4
          %v8464 = vor.u32 %v8463, %v8459
          %v8465 = vrot.slane %v8464, 4
          %v8467 = vshll.u32 %v8107, 16
          %v8469 = vrot.slane %v8467, 5
          %v8470 = vsel %vm7678, %v8465, %v8469
          %v8472 = vshrl.u32 %v8108, 16
          %v8474 = vrot.slane %v8472, 4
          %v8475 = vshll.u32 %v8108, 16
          %v8477 = vrot.slane %v8475, 5
          %v8478 = vor.u32 %v8474, %v8477
          %v8479 = vrot.slane %v8478, 4
          %v8481 = vshll.u32 %v8109, 16
          %v8483 = vrot.slane %v8481, 5
          %v8484 = vsel %vm7678, %v8479, %v8483
          %v8485 = vshrl.u32 %v8109, 16
          %v8487 = vrot.slane %v8485, 4
          %v8488 = vor.u32 %v8487, %v8483
          %v8489 = vrot.slane %v8488, 4
          %v8491 = vshll.u32 %v8110, 16
          %v8493 = vrot.slane %v8491, 5
          %v8494 = vsel %vm7678, %v8489, %v8493
          %v8495 = vld [vmem:[%s6039 + $0x4] sm:$0xf]
          %v8496 = vld [vmem:[%s6039 + $0x8] sm:$0xf]
          %v8497 = vld [vmem:[%s6039 + $0xc] sm:$0x1]
          %v8498 = vld [vmem:[%s6039 + $0x14] sm:$0xf]
          %v8499 = vld [vmem:[%s6039 + $0x18] sm:$0xf]
          %v8500 = vld [vmem:[%s6039 + $0x1c] sm:$0x1]
          %v8501 = vld [vmem:[%s6039 + $0x24] sm:$0xf]
          %v8502 = vld [vmem:[%s6039 + $0x28] sm:$0xf]
          %v8503 = vld [vmem:[%s6039 + $0x2c] sm:$0x1]
          %v8504 = vld [vmem:[%s6039 + $0x34] sm:$0xf]
          %v8505 = vld [vmem:[%s6039 + $0x38] sm:$0xf]
          %v8506 = vld [vmem:[%s6039 + $0x3c] sm:$0x1]
          %v8507 = vld [vmem:[%s6039 + $0x44] sm:$0xf]
          %v8508 = vld [vmem:[%s6039 + $0x48] sm:$0xf]
          %v8509 = vld [vmem:[%s6039 + $0x4c] sm:$0x1]
          %v8510 = vld [vmem:[%s6039 + $0x54] sm:$0xf]
          %v8511 = vld [vmem:[%s6039 + $0x58] sm:$0xf]
          %v8512 = vld [vmem:[%s6039 + $0x5c] sm:$0x1]
          %v8513 = vld [vmem:[%s6039 + $0x64] sm:$0xf]
          %v8514 = vld [vmem:[%s6039 + $0x68] sm:$0xf]
          %v8515 = vld [vmem:[%s6039 + $0x6c] sm:$0x1]
          %v8516 = vld [vmem:[%s6039 + $0x74] sm:$0xf]
          %v8517 = vld [vmem:[%s6039 + $0x78] sm:$0xf]
          %v8518 = vld [vmem:[%s6039 + $0x7c] sm:$0x1]
          %v8519 = vld [vmem:[%s6039 + $0x84] sm:$0xf]
          %v8520 = vld [vmem:[%s6039 + $0x88] sm:$0xf]
          %v8521 = vld [vmem:[%s6039 + $0x8c] sm:$0x1]
          %v8522 = vld [vmem:[%s6039 + $0x94] sm:$0xf]
          %v8523 = vld [vmem:[%s6039 + $0x98] sm:$0xf]
          %v8524 = vld [vmem:[%s6039 + $0x9c] sm:$0x1]
          %v8525 = vld [vmem:[%s6039 + $0xa4] sm:$0xf]
          %v8526 = vld [vmem:[%s6039 + $0xa8] sm:$0xf]
          %v8527 = vld [vmem:[%s6039 + $0xac] sm:$0x1]
          %v8528 = vld [vmem:[%s6039 + $0xb4] sm:$0xf]
          %v8529 = vld [vmem:[%s6039 + $0xb8] sm:$0xf]
          %v8530 = vld [vmem:[%s6039 + $0xbc] sm:$0x1]
          %v8531 = vld [vmem:[%s6039 + $0xc4] sm:$0xf]
          %v8532 = vld [vmem:[%s6039 + $0xc8] sm:$0xf]
          %v8533 = vld [vmem:[%s6039 + $0xcc] sm:$0x1]
          %v8534 = vld [vmem:[%s6039 + $0xd4] sm:$0xf]
          %v8535 = vld [vmem:[%s6039 + $0xd8] sm:$0xf]
          %v8536 = vld [vmem:[%s6039 + $0xdc] sm:$0x1]
          %v8537 = vld [vmem:[%s6039 + $0xe4] sm:$0xf]
          %v8538 = vld [vmem:[%s6039 + $0xe8] sm:$0xf]
          %v8539 = vld [vmem:[%s6039 + $0xec] sm:$0x1]
          %v8540 = vld [vmem:[%s6039 + $0xf4] sm:$0xf]
          %v8541 = vld [vmem:[%s6039 + $0xf8] sm:$0xf]
          %v8542 = vld [vmem:[%s6039 + $0xfc] sm:$0x1]
          %v8544 = vshrl.u32 %v8495, 16
          %v8546 = vrot.slane %v8544, 4
          %v8547 = vshll.u32 %v8495, 16
          %v8549 = vrot.slane %v8547, 5
          %v8550 = vor.u32 %v8546, %v8549
          %v8551 = vrot.slane %v8550, 4
          %v8553 = vshll.u32 %v8496, 16
          %v8555 = vrot.slane %v8553, 5
          %v8556 = vsel %vm7678, %v8551, %v8555
          %v8557 = vshrl.u32 %v8496, 16
          %v8559 = vrot.slane %v8557, 4
          %v8560 = vor.u32 %v8559, %v8555
          %v8561 = vrot.slane %v8560, 4
          %v8563 = vshll.u32 %v8497, 16
          %v8565 = vrot.slane %v8563, 5
          %v8566 = vsel %vm7678, %v8561, %v8565
          %v8568 = vshrl.u32 %v8498, 16
          %v8570 = vrot.slane %v8568, 4
          %v8571 = vshll.u32 %v8498, 16
          %v8573 = vrot.slane %v8571, 5
          %v8574 = vor.u32 %v8570, %v8573
          %v8575 = vrot.slane %v8574, 4
          %v8577 = vshll.u32 %v8499, 16
          %v8579 = vrot.slane %v8577, 5
          %v8580 = vsel %vm7678, %v8575, %v8579
          %v8581 = vshrl.u32 %v8499, 16
          %v8583 = vrot.slane %v8581, 4
          %v8584 = vor.u32 %v8583, %v8579
          %v8585 = vrot.slane %v8584, 4
          %v8587 = vshll.u32 %v8500, 16
          %v8589 = vrot.slane %v8587, 5
          %v8590 = vsel %vm7678, %v8585, %v8589
          %v8592 = vshrl.u32 %v8501, 16
          %v8594 = vrot.slane %v8592, 4
          %v8595 = vshll.u32 %v8501, 16
          %v8597 = vrot.slane %v8595, 5
          %v8598 = vor.u32 %v8594, %v8597
          %v8599 = vrot.slane %v8598, 4
          %v8601 = vshll.u32 %v8502, 16
          %v8603 = vrot.slane %v8601, 5
          %v8604 = vsel %vm7678, %v8599, %v8603
          %v8605 = vshrl.u32 %v8502, 16
          %v8607 = vrot.slane %v8605, 4
          %v8608 = vor.u32 %v8607, %v8603
          %v8609 = vrot.slane %v8608, 4
          %v8611 = vshll.u32 %v8503, 16
          %v8613 = vrot.slane %v8611, 5
          %v8614 = vsel %vm7678, %v8609, %v8613
          %v8616 = vshrl.u32 %v8504, 16
          %v8618 = vrot.slane %v8616, 4
          %v8619 = vshll.u32 %v8504, 16
          %v8621 = vrot.slane %v8619, 5
          %v8622 = vor.u32 %v8618, %v8621
          %v8623 = vrot.slane %v8622, 4
          %v8625 = vshll.u32 %v8505, 16
          %v8627 = vrot.slane %v8625, 5
          %v8628 = vsel %vm7678, %v8623, %v8627
          %v8629 = vshrl.u32 %v8505, 16
          %v8631 = vrot.slane %v8629, 4
          %v8632 = vor.u32 %v8631, %v8627
          %v8633 = vrot.slane %v8632, 4
          %v8635 = vshll.u32 %v8506, 16
          %v8637 = vrot.slane %v8635, 5
          %v8638 = vsel %vm7678, %v8633, %v8637
          %v8640 = vshrl.u32 %v8507, 16
          %v8642 = vrot.slane %v8640, 4
          %v8643 = vshll.u32 %v8507, 16
          %v8645 = vrot.slane %v8643, 5
          %v8646 = vor.u32 %v8642, %v8645
          %v8647 = vrot.slane %v8646, 4
          %v8649 = vshll.u32 %v8508, 16
          %v8651 = vrot.slane %v8649, 5
          %v8652 = vsel %vm7678, %v8647, %v8651
          %v8653 = vshrl.u32 %v8508, 16
          %v8655 = vrot.slane %v8653, 4
          %v8656 = vor.u32 %v8655, %v8651
          %v8657 = vrot.slane %v8656, 4
          %v8659 = vshll.u32 %v8509, 16
          %v8661 = vrot.slane %v8659, 5
          %v8662 = vsel %vm7678, %v8657, %v8661
          %v8664 = vshrl.u32 %v8510, 16
          %v8666 = vrot.slane %v8664, 4
          %v8667 = vshll.u32 %v8510, 16
          %v8669 = vrot.slane %v8667, 5
          %v8670 = vor.u32 %v8666, %v8669
          %v8671 = vrot.slane %v8670, 4
          %v8673 = vshll.u32 %v8511, 16
          %v8675 = vrot.slane %v8673, 5
          %v8676 = vsel %vm7678, %v8671, %v8675
          %v8677 = vshrl.u32 %v8511, 16
          %v8679 = vrot.slane %v8677, 4
          %v8680 = vor.u32 %v8679, %v8675
          %v8681 = vrot.slane %v8680, 4
          %v8683 = vshll.u32 %v8512, 16
          %v8685 = vrot.slane %v8683, 5
          %v8686 = vsel %vm7678, %v8681, %v8685
          %v8688 = vshrl.u32 %v8513, 16
          %v8690 = vrot.slane %v8688, 4
          %v8691 = vshll.u32 %v8513, 16
          %v8693 = vrot.slane %v8691, 5
          %v8694 = vor.u32 %v8690, %v8693
          %v8695 = vrot.slane %v8694, 4
          %v8697 = vshll.u32 %v8514, 16
          %v8699 = vrot.slane %v8697, 5
          %v8700 = vsel %vm7678, %v8695, %v8699
          %v8701 = vshrl.u32 %v8514, 16
          %v8703 = vrot.slane %v8701, 4
          %v8704 = vor.u32 %v8703, %v8699
          %v8705 = vrot.slane %v8704, 4
          %v8707 = vshll.u32 %v8515, 16
          %v8709 = vrot.slane %v8707, 5
          %v8710 = vsel %vm7678, %v8705, %v8709
          %v8712 = vshrl.u32 %v8516, 16
          %v8714 = vrot.slane %v8712, 4
          %v8715 = vshll.u32 %v8516, 16
          %v8717 = vrot.slane %v8715, 5
          %v8718 = vor.u32 %v8714, %v8717
          %v8719 = vrot.slane %v8718, 4
          %v8721 = vshll.u32 %v8517, 16
          %v8723 = vrot.slane %v8721, 5
          %v8724 = vsel %vm7678, %v8719, %v8723
          %v8725 = vshrl.u32 %v8517, 16
          %v8727 = vrot.slane %v8725, 4
          %v8728 = vor.u32 %v8727, %v8723
          %v8729 = vrot.slane %v8728, 4
          %v8731 = vshll.u32 %v8518, 16
          %v8733 = vrot.slane %v8731, 5
          %v8734 = vsel %vm7678, %v8729, %v8733
          %v8736 = vshrl.u32 %v8519, 16
          %v8738 = vrot.slane %v8736, 4
          %v8739 = vshll.u32 %v8519, 16
          %v8741 = vrot.slane %v8739, 5
          %v8742 = vor.u32 %v8738, %v8741
          %v8743 = vrot.slane %v8742, 4
          %v8745 = vshll.u32 %v8520, 16
          %v8747 = vrot.slane %v8745, 5
          %v8748 = vsel %vm7678, %v8743, %v8747
          %v8749 = vshrl.u32 %v8520, 16
          %v8751 = vrot.slane %v8749, 4
          %v8752 = vor.u32 %v8751, %v8747
          %v8753 = vrot.slane %v8752, 4
          %v8755 = vshll.u32 %v8521, 16
          %v8757 = vrot.slane %v8755, 5
          %v8758 = vsel %vm7678, %v8753, %v8757
          %v8760 = vshrl.u32 %v8522, 16
          %v8762 = vrot.slane %v8760, 4
          %v8763 = vshll.u32 %v8522, 16
          %v8765 = vrot.slane %v8763, 5
          %v8766 = vor.u32 %v8762, %v8765
          %v8767 = vrot.slane %v8766, 4
          %v8769 = vshll.u32 %v8523, 16
          %v8771 = vrot.slane %v8769, 5
          %v8772 = vsel %vm7678, %v8767, %v8771
          %v8773 = vshrl.u32 %v8523, 16
          %v8775 = vrot.slane %v8773, 4
          %v8776 = vor.u32 %v8775, %v8771
          %v8777 = vrot.slane %v8776, 4
          %v8779 = vshll.u32 %v8524, 16
          %v8781 = vrot.slane %v8779, 5
          %v8782 = vsel %vm7678, %v8777, %v8781
          %v8784 = vshrl.u32 %v8525, 16
          %v8786 = vrot.slane %v8784, 4
          %v8787 = vshll.u32 %v8525, 16
          %v8789 = vrot.slane %v8787, 5
          %v8790 = vor.u32 %v8786, %v8789
          %v8791 = vrot.slane %v8790, 4
          %v8793 = vshll.u32 %v8526, 16
          %v8795 = vrot.slane %v8793, 5
          %v8796 = vsel %vm7678, %v8791, %v8795
          %v8797 = vshrl.u32 %v8526, 16
          %v8799 = vrot.slane %v8797, 4
          %v8800 = vor.u32 %v8799, %v8795
          %v8801 = vrot.slane %v8800, 4
          %v8803 = vshll.u32 %v8527, 16
          %v8805 = vrot.slane %v8803, 5
          %v8806 = vsel %vm7678, %v8801, %v8805
          %v8808 = vshrl.u32 %v8528, 16
          %v8810 = vrot.slane %v8808, 4
          %v8811 = vshll.u32 %v8528, 16
          %v8813 = vrot.slane %v8811, 5
          %v8814 = vor.u32 %v8810, %v8813
          %v8815 = vrot.slane %v8814, 4
          %v8817 = vshll.u32 %v8529, 16
          %v8819 = vrot.slane %v8817, 5
          %v8820 = vsel %vm7678, %v8815, %v8819
          %v8821 = vshrl.u32 %v8529, 16
          %v8823 = vrot.slane %v8821, 4
          %v8824 = vor.u32 %v8823, %v8819
          %v8825 = vrot.slane %v8824, 4
          %v8827 = vshll.u32 %v8530, 16
          %v8829 = vrot.slane %v8827, 5
          %v8830 = vsel %vm7678, %v8825, %v8829
          %v8832 = vshrl.u32 %v8531, 16
          %v8834 = vrot.slane %v8832, 4
          %v8835 = vshll.u32 %v8531, 16
          %v8837 = vrot.slane %v8835, 5
          %v8838 = vor.u32 %v8834, %v8837
          %v8839 = vrot.slane %v8838, 4
          %v8841 = vshll.u32 %v8532, 16
          %v8843 = vrot.slane %v8841, 5
          %v8844 = vsel %vm7678, %v8839, %v8843
          %v8845 = vshrl.u32 %v8532, 16
          %v8847 = vrot.slane %v8845, 4
          %v8848 = vor.u32 %v8847, %v8843
          %v8849 = vrot.slane %v8848, 4
          %v8851 = vshll.u32 %v8533, 16
          %v8853 = vrot.slane %v8851, 5
          %v8854 = vsel %vm7678, %v8849, %v8853
          %v8856 = vshrl.u32 %v8534, 16
          %v8858 = vrot.slane %v8856, 4
          %v8859 = vshll.u32 %v8534, 16
          %v8861 = vrot.slane %v8859, 5
          %v8862 = vor.u32 %v8858, %v8861
          %v8863 = vrot.slane %v8862, 4
          %v8865 = vshll.u32 %v8535, 16
          %v8867 = vrot.slane %v8865, 5
          %v8868 = vsel %vm7678, %v8863, %v8867
          %v8869 = vshrl.u32 %v8535, 16
          %v8871 = vrot.slane %v8869, 4
          %v8872 = vor.u32 %v8871, %v8867
          %v8873 = vrot.slane %v8872, 4
          %v8875 = vshll.u32 %v8536, 16
          %v8877 = vrot.slane %v8875, 5
          %v8878 = vsel %vm7678, %v8873, %v8877
          %v8880 = vshrl.u32 %v8537, 16
          %v8882 = vrot.slane %v8880, 4
          %v8883 = vshll.u32 %v8537, 16
          %v8885 = vrot.slane %v8883, 5
          %v8886 = vor.u32 %v8882, %v8885
          %v8887 = vrot.slane %v8886, 4
          %v8889 = vshll.u32 %v8538, 16
          %v8891 = vrot.slane %v8889, 5
          %v8892 = vsel %vm7678, %v8887, %v8891
          %v8893 = vshrl.u32 %v8538, 16
          %v8895 = vrot.slane %v8893, 4
          %v8896 = vor.u32 %v8895, %v8891
          %v8897 = vrot.slane %v8896, 4
          %v8899 = vshll.u32 %v8539, 16
          %v8901 = vrot.slane %v8899, 5
          %v8902 = vsel %vm7678, %v8897, %v8901
          %v8904 = vshrl.u32 %v8540, 16
          %v8906 = vrot.slane %v8904, 4
          %v8907 = vshll.u32 %v8540, 16
          %v8909 = vrot.slane %v8907, 5
          %v8910 = vor.u32 %v8906, %v8909
          %v8911 = vrot.slane %v8910, 4
          %v8913 = vshll.u32 %v8541, 16
          %v8915 = vrot.slane %v8913, 5
          %v8916 = vsel %vm7678, %v8911, %v8915
          %v8917 = vshrl.u32 %v8541, 16
          %v8919 = vrot.slane %v8917, 4
          %v8920 = vor.u32 %v8919, %v8915
          %v8921 = vrot.slane %v8920, 4
          %v8923 = vshll.u32 %v8542, 16
          %v8925 = vrot.slane %v8923, 5
          %v8926 = vsel %vm7678, %v8921, %v8925
          %v8927 = vunpack.c.l.b16 %v7692
          %v8928 = vunpack.c.l.b16 %v7702
          %v8929 = vunpack.c.l.b16 %v7716
          %v8930 = vunpack.c.l.b16 %v7726
          %v8931 = vunpack.c.l.b16 %v7740
          %v8932 = vunpack.c.l.b16 %v7750
          %v8933 = vunpack.c.l.b16 %v7764
          %v8934 = vunpack.c.l.b16 %v7774
          %v8935 = vunpack.c.l.b16 %v7788
          %v8936 = vunpack.c.l.b16 %v7798
          %v8937 = vunpack.c.l.b16 %v7812
          %v8938 = vunpack.c.l.b16 %v7822
          %v8939 = vunpack.c.l.b16 %v7836
          %v8940 = vunpack.c.l.b16 %v7846
          %v8941 = vunpack.c.l.b16 %v7860
          %v8942 = vunpack.c.l.b16 %v7870
          %v8943 = vunpack.c.l.b16 %v7884
          %v8944 = vunpack.c.l.b16 %v7894
          %v8945 = vunpack.c.l.b16 %v7908
          %v8946 = vunpack.c.l.b16 %v7918
          %v8947 = vunpack.c.l.b16 %v7932
          %v8948 = vunpack.c.l.b16 %v7942
          %v8949 = vunpack.c.l.b16 %v7956
          %v8950 = vunpack.c.l.b16 %v7966
          %v8951 = vunpack.c.l.b16 %v7980
          %v8952 = vunpack.c.l.b16 %v7990
          %v8953 = vunpack.c.l.b16 %v8004
          %v8954 = vunpack.c.l.b16 %v8014
          %v8955 = vunpack.c.l.b16 %v8028
          %v8956 = vunpack.c.l.b16 %v8038
          %v8957 = vunpack.c.l.b16 %v8052
          %v8958 = vunpack.c.l.b16 %v8062
          %v8959 = vpack.c.b16 %v8928, %v8927
          %v8960 = vpack.c.b16 %v8930, %v8929
          %v8961 = vpack.c.b16 %v8932, %v8931
          %v8962 = vpack.c.b16 %v8934, %v8933
          %v8963 = vpack.c.b16 %v8936, %v8935
          %v8964 = vpack.c.b16 %v8938, %v8937
          %v8965 = vpack.c.b16 %v8940, %v8939
          %v8966 = vpack.c.b16 %v8942, %v8941
          %v8967 = vpack.c.b16 %v8944, %v8943
          %v8968 = vpack.c.b16 %v8946, %v8945
          %v8969 = vpack.c.b16 %v8948, %v8947
          %v8970 = vpack.c.b16 %v8950, %v8949
          %v8971 = vpack.c.b16 %v8952, %v8951
          %v8972 = vpack.c.b16 %v8954, %v8953
          %v8973 = vpack.c.b16 %v8956, %v8955
          %v8974 = vpack.c.b16 %v8958, %v8957
          %v8975 = vunpack.c.l.b16 %v8124
          %v8976 = vunpack.c.l.b16 %v8134
          %v8977 = vunpack.c.l.b16 %v8148
          %v8978 = vunpack.c.l.b16 %v8158
          %v8979 = vunpack.c.l.b16 %v8172
          %v8980 = vunpack.c.l.b16 %v8182
          %v8981 = vunpack.c.l.b16 %v8196
          %v8982 = vunpack.c.l.b16 %v8206
          %v8983 = vunpack.c.l.b16 %v8220
          %v8984 = vunpack.c.l.b16 %v8230
          %v8985 = vunpack.c.l.b16 %v8244
          %v8986 = vunpack.c.l.b16 %v8254
          %v8987 = vunpack.c.l.b16 %v8268
          %v8988 = vunpack.c.l.b16 %v8278
          %v8989 = vunpack.c.l.b16 %v8292
          %v8990 = vunpack.c.l.b16 %v8302
          %v8991 = vunpack.c.l.b16 %v8316
          %v8992 = vunpack.c.l.b16 %v8326
          %v8993 = vunpack.c.l.b16 %v8340
          %v8994 = vunpack.c.l.b16 %v8350
          %v8995 = vunpack.c.l.b16 %v8364
          %v8996 = vunpack.c.l.b16 %v8374
          %v8997 = vunpack.c.l.b16 %v8388
          %v8998 = vunpack.c.l.b16 %v8398
          %v8999 = vunpack.c.l.b16 %v8412
          %v9000 = vunpack.c.l.b16 %v8422
          %v9001 = vunpack.c.l.b16 %v8436
          %v9002 = vunpack.c.l.b16 %v8446
          %v9003 = vunpack.c.l.b16 %v8460
          %v9004 = vunpack.c.l.b16 %v8470
          %v9005 = vunpack.c.l.b16 %v8484
          %v9006 = vunpack.c.l.b16 %v8494
          %v9007 = vpack.c.b16 %v8976, %v8975
          %v9008 = vpack.c.b16 %v8978, %v8977
          %v9009 = vpack.c.b16 %v8980, %v8979
          %v9010 = vpack.c.b16 %v8982, %v8981
          %v9011 = vpack.c.b16 %v8984, %v8983
          %v9012 = vpack.c.b16 %v8986, %v8985
          %v9013 = vpack.c.b16 %v8988, %v8987
          %v9014 = vpack.c.b16 %v8990, %v8989
          %v9015 = vpack.c.b16 %v8992, %v8991
          %v9016 = vpack.c.b16 %v8994, %v8993
          %v9017 = vpack.c.b16 %v8996, %v8995
          %v9018 = vpack.c.b16 %v8998, %v8997
          %v9019 = vpack.c.b16 %v9000, %v8999
          %v9020 = vpack.c.b16 %v9002, %v9001
          %v9021 = vpack.c.b16 %v9004, %v9003
          %v9022 = vpack.c.b16 %v9006, %v9005
          %9023 = vrot.lane.b32.xlu0 %v9007, 64
          %v9024 = vpop.permute.xlu0 %9023
          %9025 = vrot.lane.b32.xlu0 %v9008, 64
          %v9026 = vpop.permute.xlu0 %9025
          %9027 = vrot.lane.b32.xlu0 %v9009, 64
          %v9028 = vpop.permute.xlu0 %9027
          %9029 = vrot.lane.b32.xlu0 %v9010, 64
          %v9030 = vpop.permute.xlu0 %9029
          %9031 = vrot.lane.b32.xlu0 %v9011, 64
          %v9032 = vpop.permute.xlu0 %9031
          %9033 = vrot.lane.b32.xlu0 %v9012, 64
          %v9034 = vpop.permute.xlu0 %9033
          %9035 = vrot.lane.b32.xlu0 %v9013, 64
          %v9036 = vpop.permute.xlu0 %9035
          %9037 = vrot.lane.b32.xlu0 %v9014, 64
          %v9038 = vpop.permute.xlu0 %9037
          %9039 = vrot.lane.b32.xlu0 %v9015, 64
          %v9040 = vpop.permute.xlu0 %9039
          %9041 = vrot.lane.b32.xlu0 %v9016, 64
          %v9042 = vpop.permute.xlu0 %9041
          %9043 = vrot.lane.b32.xlu0 %v9017, 64
          %v9044 = vpop.permute.xlu0 %9043
          %9045 = vrot.lane.b32.xlu0 %v9018, 64
          %v9046 = vpop.permute.xlu0 %9045
          %9047 = vrot.lane.b32.xlu0 %v9019, 64
          %v9048 = vpop.permute.xlu0 %9047
          %9049 = vrot.lane.b32.xlu0 %v9020, 64
          %v9050 = vpop.permute.xlu0 %9049
          %9051 = vrot.lane.b32.xlu0 %v9021, 64
          %v9052 = vpop.permute.xlu0 %9051
          %9053 = vrot.lane.b32.xlu0 %v9022, 64
          %v9054 = vpop.permute.xlu0 %9053
          %v9055 = vunpack.c.l.b16 %v8556
          %v9056 = vunpack.c.l.b16 %v8566
          %v9057 = vunpack.c.l.b16 %v8580
          %v9058 = vunpack.c.l.b16 %v8590
          %v9059 = vunpack.c.l.b16 %v8604
          %v9060 = vunpack.c.l.b16 %v8614
          %v9061 = vunpack.c.l.b16 %v8628
          %v9062 = vunpack.c.l.b16 %v8638
          %v9063 = vunpack.c.l.b16 %v8652
          %v9064 = vunpack.c.l.b16 %v8662
          %v9065 = vunpack.c.l.b16 %v8676
          %v9066 = vunpack.c.l.b16 %v8686
          %v9067 = vunpack.c.l.b16 %v8700
          %v9068 = vunpack.c.l.b16 %v8710
          %v9069 = vunpack.c.l.b16 %v8724
          %v9070 = vunpack.c.l.b16 %v8734
          %v9071 = vunpack.c.l.b16 %v8748
          %v9072 = vunpack.c.l.b16 %v8758
          %v9073 = vunpack.c.l.b16 %v8772
          %v9074 = vunpack.c.l.b16 %v8782
          %v9075 = vunpack.c.l.b16 %v8796
          %v9076 = vunpack.c.l.b16 %v8806
          %v9077 = vunpack.c.l.b16 %v8820
          %v9078 = vunpack.c.l.b16 %v8830
          %v9079 = vunpack.c.l.b16 %v8844
          %v9080 = vunpack.c.l.b16 %v8854
          %v9081 = vunpack.c.l.b16 %v8868
          %v9082 = vunpack.c.l.b16 %v8878
          %v9083 = vunpack.c.l.b16 %v8892
          %v9084 = vunpack.c.l.b16 %v8902
          %v9085 = vunpack.c.l.b16 %v8916
          %v9086 = vunpack.c.l.b16 %v8926
          %v9087 = vpack.c.b16 %v9056, %v9055
          %v9088 = vpack.c.b16 %v9058, %v9057
          %v9089 = vpack.c.b16 %v9060, %v9059
          %v9090 = vpack.c.b16 %v9062, %v9061
          %v9091 = vpack.c.b16 %v9064, %v9063
          %v9092 = vpack.c.b16 %v9066, %v9065
          %v9093 = vpack.c.b16 %v9068, %v9067
          %v9094 = vpack.c.b16 %v9070, %v9069
          %v9095 = vpack.c.b16 %v9072, %v9071
          %v9096 = vpack.c.b16 %v9074, %v9073
          %v9097 = vpack.c.b16 %v9076, %v9075
          %v9098 = vpack.c.b16 %v9078, %v9077
          %v9099 = vpack.c.b16 %v9080, %v9079
          %v9100 = vpack.c.b16 %v9082, %v9081
          %v9101 = vpack.c.b16 %v9084, %v9083
          %v9102 = vpack.c.b16 %v9086, %v9085
          %v9105 = vsel %vm6616, %v8959, %v9024
          %v9109 = vsel %vm6616, %v8960, %v9026
          %v9113 = vsel %vm6616, %v8961, %v9028
          %v9117 = vsel %vm6616, %v8962, %v9030
          %v9121 = vsel %vm6616, %v8963, %v9032
          %v9125 = vsel %vm6616, %v8964, %v9034
          %v9129 = vsel %vm6616, %v8965, %v9036
          %v9133 = vsel %vm6616, %v8966, %v9038
          %v9137 = vsel %vm6616, %v8967, %v9040
          %v9141 = vsel %vm6616, %v8968, %v9042
          %v9145 = vsel %vm6616, %v8969, %v9044
          %v9149 = vsel %vm6616, %v8970, %v9046
          %v9153 = vsel %vm6616, %v8971, %v9048
          %v9157 = vsel %vm6616, %v8972, %v9050
          %v9161 = vsel %vm6616, %v8973, %v9052
          %v9165 = vsel %vm6616, %v8974, %v9054
          %s9167 = scalar_lea.vmem %s287, 192
          %v9168 = vld [vmem:[%s9167] sm:$0xf]
          %v9169 = vld [vmem:[%s9167 + $0x4] sm:$0xf]
          %v9170 = vld [vmem:[%s9167 + $0x8] sm:$0xf]
          %v9171 = vld [vmem:[%s9167 + $0xc] sm:$0xf]
          %v9172 = vld [vmem:[%s9167 + $0x10] sm:$0xf]
          %v9173 = vld [vmem:[%s9167 + $0x14] sm:$0xf]
          %v9174 = vld [vmem:[%s9167 + $0x18] sm:$0xf]
          %v9175 = vld [vmem:[%s9167 + $0x1c] sm:$0xf]
          %v9176 = vld [vmem:[%s9167 + $0x20] sm:$0xf]
          %v9177 = vld [vmem:[%s9167 + $0x24] sm:$0xf]
          %v9178 = vld [vmem:[%s9167 + $0x28] sm:$0xf]
          %v9179 = vld [vmem:[%s9167 + $0x2c] sm:$0xf]
          %v9180 = vld [vmem:[%s9167 + $0x30] sm:$0xf]
          %v9181 = vld [vmem:[%s9167 + $0x34] sm:$0xf]
          %v9182 = vld [vmem:[%s9167 + $0x38] sm:$0xf]
          %v9183 = vld [vmem:[%s9167 + $0x3c] sm:$0xf]
          %v9184 = vld [vmem:[%s9167 + $0x40] sm:$0xf]
          %v9185 = vld [vmem:[%s9167 + $0x44] sm:$0xf]
          %v9186 = vld [vmem:[%s9167 + $0x48] sm:$0xf]
          %v9187 = vld [vmem:[%s9167 + $0x4c] sm:$0xf]
          %v9188 = vld [vmem:[%s9167 + $0x50] sm:$0xf]
          %v9189 = vld [vmem:[%s9167 + $0x54] sm:$0xf]
          %v9190 = vld [vmem:[%s9167 + $0x58] sm:$0xf]
          %v9191 = vld [vmem:[%s9167 + $0x5c] sm:$0xf]
          %v9216 = vunpack.c.l.b16 %v9168
          %v9217 = vunpack.c.l.b16 %v9169
          %v9218 = vunpack.c.l.b16 %v9170
          %v9219 = vunpack.c.l.b16 %v9171
          %v9220 = vunpack.c.l.b16 %v9172
          %v9221 = vunpack.c.l.b16 %v9173
          %v9222 = vunpack.c.l.b16 %v9174
          %v9223 = vunpack.c.l.b16 %v9175
          %v9224 = vunpack.c.l.b16 %v9176
          %v9225 = vunpack.c.l.b16 %v9177
          %v9226 = vunpack.c.l.b16 %v9178
          %v9227 = vunpack.c.l.b16 %v9179
          %v9228 = vunpack.c.l.b16 %v9180
          %v9229 = vunpack.c.l.b16 %v9181
          %v9230 = vunpack.c.l.b16 %v9182
          %v9231 = vunpack.c.l.b16 %v9183
          %v9232 = vunpack.c.l.b16 %v9184
          %v9233 = vunpack.c.l.b16 %v9185
          %v9234 = vunpack.c.l.b16 %v9186
          %v9235 = vunpack.c.l.b16 %v9187
          %v9236 = vunpack.c.l.b16 %v9188
          %v9237 = vunpack.c.l.b16 %v9189
          %v9238 = vunpack.c.l.b16 %v9190
          %v9239 = vunpack.c.l.b16 %v9191
          %v9240 = vpack.c.b16 %v9217, %v9216
          %v9241 = vpack.c.b16 %v9219, %v9218
          %v9242 = vpack.c.b16 %v9221, %v9220
          %v9243 = vpack.c.b16 %v9223, %v9222
          %v9244 = vpack.c.b16 %v9225, %v9224
          %v9245 = vpack.c.b16 %v9227, %v9226
          %v9246 = vpack.c.b16 %v9229, %v9228
          %v9247 = vpack.c.b16 %v9231, %v9230
          %v9248 = vpack.c.b16 %v9233, %v9232
          %v9249 = vpack.c.b16 %v9235, %v9234
          %v9250 = vpack.c.b16 %v9237, %v9236
          %v9251 = vpack.c.b16 %v9239, %v9238
          %v9265 = vsel %vm6616, %v9087, 0
          %v9268 = vsel %vm6616, %v9088, 0
          %v9271 = vsel %vm6616, %v9089, 0
          %v9274 = vsel %vm6616, %v9090, 0
          %v9277 = vsel %vm6616, %v9091, 0
          %v9280 = vsel %vm6616, %v9092, 0
          %v9283 = vsel %vm6616, %v9093, 0
          %v9286 = vsel %vm6616, %v9094, 0
          %v9289 = vsel %vm6616, %v9095, 0
          %v9292 = vsel %vm6616, %v9096, 0
          %v9295 = vsel %vm6616, %v9097, 0
          %v9298 = vsel %vm6616, %v9098, 0
          %v9301 = vsel %vm6616, %v9099, 0
          %v9304 = vsel %vm6616, %v9100, 0
          %v9307 = vsel %vm6616, %v9101, 0
          %v9310 = vsel %vm6616, %v9102, 0
          %9312 = vmatprep.subr.bf16.mxu0 0
          %9313 = vmatpush1.bf16.msra.mxu0 %v9247
          %9314 = vmatprep.subr.bf16.mxu0 0
          %9315 = vmatpush1.bf16.msra.mxu0 %v9246
          %9316 = vmatprep.subr.bf16.mxu0 0
          %9317 = vmatpush1.bf16.msra.mxu0 %v9245
          %9318 = vmatprep.subr.bf16.mxu0 0
          %9319 = vmatpush1.bf16.msra.mxu0 %v9244
          %9320 = vmatprep.subr.bf16.mxu0 0
          %9321 = vmatpush1.bf16.msra.mxu0 %v9243
          %9322 = vmatprep.subr.bf16.mxu0 0
          %9323 = vmatpush1.bf16.msra.mxu0 %v9242
          %9324 = vmatprep.subr.bf16.mxu0 0
          %9325 = vmatpush1.bf16.msra.mxu0 %v9241
          %9326 = vmatprep.subr.bf16.mxu0 0
          %9327 = vmatpush1.bf16.msra.mxu0 %v9240
          %9328 = vmatprep.subr.bf16.mxu0 0
          %9329 = vmatpush2.bf16.msra.mxu0 0
          %9330 = vmatprep.subr.bf16.mxu0 0
          %9331 = vmatpush2.bf16.msra.mxu0 0
          %9332 = vmatprep.subr.bf16.mxu0 0
          %9333 = vmatpush2.bf16.msra.mxu0 0
          %9334 = vmatprep.subr.bf16.mxu0 0
          %9335 = vmatpush2.bf16.msra.mxu0 0
          %9336 = vmatprep.subr.bf16.mxu0 0
          %9337 = vmatpush2.bf16.msra.mxu0 %v9251
          %9338 = vmatprep.subr.bf16.mxu0 0
          %9339 = vmatpush2.bf16.msra.mxu0 %v9250
          %9340 = vmatprep.subr.bf16.mxu0 0
          %9341 = vmatpush2.bf16.msra.mxu0 %v9249
          %9342 = vmatprep.subr.bf16.mxu0 0
          %9343 = vmatpush2.bf16.msra.mxu0 %v9248
          %9344 = vmatprep.mubr.bf16.mxu0 %v9265
          %9345 = vmatmul.mubr.bf16.gmra.mxu0 %v9105
          %v9346 = vpop.f32.mrf.mxu0
          %v9347 = vadd.f32 0.0, %v9346
          %v9348 = vpop.f32.mrf.mxu0
          %v9349 = vpop.f32.mrf.mxu0
          %v9350 = vadd.f32 0.0, %v9349
          %v9351 = vpop.f32.mrf.mxu0
          %9352 = vmatprep.mubr.bf16.mxu0 %v9268
          %9353 = vmatmul.mubr.bf16.gmra.mxu0 %v9109
          %v9354 = vpop.f32.mrf.mxu0
          %v9355 = vadd.f32 0.0, %v9354
          %v9356 = vpop.f32.mrf.mxu0
          %v9357 = vpop.f32.mrf.mxu0
          %v9358 = vadd.f32 0.0, %v9357
          %v9359 = vpop.f32.mrf.mxu0
          %9360 = vmatprep.mubr.bf16.mxu0 %v9271
          %9361 = vmatmul.mubr.bf16.gmra.mxu0 %v9113
          %v9362 = vpop.f32.mrf.mxu0
          %v9363 = vadd.f32 0.0, %v9362
          %v9364 = vpop.f32.mrf.mxu0
          %v9365 = vpop.f32.mrf.mxu0
          %v9366 = vadd.f32 0.0, %v9365
          %v9367 = vpop.f32.mrf.mxu0
          %9368 = vmatprep.mubr.bf16.mxu0 %v9274
          %9369 = vmatmul.mubr.bf16.gmra.mxu0 %v9117
          %v9370 = vpop.f32.mrf.mxu0
          %v9371 = vadd.f32 0.0, %v9370
          %v9372 = vpop.f32.mrf.mxu0
          %v9373 = vpop.f32.mrf.mxu0
          %v9374 = vadd.f32 0.0, %v9373
          %v9375 = vpop.f32.mrf.mxu0
          %9376 = vmatprep.mubr.bf16.mxu0 %v9277
          %9377 = vmatmul.mubr.bf16.gmra.mxu0 %v9121
          %v9378 = vpop.f32.mrf.mxu0
          %v9379 = vadd.f32 0.0, %v9378
          %v9380 = vpop.f32.mrf.mxu0
          %v9381 = vpop.f32.mrf.mxu0
          %v9382 = vadd.f32 0.0, %v9381
          %v9383 = vpop.f32.mrf.mxu0
          %9384 = vmatprep.mubr.bf16.mxu0 %v9280
          %9385 = vmatmul.mubr.bf16.gmra.mxu0 %v9125
          %v9386 = vpop.f32.mrf.mxu0
          %v9387 = vadd.f32 0.0, %v9386
          %v9388 = vpop.f32.mrf.mxu0
          %v9389 = vpop.f32.mrf.mxu0
          %v9390 = vadd.f32 0.0, %v9389
          %v9391 = vpop.f32.mrf.mxu0
          %9392 = vmatprep.mubr.bf16.mxu0 %v9283
          %9393 = vmatmul.mubr.bf16.gmra.mxu0 %v9129
          %v9394 = vpop.f32.mrf.mxu0
          %v9395 = vadd.f32 0.0, %v9394
          %v9396 = vpop.f32.mrf.mxu0
          %v9397 = vpop.f32.mrf.mxu0
          %v9398 = vadd.f32 0.0, %v9397
          %v9399 = vpop.f32.mrf.mxu0
          %9400 = vmatprep.mubr.bf16.mxu0 %v9286
          %9401 = vmatmul.mubr.bf16.gmra.mxu0 %v9133
          %v9402 = vpop.f32.mrf.mxu0
          %v9403 = vadd.f32 0.0, %v9402
          %v9404 = vpop.f32.mrf.mxu0
          %v9405 = vpop.f32.mrf.mxu0
          %v9406 = vadd.f32 0.0, %v9405
          %v9407 = vpop.f32.mrf.mxu0
          %9408 = vmatprep.mubr.bf16.mxu0 %v9289
          %9409 = vmatmul.mubr.bf16.gmra.mxu0 %v9137
          %v9410 = vpop.f32.mrf.mxu0
          %v9411 = vadd.f32 0.0, %v9410
          %v9412 = vpop.f32.mrf.mxu0
          %v9413 = vpop.f32.mrf.mxu0
          %v9414 = vadd.f32 0.0, %v9413
          %v9415 = vpop.f32.mrf.mxu0
          %9416 = vmatprep.mubr.bf16.mxu0 %v9292
          %9417 = vmatmul.mubr.bf16.gmra.mxu0 %v9141
          %v9418 = vpop.f32.mrf.mxu0
          %v9419 = vadd.f32 0.0, %v9418
          %v9420 = vpop.f32.mrf.mxu0
          %v9421 = vpop.f32.mrf.mxu0
          %v9422 = vadd.f32 0.0, %v9421
          %v9423 = vpop.f32.mrf.mxu0
          %9424 = vmatprep.mubr.bf16.mxu0 %v9295
          %9425 = vmatmul.mubr.bf16.gmra.mxu0 %v9145
          %v9426 = vpop.f32.mrf.mxu0
          %v9427 = vadd.f32 0.0, %v9426
          %v9428 = vpop.f32.mrf.mxu0
          %v9429 = vpop.f32.mrf.mxu0
          %v9430 = vadd.f32 0.0, %v9429
          %v9431 = vpop.f32.mrf.mxu0
          %9432 = vmatprep.mubr.bf16.mxu0 %v9298
          %9433 = vmatmul.mubr.bf16.gmra.mxu0 %v9149
          %v9434 = vpop.f32.mrf.mxu0
          %v9435 = vadd.f32 0.0, %v9434
          %v9436 = vpop.f32.mrf.mxu0
          %v9437 = vpop.f32.mrf.mxu0
          %v9438 = vadd.f32 0.0, %v9437
          %v9439 = vpop.f32.mrf.mxu0
          %9440 = vmatprep.mubr.bf16.mxu0 %v9301
          %9441 = vmatmul.mubr.bf16.gmra.mxu0 %v9153
          %v9442 = vpop.f32.mrf.mxu0
          %v9443 = vadd.f32 0.0, %v9442
          %v9444 = vpop.f32.mrf.mxu0
          %v9445 = vpop.f32.mrf.mxu0
          %v9446 = vadd.f32 0.0, %v9445
          %v9447 = vpop.f32.mrf.mxu0
          %9448 = vmatprep.mubr.bf16.mxu0 %v9304
          %9449 = vmatmul.mubr.bf16.gmra.mxu0 %v9157
          %v9450 = vpop.f32.mrf.mxu0
          %v9451 = vadd.f32 0.0, %v9450
          %v9452 = vpop.f32.mrf.mxu0
          %v9453 = vpop.f32.mrf.mxu0
          %v9454 = vadd.f32 0.0, %v9453
          %v9455 = vpop.f32.mrf.mxu0
          %9456 = vmatprep.mubr.bf16.mxu0 %v9307
          %9457 = vmatmul.mubr.bf16.gmra.mxu0 %v9161
          %v9458 = vpop.f32.mrf.mxu0
          %v9459 = vadd.f32 0.0, %v9458
          %v9460 = vpop.f32.mrf.mxu0
          %v9461 = vpop.f32.mrf.mxu0
          %v9462 = vadd.f32 0.0, %v9461
          %v9463 = vpop.f32.mrf.mxu0
          %9464 = vmatprep.mubr.bf16.mxu0 %v9310
          %9465 = vmatmul.mubr.bf16.gmra.mxu0 %v9165
          %v9466 = vpop.f32.mrf.mxu0
          %v9467 = vadd.f32 0.0, %v9466
          %v9468 = vpop.f32.mrf.mxu0
          %v9469 = vpop.f32.mrf.mxu0
          %v9470 = vadd.f32 0.0, %v9469
          %v9471 = vpop.f32.mrf.mxu0
          %9472 = vdwg.mxu0
          %v9473 = vadd.f32 %v7502, %v9347
          %v9474 = vadd.f32 %v7505, %v9350
          %v9475 = vadd.f32 %v7510, %v9355
          %v9476 = vadd.f32 %v7513, %v9358
          %v9477 = vadd.f32 %v7518, %v9363
          %v9478 = vadd.f32 %v7521, %v9366
          %v9479 = vadd.f32 %v7526, %v9371
          %v9480 = vadd.f32 %v7529, %v9374
          %v9481 = vadd.f32 %v7534, %v9379
          %v9482 = vadd.f32 %v7537, %v9382
          %v9483 = vadd.f32 %v7542, %v9387
          %v9484 = vadd.f32 %v7545, %v9390
          %v9485 = vadd.f32 %v7550, %v9395
          %v9486 = vadd.f32 %v7553, %v9398
          %v9487 = vadd.f32 %v7558, %v9403
          %v9488 = vadd.f32 %v7561, %v9406
          %v9489 = vadd.f32 %v7566, %v9411
          %v9490 = vadd.f32 %v7569, %v9414
          %v9491 = vadd.f32 %v7574, %v9419
          %v9492 = vadd.f32 %v7577, %v9422
          %v9493 = vadd.f32 %v7582, %v9427
          %v9494 = vadd.f32 %v7585, %v9430
          %v9495 = vadd.f32 %v7590, %v9435
          %v9496 = vadd.f32 %v7593, %v9438
          %v9497 = vadd.f32 %v7598, %v9443
          %v9498 = vadd.f32 %v7601, %v9446
          %v9499 = vadd.f32 %v7606, %v9451
          %v9500 = vadd.f32 %v7609, %v9454
          %v9501 = vadd.f32 %v7614, %v9459
          %v9502 = vadd.f32 %v7617, %v9462
          %v9503 = vadd.f32 %v7622, %v9467
          %v9504 = vadd.f32 %v7625, %v9470
          %v9505 = vunpack.c.l.bf16 %v5640
          %v9506 = vunpack.c.l.bf16 %v5641
          %v9507 = vunpack.c.l.bf16 %v5643
          %v9508 = vunpack.c.l.bf16 %v5644
          %v9509 = vunpack.c.l.bf16 %v5646
          %v9510 = vunpack.c.l.bf16 %v5647
          %v9511 = vunpack.c.l.bf16 %v5649
          %v9512 = vunpack.c.l.bf16 %v5650
          %v9513 = vunpack.c.l.bf16 %v5652
          %v9514 = vunpack.c.l.bf16 %v5653
          %v9515 = vunpack.c.l.bf16 %v5655
          %v9516 = vunpack.c.l.bf16 %v5656
          %v9517 = vunpack.c.l.bf16 %v5658
          %v9518 = vunpack.c.l.bf16 %v5659
          %v9519 = vunpack.c.l.bf16 %v5661
          %v9520 = vunpack.c.l.bf16 %v5662
          %v9521 = vunpack.c.l.bf16 %v5664
          %v9522 = vunpack.c.l.bf16 %v5665
          %v9523 = vunpack.c.l.bf16 %v5667
          %v9524 = vunpack.c.l.bf16 %v5668
          %v9525 = vunpack.c.l.bf16 %v5670
          %v9526 = vunpack.c.l.bf16 %v5671
          %v9527 = vunpack.c.l.bf16 %v5673
          %v9528 = vunpack.c.l.bf16 %v5674
          %v9529 = vunpack.c.l.bf16 %v5676
          %v9530 = vunpack.c.l.bf16 %v5677
          %v9531 = vunpack.c.l.bf16 %v5679
          %v9532 = vunpack.c.l.bf16 %v5680
          %v9533 = vunpack.c.l.bf16 %v5682
          %v9534 = vunpack.c.l.bf16 %v5683
          %v9535 = vunpack.c.l.bf16 %v5685
          %v9536 = vunpack.c.l.bf16 %v5686
          %v9537 = vstv %s464
          %v9538 = vmul.f32 %v9537, %v9505
          %v9539 = vmul.f32 %v9537, %v9506
          %v9540 = vmul.f32 %v9537, %v9507
          %v9541 = vmul.f32 %v9537, %v9508
          %v9542 = vmul.f32 %v9537, %v9509
          %v9543 = vmul.f32 %v9537, %v9510
          %v9544 = vmul.f32 %v9537, %v9511
          %v9545 = vmul.f32 %v9537, %v9512
          %v9546 = vmul.f32 %v9537, %v9513
          %v9547 = vmul.f32 %v9537, %v9514
          %v9548 = vmul.f32 %v9537, %v9515
          %v9549 = vmul.f32 %v9537, %v9516
          %v9550 = vmul.f32 %v9537, %v9517
          %v9551 = vmul.f32 %v9537, %v9518
          %v9552 = vmul.f32 %v9537, %v9519
          %v9553 = vmul.f32 %v9537, %v9520
          %v9554 = vmul.f32 %v9537, %v9521
          %v9555 = vmul.f32 %v9537, %v9522
          %v9556 = vmul.f32 %v9537, %v9523
          %v9557 = vmul.f32 %v9537, %v9524
          %v9558 = vmul.f32 %v9537, %v9525
          %v9559 = vmul.f32 %v9537, %v9526
          %v9560 = vmul.f32 %v9537, %v9527
          %v9561 = vmul.f32 %v9537, %v9528
          %v9562 = vmul.f32 %v9537, %v9529
          %v9563 = vmul.f32 %v9537, %v9530
          %v9564 = vmul.f32 %v9537, %v9531
          %v9565 = vmul.f32 %v9537, %v9532
          %v9566 = vmul.f32 %v9537, %v9533
          %v9567 = vmul.f32 %v9537, %v9534
          %v9568 = vmul.f32 %v9537, %v9535
          %v9569 = vmul.f32 %v9537, %v9536
          %v9570 = vadd.f32 %v9473, %v9538
          %v9571 = vadd.f32 %v9474, %v9539
          %v9572 = vadd.f32 %v9475, %v9540
          %v9573 = vadd.f32 %v9476, %v9541
          %v9574 = vadd.f32 %v9477, %v9542
          %v9575 = vadd.f32 %v9478, %v9543
          %v9576 = vadd.f32 %v9479, %v9544
          %v9577 = vadd.f32 %v9480, %v9545
          %v9578 = vadd.f32 %v9481, %v9546
          %v9579 = vadd.f32 %v9482, %v9547
          %v9580 = vadd.f32 %v9483, %v9548
          %v9581 = vadd.f32 %v9484, %v9549
          %v9582 = vadd.f32 %v9485, %v9550
          %v9583 = vadd.f32 %v9486, %v9551
          %v9584 = vadd.f32 %v9487, %v9552
          %v9585 = vadd.f32 %v9488, %v9553
          %v9586 = vadd.f32 %v9489, %v9554
          %v9587 = vadd.f32 %v9490, %v9555
          %v9588 = vadd.f32 %v9491, %v9556
          %v9589 = vadd.f32 %v9492, %v9557
          %v9590 = vadd.f32 %v9493, %v9558
          %v9591 = vadd.f32 %v9494, %v9559
          %v9592 = vadd.f32 %v9495, %v9560
          %v9593 = vadd.f32 %v9496, %v9561
          %v9594 = vadd.f32 %v9497, %v9562
          %v9595 = vadd.f32 %v9498, %v9563
          %v9596 = vadd.f32 %v9499, %v9564
          %v9597 = vadd.f32 %v9500, %v9565
          %v9598 = vadd.f32 %v9501, %v9566
          %v9599 = vadd.f32 %v9502, %v9567
          %v9600 = vadd.f32 %v9503, %v9568
          %v9601 = vadd.f32 %v9504, %v9569
          %v9602 = vld [vmem:[%s290] sm:$0x1]
          %v9604 = vlaneseq
          %v9605 = vshrl.u32 %v9604, 7
          %v9606 = vsub.s32 0, %v9605
          %v9607 = vrot.slane %v9602, %v9606
          %v9609 = vmul.f32 %v9570, %v9607
          %v9610 = vmul.f32 %v9571, %v9607
          %v9611 = vmul.f32 %v9572, %v9607
          %v9612 = vmul.f32 %v9573, %v9607
          %v9613 = vmul.f32 %v9574, %v9607
          %v9614 = vmul.f32 %v9575, %v9607
          %v9615 = vmul.f32 %v9576, %v9607
          %v9616 = vmul.f32 %v9577, %v9607
          %v9617 = vmul.f32 %v9578, %v9607
          %v9618 = vmul.f32 %v9579, %v9607
          %v9619 = vmul.f32 %v9580, %v9607
          %v9620 = vmul.f32 %v9581, %v9607
          %v9621 = vmul.f32 %v9582, %v9607
          %v9622 = vmul.f32 %v9583, %v9607
          %v9623 = vmul.f32 %v9584, %v9607
          %v9624 = vmul.f32 %v9585, %v9607
          %v9625 = vmul.f32 %v9586, %v9607
          %v9626 = vmul.f32 %v9587, %v9607
          %v9627 = vmul.f32 %v9588, %v9607
          %v9628 = vmul.f32 %v9589, %v9607
          %v9629 = vmul.f32 %v9590, %v9607
          %v9630 = vmul.f32 %v9591, %v9607
          %v9631 = vmul.f32 %v9592, %v9607
          %v9632 = vmul.f32 %v9593, %v9607
          %v9633 = vmul.f32 %v9594, %v9607
          %v9634 = vmul.f32 %v9595, %v9607
          %v9635 = vmul.f32 %v9596, %v9607
          %v9636 = vmul.f32 %v9597, %v9607
          %v9637 = vmul.f32 %v9598, %v9607
          %v9638 = vmul.f32 %v9599, %v9607
          %v9639 = vmul.f32 %v9600, %v9607
          %v9640 = vmul.f32 %v9601, %v9607
          %v9641 = vld [vmem:[%s293] sm:$0x1]
          %v9643 = vlaneseq
          %v9644 = vshrl.u32 %v9643, 7
          %v9645 = vsub.s32 0, %v9644
          %v9646 = vrot.slane %v9641, %v9645
          %v9648 = vadd.f32 %v9609, %v9646
          %v9649 = vadd.f32 %v9610, %v9646
          %v9650 = vadd.f32 %v9611, %v9646
          %v9651 = vadd.f32 %v9612, %v9646
          %v9652 = vadd.f32 %v9613, %v9646
          %v9653 = vadd.f32 %v9614, %v9646
          %v9654 = vadd.f32 %v9615, %v9646
          %v9655 = vadd.f32 %v9616, %v9646
          %v9656 = vadd.f32 %v9617, %v9646
          %v9657 = vadd.f32 %v9618, %v9646
          %v9658 = vadd.f32 %v9619, %v9646
          %v9659 = vadd.f32 %v9620, %v9646
          %v9660 = vadd.f32 %v9621, %v9646
          %v9661 = vadd.f32 %v9622, %v9646
          %v9662 = vadd.f32 %v9623, %v9646
          %v9663 = vadd.f32 %v9624, %v9646
          %v9664 = vadd.f32 %v9625, %v9646
          %v9665 = vadd.f32 %v9626, %v9646
          %v9666 = vadd.f32 %v9627, %v9646
          %v9667 = vadd.f32 %v9628, %v9646
          %v9668 = vadd.f32 %v9629, %v9646
          %v9669 = vadd.f32 %v9630, %v9646
          %v9670 = vadd.f32 %v9631, %v9646
          %v9671 = vadd.f32 %v9632, %v9646
          %v9672 = vadd.f32 %v9633, %v9646
          %v9673 = vadd.f32 %v9634, %v9646
          %v9674 = vadd.f32 %v9635, %v9646
          %v9675 = vadd.f32 %v9636, %v9646
          %v9676 = vadd.f32 %v9637, %v9646
          %v9677 = vadd.f32 %v9638, %v9646
          %v9678 = vadd.f32 %v9639, %v9646
          %v9679 = vadd.f32 %v9640, %v9646
          %vm9680 = vcmp.ge.f32.partialorder %v9648, 0.0
          %vm9681 = vcmp.ge.f32.partialorder %v9649, 0.0
          %vm9682 = vcmp.ge.f32.partialorder %v9650, 0.0
          %vm9683 = vcmp.ge.f32.partialorder %v9651, 0.0
          %vm9684 = vcmp.ge.f32.partialorder %v9652, 0.0
          %vm9685 = vcmp.ge.f32.partialorder %v9653, 0.0
          %vm9686 = vcmp.ge.f32.partialorder %v9654, 0.0
          %vm9687 = vcmp.ge.f32.partialorder %v9655, 0.0
          %vm9688 = vcmp.ge.f32.partialorder %v9656, 0.0
          %vm9689 = vcmp.ge.f32.partialorder %v9657, 0.0
          %vm9690 = vcmp.ge.f32.partialorder %v9658, 0.0
          %vm9691 = vcmp.ge.f32.partialorder %v9659, 0.0
          %vm9692 = vcmp.ge.f32.partialorder %v9660, 0.0
          %vm9693 = vcmp.ge.f32.partialorder %v9661, 0.0
          %vm9694 = vcmp.ge.f32.partialorder %v9662, 0.0
          %vm9695 = vcmp.ge.f32.partialorder %v9663, 0.0
          %vm9696 = vcmp.ge.f32.partialorder %v9664, 0.0
          %vm9697 = vcmp.ge.f32.partialorder %v9665, 0.0
          %vm9698 = vcmp.ge.f32.partialorder %v9666, 0.0
          %vm9699 = vcmp.ge.f32.partialorder %v9667, 0.0
          %vm9700 = vcmp.ge.f32.partialorder %v9668, 0.0
          %vm9701 = vcmp.ge.f32.partialorder %v9669, 0.0
          %vm9702 = vcmp.ge.f32.partialorder %v9670, 0.0
          %vm9703 = vcmp.ge.f32.partialorder %v9671, 0.0
          %vm9704 = vcmp.ge.f32.partialorder %v9672, 0.0
          %vm9705 = vcmp.ge.f32.partialorder %v9673, 0.0
          %vm9706 = vcmp.ge.f32.partialorder %v9674, 0.0
          %vm9707 = vcmp.ge.f32.partialorder %v9675, 0.0
          %vm9708 = vcmp.ge.f32.partialorder %v9676, 0.0
          %vm9709 = vcmp.ge.f32.partialorder %v9677, 0.0
          %vm9710 = vcmp.ge.f32.partialorder %v9678, 0.0
          %vm9711 = vcmp.ge.f32.partialorder %v9679, 0.0
          %v9712 = vld [vmem:[%s296] sm:$0x1]
          %v9714 = vlaneseq
          %v9715 = vshrl.u32 %v9714, 7
          %v9716 = vsub.s32 0, %v9715
          %v9717 = vrot.slane %v9712, %v9716
          %v9719 = vmul.f32 %v9648, %v9717
          %v9720 = vmul.f32 %v9649, %v9717
          %v9721 = vmul.f32 %v9650, %v9717
          %v9722 = vmul.f32 %v9651, %v9717
          %v9723 = vmul.f32 %v9652, %v9717
          %v9724 = vmul.f32 %v9653, %v9717
          %v9725 = vmul.f32 %v9654, %v9717
          %v9726 = vmul.f32 %v9655, %v9717
          %v9727 = vmul.f32 %v9656, %v9717
          %v9728 = vmul.f32 %v9657, %v9717
          %v9729 = vmul.f32 %v9658, %v9717
          %v9730 = vmul.f32 %v9659, %v9717
          %v9731 = vmul.f32 %v9660, %v9717
          %v9732 = vmul.f32 %v9661, %v9717
          %v9733 = vmul.f32 %v9662, %v9717
          %v9734 = vmul.f32 %v9663, %v9717
          %v9735 = vmul.f32 %v9664, %v9717
          %v9736 = vmul.f32 %v9665, %v9717
          %v9737 = vmul.f32 %v9666, %v9717
          %v9738 = vmul.f32 %v9667, %v9717
          %v9739 = vmul.f32 %v9668, %v9717
          %v9740 = vmul.f32 %v9669, %v9717
          %v9741 = vmul.f32 %v9670, %v9717
          %v9742 = vmul.f32 %v9671, %v9717
          %v9743 = vmul.f32 %v9672, %v9717
          %v9744 = vmul.f32 %v9673, %v9717
          %v9745 = vmul.f32 %v9674, %v9717
          %v9746 = vmul.f32 %v9675, %v9717
          %v9747 = vmul.f32 %v9676, %v9717
          %v9748 = vmul.f32 %v9677, %v9717
          %v9749 = vmul.f32 %v9678, %v9717
          %v9750 = vmul.f32 %v9679, %v9717
          %v9751 = vsel %vm9680, %v9648, %v9719
          %v9752 = vsel %vm9681, %v9649, %v9720
          %v9753 = vsel %vm9682, %v9650, %v9721
          %v9754 = vsel %vm9683, %v9651, %v9722
          %v9755 = vsel %vm9684, %v9652, %v9723
          %v9756 = vsel %vm9685, %v9653, %v9724
          %v9757 = vsel %vm9686, %v9654, %v9725
          %v9758 = vsel %vm9687, %v9655, %v9726
          %v9759 = vsel %vm9688, %v9656, %v9727
          %v9760 = vsel %vm9689, %v9657, %v9728
          %v9761 = vsel %vm9690, %v9658, %v9729
          %v9762 = vsel %vm9691, %v9659, %v9730
          %v9763 = vsel %vm9692, %v9660, %v9731
          %v9764 = vsel %vm9693, %v9661, %v9732
          %v9765 = vsel %vm9694, %v9662, %v9733
          %v9766 = vsel %vm9695, %v9663, %v9734
          %v9767 = vsel %vm9696, %v9664, %v9735
          %v9768 = vsel %vm9697, %v9665, %v9736
          %v9769 = vsel %vm9698, %v9666, %v9737
          %v9770 = vsel %vm9699, %v9667, %v9738
          %v9771 = vsel %vm9700, %v9668, %v9739
          %v9772 = vsel %vm9701, %v9669, %v9740
          %v9773 = vsel %vm9702, %v9670, %v9741
          %v9774 = vsel %vm9703, %v9671, %v9742
          %v9775 = vsel %vm9704, %v9672, %v9743
          %v9776 = vsel %vm9705, %v9673, %v9744
          %v9777 = vsel %vm9706, %v9674, %v9745
          %v9778 = vsel %vm9707, %v9675, %v9746
          %v9779 = vsel %vm9708, %v9676, %v9747
          %v9780 = vsel %vm9709, %v9677, %v9748
          %v9781 = vsel %vm9710, %v9678, %v9749
          %v9782 = vsel %vm9711, %v9679, %v9750
          %p9783 = scmp.eq.s32.totalorder %s24, 5
          // Predicated region
          $region61: #{tpu_custom_call.1} parent=59 // pred_check
            %p9784 = pneg %p9783
          $region62: #{tpu_custom_call.1} parent=59 // pred_check_branch
            %9786 = sbr.rel (%p9784) target = $region64
          $region63: #{tpu_custom_call.1} parent=59 // pred_region
            %9787 = vst.msk [vmem:[%s277] sm:$0xff] %vm6616, %v9751
            %9788 = vst.msk [vmem:[%s277 + $0x8] sm:$0xff] %vm6616, %v9752
            %9789 = vst.msk [vmem:[%s277 + $0x10] sm:$0xff] %vm6616, %v9753
            %9790 = vst.msk [vmem:[%s277 + $0x18] sm:$0xff] %vm6616, %v9754
            %9791 = vst.msk [vmem:[%s277 + $0x20] sm:$0xff] %vm6616, %v9755
            %9792 = vst.msk [vmem:[%s277 + $0x28] sm:$0xff] %vm6616, %v9756
            %9793 = vst.msk [vmem:[%s277 + $0x30] sm:$0xff] %vm6616, %v9757
            %9794 = vst.msk [vmem:[%s277 + $0x38] sm:$0xff] %vm6616, %v9758
            %9795 = vst.msk [vmem:[%s277 + $0x40] sm:$0xff] %vm6616, %v9759
            %9796 = vst.msk [vmem:[%s277 + $0x48] sm:$0xff] %vm6616, %v9760
            %9797 = vst.msk [vmem:[%s277 + $0x50] sm:$0xff] %vm6616, %v9761
            %9798 = vst.msk [vmem:[%s277 + $0x58] sm:$0xff] %vm6616, %v9762
            %9799 = vst.msk [vmem:[%s277 + $0x60] sm:$0xff] %vm6616, %v9763
            %9800 = vst.msk [vmem:[%s277 + $0x68] sm:$0xff] %vm6616, %v9764
            %9801 = vst.msk [vmem:[%s277 + $0x70] sm:$0xff] %vm6616, %v9765
            %9802 = vst.msk [vmem:[%s277 + $0x78] sm:$0xff] %vm6616, %v9766
            %9803 = vst.msk [vmem:[%s277 + $0x80] sm:$0xff] %vm6616, %v9767
            %9804 = vst.msk [vmem:[%s277 + $0x88] sm:$0xff] %vm6616, %v9768
            %9805 = vst.msk [vmem:[%s277 + $0x90] sm:$0xff] %vm6616, %v9769
            %9806 = vst.msk [vmem:[%s277 + $0x98] sm:$0xff] %vm6616, %v9770
            %9807 = vst.msk [vmem:[%s277 + $0xa0] sm:$0xff] %vm6616, %v9771
            %9808 = vst.msk [vmem:[%s277 + $0xa8] sm:$0xff] %vm6616, %v9772
            %9809 = vst.msk [vmem:[%s277 + $0xb0] sm:$0xff] %vm6616, %v9773
            %9810 = vst.msk [vmem:[%s277 + $0xb8] sm:$0xff] %vm6616, %v9774
            %9811 = vst.msk [vmem:[%s277 + $0xc0] sm:$0xff] %vm6616, %v9775
            %9812 = vst.msk [vmem:[%s277 + $0xc8] sm:$0xff] %vm6616, %v9776
            %9813 = vst.msk [vmem:[%s277 + $0xd0] sm:$0xff] %vm6616, %v9777
            %9814 = vst.msk [vmem:[%s277 + $0xd8] sm:$0xff] %vm6616, %v9778
            %9815 = vst.msk [vmem:[%s277 + $0xe0] sm:$0xff] %vm6616, %v9779
            %9816 = vst.msk [vmem:[%s277 + $0xe8] sm:$0xff] %vm6616, %v9780
            %9817 = vst.msk [vmem:[%s277 + $0xf0] sm:$0xff] %vm6616, %v9781
            %9818 = vst.msk [vmem:[%s277 + $0xf8] sm:$0xff] %vm6616, %v9782
          $region64: #{tpu_custom_call.1} parent=59 // pred_fallthru
            _
          // Predicated region
          $region65: #{tpu_custom_call.1} parent=59 // pred_check
            %p9819 = pneg %p460
          $region66: #{tpu_custom_call.1} parent=59 // pred_check_branch
            %9821 = sbr.rel (%p9819) target = $region68
          $region67: #{tpu_custom_call.1} parent=59 // pred_region
            %v9822 = vpack.c.bf16 %v9752, %v9751
            %v9823 = vpack.c.bf16 %v9754, %v9753
            %v9824 = vpack.c.bf16 %v9756, %v9755
            %v9825 = vpack.c.bf16 %v9758, %v9757
            %v9826 = vpack.c.bf16 %v9760, %v9759
            %v9827 = vpack.c.bf16 %v9762, %v9761
            %v9828 = vpack.c.bf16 %v9764, %v9763
            %v9829 = vpack.c.bf16 %v9766, %v9765
            %v9830 = vpack.c.bf16 %v9768, %v9767
            %v9831 = vpack.c.bf16 %v9770, %v9769
            %v9832 = vpack.c.bf16 %v9772, %v9771
            %v9833 = vpack.c.bf16 %v9774, %v9773
            %v9834 = vpack.c.bf16 %v9776, %v9775
            %v9835 = vpack.c.bf16 %v9778, %v9777
            %v9836 = vpack.c.bf16 %v9780, %v9779
            %v9837 = vpack.c.bf16 %v9782, %v9781
            %v9854 = vunpack.c.l.b16 %v9822
            %v9855 = vunpack.c.h.b16 %v9822
            %v9856 = vunpack.c.l.b16 %v9823
            %v9857 = vunpack.c.h.b16 %v9823
            %v9858 = vunpack.c.l.b16 %v9824
            %v9859 = vunpack.c.h.b16 %v9824
            %v9860 = vunpack.c.l.b16 %v9825
            %v9861 = vunpack.c.h.b16 %v9825
            %v9862 = vunpack.c.l.b16 %v9826
            %v9863 = vunpack.c.h.b16 %v9826
            %v9864 = vunpack.c.l.b16 %v9827
            %v9865 = vunpack.c.h.b16 %v9827
            %v9866 = vunpack.c.l.b16 %v9828
            %v9867 = vunpack.c.h.b16 %v9828
            %v9868 = vunpack.c.l.b16 %v9829
            %v9869 = vunpack.c.h.b16 %v9829
            %v9870 = vunpack.c.l.b16 %v9830
            %v9871 = vunpack.c.h.b16 %v9830
            %v9872 = vunpack.c.l.b16 %v9831
            %v9873 = vunpack.c.h.b16 %v9831
            %v9874 = vunpack.c.l.b16 %v9832
            %v9875 = vunpack.c.h.b16 %v9832
            %v9876 = vunpack.c.l.b16 %v9833
            %v9877 = vunpack.c.h.b16 %v9833
            %v9878 = vunpack.c.l.b16 %v9834
            %v9879 = vunpack.c.h.b16 %v9834
            %v9880 = vunpack.c.l.b16 %v9835
            %v9881 = vunpack.c.h.b16 %v9835
            %v9882 = vunpack.c.l.b16 %v9836
            %v9883 = vunpack.c.h.b16 %v9836
            %v9884 = vunpack.c.l.b16 %v9837
            %v9885 = vunpack.c.h.b16 %v9837
            %v9886 = vpack.c.b16 %v9854, %v9854
            %v9887 = vpack.c.b16 %v9855, %v9855
            %v9888 = vpack.c.b16 %v9856, %v9856
            %v9889 = vpack.c.b16 %v9857, %v9857
            %v9890 = vpack.c.b16 %v9858, %v9858
            %v9891 = vpack.c.b16 %v9859, %v9859
            %v9892 = vpack.c.b16 %v9860, %v9860
            %v9893 = vpack.c.b16 %v9861, %v9861
            %v9894 = vpack.c.b16 %v9862, %v9862
            %v9895 = vpack.c.b16 %v9863, %v9863
            %v9896 = vpack.c.b16 %v9864, %v9864
            %v9897 = vpack.c.b16 %v9865, %v9865
            %v9898 = vpack.c.b16 %v9866, %v9866
            %v9899 = vpack.c.b16 %v9867, %v9867
            %v9900 = vpack.c.b16 %v9868, %v9868
            %v9901 = vpack.c.b16 %v9869, %v9869
            %v9902 = vpack.c.b16 %v9870, %v9870
            %v9903 = vpack.c.b16 %v9871, %v9871
            %v9904 = vpack.c.b16 %v9872, %v9872
            %v9905 = vpack.c.b16 %v9873, %v9873
            %v9906 = vpack.c.b16 %v9874, %v9874
            %v9907 = vpack.c.b16 %v9875, %v9875
            %v9908 = vpack.c.b16 %v9876, %v9876
            %v9909 = vpack.c.b16 %v9877, %v9877
            %v9910 = vpack.c.b16 %v9878, %v9878
            %v9911 = vpack.c.b16 %v9879, %v9879
            %v9912 = vpack.c.b16 %v9880, %v9880
            %v9913 = vpack.c.b16 %v9881, %v9881
            %v9914 = vpack.c.b16 %v9882, %v9882
            %v9915 = vpack.c.b16 %v9883, %v9883
            %v9916 = vpack.c.b16 %v9884, %v9884
            %v9917 = vpack.c.b16 %v9885, %v9885
            %s9950 = scalar_lea.vmem [#allocation2], 16
            %vm9951 = vcmask 519168
            %9952 = vst.msk [vmem:[%s9950 + $0x4] sm:$0xf] %vm9951, %v9886
            %9953 = vst.msk [vmem:[%s9950 + $0x8] sm:$0xf] %vm9951, %v9887
            %9954 = vst.msk [vmem:[%s9950 + $0x14] sm:$0xf] %vm9951, %v9888
            %9955 = vst.msk [vmem:[%s9950 + $0x18] sm:$0xf] %vm9951, %v9889
            %9956 = vst.msk [vmem:[%s9950 + $0x24] sm:$0xf] %vm9951, %v9890
            %9957 = vst.msk [vmem:[%s9950 + $0x28] sm:$0xf] %vm9951, %v9891
            %9958 = vst.msk [vmem:[%s9950 + $0x34] sm:$0xf] %vm9951, %v9892
            %9959 = vst.msk [vmem:[%s9950 + $0x38] sm:$0xf] %vm9951, %v9893
            %9960 = vst.msk [vmem:[%s9950 + $0x44] sm:$0xf] %vm9951, %v9894
            %9961 = vst.msk [vmem:[%s9950 + $0x48] sm:$0xf] %vm9951, %v9895
            %9962 = vst.msk [vmem:[%s9950 + $0x54] sm:$0xf] %vm9951, %v9896
            %9963 = vst.msk [vmem:[%s9950 + $0x58] sm:$0xf] %vm9951, %v9897
            %9964 = vst.msk [vmem:[%s9950 + $0x64] sm:$0xf] %vm9951, %v9898
            %9965 = vst.msk [vmem:[%s9950 + $0x68] sm:$0xf] %vm9951, %v9899
            %9966 = vst.msk [vmem:[%s9950 + $0x74] sm:$0xf] %vm9951, %v9900
            %9967 = vst.msk [vmem:[%s9950 + $0x78] sm:$0xf] %vm9951, %v9901
            %9968 = vst.msk [vmem:[%s9950 + $0x84] sm:$0xf] %vm9951, %v9902
            %9969 = vst.msk [vmem:[%s9950 + $0x88] sm:$0xf] %vm9951, %v9903
            %9970 = vst.msk [vmem:[%s9950 + $0x94] sm:$0xf] %vm9951, %v9904
            %9971 = vst.msk [vmem:[%s9950 + $0x98] sm:$0xf] %vm9951, %v9905
            %9972 = vst.msk [vmem:[%s9950 + $0xa4] sm:$0xf] %vm9951, %v9906
            %9973 = vst.msk [vmem:[%s9950 + $0xa8] sm:$0xf] %vm9951, %v9907
            %9974 = vst.msk [vmem:[%s9950 + $0xb4] sm:$0xf] %vm9951, %v9908
            %9975 = vst.msk [vmem:[%s9950 + $0xb8] sm:$0xf] %vm9951, %v9909
            %9976 = vst.msk [vmem:[%s9950 + $0xc4] sm:$0xf] %vm9951, %v9910
            %9977 = vst.msk [vmem:[%s9950 + $0xc8] sm:$0xf] %vm9951, %v9911
            %9978 = vst.msk [vmem:[%s9950 + $0xd4] sm:$0xf] %vm9951, %v9912
            %9979 = vst.msk [vmem:[%s9950 + $0xd8] sm:$0xf] %vm9951, %v9913
            %9980 = vst.msk [vmem:[%s9950 + $0xe4] sm:$0xf] %vm9951, %v9914
            %9981 = vst.msk [vmem:[%s9950 + $0xe8] sm:$0xf] %vm9951, %v9915
            %9982 = vst.msk [vmem:[%s9950 + $0xf4] sm:$0xf] %vm9951, %v9916
            %9983 = vst.msk [vmem:[%s9950 + $0xf8] sm:$0xf] %vm9951, %v9917
          $region68: #{tpu_custom_call.1} parent=59 // pred_fallthru
            _
        $region60: #{tpu_custom_call.1} parent=39 // pred_fallthru
          _
        %s9984 = sand.u32 %s169, 1
        %s9985 = scalar_lea.sflag [#allocation4], %s9984
        %s9986 = sand.u32 %s169, 1
        %s9987 = smul.addr %s9986, 256
        %s9988 = scalar_lea.vmem [#allocation3], %s9987
        // Predicated region
        $region69: #{tpu_custom_call.1} parent=39 // pred_check
          %p9989 = pneg %p179
        $region70: #{tpu_custom_call.1} parent=39 // pred_check_branch
          %9991 = sbr.rel (%p9989) target = $region72
        $region71: #{tpu_custom_call.1} parent=39 // pred_region
          %s9993 = ssub.s32 4096, 4096
          %9994 = vsyncadd %s9985, %s9993
          %s9995 = smul.addr %s23, 32
          %s9996 = smul.addr %s9995, 128
          %s9997 = scalar_lea.hbm %s5, %s9996
          %s9998 = sshll.u32 %s9988, 4
          %s9999 = int_to_ptr.vmem [resolvable:$true] %s9998
          %10004 = dma.vmem_to_hbm [thread:$0]  %s9999, 4096, %s9997, %s9985, 128, 128, 8
        $region72: #{tpu_custom_call.1} parent=39 // pred_fallthru
          _
      $region40: #{tpu_custom_call.1} parent=5 // pred_fallthru
        _
      %p10005 = scmp.le.s32.totalorder 2, %s14
      // Predicated region
      $region73: #{tpu_custom_call.1} parent=5 // pred_check
        %p10006 = pneg %p10005
      $region74: #{tpu_custom_call.1} parent=5 // pred_check_branch
        %10008 = sbr.rel (%p10006) target = $region76
      $region75: #{tpu_custom_call.1} parent=5 // pred_region
        %s10009 = ssub.s32 %s14, 2
        // Predicated region
        $region77: #{tpu_custom_call.1} parent=75 // pred_check
          %p10010 = pneg %p185
        $region78: #{tpu_custom_call.1} parent=75 // pred_check_branch
          %10012 = sbr.rel (%p10010) target = $region80
        $region79: #{tpu_custom_call.1} parent=75 // pred_region
          %s10013 = sand.u32 %s170, 1
          %s10014 = scalar_lea.sflag [#allocation4], %s10013
          %s10015 = sand.u32 %s170, 1
          %s10016 = smul.addr %s10015, 256
          %s10017 = scalar_lea.vmem [#allocation3], %s10016
          %10018 = dma.done %s10014, 4096
        $region80: #{tpu_custom_call.1} parent=75 // pred_fallthru
          _
      $region76: #{tpu_custom_call.1} parent=5 // pred_fallthru
        _
    $region6: #{tpu_custom_call.1} parent=1 // loop_footer
      %s18 = sadd.s32 1, %s14
    $region7: #{tpu_custom_call.1} parent=1 // loop_footer_branch
      %13 = sbr.rel target = $region3
    $region8: #{tpu_custom_call.1} parent=1 // loop_exit
      _
    %10019 = vsyncpa [#allocation4], 1
    %s10020 = scalar_lea.sflag [#allocation4], 1
    %10021 = vsyncpa %s10020, 1

</llo_original>
